<compile_context>
chip_gen: v7x
topology: tpu7x:2x2x1
jax: 0.10.0
libtpu: 0.0.40
codegen_flags: <defaults>
</compile_context>

<pallas_src>
import jax
import jax.numpy as jnp
import numpy as np
from jax.experimental import pallas as pl
from jax.experimental.pallas import tpu as pltpu


def _round_up(x, m):
    return (x + m - 1) // m * m


def make_mask_head_kernel(H, W, NB, S, CB, Kpad):
    Wp = W + 2
    NBS = NB * S

    def kernel(xpf_ref, mask_ref,
               w1_ref, b1_ref, w2_ref, b2_ref, w3_ref, b3_ref, w4_ref, b4_ref,
               wtc_ref, btc_ref, wl_ref, bl_ref,
               feat_ref, logit_ref,
               buf_ref, patch_ref):
        TAIL = buf_ref.shape[0] - NBS
        mask = mask_ref[...]                    # (NBS,1): 1.0 valid row, 0.0 pad/junk

        # Zero the read-overhang tail every step (scratch is per-core with
        # "parallel" semantics, so a program_id==0 guard would not be safe),
        # then stage the already padded-flat input block.
        buf_ref[pl.ds(NBS, TAIL), :] = jnp.zeros((TAIL, CB), jnp.bfloat16)
        buf_ref[pl.ds(0, NBS), :] = xpf_ref[...].reshape(NBS, CB)

        def conv3x3_relu(w_ref, b_ref):
            # im2col: each tap is a contiguous row-shifted slice of the flat
            # padded activations, stored into a lane-aligned 128-wide column.
            for t in range(9):
                dy, dx = divmod(t, 3)
                patch_ref[:, t * CB:(t + 1) * CB] = buf_ref[pl.ds(dy * Wp + dx, NBS), :]
            # one deep-K MXU matmul per layer (K = 9*CB), f32 accumulation
            acc = jnp.dot(patch_ref[...], w_ref[...],
                          preferred_element_type=jnp.float32)
            y = jnp.maximum(acc + b_ref[...], 0.0) * mask   # zero pad/junk rows
            yb = y.astype(jnp.bfloat16)
            # shifted store re-creates the zero-padded layout for the next layer
            buf_ref[pl.ds(W + 3, NBS), :] = yb
            return y, yb

        for w_ref, b_ref in ((w1_ref, b1_ref), (w2_ref, b2_ref),
                             (w3_ref, b3_ref), (w4_ref, b4_ref)):
            y, yb = conv3x3_relu(w_ref, b_ref)

        # feature-extractor output (lane-dense; crop to valid rows in wrapper)
        feat_ref[...] = y.reshape(NB, S, CB)

        # predictor: ConvTranspose2d(2,2,stride 2) fused into ONE matmul over
        # its 4 output phases, then the 1x1 logits conv on 128-aligned slices.
        z = jnp.dot(yb, wtc_ref[...], preferred_element_type=jnp.float32)
        z = jnp.maximum(z + btc_ref[...], 0.0).astype(jnp.bfloat16)    # (NBS, 4*CB)
        wl = wl_ref[...]     # hoisted out of the phase loop
        bl = bl_ref[...]
        for p in range(4):
            lg = jnp.dot(z[:, p * CB:(p + 1) * CB], wl,
                         preferred_element_type=jnp.float32) + bl
            logit_ref[:, :, p * Kpad:(p + 1) * Kpad] = lg.reshape(NB, S, Kpad)

    return kernel


def roi_mask_head_forward(x_nchw, params, roi_block=8):
    """x_nchw: pooled ROI features (N, Cin, H, W) (stand-in for the ROIAlign output).

    Returns (feat_nchw, mask_logits_nchw):
      feat_nchw        : (N, Chid, H, W)   -- the `x` returned by ROIMaskHead
      mask_logits_nchw : (N, K, 2H, 2W)    -- predictor output
    """
    N, Cin, H, W = x_nchw.shape
    Chid = params['w1'].shape[0]
    K = params['wl'].shape[0]

    Hp, Wp = H + 2, W + 2
    CB = _round_up(max(Cin, Chid), 128)          # shared lane-padded channel width
    Kpad = _round_up(K, 128)                     # lane-padded class count
    S = _round_up(Hp * Wp, 16)                   # per-ROI flat frame (bf16 tiling)
    NB = max(1, min(roi_block, N))               # ROIs batched per grid step
    Npad = _round_up(N, NB)
    NBS = NB * S
    TAIL = _round_up(2 * Wp + 2, 16)             # read/write overhang rows

    # ---- input: NCHW -> NHWC, spatial zero-pad, channel zero-pad, flatten, bf16
    x = jnp.transpose(x_nchw, (0, 2, 3, 1)).astype(jnp.float32)
    xp = jnp.pad(x, ((0, Npad - N), (1, 1), (1, 1), (0, CB - Cin)))
    xpf = jnp.pad(xp.reshape(Npad, Hp * Wp, CB), ((0, 0), (0, S - Hp * Wp), (0, 0)))
    xpf = xpf.astype(jnp.bfloat16)

    # ---- per-row validity mask of the flat output layout (y < H and x < W)
    loc = np.arange(S)
    frame = ((loc % Wp < W) & (loc // Wp < H)).astype(np.float32)
    mask = jnp.asarray(np.tile(frame, NB).reshape(NBS, 1))

    # ---- weights: bf16, lane-padded, tap / phase fused
    def conv_w(w):                                    # (Cout, Cin, 3, 3) -> (9*CB, CB)
        cout, cin = w.shape[0], w.shape[1]
        t = jnp.transpose(w, (2, 3, 1, 0))            # (3, 3, cin, cout)
        t = jnp.pad(t, ((0, 0), (0, 0), (0, CB - cin), (0, CB - cout)))
        return t.reshape(9 * CB, CB).astype(jnp.bfloat16)

    def conv_b(b):
        return jnp.pad(b, (0, CB - b.shape[0])).reshape(1, CB).astype(jnp.float32)

    w1, w2, w3, w4 = (conv_w(params[k]) for k in ('w1', 'w2', 'w3', 'w4'))
    b1, b2, b3, b4 = (conv_b(params[k]) for k in ('b1', 'b2', 'b3', 'b4'))

    wt4 = jnp.transpose(params['wt'], (2, 3, 0, 1)).reshape(4, Chid, Chid)  # (phase,cin,cout)
    wt4 = jnp.pad(wt4, ((0, 0), (0, CB - Chid), (0, CB - Chid)))
    wtc = jnp.transpose(wt4, (1, 0, 2)).reshape(CB, 4 * CB).astype(jnp.bfloat16)
    btc = jnp.tile(jnp.pad(params['bt'], (0, CB - Chid)), 4).reshape(1, 4 * CB)
    btc = btc.astype(jnp.float32)

    wl = jnp.pad(params['wl'][:, :, 0, 0].T, ((0, CB - Chid), (0, Kpad - K)))
    wl = wl.astype(jnp.bfloat16)
    bl = jnp.pad(params['bl'], (0, Kpad - K)).reshape(1, Kpad).astype(jnp.float32)

    def const_spec(a):
        nd = a.ndim
        return pl.BlockSpec(a.shape, lambda n, _nd=nd: (0,) * _nd)

    in_specs = ([pl.BlockSpec((NB, S, CB), lambda n: (n, 0, 0))]
                + [const_spec(a) for a in (mask, w1, b1, w2, b2, w3, b3, w4, b4,
                                           wtc, btc, wl, bl)])
    out_specs = [pl.BlockSpec((NB, S, CB), lambda n: (n, 0, 0)),
                 pl.BlockSpec((NB, S, 4 * Kpad), lambda n: (n, 0, 0))]
    out_shape = [jax.ShapeDtypeStruct((Npad, S, CB), jnp.float32),
                 jax.ShapeDtypeStruct((Npad, S, 4 * Kpad), jnp.float32)]

    feat_flat, logit_flat = pl.pallas_call(
        make_mask_head_kernel(H, W, NB, S, CB, Kpad),
        out_shape=out_shape,
        grid_spec=pltpu.PrefetchScalarGridSpec(
            num_scalar_prefetch=0,
            grid=(Npad // NB,),                      # NB ROIs per grid step
            in_specs=in_specs,
            out_specs=out_specs,
            scratch_shapes=[pltpu.VMEM((NBS + TAIL, CB), jnp.bfloat16),   # activations
                            pltpu.VMEM((NBS, 9 * CB), jnp.bfloat16)],     # im2col
        ),
        compiler_params=pltpu.CompilerParams(dimension_semantics=("parallel",)),
    )(xpf, mask, w1, b1, w2, b2, w3, b3, w4, b4, wtc, btc, wl, bl)

    # ---- wrapper-side layout glue: crop valid rows/cols, interleave phases, NCHW
    HWp = H * Wp
    feat = feat_flat[:N, :HWp, :Chid].reshape(N, H, Wp, Chid)[:, :, :W, :]
    feat_nchw = jnp.transpose(feat, (0, 3, 1, 2))

    lg = logit_flat[:N, :HWp, :].reshape(N, H, Wp, 4, Kpad)[:, :, :W, :, :K]
    lg = lg.reshape(N, H, W, 2, 2, K)                               # (.., dy, dx, K)
    masks = jnp.transpose(lg, (0, 1, 3, 2, 4, 5)).reshape(N, 2 * H, 2 * W, K)
    logits_nchw = jnp.transpose(masks, (0, 3, 1, 2))
    # TODO(synk): BoxList post-processor (sigmoid + per-class mask pasting), the
    # training-time loss evaluator and the numpy.save dumps are not representable
    # without BoxList glue.
    return feat_nchw, logits_nchw


# ---------------- pure-JAX reference (for correctness check) ----------------
def ref_forward(x_nchw, params):
    x = jnp.transpose(x_nchw, (0, 2, 3, 1)).astype(jnp.float32)
    dn = ('NHWC', 'HWIO', 'NHWC')
    for wname, bname in (('w1', 'b1'), ('w2', 'b2'), ('w3', 'b3'), ('w4', 'b4')):
        w_hwio = jnp.transpose(params[wname], (2, 3, 1, 0))
        x = jax.lax.conv_general_dilated(x, w_hwio, (1, 1), 'SAME',
                                         dimension_numbers=dn)
        x = jax.nn.relu(x + params[bname][None, None, None, :])
    feat = x
    N, H, W, C = x.shape
    wt = params['wt']                       # (Cin, Cout, 2, 2)
    Cout = wt.shape[1]
    up = jnp.zeros((N, 2 * H, 2 * W, Cout), jnp.float32)
    for dy in range(2):
        for dx in range(2):
            up = up.at[:, dy::2, dx::2, :].set(
                jnp.einsum('nhwc,cd->nhwd', x, wt[:, :, dy, dx]))
    up = jax.nn.relu(up + params['bt'][None, None, None, :])
    wl = params['wl'][:, :, 0, 0]           # (K, Chid)
    logits = jnp.einsum('nhwc,kc->nhwk', up, wl) + params['bl'][None, None, None, :]
    return jnp.transpose(feat, (0, 3, 1, 2)), jnp.transpose(logits, (0, 3, 1, 2))


if __name__ == "__main__":
    # small deterministic synthetic config:
    #   N=2 positive ROIs, Cin=8 pooled channels, 8x8 pooled resolution,
    #   Chid=16 mask-head conv dim, K=8 classes -> mask_logits (2, 8, 16, 16)
    N, Cin, H, W = 2, 8, 8, 8
    Chid, K = 16, 8

    key = jax.random.PRNGKey(0)
    ks = jax.random.split(key, 8)
    params = {
        'w1': 0.1 * jax.random.normal(ks[0], (Chid, Cin, 3, 3), jnp.float32),
        'b1': 0.01 * jnp.ones((Chid,), jnp.float32),
        'w2': 0.1 * jax.random.normal(ks[1], (Chid, Chid, 3, 3), jnp.float32),
        'b2': 0.02 * jnp.ones((Chid,), jnp.float32),
        'w3': 0.1 * jax.random.normal(ks[2], (Chid, Chid, 3, 3), jnp.float32),
        'b3': 0.03 * jnp.ones((Chid,), jnp.float32),
        'w4': 0.1 * jax.random.normal(ks[3], (Chid, Chid, 3, 3), jnp.float32),
        'b4': 0.04 * jnp.ones((Chid,), jnp.float32),
        'wt': 0.1 * jax.random.normal(ks[4], (Chid, Chid, 2, 2), jnp.float32),  # ConvTranspose2d
        'bt': 0.05 * jnp.ones((Chid,), jnp.float32),
        'wl': 0.1 * jax.random.normal(ks[5], (K, Chid, 1, 1), jnp.float32),     # 1x1 logits conv
        'bl': 0.01 * jnp.ones((K,), jnp.float32),
    }
    x = jax.random.normal(ks[6], (N, Cin, H, W), jnp.float32)

    feat, mask_logits = roi_mask_head_forward(x, params)
    jax.block_until_ready((feat, mask_logits))

    rfeat, rlogits = ref_forward(x, params)
    np.testing.assert_allclose(np.asarray(feat), np.asarray(rfeat), rtol=2e-2, atol=2e-2)
    np.testing.assert_allclose(np.asarray(mask_logits), np.asarray(rlogits), rtol=2e-2, atol=2e-2)

    assert feat.shape == (N, Chid, H, W)
    assert mask_logits.shape == (N, K, 2 * H, 2 * W)
    print("KERNEL_OK")
</pallas_src>

<mosaic_0001>
module attributes {stable_mosaic.version = 11 : i64} {
  func.func @kernel(%arg0: i32, %arg1: memref<2x112x128xbf16, #tpu.memory_space<vmem>>, %arg2: memref<224x1xf32, #tpu.memory_space<vmem>>, %arg3: memref<1152x128xbf16, #tpu.memory_space<vmem>>, %arg4: memref<1x128xf32, #tpu.memory_space<vmem>>, %arg5: memref<1152x128xbf16, #tpu.memory_space<vmem>>, %arg6: memref<1x128xf32, #tpu.memory_space<vmem>>, %arg7: memref<1152x128xbf16, #tpu.memory_space<vmem>>, %arg8: memref<1x128xf32, #tpu.memory_space<vmem>>, %arg9: memref<1152x128xbf16, #tpu.memory_space<vmem>>, %arg10: memref<1x128xf32, #tpu.memory_space<vmem>>, %arg11: memref<128x512xbf16, #tpu.memory_space<vmem>>, %arg12: memref<1x512xf32, #tpu.memory_space<vmem>>, %arg13: memref<128x128xbf16, #tpu.memory_space<vmem>>, %arg14: memref<1x128xf32, #tpu.memory_space<vmem>>, %arg15: memref<2x112x128xf32, #tpu.memory_space<vmem>>, %arg16: memref<2x112x512xf32, #tpu.memory_space<vmem>>, %arg17: memref<256x128xbf16, #tpu.memory_space<vmem>>, %arg18: memref<224x1152xbf16, #tpu.memory_space<vmem>>) attributes {dimension_semantics = [#tpu.dimension_semantics<parallel>], iteration_bounds = array<i64: 1>, scalar_prefetch = 0 : i64, scratch_operands = 2 : i64, tpu.core_type = #tpu.core_type<tc>, window_params = [{transform_indices = @transform_0, window_bounds = array<i64: 2, 112, 128>}, {pipeline_mode = #tpu.pipeline_mode<synchronous>, transform_indices = @transform_1, window_bounds = array<i64: 224, 1>}, {pipeline_mode = #tpu.pipeline_mode<synchronous>, transform_indices = @transform_2, window_bounds = array<i64: 1152, 128>}, {pipeline_mode = #tpu.pipeline_mode<synchronous>, transform_indices = @transform_3, window_bounds = array<i64: 1, 128>}, {pipeline_mode = #tpu.pipeline_mode<synchronous>, transform_indices = @transform_4, window_bounds = array<i64: 1152, 128>}, {pipeline_mode = #tpu.pipeline_mode<synchronous>, transform_indices = @transform_5, window_bounds = array<i64: 1, 128>}, {pipeline_mode = #tpu.pipeline_mode<synchronous>, transform_indices = @transform_6, window_bounds = array<i64: 1152, 128>}, {pipeline_mode = #tpu.pipeline_mode<synchronous>, transform_indices = @transform_7, window_bounds = array<i64: 1, 128>}, {pipeline_mode = #tpu.pipeline_mode<synchronous>, transform_indices = @transform_8, window_bounds = array<i64: 1152, 128>}, {pipeline_mode = #tpu.pipeline_mode<synchronous>, transform_indices = @transform_9, window_bounds = array<i64: 1, 128>}, {pipeline_mode = #tpu.pipeline_mode<synchronous>, transform_indices = @transform_10, window_bounds = array<i64: 128, 512>}, {pipeline_mode = #tpu.pipeline_mode<synchronous>, transform_indices = @transform_11, window_bounds = array<i64: 1, 512>}, {pipeline_mode = #tpu.pipeline_mode<synchronous>, transform_indices = @transform_12, window_bounds = array<i64: 128, 128>}, {pipeline_mode = #tpu.pipeline_mode<synchronous>, transform_indices = @transform_13, window_bounds = array<i64: 1, 128>}, {transform_indices = @transform_14, window_bounds = array<i64: 2, 112, 128>}, {transform_indices = @transform_15, window_bounds = array<i64: 2, 112, 512>}]} {
    %c0 = arith.constant 0 : index
    %c0_0 = arith.constant 0 : index
    %0 = vector.load %arg2[%c0, %c0_0] : memref<224x1xf32, #tpu.memory_space<vmem>>, vector<224x1xf32>
    %cst = arith.constant 0.000000e+00 : bf16
    %1 = vector.broadcast %cst : bf16 to vector<32x128xbf16>
    %c224 = arith.constant 224 : index
    %c0_1 = arith.constant 0 : index
    %2 = vector.load %arg17[%c224, %c0_1] : memref<256x128xbf16, #tpu.memory_space<vmem>>, vector<32x128xbf16>
    tpu.vector_store %arg17[%c224, %c0_1], %1 {strides = array<i32>} : memref<256x128xbf16, #tpu.memory_space<vmem>>, vector<32x128xbf16>,
    %c0_2 = arith.constant 0 : index
    %c0_3 = arith.constant 0 : index
    %c0_4 = arith.constant 0 : index
    %3 = vector.load %arg1[%c0_2, %c0_3, %c0_4] : memref<2x112x128xbf16, #tpu.memory_space<vmem>>, vector<2x112x128xbf16>
    %4 = vector.shape_cast %3 : vector<2x112x128xbf16> to vector<224x128xbf16>
    %c0_5 = arith.constant 0 : index
    %c0_6 = arith.constant 0 : index
    %5 = vector.load %arg17[%c0_5, %c0_6] : memref<256x128xbf16, #tpu.memory_space<vmem>>, vector<224x128xbf16>
    tpu.vector_store %arg17[%c0_5, %c0_6], %4 {strides = array<i32>} : memref<256x128xbf16, #tpu.memory_space<vmem>>, vector<224x128xbf16>,
    %c0_7 = arith.constant 0 : index
    %c0_8 = arith.constant 0 : index
    %6 = vector.load %arg17[%c0_7, %c0_8] : memref<256x128xbf16, #tpu.memory_space<vmem>>, vector<224x128xbf16>
    %c0_9 = arith.constant 0 : index
    %c0_10 = arith.constant 0 : index
    %7 = vector.load %arg18[%c0_9, %c0_10] : memref<224x1152xbf16, #tpu.memory_space<vmem>>, vector<224x128xbf16>
    tpu.vector_store %arg18[%c0_9, %c0_10], %6 {strides = array<i32>} : memref<224x1152xbf16, #tpu.memory_space<vmem>>, vector<224x128xbf16>,
    %c1 = arith.constant 1 : index
    %c0_11 = arith.constant 0 : index
    %8 = vector.load %arg17[%c1, %c0_11] : memref<256x128xbf16, #tpu.memory_space<vmem>>, vector<224x128xbf16>
    %c0_12 = arith.constant 0 : index
    %c128 = arith.constant 128 : index
    %9 = vector.load %arg18[%c0_12, %c128] : memref<224x1152xbf16, #tpu.memory_space<vmem>>, vector<224x128xbf16>
    tpu.vector_store %arg18[%c0_12, %c128], %8 {strides = array<i32>} : memref<224x1152xbf16, #tpu.memory_space<vmem>>, vector<224x128xbf16>,
    %c2 = arith.constant 2 : index
    %c0_13 = arith.constant 0 : index
    %10 = vector.load %arg17[%c2, %c0_13] : memref<256x128xbf16, #tpu.memory_space<vmem>>, vector<224x128xbf16>
    %c0_14 = arith.constant 0 : index
    %c256 = arith.constant 256 : index
    %11 = vector.load %arg18[%c0_14, %c256] : memref<224x1152xbf16, #tpu.memory_space<vmem>>, vector<224x128xbf16>
    tpu.vector_store %arg18[%c0_14, %c256], %10 {strides = array<i32>} : memref<224x1152xbf16, #tpu.memory_space<vmem>>, vector<224x128xbf16>,
    %c10 = arith.constant 10 : index
    %c0_15 = arith.constant 0 : index
    %12 = vector.load %arg17[%c10, %c0_15] : memref<256x128xbf16, #tpu.memory_space<vmem>>, vector<224x128xbf16>
    %c0_16 = arith.constant 0 : index
    %c384 = arith.constant 384 : index
    %13 = vector.load %arg18[%c0_16, %c384] : memref<224x1152xbf16, #tpu.memory_space<vmem>>, vector<224x128xbf16>
    tpu.vector_store %arg18[%c0_16, %c384], %12 {strides = array<i32>} : memref<224x1152xbf16, #tpu.memory_space<vmem>>, vector<224x128xbf16>,
    %c11 = arith.constant 11 : index
    %c0_17 = arith.constant 0 : index
    %14 = vector.load %arg17[%c11, %c0_17] : memref<256x128xbf16, #tpu.memory_space<vmem>>, vector<224x128xbf16>
    %c0_18 = arith.constant 0 : index
    %c512 = arith.constant 512 : index
    %15 = vector.load %arg18[%c0_18, %c512] : memref<224x1152xbf16, #tpu.memory_space<vmem>>, vector<224x128xbf16>
    tpu.vector_store %arg18[%c0_18, %c512], %14 {strides = array<i32>} : memref<224x1152xbf16, #tpu.memory_space<vmem>>, vector<224x128xbf16>,
    %c12 = arith.constant 12 : index
    %c0_19 = arith.constant 0 : index
    %16 = vector.load %arg17[%c12, %c0_19] : memref<256x128xbf16, #tpu.memory_space<vmem>>, vector<224x128xbf16>
    %c0_20 = arith.constant 0 : index
    %c640 = arith.constant 640 : index
    %17 = vector.load %arg18[%c0_20, %c640] : memref<224x1152xbf16, #tpu.memory_space<vmem>>, vector<224x128xbf16>
    tpu.vector_store %arg18[%c0_20, %c640], %16 {strides = array<i32>} : memref<224x1152xbf16, #tpu.memory_space<vmem>>, vector<224x128xbf16>,
    %c20 = arith.constant 20 : index
    %c0_21 = arith.constant 0 : index
    %18 = vector.load %arg17[%c20, %c0_21] : memref<256x128xbf16, #tpu.memory_space<vmem>>, vector<224x128xbf16>
    %c0_22 = arith.constant 0 : index
    %c768 = arith.constant 768 : index
    %19 = vector.load %arg18[%c0_22, %c768] : memref<224x1152xbf16, #tpu.memory_space<vmem>>, vector<224x128xbf16>
    tpu.vector_store %arg18[%c0_22, %c768], %18 {strides = array<i32>} : memref<224x1152xbf16, #tpu.memory_space<vmem>>, vector<224x128xbf16>,
    %c21 = arith.constant 21 : index
    %c0_23 = arith.constant 0 : index
    %20 = vector.load %arg17[%c21, %c0_23] : memref<256x128xbf16, #tpu.memory_space<vmem>>, vector<224x128xbf16>
    %c0_24 = arith.constant 0 : index
    %c896 = arith.constant 896 : index
    %21 = vector.load %arg18[%c0_24, %c896] : memref<224x1152xbf16, #tpu.memory_space<vmem>>, vector<224x128xbf16>
    tpu.vector_store %arg18[%c0_24, %c896], %20 {strides = array<i32>} : memref<224x1152xbf16, #tpu.memory_space<vmem>>, vector<224x128xbf16>,
    %c22 = arith.constant 22 : index
    %c0_25 = arith.constant 0 : index
    %22 = vector.load %arg17[%c22, %c0_25] : memref<256x128xbf16, #tpu.memory_space<vmem>>, vector<224x128xbf16>
    %c0_26 = arith.constant 0 : index
    %c1024 = arith.constant 1024 : index
    %23 = vector.load %arg18[%c0_26, %c1024] : memref<224x1152xbf16, #tpu.memory_space<vmem>>, vector<224x128xbf16>
    tpu.vector_store %arg18[%c0_26, %c1024], %22 {strides = array<i32>} : memref<224x1152xbf16, #tpu.memory_space<vmem>>, vector<224x128xbf16>,
    %c0_27 = arith.constant 0 : index
    %c0_28 = arith.constant 0 : index
    %24 = vector.load %arg18[%c0_27, %c0_28] : memref<224x1152xbf16, #tpu.memory_space<vmem>>, vector<224x1152xbf16>
    %c0_29 = arith.constant 0 : index
    %c0_30 = arith.constant 0 : index
    %25 = vector.load %arg3[%c0_29, %c0_30] : memref<1152x128xbf16, #tpu.memory_space<vmem>>, vector<1152x128xbf16>
    %cst_31 = arith.constant dense<0.000000e+00> : vector<224x128xf32>
    %26 = tpu.matmul %24, %25, %cst_31 {dimension_numbers = #tpu.dot_dimension_numbers<[1], [0], [0], [1], [0, 0, 1, 1], [], []>} : vector<224x1152xbf16>, vector<1152x128xbf16>, vector<224x128xf32> -> vector<224x128xf32>
    %c0_32 = arith.constant 0 : index
    %c0_33 = arith.constant 0 : index
    %27 = vector.load %arg4[%c0_32, %c0_33] : memref<1x128xf32, #tpu.memory_space<vmem>>, vector<1x128xf32>
    %28 = vector.broadcast %27 : vector<1x128xf32> to vector<224x128xf32>
    %29 = arith.addf %26, %28 : vector<224x128xf32>
    %cst_34 = arith.constant 0.000000e+00 : f32
    %30 = vector.broadcast %cst_34 : f32 to vector<224x128xf32>
    %31 = arith.maximumf %29, %30 : vector<224x128xf32>
    %32 = vector.broadcast %0 : vector<224x1xf32> to vector<224x128xf32>
    %33 = arith.mulf %31, %32 : vector<224x128xf32>
    %34 = arith.truncf %33 : vector<224x128xf32> to vector<224x128xbf16>
    %c11_35 = arith.constant 11 : index
    %c0_36 = arith.constant 0 : index
    %35 = vector.load %arg17[%c11_35, %c0_36] : memref<256x128xbf16, #tpu.memory_space<vmem>>, vector<224x128xbf16>
    tpu.vector_store %arg17[%c11_35, %c0_36], %34 {strides = array<i32>} : memref<256x128xbf16, #tpu.memory_space<vmem>>, vector<224x128xbf16>,
    %c0_37 = arith.constant 0 : index
    %c0_38 = arith.constant 0 : index
    %36 = vector.load %arg17[%c0_37, %c0_38] : memref<256x128xbf16, #tpu.memory_space<vmem>>, vector<224x128xbf16>
    %c0_39 = arith.constant 0 : index
    %c0_40 = arith.constant 0 : index
    %37 = vector.load %arg18[%c0_39, %c0_40] : memref<224x1152xbf16, #tpu.memory_space<vmem>>, vector<224x128xbf16>
    tpu.vector_store %arg18[%c0_39, %c0_40], %36 {strides = array<i32>} : memref<224x1152xbf16, #tpu.memory_space<vmem>>, vector<224x128xbf16>,
    %c1_41 = arith.constant 1 : index
    %c0_42 = arith.constant 0 : index
    %38 = vector.load %arg17[%c1_41, %c0_42] : memref<256x128xbf16, #tpu.memory_space<vmem>>, vector<224x128xbf16>
    %c0_43 = arith.constant 0 : index
    %c128_44 = arith.constant 128 : index
    %39 = vector.load %arg18[%c0_43, %c128_44] : memref<224x1152xbf16, #tpu.memory_space<vmem>>, vector<224x128xbf16>
    tpu.vector_store %arg18[%c0_43, %c128_44], %38 {strides = array<i32>} : memref<224x1152xbf16, #tpu.memory_space<vmem>>, vector<224x128xbf16>,
    %c2_45 = arith.constant 2 : index
    %c0_46 = arith.constant 0 : index
    %40 = vector.load %arg17[%c2_45, %c0_46] : memref<256x128xbf16, #tpu.memory_space<vmem>>, vector<224x128xbf16>
    %c0_47 = arith.constant 0 : index
    %c256_48 = arith.constant 256 : index
    %41 = vector.load %arg18[%c0_47, %c256_48] : memref<224x1152xbf16, #tpu.memory_space<vmem>>, vector<224x128xbf16>
    tpu.vector_store %arg18[%c0_47, %c256_48], %40 {strides = array<i32>} : memref<224x1152xbf16, #tpu.memory_space<vmem>>, vector<224x128xbf16>,
    %c10_49 = arith.constant 10 : index
    %c0_50 = arith.constant 0 : index
    %42 = vector.load %arg17[%c10_49, %c0_50] : memref<256x128xbf16, #tpu.memory_space<vmem>>, vector<224x128xbf16>
    %c0_51 = arith.constant 0 : index
    %c384_52 = arith.constant 384 : index
    %43 = vector.load %arg18[%c0_51, %c384_52] : memref<224x1152xbf16, #tpu.memory_space<vmem>>, vector<224x128xbf16>
    tpu.vector_store %arg18[%c0_51, %c384_52], %42 {strides = array<i32>} : memref<224x1152xbf16, #tpu.memory_space<vmem>>, vector<224x128xbf16>,
    %c11_53 = arith.constant 11 : index
    %c0_54 = arith.constant 0 : index
    %44 = vector.load %arg17[%c11_53, %c0_54] : memref<256x128xbf16, #tpu.memory_space<vmem>>, vector<224x128xbf16>
    %c0_55 = arith.constant 0 : index
    %c512_56 = arith.constant 512 : index
    %45 = vector.load %arg18[%c0_55, %c512_56] : memref<224x1152xbf16, #tpu.memory_space<vmem>>, vector<224x128xbf16>
    tpu.vector_store %arg18[%c0_55, %c512_56], %44 {strides = array<i32>} : memref<224x1152xbf16, #tpu.memory_space<vmem>>, vector<224x128xbf16>,
    %c12_57 = arith.constant 12 : index
    %c0_58 = arith.constant 0 : index
    %46 = vector.load %arg17[%c12_57, %c0_58] : memref<256x128xbf16, #tpu.memory_space<vmem>>, vector<224x128xbf16>
    %c0_59 = arith.constant 0 : index
    %c640_60 = arith.constant 640 : index
    %47 = vector.load %arg18[%c0_59, %c640_60] : memref<224x1152xbf16, #tpu.memory_space<vmem>>, vector<224x128xbf16>
    tpu.vector_store %arg18[%c0_59, %c640_60], %46 {strides = array<i32>} : memref<224x1152xbf16, #tpu.memory_space<vmem>>, vector<224x128xbf16>,
    %c20_61 = arith.constant 20 : index
    %c0_62 = arith.constant 0 : index
    %48 = vector.load %arg17[%c20_61, %c0_62] : memref<256x128xbf16, #tpu.memory_space<vmem>>, vector<224x128xbf16>
    %c0_63 = arith.constant 0 : index
    %c768_64 = arith.constant 768 : index
    %49 = vector.load %arg18[%c0_63, %c768_64] : memref<224x1152xbf16, #tpu.memory_space<vmem>>, vector<224x128xbf16>
    tpu.vector_store %arg18[%c0_63, %c768_64], %48 {strides = array<i32>} : memref<224x1152xbf16, #tpu.memory_space<vmem>>, vector<224x128xbf16>,
    %c21_65 = arith.constant 21 : index
    %c0_66 = arith.constant 0 : index
    %50 = vector.load %arg17[%c21_65, %c0_66] : memref<256x128xbf16, #tpu.memory_space<vmem>>, vector<224x128xbf16>
    %c0_67 = arith.constant 0 : index
    %c896_68 = arith.constant 896 : index
    %51 = vector.load %arg18[%c0_67, %c896_68] : memref<224x1152xbf16, #tpu.memory_space<vmem>>, vector<224x128xbf16>
    tpu.vector_store %arg18[%c0_67, %c896_68], %50 {strides = array<i32>} : memref<224x1152xbf16, #tpu.memory_space<vmem>>, vector<224x128xbf16>,
    %c22_69 = arith.constant 22 : index
    %c0_70 = arith.constant 0 : index
    %52 = vector.load %arg17[%c22_69, %c0_70] : memref<256x128xbf16, #tpu.memory_space<vmem>>, vector<224x128xbf16>
    %c0_71 = arith.constant 0 : index
    %c1024_72 = arith.constant 1024 : index
    %53 = vector.load %arg18[%c0_71, %c1024_72] : memref<224x1152xbf16, #tpu.memory_space<vmem>>, vector<224x128xbf16>
    tpu.vector_store %arg18[%c0_71, %c1024_72], %52 {strides = array<i32>} : memref<224x1152xbf16, #tpu.memory_space<vmem>>, vector<224x128xbf16>,
    %c0_73 = arith.constant 0 : index
    %c0_74 = arith.constant 0 : index
    %54 = vector.load %arg18[%c0_73, %c0_74] : memref<224x1152xbf16, #tpu.memory_space<vmem>>, vector<224x1152xbf16>
    %c0_75 = arith.constant 0 : index
    %c0_76 = arith.constant 0 : index
    %55 = vector.load %arg5[%c0_75, %c0_76] : memref<1152x128xbf16, #tpu.memory_space<vmem>>, vector<1152x128xbf16>
    %cst_77 = arith.constant dense<0.000000e+00> : vector<224x128xf32>
    %56 = tpu.matmul %54, %55, %cst_77 {dimension_numbers = #tpu.dot_dimension_numbers<[1], [0], [0], [1], [0, 0, 1, 1], [], []>} : vector<224x1152xbf16>, vector<1152x128xbf16>, vector<224x128xf32> -> vector<224x128xf32>
    %c0_78 = arith.constant 0 : index
    %c0_79 = arith.constant 0 : index
    %57 = vector.load %arg6[%c0_78, %c0_79] : memref<1x128xf32, #tpu.memory_space<vmem>>, vector<1x128xf32>
    %58 = vector.broadcast %57 : vector<1x128xf32> to vector<224x128xf32>
    %59 = arith.addf %56, %58 : vector<224x128xf32>
    %cst_80 = arith.constant 0.000000e+00 : f32
    %60 = vector.broadcast %cst_80 : f32 to vector<224x128xf32>
    %61 = arith.maximumf %59, %60 : vector<224x128xf32>
    %62 = vector.broadcast %0 : vector<224x1xf32> to vector<224x128xf32>
    %63 = arith.mulf %61, %62 : vector<224x128xf32>
    %64 = arith.truncf %63 : vector<224x128xf32> to vector<224x128xbf16>
    %c11_81 = arith.constant 11 : index
    %c0_82 = arith.constant 0 : index
    %65 = vector.load %arg17[%c11_81, %c0_82] : memref<256x128xbf16, #tpu.memory_space<vmem>>, vector<224x128xbf16>
    tpu.vector_store %arg17[%c11_81, %c0_82], %64 {strides = array<i32>} : memref<256x128xbf16, #tpu.memory_space<vmem>>, vector<224x128xbf16>,
    %c0_83 = arith.constant 0 : index
    %c0_84 = arith.constant 0 : index
    %66 = vector.load %arg17[%c0_83, %c0_84] : memref<256x128xbf16, #tpu.memory_space<vmem>>, vector<224x128xbf16>
    %c0_85 = arith.constant 0 : index
    %c0_86 = arith.constant 0 : index
    %67 = vector.load %arg18[%c0_85, %c0_86] : memref<224x1152xbf16, #tpu.memory_space<vmem>>, vector<224x128xbf16>
    tpu.vector_store %arg18[%c0_85, %c0_86], %66 {strides = array<i32>} : memref<224x1152xbf16, #tpu.memory_space<vmem>>, vector<224x128xbf16>,
    %c1_87 = arith.constant 1 : index
    %c0_88 = arith.constant 0 : index
    %68 = vector.load %arg17[%c1_87, %c0_88] : memref<256x128xbf16, #tpu.memory_space<vmem>>, vector<224x128xbf16>
    %c0_89 = arith.constant 0 : index
    %c128_90 = arith.constant 128 : index
    %69 = vector.load %arg18[%c0_89, %c128_90] : memref<224x1152xbf16, #tpu.memory_space<vmem>>, vector<224x128xbf16>
    tpu.vector_store %arg18[%c0_89, %c128_90], %68 {strides = array<i32>} : memref<224x1152xbf16, #tpu.memory_space<vmem>>, vector<224x128xbf16>,
    %c2_91 = arith.constant 2 : index
    %c0_92 = arith.constant 0 : index
    %70 = vector.load %arg17[%c2_91, %c0_92] : memref<256x128xbf16, #tpu.memory_space<vmem>>, vector<224x128xbf16>
    %c0_93 = arith.constant 0 : index
    %c256_94 = arith.constant 256 : index
    %71 = vector.load %arg18[%c0_93, %c256_94] : memref<224x1152xbf16, #tpu.memory_space<vmem>>, vector<224x128xbf16>
    tpu.vector_store %arg18[%c0_93, %c256_94], %70 {strides = array<i32>} : memref<224x1152xbf16, #tpu.memory_space<vmem>>, vector<224x128xbf16>,
    %c10_95 = arith.constant 10 : index
    %c0_96 = arith.constant 0 : index
    %72 = vector.load %arg17[%c10_95, %c0_96] : memref<256x128xbf16, #tpu.memory_space<vmem>>, vector<224x128xbf16>
    %c0_97 = arith.constant 0 : index
    %c384_98 = arith.constant 384 : index
    %73 = vector.load %arg18[%c0_97, %c384_98] : memref<224x1152xbf16, #tpu.memory_space<vmem>>, vector<224x128xbf16>
    tpu.vector_store %arg18[%c0_97, %c384_98], %72 {strides = array<i32>} : memref<224x1152xbf16, #tpu.memory_space<vmem>>, vector<224x128xbf16>,
    %c11_99 = arith.constant 11 : index
    %c0_100 = arith.constant 0 : index
    %74 = vector.load %arg17[%c11_99, %c0_100] : memref<256x128xbf16, #tpu.memory_space<vmem>>, vector<224x128xbf16>
    %c0_101 = arith.constant 0 : index
    %c512_102 = arith.constant 512 : index
    %75 = vector.load %arg18[%c0_101, %c512_102] : memref<224x1152xbf16, #tpu.memory_space<vmem>>, vector<224x128xbf16>
    tpu.vector_store %arg18[%c0_101, %c512_102], %74 {strides = array<i32>} : memref<224x1152xbf16, #tpu.memory_space<vmem>>, vector<224x128xbf16>,
    %c12_103 = arith.constant 12 : index
    %c0_104 = arith.constant 0 : index
    %76 = vector.load %arg17[%c12_103, %c0_104] : memref<256x128xbf16, #tpu.memory_space<vmem>>, vector<224x128xbf16>
    %c0_105 = arith.constant 0 : index
    %c640_106 = arith.constant 640 : index
    %77 = vector.load %arg18[%c0_105, %c640_106] : memref<224x1152xbf16, #tpu.memory_space<vmem>>, vector<224x128xbf16>
    tpu.vector_store %arg18[%c0_105, %c640_106], %76 {strides = array<i32>} : memref<224x1152xbf16, #tpu.memory_space<vmem>>, vector<224x128xbf16>,
    %c20_107 = arith.constant 20 : index
    %c0_108 = arith.constant 0 : index
    %78 = vector.load %arg17[%c20_107, %c0_108] : memref<256x128xbf16, #tpu.memory_space<vmem>>, vector<224x128xbf16>
    %c0_109 = arith.constant 0 : index
    %c768_110 = arith.constant 768 : index
    %79 = vector.load %arg18[%c0_109, %c768_110] : memref<224x1152xbf16, #tpu.memory_space<vmem>>, vector<224x128xbf16>
    tpu.vector_store %arg18[%c0_109, %c768_110], %78 {strides = array<i32>} : memref<224x1152xbf16, #tpu.memory_space<vmem>>, vector<224x128xbf16>,
    %c21_111 = arith.constant 21 : index
    %c0_112 = arith.constant 0 : index
    %80 = vector.load %arg17[%c21_111, %c0_112] : memref<256x128xbf16, #tpu.memory_space<vmem>>, vector<224x128xbf16>
    %c0_113 = arith.constant 0 : index
    %c896_114 = arith.constant 896 : index
    %81 = vector.load %arg18[%c0_113, %c896_114] : memref<224x1152xbf16, #tpu.memory_space<vmem>>, vector<224x128xbf16>
    tpu.vector_store %arg18[%c0_113, %c896_114], %80 {strides = array<i32>} : memref<224x1152xbf16, #tpu.memory_space<vmem>>, vector<224x128xbf16>,
    %c22_115 = arith.constant 22 : index
    %c0_116 = arith.constant 0 : index
    %82 = vector.load %arg17[%c22_115, %c0_116] : memref<256x128xbf16, #tpu.memory_space<vmem>>, vector<224x128xbf16>
    %c0_117 = arith.constant 0 : index
    %c1024_118 = arith.constant 1024 : index
    %83 = vector.load %arg18[%c0_117, %c1024_118] : memref<224x1152xbf16, #tpu.memory_space<vmem>>, vector<224x128xbf16>
    tpu.vector_store %arg18[%c0_117, %c1024_118], %82 {strides = array<i32>} : memref<224x1152xbf16, #tpu.memory_space<vmem>>, vector<224x128xbf16>,
    %c0_119 = arith.constant 0 : index
    %c0_120 = arith.constant 0 : index
    %84 = vector.load %arg18[%c0_119, %c0_120] : memref<224x1152xbf16, #tpu.memory_space<vmem>>, vector<224x1152xbf16>
    %c0_121 = arith.constant 0 : index
    %c0_122 = arith.constant 0 : index
    %85 = vector.load %arg7[%c0_121, %c0_122] : memref<1152x128xbf16, #tpu.memory_space<vmem>>, vector<1152x128xbf16>
    %cst_123 = arith.constant dense<0.000000e+00> : vector<224x128xf32>
    %86 = tpu.matmul %84, %85, %cst_123 {dimension_numbers = #tpu.dot_dimension_numbers<[1], [0], [0], [1], [0, 0, 1, 1], [], []>} : vector<224x1152xbf16>, vector<1152x128xbf16>, vector<224x128xf32> -> vector<224x128xf32>
    %c0_124 = arith.constant 0 : index
    %c0_125 = arith.constant 0 : index
    %87 = vector.load %arg8[%c0_124, %c0_125] : memref<1x128xf32, #tpu.memory_space<vmem>>, vector<1x128xf32>
    %88 = vector.broadcast %87 : vector<1x128xf32> to vector<224x128xf32>
    %89 = arith.addf %86, %88 : vector<224x128xf32>
    %cst_126 = arith.constant 0.000000e+00 : f32
    %90 = vector.broadcast %cst_126 : f32 to vector<224x128xf32>
    %91 = arith.maximumf %89, %90 : vector<224x128xf32>
    %92 = vector.broadcast %0 : vector<224x1xf32> to vector<224x128xf32>
    %93 = arith.mulf %91, %92 : vector<224x128xf32>
    %94 = arith.truncf %93 : vector<224x128xf32> to vector<224x128xbf16>
    %c11_127 = arith.constant 11 : index
    %c0_128 = arith.constant 0 : index
    %95 = vector.load %arg17[%c11_127, %c0_128] : memref<256x128xbf16, #tpu.memory_space<vmem>>, vector<224x128xbf16>
    tpu.vector_store %arg17[%c11_127, %c0_128], %94 {strides = array<i32>} : memref<256x128xbf16, #tpu.memory_space<vmem>>, vector<224x128xbf16>,
    %c0_129 = arith.constant 0 : index
    %c0_130 = arith.constant 0 : index
    %96 = vector.load %arg17[%c0_129, %c0_130] : memref<256x128xbf16, #tpu.memory_space<vmem>>, vector<224x128xbf16>
    %c0_131 = arith.constant 0 : index
    %c0_132 = arith.constant 0 : index
    %97 = vector.load %arg18[%c0_131, %c0_132] : memref<224x1152xbf16, #tpu.memory_space<vmem>>, vector<224x128xbf16>
    tpu.vector_store %arg18[%c0_131, %c0_132], %96 {strides = array<i32>} : memref<224x1152xbf16, #tpu.memory_space<vmem>>, vector<224x128xbf16>,
    %c1_133 = arith.constant 1 : index
    %c0_134 = arith.constant 0 : index
    %98 = vector.load %arg17[%c1_133, %c0_134] : memref<256x128xbf16, #tpu.memory_space<vmem>>, vector<224x128xbf16>
    %c0_135 = arith.constant 0 : index
    %c128_136 = arith.constant 128 : index
    %99 = vector.load %arg18[%c0_135, %c128_136] : memref<224x1152xbf16, #tpu.memory_space<vmem>>, vector<224x128xbf16>
    tpu.vector_store %arg18[%c0_135, %c128_136], %98 {strides = array<i32>} : memref<224x1152xbf16, #tpu.memory_space<vmem>>, vector<224x128xbf16>,
    %c2_137 = arith.constant 2 : index
    %c0_138 = arith.constant 0 : index
    %100 = vector.load %arg17[%c2_137, %c0_138] : memref<256x128xbf16, #tpu.memory_space<vmem>>, vector<224x128xbf16>
    %c0_139 = arith.constant 0 : index
    %c256_140 = arith.constant 256 : index
    %101 = vector.load %arg18[%c0_139, %c256_140] : memref<224x1152xbf16, #tpu.memory_space<vmem>>, vector<224x128xbf16>
    tpu.vector_store %arg18[%c0_139, %c256_140], %100 {strides = array<i32>} : memref<224x1152xbf16, #tpu.memory_space<vmem>>, vector<224x128xbf16>,
    %c10_141 = arith.constant 10 : index
    %c0_142 = arith.constant 0 : index
    %102 = vector.load %arg17[%c10_141, %c0_142] : memref<256x128xbf16, #tpu.memory_space<vmem>>, vector<224x128xbf16>
    %c0_143 = arith.constant 0 : index
    %c384_144 = arith.constant 384 : index
    %103 = vector.load %arg18[%c0_143, %c384_144] : memref<224x1152xbf16, #tpu.memory_space<vmem>>, vector<224x128xbf16>
    tpu.vector_store %arg18[%c0_143, %c384_144], %102 {strides = array<i32>} : memref<224x1152xbf16, #tpu.memory_space<vmem>>, vector<224x128xbf16>,
    %c11_145 = arith.constant 11 : index
    %c0_146 = arith.constant 0 : index
    %104 = vector.load %arg17[%c11_145, %c0_146] : memref<256x128xbf16, #tpu.memory_space<vmem>>, vector<224x128xbf16>
    %c0_147 = arith.constant 0 : index
    %c512_148 = arith.constant 512 : index
    %105 = vector.load %arg18[%c0_147, %c512_148] : memref<224x1152xbf16, #tpu.memory_space<vmem>>, vector<224x128xbf16>
    tpu.vector_store %arg18[%c0_147, %c512_148], %104 {strides = array<i32>} : memref<224x1152xbf16, #tpu.memory_space<vmem>>, vector<224x128xbf16>,
    %c12_149 = arith.constant 12 : index
    %c0_150 = arith.constant 0 : index
    %106 = vector.load %arg17[%c12_149, %c0_150] : memref<256x128xbf16, #tpu.memory_space<vmem>>, vector<224x128xbf16>
    %c0_151 = arith.constant 0 : index
    %c640_152 = arith.constant 640 : index
    %107 = vector.load %arg18[%c0_151, %c640_152] : memref<224x1152xbf16, #tpu.memory_space<vmem>>, vector<224x128xbf16>
    tpu.vector_store %arg18[%c0_151, %c640_152], %106 {strides = array<i32>} : memref<224x1152xbf16, #tpu.memory_space<vmem>>, vector<224x128xbf16>,
    %c20_153 = arith.constant 20 : index
    %c0_154 = arith.constant 0 : index
    %108 = vector.load %arg17[%c20_153, %c0_154] : memref<256x128xbf16, #tpu.memory_space<vmem>>, vector<224x128xbf16>
    %c0_155 = arith.constant 0 : index
    %c768_156 = arith.constant 768 : index
    %109 = vector.load %arg18[%c0_155, %c768_156] : memref<224x1152xbf16, #tpu.memory_space<vmem>>, vector<224x128xbf16>
    tpu.vector_store %arg18[%c0_155, %c768_156], %108 {strides = array<i32>} : memref<224x1152xbf16, #tpu.memory_space<vmem>>, vector<224x128xbf16>,
    %c21_157 = arith.constant 21 : index
    %c0_158 = arith.constant 0 : index
    %110 = vector.load %arg17[%c21_157, %c0_158] : memref<256x128xbf16, #tpu.memory_space<vmem>>, vector<224x128xbf16>
    %c0_159 = arith.constant 0 : index
    %c896_160 = arith.constant 896 : index
    %111 = vector.load %arg18[%c0_159, %c896_160] : memref<224x1152xbf16, #tpu.memory_space<vmem>>, vector<224x128xbf16>
    tpu.vector_store %arg18[%c0_159, %c896_160], %110 {strides = array<i32>} : memref<224x1152xbf16, #tpu.memory_space<vmem>>, vector<224x128xbf16>,
    %c22_161 = arith.constant 22 : index
    %c0_162 = arith.constant 0 : index
    %112 = vector.load %arg17[%c22_161, %c0_162] : memref<256x128xbf16, #tpu.memory_space<vmem>>, vector<224x128xbf16>
    %c0_163 = arith.constant 0 : index
    %c1024_164 = arith.constant 1024 : index
    %113 = vector.load %arg18[%c0_163, %c1024_164] : memref<224x1152xbf16, #tpu.memory_space<vmem>>, vector<224x128xbf16>
    tpu.vector_store %arg18[%c0_163, %c1024_164], %112 {strides = array<i32>} : memref<224x1152xbf16, #tpu.memory_space<vmem>>, vector<224x128xbf16>,
    %c0_165 = arith.constant 0 : index
    %c0_166 = arith.constant 0 : index
    %114 = vector.load %arg18[%c0_165, %c0_166] : memref<224x1152xbf16, #tpu.memory_space<vmem>>, vector<224x1152xbf16>
    %c0_167 = arith.constant 0 : index
    %c0_168 = arith.constant 0 : index
    %115 = vector.load %arg9[%c0_167, %c0_168] : memref<1152x128xbf16, #tpu.memory_space<vmem>>, vector<1152x128xbf16>
    %cst_169 = arith.constant dense<0.000000e+00> : vector<224x128xf32>
    %116 = tpu.matmul %114, %115, %cst_169 {dimension_numbers = #tpu.dot_dimension_numbers<[1], [0], [0], [1], [0, 0, 1, 1], [], []>} : vector<224x1152xbf16>, vector<1152x128xbf16>, vector<224x128xf32> -> vector<224x128xf32>
    %c0_170 = arith.constant 0 : index
    %c0_171 = arith.constant 0 : index
    %117 = vector.load %arg10[%c0_170, %c0_171] : memref<1x128xf32, #tpu.memory_space<vmem>>, vector<1x128xf32>
    %118 = vector.broadcast %117 : vector<1x128xf32> to vector<224x128xf32>
    %119 = arith.addf %116, %118 : vector<224x128xf32>
    %cst_172 = arith.constant 0.000000e+00 : f32
    %120 = vector.broadcast %cst_172 : f32 to vector<224x128xf32>
    %121 = arith.maximumf %119, %120 : vector<224x128xf32>
    %122 = vector.broadcast %0 : vector<224x1xf32> to vector<224x128xf32>
    %123 = arith.mulf %121, %122 : vector<224x128xf32>
    %124 = arith.truncf %123 : vector<224x128xf32> to vector<224x128xbf16>
    %c11_173 = arith.constant 11 : index
    %c0_174 = arith.constant 0 : index
    %125 = vector.load %arg17[%c11_173, %c0_174] : memref<256x128xbf16, #tpu.memory_space<vmem>>, vector<224x128xbf16>
    tpu.vector_store %arg17[%c11_173, %c0_174], %124 {strides = array<i32>} : memref<256x128xbf16, #tpu.memory_space<vmem>>, vector<224x128xbf16>,
    %126 = vector.shape_cast %123 : vector<224x128xf32> to vector<2x112x128xf32>
    %c0_175 = arith.constant 0 : index
    %c0_176 = arith.constant 0 : index
    %c0_177 = arith.constant 0 : index
    %127 = vector.load %arg15[%c0_175, %c0_176, %c0_177] : memref<2x112x128xf32, #tpu.memory_space<vmem>>, vector<2x112x128xf32>
    tpu.vector_store %arg15[%c0_175, %c0_176, %c0_177], %126 {strides = array<i32>} : memref<2x112x128xf32, #tpu.memory_space<vmem>>, vector<2x112x128xf32>,
    %c0_178 = arith.constant 0 : index
    %c0_179 = arith.constant 0 : index
    %128 = vector.load %arg11[%c0_178, %c0_179] : memref<128x512xbf16, #tpu.memory_space<vmem>>, vector<128x512xbf16>
    %cst_180 = arith.constant dense<0.000000e+00> : vector<224x512xf32>
    %129 = tpu.matmul %124, %128, %cst_180 {dimension_numbers = #tpu.dot_dimension_numbers<[1], [0], [0], [1], [0, 0, 1, 1], [], []>} : vector<224x128xbf16>, vector<128x512xbf16>, vector<224x512xf32> -> vector<224x512xf32>
    %c0_181 = arith.constant 0 : index
    %c0_182 = arith.constant 0 : index
    %130 = vector.load %arg12[%c0_181, %c0_182] : memref<1x512xf32, #tpu.memory_space<vmem>>, vector<1x512xf32>
    %131 = vector.broadcast %130 : vector<1x512xf32> to vector<224x512xf32>
    %132 = arith.addf %129, %131 : vector<224x512xf32>
    %cst_183 = arith.constant 0.000000e+00 : f32
    %133 = vector.broadcast %cst_183 : f32 to vector<224x512xf32>
    %134 = arith.maximumf %132, %133 : vector<224x512xf32>
    %135 = arith.truncf %134 : vector<224x512xf32> to vector<224x512xbf16>
    %c0_184 = arith.constant 0 : index
    %c0_185 = arith.constant 0 : index
    %136 = vector.load %arg13[%c0_184, %c0_185] : memref<128x128xbf16, #tpu.memory_space<vmem>>, vector<128x128xbf16>
    %c0_186 = arith.constant 0 : index
    %c0_187 = arith.constant 0 : index
    %137 = vector.load %arg14[%c0_186, %c0_187] : memref<1x128xf32, #tpu.memory_space<vmem>>, vector<1x128xf32>
    %138 = vector.extract_strided_slice %135 {offsets = [0, 0], sizes = [224, 128], strides = [1, 1]} : vector<224x512xbf16> to vector<224x128xbf16>
    %cst_188 = arith.constant dense<0.000000e+00> : vector<224x128xf32>
    %139 = tpu.matmul %138, %136, %cst_188 {dimension_numbers = #tpu.dot_dimension_numbers<[1], [0], [0], [1], [0, 0, 1, 1], [], []>} : vector<224x128xbf16>, vector<128x128xbf16>, vector<224x128xf32> -> vector<224x128xf32>
    %140 = vector.broadcast %137 : vector<1x128xf32> to vector<224x128xf32>
    %141 = arith.addf %139, %140 : vector<224x128xf32>
    %142 = vector.shape_cast %141 : vector<224x128xf32> to vector<2x112x128xf32>
    %c0_189 = arith.constant 0 : index
    %c0_190 = arith.constant 0 : index
    %c0_191 = arith.constant 0 : index
    %143 = vector.load %arg16[%c0_189, %c0_190, %c0_191] : memref<2x112x512xf32, #tpu.memory_space<vmem>>, vector<2x112x128xf32>
    tpu.vector_store %arg16[%c0_189, %c0_190, %c0_191], %142 {strides = array<i32>} : memref<2x112x512xf32, #tpu.memory_space<vmem>>, vector<2x112x128xf32>,
    %144 = vector.extract_strided_slice %135 {offsets = [0, 128], sizes = [224, 128], strides = [1, 1]} : vector<224x512xbf16> to vector<224x128xbf16>
    %cst_192 = arith.constant dense<0.000000e+00> : vector<224x128xf32>
    %145 = tpu.matmul %144, %136, %cst_192 {dimension_numbers = #tpu.dot_dimension_numbers<[1], [0], [0], [1], [0, 0, 1, 1], [], []>} : vector<224x128xbf16>, vector<128x128xbf16>, vector<224x128xf32> -> vector<224x128xf32>
    %146 = vector.broadcast %137 : vector<1x128xf32> to vector<224x128xf32>
    %147 = arith.addf %145, %146 : vector<224x128xf32>
    %148 = vector.shape_cast %147 : vector<224x128xf32> to vector<2x112x128xf32>
    %c0_193 = arith.constant 0 : index
    %c0_194 = arith.constant 0 : index
    %c128_195 = arith.constant 128 : index
    %149 = vector.load %arg16[%c0_193, %c0_194, %c128_195] : memref<2x112x512xf32, #tpu.memory_space<vmem>>, vector<2x112x128xf32>
    tpu.vector_store %arg16[%c0_193, %c0_194, %c128_195], %148 {strides = array<i32>} : memref<2x112x512xf32, #tpu.memory_space<vmem>>, vector<2x112x128xf32>,
    %150 = vector.extract_strided_slice %135 {offsets = [0, 256], sizes = [224, 128], strides = [1, 1]} : vector<224x512xbf16> to vector<224x128xbf16>
    %cst_196 = arith.constant dense<0.000000e+00> : vector<224x128xf32>
    %151 = tpu.matmul %150, %136, %cst_196 {dimension_numbers = #tpu.dot_dimension_numbers<[1], [0], [0], [1], [0, 0, 1, 1], [], []>} : vector<224x128xbf16>, vector<128x128xbf16>, vector<224x128xf32> -> vector<224x128xf32>
    %152 = vector.broadcast %137 : vector<1x128xf32> to vector<224x128xf32>
    %153 = arith.addf %151, %152 : vector<224x128xf32>
    %154 = vector.shape_cast %153 : vector<224x128xf32> to vector<2x112x128xf32>
    %c0_197 = arith.constant 0 : index
    %c0_198 = arith.constant 0 : index
    %c256_199 = arith.constant 256 : index
    %155 = vector.load %arg16[%c0_197, %c0_198, %c256_199] : memref<2x112x512xf32, #tpu.memory_space<vmem>>, vector<2x112x128xf32>
    tpu.vector_store %arg16[%c0_197, %c0_198, %c256_199], %154 {strides = array<i32>} : memref<2x112x512xf32, #tpu.memory_space<vmem>>, vector<2x112x128xf32>,
    %156 = vector.extract_strided_slice %135 {offsets = [0, 384], sizes = [224, 128], strides = [1, 1]} : vector<224x512xbf16> to vector<224x128xbf16>
    %cst_200 = arith.constant dense<0.000000e+00> : vector<224x128xf32>
    %157 = tpu.matmul %156, %136, %cst_200 {dimension_numbers = #tpu.dot_dimension_numbers<[1], [0], [0], [1], [0, 0, 1, 1], [], []>} : vector<224x128xbf16>, vector<128x128xbf16>, vector<224x128xf32> -> vector<224x128xf32>
    %158 = vector.broadcast %137 : vector<1x128xf32> to vector<224x128xf32>
    %159 = arith.addf %157, %158 : vector<224x128xf32>
    %160 = vector.shape_cast %159 : vector<224x128xf32> to vector<2x112x128xf32>
    %c0_201 = arith.constant 0 : index
    %c0_202 = arith.constant 0 : index
    %c384_203 = arith.constant 384 : index
    %161 = vector.load %arg16[%c0_201, %c0_202, %c384_203] : memref<2x112x512xf32, #tpu.memory_space<vmem>>, vector<2x112x128xf32>
    tpu.vector_store %arg16[%c0_201, %c0_202, %c384_203], %160 {strides = array<i32>} : memref<2x112x512xf32, #tpu.memory_space<vmem>>, vector<2x112x128xf32>,
    return
  }
  func.func @transform_0(%arg0: i32) -> (i32, i32, i32) {
    %c0_i32 = arith.constant 0 : i32
    %c0_i32_0 = arith.constant 0 : i32
    %c0_i32_1 = arith.constant 0 : i32
    return %arg0, %c0_i32, %c0_i32_0 : i32, i32, i32
  }
  func.func @transform_1(%arg0: i32) -> (i32, i32) {
    %c0_i32 = arith.constant 0 : i32
    %c0_i32_0 = arith.constant 0 : i32
    %c0_i32_1 = arith.constant 0 : i32
    return %c0_i32, %c0_i32_0 : i32, i32
  }
  func.func @transform_2(%arg0: i32) -> (i32, i32) {
    %c0_i32 = arith.constant 0 : i32
    %c0_i32_0 = arith.constant 0 : i32
    %c0_i32_1 = arith.constant 0 : i32
    return %c0_i32, %c0_i32_0 : i32, i32
  }
  func.func @transform_3(%arg0: i32) -> (i32, i32) {
    %c0_i32 = arith.constant 0 : i32
    %c0_i32_0 = arith.constant 0 : i32
    %c0_i32_1 = arith.constant 0 : i32
    return %c0_i32, %c0_i32_0 : i32, i32
  }
  func.func @transform_4(%arg0: i32) -> (i32, i32) {
    %c0_i32 = arith.constant 0 : i32
    %c0_i32_0 = arith.constant 0 : i32
    %c0_i32_1 = arith.constant 0 : i32
    return %c0_i32, %c0_i32_0 : i32, i32
  }
  func.func @transform_5(%arg0: i32) -> (i32, i32) {
    %c0_i32 = arith.constant 0 : i32
    %c0_i32_0 = arith.constant 0 : i32
    %c0_i32_1 = arith.constant 0 : i32
    return %c0_i32, %c0_i32_0 : i32, i32
  }
  func.func @transform_6(%arg0: i32) -> (i32, i32) {
    %c0_i32 = arith.constant 0 : i32
    %c0_i32_0 = arith.constant 0 : i32
    %c0_i32_1 = arith.constant 0 : i32
    return %c0_i32, %c0_i32_0 : i32, i32
  }
  func.func @transform_7(%arg0: i32) -> (i32, i32) {
    %c0_i32 = arith.constant 0 : i32
    %c0_i32_0 = arith.constant 0 : i32
    %c0_i32_1 = arith.constant 0 : i32
    return %c0_i32, %c0_i32_0 : i32, i32
  }
  func.func @transform_8(%arg0: i32) -> (i32, i32) {
    %c0_i32 = arith.constant 0 : i32
    %c0_i32_0 = arith.constant 0 : i32
    %c0_i32_1 = arith.constant 0 : i32
    return %c0_i32, %c0_i32_0 : i32, i32
  }
  func.func @transform_9(%arg0: i32) -> (i32, i32) {
    %c0_i32 = arith.constant 0 : i32
    %c0_i32_0 = arith.constant 0 : i32
    %c0_i32_1 = arith.constant 0 : i32
    return %c0_i32, %c0_i32_0 : i32, i32
  }
  func.func @transform_10(%arg0: i32) -> (i32, i32) {
    %c0_i32 = arith.constant 0 : i32
    %c0_i32_0 = arith.constant 0 : i32
    %c0_i32_1 = arith.constant 0 : i32
    return %c0_i32, %c0_i32_0 : i32, i32
  }
  func.func @transform_11(%arg0: i32) -> (i32, i32) {
    %c0_i32 = arith.constant 0 : i32
    %c0_i32_0 = arith.constant 0 : i32
    %c0_i32_1 = arith.constant 0 : i32
    return %c0_i32, %c0_i32_0 : i32, i32
  }
  func.func @transform_12(%arg0: i32) -> (i32, i32) {
    %c0_i32 = arith.constant 0 : i32
    %c0_i32_0 = arith.constant 0 : i32
    %c0_i32_1 = arith.constant 0 : i32
    return %c0_i32, %c0_i32_0 : i32, i32
  }
  func.func @transform_13(%arg0: i32) -> (i32, i32) {
    %c0_i32 = arith.constant 0 : i32
    %c0_i32_0 = arith.constant 0 : i32
    %c0_i32_1 = arith.constant 0 : i32
    return %c0_i32, %c0_i32_0 : i32, i32
  }
  func.func @transform_14(%arg0: i32) -> (i32, i32, i32) {
    %c0_i32 = arith.constant 0 : i32
    %c0_i32_0 = arith.constant 0 : i32
    %c0_i32_1 = arith.constant 0 : i32
    return %arg0, %c0_i32, %c0_i32_0 : i32, i32, i32
  }
  func.func @transform_15(%arg0: i32) -> (i32, i32, i32) {
    %c0_i32 = arith.constant 0 : i32
    %c0_i32_0 = arith.constant 0 : i32
    %c0_i32_1 = arith.constant 0 : i32
    return %arg0, %c0_i32, %c0_i32_0 : i32, i32, i32
  }
}

</mosaic_0001>

<llo_original>
// kernel: tpu_custom_call.1
$region0: #{tpu_custom_call.1}
  #allocation0 [shape = 'u32[]', space=smem, size = 0x4, offset = 0x4, fixed_abs, tag = 'smem constant byte address 0x4 - core index']
  #allocation1 [shape = 'u32[144,128]{1,0:T(1,128)}', space=vmem, size = 0x12000, scoped, tag = 'internal scratch']
  #allocation2 [shape = 'bf16[256,128]{1,0:T(16,128)(2,1)}', space=vmem, size = 0x10000, scoped, tag = 'scratch operand']
  #allocation3 [shape = 'bf16[224,1152]{1,0:T(16,128)(2,1)}', space=vmem, size = 0x7e000, scoped, tag = 'scratch operand']
  %s0 = inlined_call_operand.hbm [shape: bf16[2,112,128], index: 0, kind: input, shape index: {}]
  %s1 = inlined_call_operand.vmem [shape: f32[224,1], index: 1, kind: input, shape index: {}]
  %s2 = inlined_call_operand.hbm [shape: bf16[1152,128], index: 2, kind: input, shape index: {}]
  %s3 = inlined_call_operand.vmem [shape: f32[1,128], index: 3, kind: input, shape index: {}]
  %s4 = inlined_call_operand.hbm [shape: bf16[1152,128], index: 4, kind: input, shape index: {}]
  %s5 = inlined_call_operand.vmem [shape: f32[1,128], index: 5, kind: input, shape index: {}]
  %s6 = inlined_call_operand.hbm [shape: bf16[1152,128], index: 6, kind: input, shape index: {}]
  %s7 = inlined_call_operand.vmem [shape: f32[1,128], index: 7, kind: input, shape index: {}]
  %s8 = inlined_call_operand.hbm [shape: bf16[1152,128], index: 8, kind: input, shape index: {}]
  %s9 = inlined_call_operand.hbm [shape: f32[1,128], index: 9, kind: input, shape index: {}]
  %s10 = inlined_call_operand.vmem [shape: bf16[128,512], index: 10, kind: input, shape index: {}]
  %s11 = inlined_call_operand.vmem [shape: f32[1,512], index: 11, kind: input, shape index: {}]
  %s12 = inlined_call_operand.hbm [shape: bf16[128,128], index: 12, kind: input, shape index: {}]
  %s13 = inlined_call_operand.vmem [shape: f32[1,128], index: 13, kind: input, shape index: {}]
  %s14 = inlined_call_operand.hbm [shape: f32[2,112,128], index: 14, kind: output, shape index: {0}]
  %s15 = inlined_call_operand.hbm [shape: f32[2,112,512], index: 15, kind: output, shape index: {1}]
  %16 = xla_tuple %s14, %s15
  %s17 = sld [smem:[#allocation0]]
  $region102: #{tpu_custom_call.1} parent=0
    _
  %s19 = ssub.s32 1, %s17
  %s20 = scalar_select 0, %s19, %s17
  $region1: #{tpu_custom_call.1} parent=0
    #allocation4 [shape = 'u8[57344]{0}', space=vmem, size = 0xe000, scoped, tag = 'input window, operand 0, single buffered']
    #allocation5 [shape = 's32[1]{0}', space=sflag, size = 0x4, scoped, tag = 'scoped memory for tpu_custom_call.1']
    #allocation6 [shape = 's32[1]{0}', space=sflag, size = 0x4, scoped, tag = 'scoped memory for tpu_custom_call.1']
    #allocation7 [shape = 'u8[294912]{0}', space=vmem, size = 0x48000, scoped, tag = 'input window, operand 2, single buffered']
    #allocation8 [shape = 's32[1]{0}', space=sflag, size = 0x4, scoped, tag = 'scoped memory for tpu_custom_call.1']
    #allocation9 [shape = 'u8[294912]{0}', space=vmem, size = 0x48000, scoped, tag = 'input window, operand 4, single buffered']
    #allocation10 [shape = 'u8[294912]{0}', space=vmem, size = 0x48000, scoped, tag = 'input window, operand 6, single buffered']
    #allocation11 [shape = 's32[1]{0}', space=sflag, size = 0x4, scoped, tag = 'scoped memory for tpu_custom_call.1']
    #allocation12 [shape = 'u8[294912]{0}', space=vmem, size = 0x48000, scoped, tag = 'input window, operand 8, single buffered']
    #allocation13 [shape = 'u8[512]{0}', space=vmem, size = 0x400, scoped, tag = 'input window, operand 9, single buffered']
    #allocation14 [shape = 's32[1]{0}', space=sflag, size = 0x4, scoped, tag = 'scoped memory for tpu_custom_call.1']
    #allocation15 [shape = 'u8[32768]{0}', space=vmem, size = 0x8000, scoped, tag = 'input window, operand 12, single buffered']
    #allocation16 [shape = 'u8[114688]{0}', space=vmem, size = 0x1c000, scoped, tag = 'output window, operand 0, single buffered']
    #allocation17 [shape = 'u8[458752]{0}', space=vmem, size = 0x70000, scoped, tag = 'output window, operand 1, single buffered']
    #allocation18 [shape = 's32[1]{0}', space=sflag, size = 0x4, scoped, tag = 'scoped memory for tpu_custom_call.1']
    %21 = vsyncpa [#allocation5], 0
    %22 = vsyncpa [#allocation8], 0
    %23 = vsyncpa [#allocation11], 0
    %24 = vsyncpa [#allocation14], 0
    %25 = vsyncpa [#allocation6], 0
    %26 = vsyncpa [#allocation18], 0
    // Predicated region
    $region2: #{tpu_custom_call.1} parent=1 // pred_check
      _
    $region3: #{tpu_custom_call.1} parent=1 // pred_check_branch
      %28 = sbr.rel (0) target = $region5
    $region4: #{tpu_custom_call.1} parent=1 // pred_region
      %s30 = ssub.s32 1792, 1792
      %31 = vsyncadd [#allocation5], %s30
      %s32 = sshll.u32 [#allocation4], 4
      %s33 = int_to_ptr.vmem [resolvable:$true] %s32
      %38 = dma.hbm_to_vmem [thread:$0]  %s0, 1792, %s33, [#allocation5], 64, 64, 4
    $region5: #{tpu_custom_call.1} parent=1 // pred_fallthru
      _
    // Predicated region
    $region6: #{tpu_custom_call.1} parent=1 // pred_check
      _
    $region7: #{tpu_custom_call.1} parent=1 // pred_check_branch
      %40 = sbr.rel (0) target = $region9
    $region8: #{tpu_custom_call.1} parent=1 // pred_region
      _
    $region9: #{tpu_custom_call.1} parent=1 // pred_fallthru
      _
    // Predicated region
    $region10: #{tpu_custom_call.1} parent=1 // pred_check
      _
    $region11: #{tpu_custom_call.1} parent=1 // pred_check_branch
      %42 = sbr.rel (0) target = $region13
    $region12: #{tpu_custom_call.1} parent=1 // pred_region
      %s44 = ssub.s32 9216, 9216
      %45 = vsyncadd [#allocation8], %s44
      %s46 = sshll.u32 [#allocation7], 4
      %s47 = int_to_ptr.vmem [resolvable:$true] %s46
      %52 = dma.hbm_to_vmem [thread:$0]  %s2, 9216, %s47, [#allocation8], 64, 64, 4
    $region13: #{tpu_custom_call.1} parent=1 // pred_fallthru
      _
    // Predicated region
    $region14: #{tpu_custom_call.1} parent=1 // pred_check
      _
    $region15: #{tpu_custom_call.1} parent=1 // pred_check_branch
      %54 = sbr.rel (0) target = $region17
    $region16: #{tpu_custom_call.1} parent=1 // pred_region
      _
    $region17: #{tpu_custom_call.1} parent=1 // pred_fallthru
      _
    // Predicated region
    $region18: #{tpu_custom_call.1} parent=1 // pred_check
      _
    $region19: #{tpu_custom_call.1} parent=1 // pred_check_branch
      %56 = sbr.rel (0) target = $region21
    $region20: #{tpu_custom_call.1} parent=1 // pred_region
      %s58 = ssub.s32 9216, 9216
      %59 = vsyncadd [#allocation8], %s58
      %s60 = sshll.u32 [#allocation9], 4
      %s61 = int_to_ptr.vmem [resolvable:$true] %s60
      %66 = dma.hbm_to_vmem [thread:$0]  %s4, 9216, %s61, [#allocation8], 64, 64, 4
    $region21: #{tpu_custom_call.1} parent=1 // pred_fallthru
      _
    // Predicated region
    $region22: #{tpu_custom_call.1} parent=1 // pred_check
      _
    $region23: #{tpu_custom_call.1} parent=1 // pred_check_branch
      %68 = sbr.rel (0) target = $region25
    $region24: #{tpu_custom_call.1} parent=1 // pred_region
      _
    $region25: #{tpu_custom_call.1} parent=1 // pred_fallthru
      _
    // Predicated region
    $region26: #{tpu_custom_call.1} parent=1 // pred_check
      _
    $region27: #{tpu_custom_call.1} parent=1 // pred_check_branch
      %70 = sbr.rel (0) target = $region29
    $region28: #{tpu_custom_call.1} parent=1 // pred_region
      %s72 = ssub.s32 9216, 9216
      %73 = vsyncadd [#allocation11], %s72
      %s74 = sshll.u32 [#allocation10], 4
      %s75 = int_to_ptr.vmem [resolvable:$true] %s74
      %80 = dma.hbm_to_vmem [thread:$0]  %s6, 9216, %s75, [#allocation11], 64, 64, 4
    $region29: #{tpu_custom_call.1} parent=1 // pred_fallthru
      _
    // Predicated region
    $region30: #{tpu_custom_call.1} parent=1 // pred_check
      _
    $region31: #{tpu_custom_call.1} parent=1 // pred_check_branch
      %82 = sbr.rel (0) target = $region33
    $region32: #{tpu_custom_call.1} parent=1 // pred_region
      _
    $region33: #{tpu_custom_call.1} parent=1 // pred_fallthru
      _
    // Predicated region
    $region34: #{tpu_custom_call.1} parent=1 // pred_check
      _
    $region35: #{tpu_custom_call.1} parent=1 // pred_check_branch
      %84 = sbr.rel (0) target = $region37
    $region36: #{tpu_custom_call.1} parent=1 // pred_region
      %s86 = ssub.s32 9216, 9216
      %87 = vsyncadd [#allocation11], %s86
      %s88 = sshll.u32 [#allocation12], 4
      %s89 = int_to_ptr.vmem [resolvable:$true] %s88
      %94 = dma.hbm_to_vmem [thread:$0]  %s8, 9216, %s89, [#allocation11], 64, 64, 4
    $region37: #{tpu_custom_call.1} parent=1 // pred_fallthru
      _
    // Predicated region
    $region38: #{tpu_custom_call.1} parent=1 // pred_check
      _
    $region39: #{tpu_custom_call.1} parent=1 // pred_check_branch
      %96 = sbr.rel (0) target = $region41
    $region40: #{tpu_custom_call.1} parent=1 // pred_region
      %s98 = ssub.s32 16, 16
      %99 = vsyncadd [#allocation14], %s98
      %s101 = sshll.u32 [#allocation13], 4
      %s102 = int_to_ptr.vmem [resolvable:$true] %s101
      %104 = dma.hbm_to_vmem [thread:$0]  %s9, 16, %s102, [#allocation14]
    $region41: #{tpu_custom_call.1} parent=1 // pred_fallthru
      _
    // Predicated region
    $region42: #{tpu_custom_call.1} parent=1 // pred_check
      _
    $region43: #{tpu_custom_call.1} parent=1 // pred_check_branch
      %106 = sbr.rel (0) target = $region45
    $region44: #{tpu_custom_call.1} parent=1 // pred_region
      _
    $region45: #{tpu_custom_call.1} parent=1 // pred_fallthru
      _
    // Predicated region
    $region46: #{tpu_custom_call.1} parent=1 // pred_check
      _
    $region47: #{tpu_custom_call.1} parent=1 // pred_check_branch
      %108 = sbr.rel (0) target = $region49
    $region48: #{tpu_custom_call.1} parent=1 // pred_region
      _
    $region49: #{tpu_custom_call.1} parent=1 // pred_fallthru
      _
    // Predicated region
    $region50: #{tpu_custom_call.1} parent=1 // pred_check
      _
    $region51: #{tpu_custom_call.1} parent=1 // pred_check_branch
      %110 = sbr.rel (0) target = $region53
    $region52: #{tpu_custom_call.1} parent=1 // pred_region
      %s112 = ssub.s32 1024, 1024
      %113 = vsyncadd [#allocation14], %s112
      %s114 = sshll.u32 [#allocation15], 4
      %s115 = int_to_ptr.vmem [resolvable:$true] %s114
      %120 = dma.hbm_to_vmem [thread:$0]  %s12, 1024, %s115, [#allocation14], 64, 64, 4
    $region53: #{tpu_custom_call.1} parent=1 // pred_fallthru
      _
    // Predicated region
    $region54: #{tpu_custom_call.1} parent=1 // pred_check
      _
    $region55: #{tpu_custom_call.1} parent=1 // pred_check_branch
      %122 = sbr.rel (0) target = $region57
    $region56: #{tpu_custom_call.1} parent=1 // pred_region
      _
    $region57: #{tpu_custom_call.1} parent=1 // pred_fallthru
      _
    // Predicated region
    $region58: #{tpu_custom_call.1} parent=1 // pred_check
      _
    $region59: #{tpu_custom_call.1} parent=1 // pred_check_branch
      %124 = sbr.rel (0) target = $region61
    $region60: #{tpu_custom_call.1} parent=1 // pred_region
      %125 = dma.done [#allocation5], 1792
    $region61: #{tpu_custom_call.1} parent=1 // pred_fallthru
      _
    // Predicated region
    $region62: #{tpu_custom_call.1} parent=1 // pred_check
      _
    $region63: #{tpu_custom_call.1} parent=1 // pred_check_branch
      %127 = sbr.rel (0) target = $region65
    $region64: #{tpu_custom_call.1} parent=1 // pred_region
      %128 = dma.done [#allocation8], 9216
    $region65: #{tpu_custom_call.1} parent=1 // pred_fallthru
      _
    // Predicated region
    $region66: #{tpu_custom_call.1} parent=1 // pred_check
      _
    $region67: #{tpu_custom_call.1} parent=1 // pred_check_branch
      %130 = sbr.rel (0) target = $region69
    $region68: #{tpu_custom_call.1} parent=1 // pred_region
      %131 = dma.done [#allocation8], 9216
    $region69: #{tpu_custom_call.1} parent=1 // pred_fallthru
      _
    // Predicated region
    $region70: #{tpu_custom_call.1} parent=1 // pred_check
      _
    $region71: #{tpu_custom_call.1} parent=1 // pred_check_branch
      %133 = sbr.rel (0) target = $region73
    $region72: #{tpu_custom_call.1} parent=1 // pred_region
      %134 = dma.done [#allocation11], 9216
    $region73: #{tpu_custom_call.1} parent=1 // pred_fallthru
      _
    // Predicated region
    $region74: #{tpu_custom_call.1} parent=1 // pred_check
      _
    $region75: #{tpu_custom_call.1} parent=1 // pred_check_branch
      %136 = sbr.rel (0) target = $region77
    $region76: #{tpu_custom_call.1} parent=1 // pred_region
      %137 = dma.done [#allocation11], 9216
    $region77: #{tpu_custom_call.1} parent=1 // pred_fallthru
      _
    // Predicated region
    $region78: #{tpu_custom_call.1} parent=1 // pred_check
      _
    $region79: #{tpu_custom_call.1} parent=1 // pred_check_branch
      %139 = sbr.rel (0) target = $region81
    $region80: #{tpu_custom_call.1} parent=1 // pred_region
      %140 = dma.done [#allocation14], 16
    $region81: #{tpu_custom_call.1} parent=1 // pred_fallthru
      _
    // Predicated region
    $region82: #{tpu_custom_call.1} parent=1 // pred_check
      _
    $region83: #{tpu_custom_call.1} parent=1 // pred_check_branch
      %142 = sbr.rel (0) target = $region85
    $region84: #{tpu_custom_call.1} parent=1 // pred_region
      %143 = dma.done [#allocation14], 1024
    $region85: #{tpu_custom_call.1} parent=1 // pred_fallthru
      _
    %v145 = vld [vmem:[%s1] sm:$0xff]
    %v146 = vld [vmem:[%s1 + $0x8] sm:$0xff]
    %v147 = vld [vmem:[%s1 + $0x10] sm:$0xff]
    %v148 = vld [vmem:[%s1 + $0x18] sm:$0xff]
    %v149 = vld [vmem:[%s1 + $0x20] sm:$0xff]
    %v150 = vld [vmem:[%s1 + $0x28] sm:$0xff]
    %v151 = vld [vmem:[%s1 + $0x30] sm:$0xff]
    %v152 = vld [vmem:[%s1 + $0x38] sm:$0xff]
    %v153 = vld [vmem:[%s1 + $0x40] sm:$0xff]
    %v154 = vld [vmem:[%s1 + $0x48] sm:$0xff]
    %v155 = vld [vmem:[%s1 + $0x50] sm:$0xff]
    %v156 = vld [vmem:[%s1 + $0x58] sm:$0xff]
    %v157 = vld [vmem:[%s1 + $0x60] sm:$0xff]
    %v158 = vld [vmem:[%s1 + $0x68] sm:$0xff]
    %v159 = vld [vmem:[%s1 + $0x70] sm:$0xff]
    %v160 = vld [vmem:[%s1 + $0x78] sm:$0xff]
    %v161 = vld [vmem:[%s1 + $0x80] sm:$0xff]
    %v162 = vld [vmem:[%s1 + $0x88] sm:$0xff]
    %v163 = vld [vmem:[%s1 + $0x90] sm:$0xff]
    %v164 = vld [vmem:[%s1 + $0x98] sm:$0xff]
    %v165 = vld [vmem:[%s1 + $0xa0] sm:$0xff]
    %v166 = vld [vmem:[%s1 + $0xa8] sm:$0xff]
    %v167 = vld [vmem:[%s1 + $0xb0] sm:$0xff]
    %v168 = vld [vmem:[%s1 + $0xb8] sm:$0xff]
    %v169 = vld [vmem:[%s1 + $0xc0] sm:$0xff]
    %v170 = vld [vmem:[%s1 + $0xc8] sm:$0xff]
    %v171 = vld [vmem:[%s1 + $0xd0] sm:$0xff]
    %v172 = vld [vmem:[%s1 + $0xd8] sm:$0xff]
    %173 = vst [vmem:[#allocation2 + $0x70] sm:$0xff] 0
    %174 = vst [vmem:[#allocation2 + $0x78] sm:$0xff] 0
    %v175 = vld [vmem:[#allocation4] sm:$0xf]
    %v176 = vld [vmem:[#allocation4 + $0x4] sm:$0xf]
    %v177 = vld [vmem:[#allocation4 + $0x8] sm:$0xf]
    %v178 = vld [vmem:[#allocation4 + $0xc] sm:$0xf]
    %v179 = vld [vmem:[#allocation4 + $0x10] sm:$0xf]
    %v180 = vld [vmem:[#allocation4 + $0x14] sm:$0xf]
    %v181 = vld [vmem:[#allocation4 + $0x18] sm:$0xf]
    %v182 = vld [vmem:[#allocation4 + $0x1c] sm:$0xf]
    %v183 = vld [vmem:[#allocation4 + $0x20] sm:$0xf]
    %v184 = vld [vmem:[#allocation4 + $0x24] sm:$0xf]
    %v185 = vld [vmem:[#allocation4 + $0x28] sm:$0xf]
    %v186 = vld [vmem:[#allocation4 + $0x2c] sm:$0xf]
    %v187 = vld [vmem:[#allocation4 + $0x30] sm:$0xf]
    %v188 = vld [vmem:[#allocation4 + $0x34] sm:$0xf]
    %v189 = vld [vmem:[#allocation4 + $0x38] sm:$0xf]
    %v190 = vld [vmem:[#allocation4 + $0x3c] sm:$0xf]
    %v191 = vld [vmem:[#allocation4 + $0x40] sm:$0xf]
    %v192 = vld [vmem:[#allocation4 + $0x44] sm:$0xf]
    %v193 = vld [vmem:[#allocation4 + $0x48] sm:$0xf]
    %v194 = vld [vmem:[#allocation4 + $0x4c] sm:$0xf]
    %v195 = vld [vmem:[#allocation4 + $0x50] sm:$0xf]
    %v196 = vld [vmem:[#allocation4 + $0x54] sm:$0xf]
    %v197 = vld [vmem:[#allocation4 + $0x58] sm:$0xf]
    %v198 = vld [vmem:[#allocation4 + $0x5c] sm:$0xf]
    %v199 = vld [vmem:[#allocation4 + $0x60] sm:$0xf]
    %v200 = vld [vmem:[#allocation4 + $0x64] sm:$0xf]
    %v201 = vld [vmem:[#allocation4 + $0x68] sm:$0xf]
    %v202 = vld [vmem:[#allocation4 + $0x6c] sm:$0xf]
    %v231 = vunpack.c.l.b16 %v175
    %v232 = vunpack.c.l.b16 %v176
    %v233 = vunpack.c.l.b16 %v177
    %v234 = vunpack.c.l.b16 %v178
    %v235 = vunpack.c.l.b16 %v179
    %v236 = vunpack.c.l.b16 %v180
    %v237 = vunpack.c.l.b16 %v181
    %v238 = vunpack.c.l.b16 %v182
    %v239 = vunpack.c.l.b16 %v183
    %v240 = vunpack.c.l.b16 %v184
    %v241 = vunpack.c.l.b16 %v185
    %v242 = vunpack.c.l.b16 %v186
    %v243 = vunpack.c.l.b16 %v187
    %v244 = vunpack.c.l.b16 %v188
    %v245 = vunpack.c.l.b16 %v189
    %v246 = vunpack.c.l.b16 %v190
    %v247 = vunpack.c.l.b16 %v191
    %v248 = vunpack.c.l.b16 %v192
    %v249 = vunpack.c.l.b16 %v193
    %v250 = vunpack.c.l.b16 %v194
    %v251 = vunpack.c.l.b16 %v195
    %v252 = vunpack.c.l.b16 %v196
    %v253 = vunpack.c.l.b16 %v197
    %v254 = vunpack.c.l.b16 %v198
    %v255 = vunpack.c.l.b16 %v199
    %v256 = vunpack.c.l.b16 %v200
    %v257 = vunpack.c.l.b16 %v201
    %v258 = vunpack.c.l.b16 %v202
    %v259 = vpack.c.b16 %v232, %v231
    %v260 = vpack.c.b16 %v234, %v233
    %v261 = vpack.c.b16 %v236, %v235
    %v262 = vpack.c.b16 %v238, %v237
    %v263 = vpack.c.b16 %v240, %v239
    %v264 = vpack.c.b16 %v242, %v241
    %v265 = vpack.c.b16 %v244, %v243
    %v266 = vpack.c.b16 %v246, %v245
    %v267 = vpack.c.b16 %v248, %v247
    %v268 = vpack.c.b16 %v250, %v249
    %v269 = vpack.c.b16 %v252, %v251
    %v270 = vpack.c.b16 %v254, %v253
    %v271 = vpack.c.b16 %v256, %v255
    %v272 = vpack.c.b16 %v258, %v257
    %287 = vst [vmem:[#allocation2] sm:$0xff] %v259
    %288 = vst [vmem:[#allocation2 + $0x8] sm:$0xff] %v260
    %289 = vst [vmem:[#allocation2 + $0x10] sm:$0xff] %v261
    %290 = vst [vmem:[#allocation2 + $0x18] sm:$0xff] %v262
    %291 = vst [vmem:[#allocation2 + $0x20] sm:$0xff] %v263
    %292 = vst [vmem:[#allocation2 + $0x28] sm:$0xff] %v264
    %293 = vst [vmem:[#allocation2 + $0x30] sm:$0xff] %v265
    %294 = vst [vmem:[#allocation2 + $0x38] sm:$0xff] %v266
    %295 = vst [vmem:[#allocation2 + $0x40] sm:$0xff] %v267
    %296 = vst [vmem:[#allocation2 + $0x48] sm:$0xff] %v268
    %297 = vst [vmem:[#allocation2 + $0x50] sm:$0xff] %v269
    %298 = vst [vmem:[#allocation2 + $0x58] sm:$0xff] %v270
    %299 = vst [vmem:[#allocation2 + $0x60] sm:$0xff] %v271
    %300 = vst [vmem:[#allocation2 + $0x68] sm:$0xff] %v272
    %v301 = vld [vmem:[#allocation2] sm:$0xff]
    %v302 = vld [vmem:[#allocation2 + $0x8] sm:$0xff]
    %v303 = vld [vmem:[#allocation2 + $0x10] sm:$0xff]
    %v304 = vld [vmem:[#allocation2 + $0x18] sm:$0xff]
    %v305 = vld [vmem:[#allocation2 + $0x20] sm:$0xff]
    %v306 = vld [vmem:[#allocation2 + $0x28] sm:$0xff]
    %v307 = vld [vmem:[#allocation2 + $0x30] sm:$0xff]
    %v308 = vld [vmem:[#allocation2 + $0x38] sm:$0xff]
    %v309 = vld [vmem:[#allocation2 + $0x40] sm:$0xff]
    %v310 = vld [vmem:[#allocation2 + $0x48] sm:$0xff]
    %v311 = vld [vmem:[#allocation2 + $0x50] sm:$0xff]
    %v312 = vld [vmem:[#allocation2 + $0x58] sm:$0xff]
    %v313 = vld [vmem:[#allocation2 + $0x60] sm:$0xff]
    %v314 = vld [vmem:[#allocation2 + $0x68] sm:$0xff]
    %315 = vst [vmem:[#allocation3] sm:$0xff] %v301
    %316 = vst [vmem:[#allocation3 + $0x48] sm:$0xff] %v302
    %317 = vst [vmem:[#allocation3 + $0x90] sm:$0xff] %v303
    %318 = vst [vmem:[#allocation3 + $0xd8] sm:$0xff] %v304
    %319 = vst [vmem:[#allocation3 + $0x120] sm:$0xff] %v305
    %320 = vst [vmem:[#allocation3 + $0x168] sm:$0xff] %v306
    %321 = vst [vmem:[#allocation3 + $0x1b0] sm:$0xff] %v307
    %322 = vst [vmem:[#allocation3 + $0x1f8] sm:$0xff] %v308
    %323 = vst [vmem:[#allocation3 + $0x240] sm:$0xff] %v309
    %324 = vst [vmem:[#allocation3 + $0x288] sm:$0xff] %v310
    %325 = vst [vmem:[#allocation3 + $0x2d0] sm:$0xff] %v311
    %326 = vst [vmem:[#allocation3 + $0x318] sm:$0xff] %v312
    %327 = vst [vmem:[#allocation3 + $0x360] sm:$0xff] %v313
    %328 = vst [vmem:[#allocation3 + $0x3a8] sm:$0xff] %v314
    %v329 = vld [vmem:[#allocation2] sm:$0xff]
    %v330 = vld [vmem:[#allocation2 + $0x8] sm:$0xff]
    %v331 = vld [vmem:[#allocation2 + $0x10] sm:$0xff]
    %v332 = vld [vmem:[#allocation2 + $0x18] sm:$0xff]
    %v333 = vld [vmem:[#allocation2 + $0x20] sm:$0xff]
    %v334 = vld [vmem:[#allocation2 + $0x28] sm:$0xff]
    %v335 = vld [vmem:[#allocation2 + $0x30] sm:$0xff]
    %v336 = vld [vmem:[#allocation2 + $0x38] sm:$0xff]
    %v337 = vld [vmem:[#allocation2 + $0x40] sm:$0xff]
    %v338 = vld [vmem:[#allocation2 + $0x48] sm:$0xff]
    %v339 = vld [vmem:[#allocation2 + $0x50] sm:$0xff]
    %v340 = vld [vmem:[#allocation2 + $0x58] sm:$0xff]
    %v341 = vld [vmem:[#allocation2 + $0x60] sm:$0xff]
    %v342 = vld [vmem:[#allocation2 + $0x68] sm:$0xff]
    %v343 = vld [vmem:[#allocation2 + $0x70] sm:$0x1]
    %vm344 = vsmask.f32 7424
    %v346 = vshrl.u32 %v329, 16
    %v348 = vshll.u32 %v329, 16
    %v350 = vrot.slane %v348, 1
    %v351 = vor.u32 %v346, %v350
    %v353 = vshll.u32 %v330, 16
    %v355 = vrot.slane %v353, 1
    %v356 = vsel %vm344, %v351, %v355
    %v357 = vshrl.u32 %v330, 16
    %v359 = vor.u32 %v357, %v355
    %v361 = vshll.u32 %v331, 16
    %v363 = vrot.slane %v361, 1
    %v364 = vsel %vm344, %v359, %v363
    %v365 = vshrl.u32 %v331, 16
    %v367 = vor.u32 %v365, %v363
    %v369 = vshll.u32 %v332, 16
    %v371 = vrot.slane %v369, 1
    %v372 = vsel %vm344, %v367, %v371
    %v373 = vshrl.u32 %v332, 16
    %v375 = vor.u32 %v373, %v371
    %v377 = vshll.u32 %v333, 16
    %v379 = vrot.slane %v377, 1
    %v380 = vsel %vm344, %v375, %v379
    %v381 = vshrl.u32 %v333, 16
    %v383 = vor.u32 %v381, %v379
    %v385 = vshll.u32 %v334, 16
    %v387 = vrot.slane %v385, 1
    %v388 = vsel %vm344, %v383, %v387
    %v389 = vshrl.u32 %v334, 16
    %v391 = vor.u32 %v389, %v387
    %v393 = vshll.u32 %v335, 16
    %v395 = vrot.slane %v393, 1
    %v396 = vsel %vm344, %v391, %v395
    %v397 = vshrl.u32 %v335, 16
    %v399 = vor.u32 %v397, %v395
    %v401 = vshll.u32 %v336, 16
    %v403 = vrot.slane %v401, 1
    %v404 = vsel %vm344, %v399, %v403
    %v405 = vshrl.u32 %v336, 16
    %v407 = vor.u32 %v405, %v403
    %v409 = vshll.u32 %v337, 16
    %v411 = vrot.slane %v409, 1
    %v412 = vsel %vm344, %v407, %v411
    %v413 = vshrl.u32 %v337, 16
    %v415 = vor.u32 %v413, %v411
    %v417 = vshll.u32 %v338, 16
    %v419 = vrot.slane %v417, 1
    %v420 = vsel %vm344, %v415, %v419
    %v421 = vshrl.u32 %v338, 16
    %v423 = vor.u32 %v421, %v419
    %v425 = vshll.u32 %v339, 16
    %v427 = vrot.slane %v425, 1
    %v428 = vsel %vm344, %v423, %v427
    %v429 = vshrl.u32 %v339, 16
    %v431 = vor.u32 %v429, %v427
    %v433 = vshll.u32 %v340, 16
    %v435 = vrot.slane %v433, 1
    %v436 = vsel %vm344, %v431, %v435
    %v437 = vshrl.u32 %v340, 16
    %v439 = vor.u32 %v437, %v435
    %v441 = vshll.u32 %v341, 16
    %v443 = vrot.slane %v441, 1
    %v444 = vsel %vm344, %v439, %v443
    %v445 = vshrl.u32 %v341, 16
    %v447 = vor.u32 %v445, %v443
    %v449 = vshll.u32 %v342, 16
    %v451 = vrot.slane %v449, 1
    %v452 = vsel %vm344, %v447, %v451
    %v453 = vshrl.u32 %v342, 16
    %v455 = vor.u32 %v453, %v451
    %v457 = vshll.u32 %v343, 16
    %v459 = vrot.slane %v457, 1
    %v460 = vsel %vm344, %v455, %v459
    %475 = vst [vmem:[#allocation3 + $0x8] sm:$0xff] %v356
    %476 = vst [vmem:[#allocation3 + $0x50] sm:$0xff] %v364
    %477 = vst [vmem:[#allocation3 + $0x98] sm:$0xff] %v372
    %478 = vst [vmem:[#allocation3 + $0xe0] sm:$0xff] %v380
    %479 = vst [vmem:[#allocation3 + $0x128] sm:$0xff] %v388
    %480 = vst [vmem:[#allocation3 + $0x170] sm:$0xff] %v396
    %481 = vst [vmem:[#allocation3 + $0x1b8] sm:$0xff] %v404
    %482 = vst [vmem:[#allocation3 + $0x200] sm:$0xff] %v412
    %483 = vst [vmem:[#allocation3 + $0x248] sm:$0xff] %v420
    %484 = vst [vmem:[#allocation3 + $0x290] sm:$0xff] %v428
    %485 = vst [vmem:[#allocation3 + $0x2d8] sm:$0xff] %v436
    %486 = vst [vmem:[#allocation3 + $0x320] sm:$0xff] %v444
    %487 = vst [vmem:[#allocation3 + $0x368] sm:$0xff] %v452
    %488 = vst [vmem:[#allocation3 + $0x3b0] sm:$0xff] %v460
    %v489 = vld [vmem:[#allocation2] sm:$0xfe]
    %v490 = vld [vmem:[#allocation2 + $0x8] sm:$0xff]
    %v491 = vld [vmem:[#allocation2 + $0x10] sm:$0xff]
    %v492 = vld [vmem:[#allocation2 + $0x18] sm:$0xff]
    %v493 = vld [vmem:[#allocation2 + $0x20] sm:$0xff]
    %v494 = vld [vmem:[#allocation2 + $0x28] sm:$0xff]
    %v495 = vld [vmem:[#allocation2 + $0x30] sm:$0xff]
    %v496 = vld [vmem:[#allocation2 + $0x38] sm:$0xff]
    %v497 = vld [vmem:[#allocation2 + $0x40] sm:$0xff]
    %v498 = vld [vmem:[#allocation2 + $0x48] sm:$0xff]
    %v499 = vld [vmem:[#allocation2 + $0x50] sm:$0xff]
    %v500 = vld [vmem:[#allocation2 + $0x58] sm:$0xff]
    %v501 = vld [vmem:[#allocation2 + $0x60] sm:$0xff]
    %v502 = vld [vmem:[#allocation2 + $0x68] sm:$0xff]
    %v503 = vld [vmem:[#allocation2 + $0x70] sm:$0x1]
    %vm519 = vcmask 1046528
    %v520 = vrot.slane %v489, 1
    %v521 = vrot.slane %v490, 1
    %v522 = vsel %vm519, %v520, %v521
    %v523 = vrot.slane %v491, 1
    %v524 = vsel %vm519, %v521, %v523
    %v525 = vrot.slane %v492, 1
    %v526 = vsel %vm519, %v523, %v525
    %v527 = vrot.slane %v493, 1
    %v528 = vsel %vm519, %v525, %v527
    %v529 = vrot.slane %v494, 1
    %v530 = vsel %vm519, %v527, %v529
    %v531 = vrot.slane %v495, 1
    %v532 = vsel %vm519, %v529, %v531
    %v533 = vrot.slane %v496, 1
    %v534 = vsel %vm519, %v531, %v533
    %v535 = vrot.slane %v497, 1
    %v536 = vsel %vm519, %v533, %v535
    %v537 = vrot.slane %v498, 1
    %v538 = vsel %vm519, %v535, %v537
    %v539 = vrot.slane %v499, 1
    %v540 = vsel %vm519, %v537, %v539
    %v541 = vrot.slane %v500, 1
    %v542 = vsel %vm519, %v539, %v541
    %v543 = vrot.slane %v501, 1
    %v544 = vsel %vm519, %v541, %v543
    %v545 = vrot.slane %v502, 1
    %v546 = vsel %vm519, %v543, %v545
    %v547 = vrot.slane %v503, 1
    %v548 = vsel %vm519, %v545, %v547
    %563 = vst [vmem:[#allocation3 + $0x10] sm:$0xff] %v522
    %564 = vst [vmem:[#allocation3 + $0x58] sm:$0xff] %v524
    %565 = vst [vmem:[#allocation3 + $0xa0] sm:$0xff] %v526
    %566 = vst [vmem:[#allocation3 + $0xe8] sm:$0xff] %v528
    %567 = vst [vmem:[#allocation3 + $0x130] sm:$0xff] %v530
    %568 = vst [vmem:[#allocation3 + $0x178] sm:$0xff] %v532
    %569 = vst [vmem:[#allocation3 + $0x1c0] sm:$0xff] %v534
    %570 = vst [vmem:[#allocation3 + $0x208] sm:$0xff] %v536
    %571 = vst [vmem:[#allocation3 + $0x250] sm:$0xff] %v538
    %572 = vst [vmem:[#allocation3 + $0x298] sm:$0xff] %v540
    %573 = vst [vmem:[#allocation3 + $0x2e0] sm:$0xff] %v542
    %574 = vst [vmem:[#allocation3 + $0x328] sm:$0xff] %v544
    %575 = vst [vmem:[#allocation3 + $0x370] sm:$0xff] %v546
    %576 = vst [vmem:[#allocation3 + $0x3b8] sm:$0xff] %v548
    %v577 = vld [vmem:[#allocation2] sm:$0xe0]
    %v578 = vld [vmem:[#allocation2 + $0x8] sm:$0xff]
    %v579 = vld [vmem:[#allocation2 + $0x10] sm:$0xff]
    %v580 = vld [vmem:[#allocation2 + $0x18] sm:$0xff]
    %v581 = vld [vmem:[#allocation2 + $0x20] sm:$0xff]
    %v582 = vld [vmem:[#allocation2 + $0x28] sm:$0xff]
    %v583 = vld [vmem:[#allocation2 + $0x30] sm:$0xff]
    %v584 = vld [vmem:[#allocation2 + $0x38] sm:$0xff]
    %v585 = vld [vmem:[#allocation2 + $0x40] sm:$0xff]
    %v586 = vld [vmem:[#allocation2 + $0x48] sm:$0xff]
    %v587 = vld [vmem:[#allocation2 + $0x50] sm:$0xff]
    %v588 = vld [vmem:[#allocation2 + $0x58] sm:$0xff]
    %v589 = vld [vmem:[#allocation2 + $0x60] sm:$0xff]
    %v590 = vld [vmem:[#allocation2 + $0x68] sm:$0xff]
    %v591 = vld [vmem:[#allocation2 + $0x70] sm:$0x1f]
    %vm607 = vcmask 1042432
    %v608 = vrot.slane %v577, 5
    %v609 = vrot.slane %v578, 5
    %v610 = vsel %vm607, %v608, %v609
    %v611 = vrot.slane %v579, 5
    %v612 = vsel %vm607, %v609, %v611
    %v613 = vrot.slane %v580, 5
    %v614 = vsel %vm607, %v611, %v613
    %v615 = vrot.slane %v581, 5
    %v616 = vsel %vm607, %v613, %v615
    %v617 = vrot.slane %v582, 5
    %v618 = vsel %vm607, %v615, %v617
    %v619 = vrot.slane %v583, 5
    %v620 = vsel %vm607, %v617, %v619
    %v621 = vrot.slane %v584, 5
    %v622 = vsel %vm607, %v619, %v621
    %v623 = vrot.slane %v585, 5
    %v624 = vsel %vm607, %v621, %v623
    %v625 = vrot.slane %v586, 5
    %v626 = vsel %vm607, %v623, %v625
    %v627 = vrot.slane %v587, 5
    %v628 = vsel %vm607, %v625, %v627
    %v629 = vrot.slane %v588, 5
    %v630 = vsel %vm607, %v627, %v629
    %v631 = vrot.slane %v589, 5
    %v632 = vsel %vm607, %v629, %v631
    %v633 = vrot.slane %v590, 5
    %v634 = vsel %vm607, %v631, %v633
    %v635 = vrot.slane %v591, 5
    %v636 = vsel %vm607, %v633, %v635
    %651 = vst [vmem:[#allocation3 + $0x18] sm:$0xff] %v610
    %652 = vst [vmem:[#allocation3 + $0x60] sm:$0xff] %v612
    %653 = vst [vmem:[#allocation3 + $0xa8] sm:$0xff] %v614
    %654 = vst [vmem:[#allocation3 + $0xf0] sm:$0xff] %v616
    %655 = vst [vmem:[#allocation3 + $0x138] sm:$0xff] %v618
    %656 = vst [vmem:[#allocation3 + $0x180] sm:$0xff] %v620
    %657 = vst [vmem:[#allocation3 + $0x1c8] sm:$0xff] %v622
    %658 = vst [vmem:[#allocation3 + $0x210] sm:$0xff] %v624
    %659 = vst [vmem:[#allocation3 + $0x258] sm:$0xff] %v626
    %660 = vst [vmem:[#allocation3 + $0x2a0] sm:$0xff] %v628
    %661 = vst [vmem:[#allocation3 + $0x2e8] sm:$0xff] %v630
    %662 = vst [vmem:[#allocation3 + $0x330] sm:$0xff] %v632
    %663 = vst [vmem:[#allocation3 + $0x378] sm:$0xff] %v634
    %664 = vst [vmem:[#allocation3 + $0x3c0] sm:$0xff] %v636
    %v665 = vld [vmem:[#allocation2] sm:$0xe0]
    %v666 = vld [vmem:[#allocation2 + $0x8] sm:$0xff]
    %v667 = vld [vmem:[#allocation2 + $0x10] sm:$0xff]
    %v668 = vld [vmem:[#allocation2 + $0x18] sm:$0xff]
    %v669 = vld [vmem:[#allocation2 + $0x20] sm:$0xff]
    %v670 = vld [vmem:[#allocation2 + $0x28] sm:$0xff]
    %v671 = vld [vmem:[#allocation2 + $0x30] sm:$0xff]
    %v672 = vld [vmem:[#allocation2 + $0x38] sm:$0xff]
    %v673 = vld [vmem:[#allocation2 + $0x40] sm:$0xff]
    %v674 = vld [vmem:[#allocation2 + $0x48] sm:$0xff]
    %v675 = vld [vmem:[#allocation2 + $0x50] sm:$0xff]
    %v676 = vld [vmem:[#allocation2 + $0x58] sm:$0xff]
    %v677 = vld [vmem:[#allocation2 + $0x60] sm:$0xff]
    %v678 = vld [vmem:[#allocation2 + $0x68] sm:$0xff]
    %v679 = vld [vmem:[#allocation2 + $0x70] sm:$0x3f]
    %vm680 = vsmask.f32 2304
    %v682 = vshrl.u32 %v665, 16
    %v684 = vrot.slane %v682, 5
    %v685 = vshll.u32 %v665, 16
    %v687 = vrot.slane %v685, 6
    %v688 = vor.u32 %v684, %v687
    %v690 = vshrl.u32 %v666, 16
    %v692 = vrot.slane %v690, 5
    %v693 = vshll.u32 %v666, 16
    %v695 = vrot.slane %v693, 6
    %v696 = vor.u32 %v692, %v695
    %v697 = vsel %vm680, %v688, %v696
    %v699 = vshrl.u32 %v667, 16
    %v701 = vrot.slane %v699, 5
    %v702 = vshll.u32 %v667, 16
    %v704 = vrot.slane %v702, 6
    %v705 = vor.u32 %v701, %v704
    %v706 = vsel %vm680, %v696, %v705
    %v708 = vshrl.u32 %v668, 16
    %v710 = vrot.slane %v708, 5
    %v711 = vshll.u32 %v668, 16
    %v713 = vrot.slane %v711, 6
    %v714 = vor.u32 %v710, %v713
    %v715 = vsel %vm680, %v705, %v714
    %v717 = vshrl.u32 %v669, 16
    %v719 = vrot.slane %v717, 5
    %v720 = vshll.u32 %v669, 16
    %v722 = vrot.slane %v720, 6
    %v723 = vor.u32 %v719, %v722
    %v724 = vsel %vm680, %v714, %v723
    %v726 = vshrl.u32 %v670, 16
    %v728 = vrot.slane %v726, 5
    %v729 = vshll.u32 %v670, 16
    %v731 = vrot.slane %v729, 6
    %v732 = vor.u32 %v728, %v731
    %v733 = vsel %vm680, %v723, %v732
    %v735 = vshrl.u32 %v671, 16
    %v737 = vrot.slane %v735, 5
    %v738 = vshll.u32 %v671, 16
    %v740 = vrot.slane %v738, 6
    %v741 = vor.u32 %v737, %v740
    %v742 = vsel %vm680, %v732, %v741
    %v744 = vshrl.u32 %v672, 16
    %v746 = vrot.slane %v744, 5
    %v747 = vshll.u32 %v672, 16
    %v749 = vrot.slane %v747, 6
    %v750 = vor.u32 %v746, %v749
    %v751 = vsel %vm680, %v741, %v750
    %v753 = vshrl.u32 %v673, 16
    %v755 = vrot.slane %v753, 5
    %v756 = vshll.u32 %v673, 16
    %v758 = vrot.slane %v756, 6
    %v759 = vor.u32 %v755, %v758
    %v760 = vsel %vm680, %v750, %v759
    %v762 = vshrl.u32 %v674, 16
    %v764 = vrot.slane %v762, 5
    %v765 = vshll.u32 %v674, 16
    %v767 = vrot.slane %v765, 6
    %v768 = vor.u32 %v764, %v767
    %v769 = vsel %vm680, %v759, %v768
    %v771 = vshrl.u32 %v675, 16
    %v773 = vrot.slane %v771, 5
    %v774 = vshll.u32 %v675, 16
    %v776 = vrot.slane %v774, 6
    %v777 = vor.u32 %v773, %v776
    %v778 = vsel %vm680, %v768, %v777
    %v780 = vshrl.u32 %v676, 16
    %v782 = vrot.slane %v780, 5
    %v783 = vshll.u32 %v676, 16
    %v785 = vrot.slane %v783, 6
    %v786 = vor.u32 %v782, %v785
    %v787 = vsel %vm680, %v777, %v786
    %v789 = vshrl.u32 %v677, 16
    %v791 = vrot.slane %v789, 5
    %v792 = vshll.u32 %v677, 16
    %v794 = vrot.slane %v792, 6
    %v795 = vor.u32 %v791, %v794
    %v796 = vsel %vm680, %v786, %v795
    %v798 = vshrl.u32 %v678, 16
    %v800 = vrot.slane %v798, 5
    %v801 = vshll.u32 %v678, 16
    %v803 = vrot.slane %v801, 6
    %v804 = vor.u32 %v800, %v803
    %v805 = vsel %vm680, %v795, %v804
    %v807 = vshrl.u32 %v679, 16
    %v809 = vrot.slane %v807, 5
    %v810 = vshll.u32 %v679, 16
    %v812 = vrot.slane %v810, 6
    %v813 = vor.u32 %v809, %v812
    %v814 = vsel %vm680, %v804, %v813
    %829 = vst [vmem:[#allocation3 + $0x20] sm:$0xff] %v697
    %830 = vst [vmem:[#allocation3 + $0x68] sm:$0xff] %v706
    %831 = vst [vmem:[#allocation3 + $0xb0] sm:$0xff] %v715
    %832 = vst [vmem:[#allocation3 + $0xf8] sm:$0xff] %v724
    %833 = vst [vmem:[#allocation3 + $0x140] sm:$0xff] %v733
    %834 = vst [vmem:[#allocation3 + $0x188] sm:$0xff] %v742
    %835 = vst [vmem:[#allocation3 + $0x1d0] sm:$0xff] %v751
    %836 = vst [vmem:[#allocation3 + $0x218] sm:$0xff] %v760
    %837 = vst [vmem:[#allocation3 + $0x260] sm:$0xff] %v769
    %838 = vst [vmem:[#allocation3 + $0x2a8] sm:$0xff] %v778
    %839 = vst [vmem:[#allocation3 + $0x2f0] sm:$0xff] %v787
    %840 = vst [vmem:[#allocation3 + $0x338] sm:$0xff] %v796
    %841 = vst [vmem:[#allocation3 + $0x380] sm:$0xff] %v805
    %842 = vst [vmem:[#allocation3 + $0x3c8] sm:$0xff] %v814
    %v843 = vld [vmem:[#allocation2] sm:$0xc0]
    %v844 = vld [vmem:[#allocation2 + $0x8] sm:$0xff]
    %v845 = vld [vmem:[#allocation2 + $0x10] sm:$0xff]
    %v846 = vld [vmem:[#allocation2 + $0x18] sm:$0xff]
    %v847 = vld [vmem:[#allocation2 + $0x20] sm:$0xff]
    %v848 = vld [vmem:[#allocation2 + $0x28] sm:$0xff]
    %v849 = vld [vmem:[#allocation2 + $0x30] sm:$0xff]
    %v850 = vld [vmem:[#allocation2 + $0x38] sm:$0xff]
    %v851 = vld [vmem:[#allocation2 + $0x40] sm:$0xff]
    %v852 = vld [vmem:[#allocation2 + $0x48] sm:$0xff]
    %v853 = vld [vmem:[#allocation2 + $0x50] sm:$0xff]
    %v854 = vld [vmem:[#allocation2 + $0x58] sm:$0xff]
    %v855 = vld [vmem:[#allocation2 + $0x60] sm:$0xff]
    %v856 = vld [vmem:[#allocation2 + $0x68] sm:$0xff]
    %v857 = vld [vmem:[#allocation2 + $0x70] sm:$0x3f]
    %vm873 = vcmask 1041408
    %v874 = vrot.slane %v843, 6
    %v875 = vrot.slane %v844, 6
    %v876 = vsel %vm873, %v874, %v875
    %v877 = vrot.slane %v845, 6
    %v878 = vsel %vm873, %v875, %v877
    %v879 = vrot.slane %v846, 6
    %v880 = vsel %vm873, %v877, %v879
    %v881 = vrot.slane %v847, 6
    %v882 = vsel %vm873, %v879, %v881
    %v883 = vrot.slane %v848, 6
    %v884 = vsel %vm873, %v881, %v883
    %v885 = vrot.slane %v849, 6
    %v886 = vsel %vm873, %v883, %v885
    %v887 = vrot.slane %v850, 6
    %v888 = vsel %vm873, %v885, %v887
    %v889 = vrot.slane %v851, 6
    %v890 = vsel %vm873, %v887, %v889
    %v891 = vrot.slane %v852, 6
    %v892 = vsel %vm873, %v889, %v891
    %v893 = vrot.slane %v853, 6
    %v894 = vsel %vm873, %v891, %v893
    %v895 = vrot.slane %v854, 6
    %v896 = vsel %vm873, %v893, %v895
    %v897 = vrot.slane %v855, 6
    %v898 = vsel %vm873, %v895, %v897
    %v899 = vrot.slane %v856, 6
    %v900 = vsel %vm873, %v897, %v899
    %v901 = vrot.slane %v857, 6
    %v902 = vsel %vm873, %v899, %v901
    %917 = vst [vmem:[#allocation3 + $0x28] sm:$0xff] %v876
    %918 = vst [vmem:[#allocation3 + $0x70] sm:$0xff] %v878
    %919 = vst [vmem:[#allocation3 + $0xb8] sm:$0xff] %v880
    %920 = vst [vmem:[#allocation3 + $0x100] sm:$0xff] %v882
    %921 = vst [vmem:[#allocation3 + $0x148] sm:$0xff] %v884
    %922 = vst [vmem:[#allocation3 + $0x190] sm:$0xff] %v886
    %923 = vst [vmem:[#allocation3 + $0x1d8] sm:$0xff] %v888
    %924 = vst [vmem:[#allocation3 + $0x220] sm:$0xff] %v890
    %925 = vst [vmem:[#allocation3 + $0x268] sm:$0xff] %v892
    %926 = vst [vmem:[#allocation3 + $0x2b0] sm:$0xff] %v894
    %927 = vst [vmem:[#allocation3 + $0x2f8] sm:$0xff] %v896
    %928 = vst [vmem:[#allocation3 + $0x340] sm:$0xff] %v898
    %929 = vst [vmem:[#allocation3 + $0x388] sm:$0xff] %v900
    %930 = vst [vmem:[#allocation3 + $0x3d0] sm:$0xff] %v902
    %v931 = vld [vmem:[#allocation2 + $0x8] sm:$0xfc]
    %v932 = vld [vmem:[#allocation2 + $0x10] sm:$0xff]
    %v933 = vld [vmem:[#allocation2 + $0x18] sm:$0xff]
    %v934 = vld [vmem:[#allocation2 + $0x20] sm:$0xff]
    %v935 = vld [vmem:[#allocation2 + $0x28] sm:$0xff]
    %v936 = vld [vmem:[#allocation2 + $0x30] sm:$0xff]
    %v937 = vld [vmem:[#allocation2 + $0x38] sm:$0xff]
    %v938 = vld [vmem:[#allocation2 + $0x40] sm:$0xff]
    %v939 = vld [vmem:[#allocation2 + $0x48] sm:$0xff]
    %v940 = vld [vmem:[#allocation2 + $0x50] sm:$0xff]
    %v941 = vld [vmem:[#allocation2 + $0x58] sm:$0xff]
    %v942 = vld [vmem:[#allocation2 + $0x60] sm:$0xff]
    %v943 = vld [vmem:[#allocation2 + $0x68] sm:$0xff]
    %v944 = vld [vmem:[#allocation2 + $0x70] sm:$0xff]
    %v945 = vld [vmem:[#allocation2 + $0x78] sm:$0x3]
    %vm961 = vcmask 1045504
    %v962 = vrot.slane %v931, 2
    %v963 = vrot.slane %v932, 2
    %v964 = vsel %vm961, %v962, %v963
    %v965 = vrot.slane %v933, 2
    %v966 = vsel %vm961, %v963, %v965
    %v967 = vrot.slane %v934, 2
    %v968 = vsel %vm961, %v965, %v967
    %v969 = vrot.slane %v935, 2
    %v970 = vsel %vm961, %v967, %v969
    %v971 = vrot.slane %v936, 2
    %v972 = vsel %vm961, %v969, %v971
    %v973 = vrot.slane %v937, 2
    %v974 = vsel %vm961, %v971, %v973
    %v975 = vrot.slane %v938, 2
    %v976 = vsel %vm961, %v973, %v975
    %v977 = vrot.slane %v939, 2
    %v978 = vsel %vm961, %v975, %v977
    %v979 = vrot.slane %v940, 2
    %v980 = vsel %vm961, %v977, %v979
    %v981 = vrot.slane %v941, 2
    %v982 = vsel %vm961, %v979, %v981
    %v983 = vrot.slane %v942, 2
    %v984 = vsel %vm961, %v981, %v983
    %v985 = vrot.slane %v943, 2
    %v986 = vsel %vm961, %v983, %v985
    %v987 = vrot.slane %v944, 2
    %v988 = vsel %vm961, %v985, %v987
    %v989 = vrot.slane %v945, 2
    %v990 = vsel %vm961, %v987, %v989
    %1005 = vst [vmem:[#allocation3 + $0x30] sm:$0xff] %v964
    %1006 = vst [vmem:[#allocation3 + $0x78] sm:$0xff] %v966
    %1007 = vst [vmem:[#allocation3 + $0xc0] sm:$0xff] %v968
    %1008 = vst [vmem:[#allocation3 + $0x108] sm:$0xff] %v970
    %1009 = vst [vmem:[#allocation3 + $0x150] sm:$0xff] %v972
    %1010 = vst [vmem:[#allocation3 + $0x198] sm:$0xff] %v974
    %1011 = vst [vmem:[#allocation3 + $0x1e0] sm:$0xff] %v976
    %1012 = vst [vmem:[#allocation3 + $0x228] sm:$0xff] %v978
    %1013 = vst [vmem:[#allocation3 + $0x270] sm:$0xff] %v980
    %1014 = vst [vmem:[#allocation3 + $0x2b8] sm:$0xff] %v982
    %1015 = vst [vmem:[#allocation3 + $0x300] sm:$0xff] %v984
    %1016 = vst [vmem:[#allocation3 + $0x348] sm:$0xff] %v986
    %1017 = vst [vmem:[#allocation3 + $0x390] sm:$0xff] %v988
    %1018 = vst [vmem:[#allocation3 + $0x3d8] sm:$0xff] %v990
    %v1019 = vld [vmem:[#allocation2 + $0x8] sm:$0xfc]
    %v1020 = vld [vmem:[#allocation2 + $0x10] sm:$0xff]
    %v1021 = vld [vmem:[#allocation2 + $0x18] sm:$0xff]
    %v1022 = vld [vmem:[#allocation2 + $0x20] sm:$0xff]
    %v1023 = vld [vmem:[#allocation2 + $0x28] sm:$0xff]
    %v1024 = vld [vmem:[#allocation2 + $0x30] sm:$0xff]
    %v1025 = vld [vmem:[#allocation2 + $0x38] sm:$0xff]
    %v1026 = vld [vmem:[#allocation2 + $0x40] sm:$0xff]
    %v1027 = vld [vmem:[#allocation2 + $0x48] sm:$0xff]
    %v1028 = vld [vmem:[#allocation2 + $0x50] sm:$0xff]
    %v1029 = vld [vmem:[#allocation2 + $0x58] sm:$0xff]
    %v1030 = vld [vmem:[#allocation2 + $0x60] sm:$0xff]
    %v1031 = vld [vmem:[#allocation2 + $0x68] sm:$0xff]
    %v1032 = vld [vmem:[#allocation2 + $0x70] sm:$0xff]
    %v1033 = vld [vmem:[#allocation2 + $0x78] sm:$0x7]
    %vm1034 = vsmask.f32 5376
    %v1036 = vshrl.u32 %v1019, 16
    %v1038 = vrot.slane %v1036, 2
    %v1039 = vshll.u32 %v1019, 16
    %v1041 = vrot.slane %v1039, 3
    %v1042 = vor.u32 %v1038, %v1041
    %v1044 = vshrl.u32 %v1020, 16
    %v1046 = vrot.slane %v1044, 2
    %v1047 = vshll.u32 %v1020, 16
    %v1049 = vrot.slane %v1047, 3
    %v1050 = vor.u32 %v1046, %v1049
    %v1051 = vsel %vm1034, %v1042, %v1050
    %v1053 = vshrl.u32 %v1021, 16
    %v1055 = vrot.slane %v1053, 2
    %v1056 = vshll.u32 %v1021, 16
    %v1058 = vrot.slane %v1056, 3
    %v1059 = vor.u32 %v1055, %v1058
    %v1060 = vsel %vm1034, %v1050, %v1059
    %v1062 = vshrl.u32 %v1022, 16
    %v1064 = vrot.slane %v1062, 2
    %v1065 = vshll.u32 %v1022, 16
    %v1067 = vrot.slane %v1065, 3
    %v1068 = vor.u32 %v1064, %v1067
    %v1069 = vsel %vm1034, %v1059, %v1068
    %v1071 = vshrl.u32 %v1023, 16
    %v1073 = vrot.slane %v1071, 2
    %v1074 = vshll.u32 %v1023, 16
    %v1076 = vrot.slane %v1074, 3
    %v1077 = vor.u32 %v1073, %v1076
    %v1078 = vsel %vm1034, %v1068, %v1077
    %v1080 = vshrl.u32 %v1024, 16
    %v1082 = vrot.slane %v1080, 2
    %v1083 = vshll.u32 %v1024, 16
    %v1085 = vrot.slane %v1083, 3
    %v1086 = vor.u32 %v1082, %v1085
    %v1087 = vsel %vm1034, %v1077, %v1086
    %v1089 = vshrl.u32 %v1025, 16
    %v1091 = vrot.slane %v1089, 2
    %v1092 = vshll.u32 %v1025, 16
    %v1094 = vrot.slane %v1092, 3
    %v1095 = vor.u32 %v1091, %v1094
    %v1096 = vsel %vm1034, %v1086, %v1095
    %v1098 = vshrl.u32 %v1026, 16
    %v1100 = vrot.slane %v1098, 2
    %v1101 = vshll.u32 %v1026, 16
    %v1103 = vrot.slane %v1101, 3
    %v1104 = vor.u32 %v1100, %v1103
    %v1105 = vsel %vm1034, %v1095, %v1104
    %v1107 = vshrl.u32 %v1027, 16
    %v1109 = vrot.slane %v1107, 2
    %v1110 = vshll.u32 %v1027, 16
    %v1112 = vrot.slane %v1110, 3
    %v1113 = vor.u32 %v1109, %v1112
    %v1114 = vsel %vm1034, %v1104, %v1113
    %v1116 = vshrl.u32 %v1028, 16
    %v1118 = vrot.slane %v1116, 2
    %v1119 = vshll.u32 %v1028, 16
    %v1121 = vrot.slane %v1119, 3
    %v1122 = vor.u32 %v1118, %v1121
    %v1123 = vsel %vm1034, %v1113, %v1122
    %v1125 = vshrl.u32 %v1029, 16
    %v1127 = vrot.slane %v1125, 2
    %v1128 = vshll.u32 %v1029, 16
    %v1130 = vrot.slane %v1128, 3
    %v1131 = vor.u32 %v1127, %v1130
    %v1132 = vsel %vm1034, %v1122, %v1131
    %v1134 = vshrl.u32 %v1030, 16
    %v1136 = vrot.slane %v1134, 2
    %v1137 = vshll.u32 %v1030, 16
    %v1139 = vrot.slane %v1137, 3
    %v1140 = vor.u32 %v1136, %v1139
    %v1141 = vsel %vm1034, %v1131, %v1140
    %v1143 = vshrl.u32 %v1031, 16
    %v1145 = vrot.slane %v1143, 2
    %v1146 = vshll.u32 %v1031, 16
    %v1148 = vrot.slane %v1146, 3
    %v1149 = vor.u32 %v1145, %v1148
    %v1150 = vsel %vm1034, %v1140, %v1149
    %v1152 = vshrl.u32 %v1032, 16
    %v1154 = vrot.slane %v1152, 2
    %v1155 = vshll.u32 %v1032, 16
    %v1157 = vrot.slane %v1155, 3
    %v1158 = vor.u32 %v1154, %v1157
    %v1159 = vsel %vm1034, %v1149, %v1158
    %v1161 = vshrl.u32 %v1033, 16
    %v1163 = vrot.slane %v1161, 2
    %v1164 = vshll.u32 %v1033, 16
    %v1166 = vrot.slane %v1164, 3
    %v1167 = vor.u32 %v1163, %v1166
    %v1168 = vsel %vm1034, %v1158, %v1167
    %1183 = vst [vmem:[#allocation3 + $0x38] sm:$0xff] %v1051
    %1184 = vst [vmem:[#allocation3 + $0x80] sm:$0xff] %v1060
    %1185 = vst [vmem:[#allocation3 + $0xc8] sm:$0xff] %v1069
    %1186 = vst [vmem:[#allocation3 + $0x110] sm:$0xff] %v1078
    %1187 = vst [vmem:[#allocation3 + $0x158] sm:$0xff] %v1087
    %1188 = vst [vmem:[#allocation3 + $0x1a0] sm:$0xff] %v1096
    %1189 = vst [vmem:[#allocation3 + $0x1e8] sm:$0xff] %v1105
    %1190 = vst [vmem:[#allocation3 + $0x230] sm:$0xff] %v1114
    %1191 = vst [vmem:[#allocation3 + $0x278] sm:$0xff] %v1123
    %1192 = vst [vmem:[#allocation3 + $0x2c0] sm:$0xff] %v1132
    %1193 = vst [vmem:[#allocation3 + $0x308] sm:$0xff] %v1141
    %1194 = vst [vmem:[#allocation3 + $0x350] sm:$0xff] %v1150
    %1195 = vst [vmem:[#allocation3 + $0x398] sm:$0xff] %v1159
    %1196 = vst [vmem:[#allocation3 + $0x3e0] sm:$0xff] %v1168
    %v1197 = vld [vmem:[#allocation2 + $0x8] sm:$0xf8]
    %v1198 = vld [vmem:[#allocation2 + $0x10] sm:$0xff]
    %v1199 = vld [vmem:[#allocation2 + $0x18] sm:$0xff]
    %v1200 = vld [vmem:[#allocation2 + $0x20] sm:$0xff]
    %v1201 = vld [vmem:[#allocation2 + $0x28] sm:$0xff]
    %v1202 = vld [vmem:[#allocation2 + $0x30] sm:$0xff]
    %v1203 = vld [vmem:[#allocation2 + $0x38] sm:$0xff]
    %v1204 = vld [vmem:[#allocation2 + $0x40] sm:$0xff]
    %v1205 = vld [vmem:[#allocation2 + $0x48] sm:$0xff]
    %v1206 = vld [vmem:[#allocation2 + $0x50] sm:$0xff]
    %v1207 = vld [vmem:[#allocation2 + $0x58] sm:$0xff]
    %v1208 = vld [vmem:[#allocation2 + $0x60] sm:$0xff]
    %v1209 = vld [vmem:[#allocation2 + $0x68] sm:$0xff]
    %v1210 = vld [vmem:[#allocation2 + $0x70] sm:$0xff]
    %v1211 = vld [vmem:[#allocation2 + $0x78] sm:$0x7]
    %vm1227 = vcmask 1044480
    %v1228 = vrot.slane %v1197, 3
    %v1229 = vrot.slane %v1198, 3
    %v1230 = vsel %vm1227, %v1228, %v1229
    %v1231 = vrot.slane %v1199, 3
    %v1232 = vsel %vm1227, %v1229, %v1231
    %v1233 = vrot.slane %v1200, 3
    %v1234 = vsel %vm1227, %v1231, %v1233
    %v1235 = vrot.slane %v1201, 3
    %v1236 = vsel %vm1227, %v1233, %v1235
    %v1237 = vrot.slane %v1202, 3
    %v1238 = vsel %vm1227, %v1235, %v1237
    %v1239 = vrot.slane %v1203, 3
    %v1240 = vsel %vm1227, %v1237, %v1239
    %v1241 = vrot.slane %v1204, 3
    %v1242 = vsel %vm1227, %v1239, %v1241
    %v1243 = vrot.slane %v1205, 3
    %v1244 = vsel %vm1227, %v1241, %v1243
    %v1245 = vrot.slane %v1206, 3
    %v1246 = vsel %vm1227, %v1243, %v1245
    %v1247 = vrot.slane %v1207, 3
    %v1248 = vsel %vm1227, %v1245, %v1247
    %v1249 = vrot.slane %v1208, 3
    %v1250 = vsel %vm1227, %v1247, %v1249
    %v1251 = vrot.slane %v1209, 3
    %v1252 = vsel %vm1227, %v1249, %v1251
    %v1253 = vrot.slane %v1210, 3
    %v1254 = vsel %vm1227, %v1251, %v1253
    %v1255 = vrot.slane %v1211, 3
    %v1256 = vsel %vm1227, %v1253, %v1255
    %1271 = vst [vmem:[#allocation3 + $0x40] sm:$0xff] %v1230
    %1272 = vst [vmem:[#allocation3 + $0x88] sm:$0xff] %v1232
    %1273 = vst [vmem:[#allocation3 + $0xd0] sm:$0xff] %v1234
    %1274 = vst [vmem:[#allocation3 + $0x118] sm:$0xff] %v1236
    %1275 = vst [vmem:[#allocation3 + $0x160] sm:$0xff] %v1238
    %1276 = vst [vmem:[#allocation3 + $0x1a8] sm:$0xff] %v1240
    %1277 = vst [vmem:[#allocation3 + $0x1f0] sm:$0xff] %v1242
    %1278 = vst [vmem:[#allocation3 + $0x238] sm:$0xff] %v1244
    %1279 = vst [vmem:[#allocation3 + $0x280] sm:$0xff] %v1246
    %1280 = vst [vmem:[#allocation3 + $0x2c8] sm:$0xff] %v1248
    %1281 = vst [vmem:[#allocation3 + $0x310] sm:$0xff] %v1250
    %1282 = vst [vmem:[#allocation3 + $0x358] sm:$0xff] %v1252
    %1283 = vst [vmem:[#allocation3 + $0x3a0] sm:$0xff] %v1254
    %1284 = vst [vmem:[#allocation3 + $0x3e8] sm:$0xff] %v1256
    %v1285 = vld [vmem:[#allocation3] sm:$0xff]
    %v1286 = vld [vmem:[#allocation3 + $0x8] sm:$0xff]
    %v1287 = vld [vmem:[#allocation3 + $0x10] sm:$0xff]
    %v1288 = vld [vmem:[#allocation3 + $0x18] sm:$0xff]
    %v1289 = vld [vmem:[#allocation3 + $0x20] sm:$0xff]
    %v1290 = vld [vmem:[#allocation3 + $0x28] sm:$0xff]
    %v1291 = vld [vmem:[#allocation3 + $0x30] sm:$0xff]
    %v1292 = vld [vmem:[#allocation3 + $0x38] sm:$0xff]
    %v1293 = vld [vmem:[#allocation3 + $0x40] sm:$0xff]
    %v1294 = vld [vmem:[#allocation3 + $0x48] sm:$0xff]
    %v1295 = vld [vmem:[#allocation3 + $0x50] sm:$0xff]
    %v1296 = vld [vmem:[#allocation3 + $0x58] sm:$0xff]
    %v1297 = vld [vmem:[#allocation3 + $0x60] sm:$0xff]
    %v1298 = vld [vmem:[#allocation3 + $0x68] sm:$0xff]
    %v1299 = vld [vmem:[#allocation3 + $0x70] sm:$0xff]
    %v1300 = vld [vmem:[#allocation3 + $0x78] sm:$0xff]
    %v1301 = vld [vmem:[#allocation3 + $0x80] sm:$0xff]
    %v1302 = vld [vmem:[#allocation3 + $0x88] sm:$0xff]
    %v1303 = vld [vmem:[#allocation3 + $0x90] sm:$0xff]
    %v1304 = vld [vmem:[#allocation3 + $0x98] sm:$0xff]
    %v1305 = vld [vmem:[#allocation3 + $0xa0] sm:$0xff]
    %v1306 = vld [vmem:[#allocation3 + $0xa8] sm:$0xff]
    %v1307 = vld [vmem:[#allocation3 + $0xb0] sm:$0xff]
    %v1308 = vld [vmem:[#allocation3 + $0xb8] sm:$0xff]
    %v1309 = vld [vmem:[#allocation3 + $0xc0] sm:$0xff]
    %v1310 = vld [vmem:[#allocation3 + $0xc8] sm:$0xff]
    %v1311 = vld [vmem:[#allocation3 + $0xd0] sm:$0xff]
    %v1312 = vld [vmem:[#allocation3 + $0xd8] sm:$0xff]
    %v1313 = vld [vmem:[#allocation3 + $0xe0] sm:$0xff]
    %v1314 = vld [vmem:[#allocation3 + $0xe8] sm:$0xff]
    %v1315 = vld [vmem:[#allocation3 + $0xf0] sm:$0xff]
    %v1316 = vld [vmem:[#allocation3 + $0xf8] sm:$0xff]
    %v1317 = vld [vmem:[#allocation3 + $0x100] sm:$0xff]
    %v1318 = vld [vmem:[#allocation3 + $0x108] sm:$0xff]
    %v1319 = vld [vmem:[#allocation3 + $0x110] sm:$0xff]
    %v1320 = vld [vmem:[#allocation3 + $0x118] sm:$0xff]
    %v1321 = vld [vmem:[#allocation3 + $0x120] sm:$0xff]
    %v1322 = vld [vmem:[#allocation3 + $0x128] sm:$0xff]
    %v1323 = vld [vmem:[#allocation3 + $0x130] sm:$0xff]
    %v1324 = vld [vmem:[#allocation3 + $0x138] sm:$0xff]
    %v1325 = vld [vmem:[#allocation3 + $0x140] sm:$0xff]
    %v1326 = vld [vmem:[#allocation3 + $0x148] sm:$0xff]
    %v1327 = vld [vmem:[#allocation3 + $0x150] sm:$0xff]
    %v1328 = vld [vmem:[#allocation3 + $0x158] sm:$0xff]
    %v1329 = vld [vmem:[#allocation3 + $0x160] sm:$0xff]
    %v1330 = vld [vmem:[#allocation3 + $0x168] sm:$0xff]
    %v1331 = vld [vmem:[#allocation3 + $0x170] sm:$0xff]
    %v1332 = vld [vmem:[#allocation3 + $0x178] sm:$0xff]
    %v1333 = vld [vmem:[#allocation3 + $0x180] sm:$0xff]
    %v1334 = vld [vmem:[#allocation3 + $0x188] sm:$0xff]
    %v1335 = vld [vmem:[#allocation3 + $0x190] sm:$0xff]
    %v1336 = vld [vmem:[#allocation3 + $0x198] sm:$0xff]
    %v1337 = vld [vmem:[#allocation3 + $0x1a0] sm:$0xff]
    %v1338 = vld [vmem:[#allocation3 + $0x1a8] sm:$0xff]
    %v1339 = vld [vmem:[#allocation3 + $0x1b0] sm:$0xff]
    %v1340 = vld [vmem:[#allocation3 + $0x1b8] sm:$0xff]
    %v1341 = vld [vmem:[#allocation3 + $0x1c0] sm:$0xff]
    %v1342 = vld [vmem:[#allocation3 + $0x1c8] sm:$0xff]
    %v1343 = vld [vmem:[#allocation3 + $0x1d0] sm:$0xff]
    %v1344 = vld [vmem:[#allocation3 + $0x1d8] sm:$0xff]
    %v1345 = vld [vmem:[#allocation3 + $0x1e0] sm:$0xff]
    %v1346 = vld [vmem:[#allocation3 + $0x1e8] sm:$0xff]
    %v1347 = vld [vmem:[#allocation3 + $0x1f0] sm:$0xff]
    %v1348 = vld [vmem:[#allocation3 + $0x1f8] sm:$0xff]
    %v1349 = vld [vmem:[#allocation3 + $0x200] sm:$0xff]
    %v1350 = vld [vmem:[#allocation3 + $0x208] sm:$0xff]
    %v1351 = vld [vmem:[#allocation3 + $0x210] sm:$0xff]
    %v1352 = vld [vmem:[#allocation3 + $0x218] sm:$0xff]
    %v1353 = vld [vmem:[#allocation3 + $0x220] sm:$0xff]
    %v1354 = vld [vmem:[#allocation3 + $0x228] sm:$0xff]
    %v1355 = vld [vmem:[#allocation3 + $0x230] sm:$0xff]
    %v1356 = vld [vmem:[#allocation3 + $0x238] sm:$0xff]
    %v1357 = vld [vmem:[#allocation3 + $0x240] sm:$0xff]
    %v1358 = vld [vmem:[#allocation3 + $0x248] sm:$0xff]
    %v1359 = vld [vmem:[#allocation3 + $0x250] sm:$0xff]
    %v1360 = vld [vmem:[#allocation3 + $0x258] sm:$0xff]
    %v1361 = vld [vmem:[#allocation3 + $0x260] sm:$0xff]
    %v1362 = vld [vmem:[#allocation3 + $0x268] sm:$0xff]
    %v1363 = vld [vmem:[#allocation3 + $0x270] sm:$0xff]
    %v1364 = vld [vmem:[#allocation3 + $0x278] sm:$0xff]
    %v1365 = vld [vmem:[#allocation3 + $0x280] sm:$0xff]
    %v1366 = vld [vmem:[#allocation3 + $0x288] sm:$0xff]
    %v1367 = vld [vmem:[#allocation3 + $0x290] sm:$0xff]
    %v1368 = vld [vmem:[#allocation3 + $0x298] sm:$0xff]
    %v1369 = vld [vmem:[#allocation3 + $0x2a0] sm:$0xff]
    %v1370 = vld [vmem:[#allocation3 + $0x2a8] sm:$0xff]
    %v1371 = vld [vmem:[#allocation3 + $0x2b0] sm:$0xff]
    %v1372 = vld [vmem:[#allocation3 + $0x2b8] sm:$0xff]
    %v1373 = vld [vmem:[#allocation3 + $0x2c0] sm:$0xff]
    %v1374 = vld [vmem:[#allocation3 + $0x2c8] sm:$0xff]
    %v1375 = vld [vmem:[#allocation3 + $0x2d0] sm:$0xff]
    %v1376 = vld [vmem:[#allocation3 + $0x2d8] sm:$0xff]
    %v1377 = vld [vmem:[#allocation3 + $0x2e0] sm:$0xff]
    %v1378 = vld [vmem:[#allocation3 + $0x2e8] sm:$0xff]
    %v1379 = vld [vmem:[#allocation3 + $0x2f0] sm:$0xff]
    %v1380 = vld [vmem:[#allocation3 + $0x2f8] sm:$0xff]
    %v1381 = vld [vmem:[#allocation3 + $0x300] sm:$0xff]
    %v1382 = vld [vmem:[#allocation3 + $0x308] sm:$0xff]
    %v1383 = vld [vmem:[#allocation3 + $0x310] sm:$0xff]
    %v1384 = vld [vmem:[#allocation3 + $0x318] sm:$0xff]
    %v1385 = vld [vmem:[#allocation3 + $0x320] sm:$0xff]
    %v1386 = vld [vmem:[#allocation3 + $0x328] sm:$0xff]
    %v1387 = vld [vmem:[#allocation3 + $0x330] sm:$0xff]
    %v1388 = vld [vmem:[#allocation3 + $0x338] sm:$0xff]
    %v1389 = vld [vmem:[#allocation3 + $0x340] sm:$0xff]
    %v1390 = vld [vmem:[#allocation3 + $0x348] sm:$0xff]
    %v1391 = vld [vmem:[#allocation3 + $0x350] sm:$0xff]
    %v1392 = vld [vmem:[#allocation3 + $0x358] sm:$0xff]
    %v1393 = vld [vmem:[#allocation3 + $0x360] sm:$0xff]
    %v1394 = vld [vmem:[#allocation3 + $0x368] sm:$0xff]
    %v1395 = vld [vmem:[#allocation3 + $0x370] sm:$0xff]
    %v1396 = vld [vmem:[#allocation3 + $0x378] sm:$0xff]
    %v1397 = vld [vmem:[#allocation3 + $0x380] sm:$0xff]
    %v1398 = vld [vmem:[#allocation3 + $0x388] sm:$0xff]
    %v1399 = vld [vmem:[#allocation3 + $0x390] sm:$0xff]
    %v1400 = vld [vmem:[#allocation3 + $0x398] sm:$0xff]
    %v1401 = vld [vmem:[#allocation3 + $0x3a0] sm:$0xff]
    %v1402 = vld [vmem:[#allocation3 + $0x3a8] sm:$0xff]
    %v1403 = vld [vmem:[#allocation3 + $0x3b0] sm:$0xff]
    %v1404 = vld [vmem:[#allocation3 + $0x3b8] sm:$0xff]
    %v1405 = vld [vmem:[#allocation3 + $0x3c0] sm:$0xff]
    %v1406 = vld [vmem:[#allocation3 + $0x3c8] sm:$0xff]
    %v1407 = vld [vmem:[#allocation3 + $0x3d0] sm:$0xff]
    %v1408 = vld [vmem:[#allocation3 + $0x3d8] sm:$0xff]
    %v1409 = vld [vmem:[#allocation3 + $0x3e0] sm:$0xff]
    %v1410 = vld [vmem:[#allocation3 + $0x3e8] sm:$0xff]
    %v1411 = vld [vmem:[#allocation7] sm:$0xf]
    %v1412 = vld [vmem:[#allocation7 + $0x4] sm:$0xf]
    %v1413 = vld [vmem:[#allocation7 + $0x8] sm:$0xf]
    %v1414 = vld [vmem:[#allocation7 + $0xc] sm:$0xf]
    %v1415 = vld [vmem:[#allocation7 + $0x10] sm:$0xf]
    %v1416 = vld [vmem:[#allocation7 + $0x14] sm:$0xf]
    %v1417 = vld [vmem:[#allocation7 + $0x18] sm:$0xf]
    %v1418 = vld [vmem:[#allocation7 + $0x1c] sm:$0xf]
    %v1419 = vld [vmem:[#allocation7 + $0x20] sm:$0xf]
    %v1420 = vld [vmem:[#allocation7 + $0x24] sm:$0xf]
    %v1421 = vld [vmem:[#allocation7 + $0x28] sm:$0xf]
    %v1422 = vld [vmem:[#allocation7 + $0x2c] sm:$0xf]
    %v1423 = vld [vmem:[#allocation7 + $0x30] sm:$0xf]
    %v1424 = vld [vmem:[#allocation7 + $0x34] sm:$0xf]
    %v1425 = vld [vmem:[#allocation7 + $0x38] sm:$0xf]
    %v1426 = vld [vmem:[#allocation7 + $0x3c] sm:$0xf]
    %v1427 = vld [vmem:[#allocation7 + $0x40] sm:$0xf]
    %v1428 = vld [vmem:[#allocation7 + $0x44] sm:$0xf]
    %v1429 = vld [vmem:[#allocation7 + $0x48] sm:$0xf]
    %v1430 = vld [vmem:[#allocation7 + $0x4c] sm:$0xf]
    %v1431 = vld [vmem:[#allocation7 + $0x50] sm:$0xf]
    %v1432 = vld [vmem:[#allocation7 + $0x54] sm:$0xf]
    %v1433 = vld [vmem:[#allocation7 + $0x58] sm:$0xf]
    %v1434 = vld [vmem:[#allocation7 + $0x5c] sm:$0xf]
    %v1435 = vld [vmem:[#allocation7 + $0x60] sm:$0xf]
    %v1436 = vld [vmem:[#allocation7 + $0x64] sm:$0xf]
    %v1437 = vld [vmem:[#allocation7 + $0x68] sm:$0xf]
    %v1438 = vld [vmem:[#allocation7 + $0x6c] sm:$0xf]
    %v1439 = vld [vmem:[#allocation7 + $0x70] sm:$0xf]
    %v1440 = vld [vmem:[#allocation7 + $0x74] sm:$0xf]
    %v1441 = vld [vmem:[#allocation7 + $0x78] sm:$0xf]
    %v1442 = vld [vmem:[#allocation7 + $0x7c] sm:$0xf]
    %v1443 = vld [vmem:[#allocation7 + $0x80] sm:$0xf]
    %v1444 = vld [vmem:[#allocation7 + $0x84] sm:$0xf]
    %v1445 = vld [vmem:[#allocation7 + $0x88] sm:$0xf]
    %v1446 = vld [vmem:[#allocation7 + $0x8c] sm:$0xf]
    %v1447 = vld [vmem:[#allocation7 + $0x90] sm:$0xf]
    %v1448 = vld [vmem:[#allocation7 + $0x94] sm:$0xf]
    %v1449 = vld [vmem:[#allocation7 + $0x98] sm:$0xf]
    %v1450 = vld [vmem:[#allocation7 + $0x9c] sm:$0xf]
    %v1451 = vld [vmem:[#allocation7 + $0xa0] sm:$0xf]
    %v1452 = vld [vmem:[#allocation7 + $0xa4] sm:$0xf]
    %v1453 = vld [vmem:[#allocation7 + $0xa8] sm:$0xf]
    %v1454 = vld [vmem:[#allocation7 + $0xac] sm:$0xf]
    %v1455 = vld [vmem:[#allocation7 + $0xb0] sm:$0xf]
    %v1456 = vld [vmem:[#allocation7 + $0xb4] sm:$0xf]
    %v1457 = vld [vmem:[#allocation7 + $0xb8] sm:$0xf]
    %v1458 = vld [vmem:[#allocation7 + $0xbc] sm:$0xf]
    %v1459 = vld [vmem:[#allocation7 + $0xc0] sm:$0xf]
    %v1460 = vld [vmem:[#allocation7 + $0xc4] sm:$0xf]
    %v1461 = vld [vmem:[#allocation7 + $0xc8] sm:$0xf]
    %v1462 = vld [vmem:[#allocation7 + $0xcc] sm:$0xf]
    %v1463 = vld [vmem:[#allocation7 + $0xd0] sm:$0xf]
    %v1464 = vld [vmem:[#allocation7 + $0xd4] sm:$0xf]
    %v1465 = vld [vmem:[#allocation7 + $0xd8] sm:$0xf]
    %v1466 = vld [vmem:[#allocation7 + $0xdc] sm:$0xf]
    %v1467 = vld [vmem:[#allocation7 + $0xe0] sm:$0xf]
    %v1468 = vld [vmem:[#allocation7 + $0xe4] sm:$0xf]
    %v1469 = vld [vmem:[#allocation7 + $0xe8] sm:$0xf]
    %v1470 = vld [vmem:[#allocation7 + $0xec] sm:$0xf]
    %v1471 = vld [vmem:[#allocation7 + $0xf0] sm:$0xf]
    %v1472 = vld [vmem:[#allocation7 + $0xf4] sm:$0xf]
    %v1473 = vld [vmem:[#allocation7 + $0xf8] sm:$0xf]
    %v1474 = vld [vmem:[#allocation7 + $0xfc] sm:$0xf]
    %v1475 = vld [vmem:[#allocation7 + $0x100] sm:$0xf]
    %v1476 = vld [vmem:[#allocation7 + $0x104] sm:$0xf]
    %v1477 = vld [vmem:[#allocation7 + $0x108] sm:$0xf]
    %v1478 = vld [vmem:[#allocation7 + $0x10c] sm:$0xf]
    %v1479 = vld [vmem:[#allocation7 + $0x110] sm:$0xf]
    %v1480 = vld [vmem:[#allocation7 + $0x114] sm:$0xf]
    %v1481 = vld [vmem:[#allocation7 + $0x118] sm:$0xf]
    %v1482 = vld [vmem:[#allocation7 + $0x11c] sm:$0xf]
    %v1483 = vld [vmem:[#allocation7 + $0x120] sm:$0xf]
    %v1484 = vld [vmem:[#allocation7 + $0x124] sm:$0xf]
    %v1485 = vld [vmem:[#allocation7 + $0x128] sm:$0xf]
    %v1486 = vld [vmem:[#allocation7 + $0x12c] sm:$0xf]
    %v1487 = vld [vmem:[#allocation7 + $0x130] sm:$0xf]
    %v1488 = vld [vmem:[#allocation7 + $0x134] sm:$0xf]
    %v1489 = vld [vmem:[#allocation7 + $0x138] sm:$0xf]
    %v1490 = vld [vmem:[#allocation7 + $0x13c] sm:$0xf]
    %v1491 = vld [vmem:[#allocation7 + $0x140] sm:$0xf]
    %v1492 = vld [vmem:[#allocation7 + $0x144] sm:$0xf]
    %v1493 = vld [vmem:[#allocation7 + $0x148] sm:$0xf]
    %v1494 = vld [vmem:[#allocation7 + $0x14c] sm:$0xf]
    %v1495 = vld [vmem:[#allocation7 + $0x150] sm:$0xf]
    %v1496 = vld [vmem:[#allocation7 + $0x154] sm:$0xf]
    %v1497 = vld [vmem:[#allocation7 + $0x158] sm:$0xf]
    %v1498 = vld [vmem:[#allocation7 + $0x15c] sm:$0xf]
    %v1499 = vld [vmem:[#allocation7 + $0x160] sm:$0xf]
    %v1500 = vld [vmem:[#allocation7 + $0x164] sm:$0xf]
    %v1501 = vld [vmem:[#allocation7 + $0x168] sm:$0xf]
    %v1502 = vld [vmem:[#allocation7 + $0x16c] sm:$0xf]
    %v1503 = vld [vmem:[#allocation7 + $0x170] sm:$0xf]
    %v1504 = vld [vmem:[#allocation7 + $0x174] sm:$0xf]
    %v1505 = vld [vmem:[#allocation7 + $0x178] sm:$0xf]
    %v1506 = vld [vmem:[#allocation7 + $0x17c] sm:$0xf]
    %v1507 = vld [vmem:[#allocation7 + $0x180] sm:$0xf]
    %v1508 = vld [vmem:[#allocation7 + $0x184] sm:$0xf]
    %v1509 = vld [vmem:[#allocation7 + $0x188] sm:$0xf]
    %v1510 = vld [vmem:[#allocation7 + $0x18c] sm:$0xf]
    %v1511 = vld [vmem:[#allocation7 + $0x190] sm:$0xf]
    %v1512 = vld [vmem:[#allocation7 + $0x194] sm:$0xf]
    %v1513 = vld [vmem:[#allocation7 + $0x198] sm:$0xf]
    %v1514 = vld [vmem:[#allocation7 + $0x19c] sm:$0xf]
    %v1515 = vld [vmem:[#allocation7 + $0x1a0] sm:$0xf]
    %v1516 = vld [vmem:[#allocation7 + $0x1a4] sm:$0xf]
    %v1517 = vld [vmem:[#allocation7 + $0x1a8] sm:$0xf]
    %v1518 = vld [vmem:[#allocation7 + $0x1ac] sm:$0xf]
    %v1519 = vld [vmem:[#allocation7 + $0x1b0] sm:$0xf]
    %v1520 = vld [vmem:[#allocation7 + $0x1b4] sm:$0xf]
    %v1521 = vld [vmem:[#allocation7 + $0x1b8] sm:$0xf]
    %v1522 = vld [vmem:[#allocation7 + $0x1bc] sm:$0xf]
    %v1523 = vld [vmem:[#allocation7 + $0x1c0] sm:$0xf]
    %v1524 = vld [vmem:[#allocation7 + $0x1c4] sm:$0xf]
    %v1525 = vld [vmem:[#allocation7 + $0x1c8] sm:$0xf]
    %v1526 = vld [vmem:[#allocation7 + $0x1cc] sm:$0xf]
    %v1527 = vld [vmem:[#allocation7 + $0x1d0] sm:$0xf]
    %v1528 = vld [vmem:[#allocation7 + $0x1d4] sm:$0xf]
    %v1529 = vld [vmem:[#allocation7 + $0x1d8] sm:$0xf]
    %v1530 = vld [vmem:[#allocation7 + $0x1dc] sm:$0xf]
    %v1531 = vld [vmem:[#allocation7 + $0x1e0] sm:$0xf]
    %v1532 = vld [vmem:[#allocation7 + $0x1e4] sm:$0xf]
    %v1533 = vld [vmem:[#allocation7 + $0x1e8] sm:$0xf]
    %v1534 = vld [vmem:[#allocation7 + $0x1ec] sm:$0xf]
    %v1535 = vld [vmem:[#allocation7 + $0x1f0] sm:$0xf]
    %v1536 = vld [vmem:[#allocation7 + $0x1f4] sm:$0xf]
    %v1537 = vld [vmem:[#allocation7 + $0x1f8] sm:$0xf]
    %v1538 = vld [vmem:[#allocation7 + $0x1fc] sm:$0xf]
    %v1539 = vld [vmem:[#allocation7 + $0x200] sm:$0xf]
    %v1540 = vld [vmem:[#allocation7 + $0x204] sm:$0xf]
    %v1541 = vld [vmem:[#allocation7 + $0x208] sm:$0xf]
    %v1542 = vld [vmem:[#allocation7 + $0x20c] sm:$0xf]
    %v1543 = vld [vmem:[#allocation7 + $0x210] sm:$0xf]
    %v1544 = vld [vmem:[#allocation7 + $0x214] sm:$0xf]
    %v1545 = vld [vmem:[#allocation7 + $0x218] sm:$0xf]
    %v1546 = vld [vmem:[#allocation7 + $0x21c] sm:$0xf]
    %v1547 = vld [vmem:[#allocation7 + $0x220] sm:$0xf]
    %v1548 = vld [vmem:[#allocation7 + $0x224] sm:$0xf]
    %v1549 = vld [vmem:[#allocation7 + $0x228] sm:$0xf]
    %v1550 = vld [vmem:[#allocation7 + $0x22c] sm:$0xf]
    %v1551 = vld [vmem:[#allocation7 + $0x230] sm:$0xf]
    %v1552 = vld [vmem:[#allocation7 + $0x234] sm:$0xf]
    %v1553 = vld [vmem:[#allocation7 + $0x238] sm:$0xf]
    %v1554 = vld [vmem:[#allocation7 + $0x23c] sm:$0xf]
    %v1555 = vld [vmem:[%s3] sm:$0x1]
    %v1557 = vlaneseq
    %v1558 = vshrl.u32 %v1557, 7
    %v1559 = vsub.s32 0, %v1558
    %v1560 = vrot.slane %v1555, %v1559
    %v1706 = vunpack.c.l.b16 %v1411
    %v1707 = vunpack.c.l.b16 %v1412
    %v1708 = vunpack.c.l.b16 %v1413
    %v1709 = vunpack.c.l.b16 %v1414
    %v1710 = vunpack.c.l.b16 %v1415
    %v1711 = vunpack.c.l.b16 %v1416
    %v1712 = vunpack.c.l.b16 %v1417
    %v1713 = vunpack.c.l.b16 %v1418
    %v1714 = vunpack.c.l.b16 %v1419
    %v1715 = vunpack.c.l.b16 %v1420
    %v1716 = vunpack.c.l.b16 %v1421
    %v1717 = vunpack.c.l.b16 %v1422
    %v1718 = vunpack.c.l.b16 %v1423
    %v1719 = vunpack.c.l.b16 %v1424
    %v1720 = vunpack.c.l.b16 %v1425
    %v1721 = vunpack.c.l.b16 %v1426
    %v1722 = vunpack.c.l.b16 %v1427
    %v1723 = vunpack.c.l.b16 %v1428
    %v1724 = vunpack.c.l.b16 %v1429
    %v1725 = vunpack.c.l.b16 %v1430
    %v1726 = vunpack.c.l.b16 %v1431
    %v1727 = vunpack.c.l.b16 %v1432
    %v1728 = vunpack.c.l.b16 %v1433
    %v1729 = vunpack.c.l.b16 %v1434
    %v1730 = vunpack.c.l.b16 %v1435
    %v1731 = vunpack.c.l.b16 %v1436
    %v1732 = vunpack.c.l.b16 %v1437
    %v1733 = vunpack.c.l.b16 %v1438
    %v1734 = vunpack.c.l.b16 %v1439
    %v1735 = vunpack.c.l.b16 %v1440
    %v1736 = vunpack.c.l.b16 %v1441
    %v1737 = vunpack.c.l.b16 %v1442
    %v1738 = vunpack.c.l.b16 %v1443
    %v1739 = vunpack.c.l.b16 %v1444
    %v1740 = vunpack.c.l.b16 %v1445
    %v1741 = vunpack.c.l.b16 %v1446
    %v1742 = vunpack.c.l.b16 %v1447
    %v1743 = vunpack.c.l.b16 %v1448
    %v1744 = vunpack.c.l.b16 %v1449
    %v1745 = vunpack.c.l.b16 %v1450
    %v1746 = vunpack.c.l.b16 %v1451
    %v1747 = vunpack.c.l.b16 %v1452
    %v1748 = vunpack.c.l.b16 %v1453
    %v1749 = vunpack.c.l.b16 %v1454
    %v1750 = vunpack.c.l.b16 %v1455
    %v1751 = vunpack.c.l.b16 %v1456
    %v1752 = vunpack.c.l.b16 %v1457
    %v1753 = vunpack.c.l.b16 %v1458
    %v1754 = vunpack.c.l.b16 %v1459
    %v1755 = vunpack.c.l.b16 %v1460
    %v1756 = vunpack.c.l.b16 %v1461
    %v1757 = vunpack.c.l.b16 %v1462
    %v1758 = vunpack.c.l.b16 %v1463
    %v1759 = vunpack.c.l.b16 %v1464
    %v1760 = vunpack.c.l.b16 %v1465
    %v1761 = vunpack.c.l.b16 %v1466
    %v1762 = vunpack.c.l.b16 %v1467
    %v1763 = vunpack.c.l.b16 %v1468
    %v1764 = vunpack.c.l.b16 %v1469
    %v1765 = vunpack.c.l.b16 %v1470
    %v1766 = vunpack.c.l.b16 %v1471
    %v1767 = vunpack.c.l.b16 %v1472
    %v1768 = vunpack.c.l.b16 %v1473
    %v1769 = vunpack.c.l.b16 %v1474
    %v1770 = vunpack.c.l.b16 %v1475
    %v1771 = vunpack.c.l.b16 %v1476
    %v1772 = vunpack.c.l.b16 %v1477
    %v1773 = vunpack.c.l.b16 %v1478
    %v1774 = vunpack.c.l.b16 %v1479
    %v1775 = vunpack.c.l.b16 %v1480
    %v1776 = vunpack.c.l.b16 %v1481
    %v1777 = vunpack.c.l.b16 %v1482
    %v1778 = vunpack.c.l.b16 %v1483
    %v1779 = vunpack.c.l.b16 %v1484
    %v1780 = vunpack.c.l.b16 %v1485
    %v1781 = vunpack.c.l.b16 %v1486
    %v1782 = vunpack.c.l.b16 %v1487
    %v1783 = vunpack.c.l.b16 %v1488
    %v1784 = vunpack.c.l.b16 %v1489
    %v1785 = vunpack.c.l.b16 %v1490
    %v1786 = vunpack.c.l.b16 %v1491
    %v1787 = vunpack.c.l.b16 %v1492
    %v1788 = vunpack.c.l.b16 %v1493
    %v1789 = vunpack.c.l.b16 %v1494
    %v1790 = vunpack.c.l.b16 %v1495
    %v1791 = vunpack.c.l.b16 %v1496
    %v1792 = vunpack.c.l.b16 %v1497
    %v1793 = vunpack.c.l.b16 %v1498
    %v1794 = vunpack.c.l.b16 %v1499
    %v1795 = vunpack.c.l.b16 %v1500
    %v1796 = vunpack.c.l.b16 %v1501
    %v1797 = vunpack.c.l.b16 %v1502
    %v1798 = vunpack.c.l.b16 %v1503
    %v1799 = vunpack.c.l.b16 %v1504
    %v1800 = vunpack.c.l.b16 %v1505
    %v1801 = vunpack.c.l.b16 %v1506
    %v1802 = vunpack.c.l.b16 %v1507
    %v1803 = vunpack.c.l.b16 %v1508
    %v1804 = vunpack.c.l.b16 %v1509
    %v1805 = vunpack.c.l.b16 %v1510
    %v1806 = vunpack.c.l.b16 %v1511
    %v1807 = vunpack.c.l.b16 %v1512
    %v1808 = vunpack.c.l.b16 %v1513
    %v1809 = vunpack.c.l.b16 %v1514
    %v1810 = vunpack.c.l.b16 %v1515
    %v1811 = vunpack.c.l.b16 %v1516
    %v1812 = vunpack.c.l.b16 %v1517
    %v1813 = vunpack.c.l.b16 %v1518
    %v1814 = vunpack.c.l.b16 %v1519
    %v1815 = vunpack.c.l.b16 %v1520
    %v1816 = vunpack.c.l.b16 %v1521
    %v1817 = vunpack.c.l.b16 %v1522
    %v1818 = vunpack.c.l.b16 %v1523
    %v1819 = vunpack.c.l.b16 %v1524
    %v1820 = vunpack.c.l.b16 %v1525
    %v1821 = vunpack.c.l.b16 %v1526
    %v1822 = vunpack.c.l.b16 %v1527
    %v1823 = vunpack.c.l.b16 %v1528
    %v1824 = vunpack.c.l.b16 %v1529
    %v1825 = vunpack.c.l.b16 %v1530
    %v1826 = vunpack.c.l.b16 %v1531
    %v1827 = vunpack.c.l.b16 %v1532
    %v1828 = vunpack.c.l.b16 %v1533
    %v1829 = vunpack.c.l.b16 %v1534
    %v1830 = vunpack.c.l.b16 %v1535
    %v1831 = vunpack.c.l.b16 %v1536
    %v1832 = vunpack.c.l.b16 %v1537
    %v1833 = vunpack.c.l.b16 %v1538
    %v1834 = vunpack.c.l.b16 %v1539
    %v1835 = vunpack.c.l.b16 %v1540
    %v1836 = vunpack.c.l.b16 %v1541
    %v1837 = vunpack.c.l.b16 %v1542
    %v1838 = vunpack.c.l.b16 %v1543
    %v1839 = vunpack.c.l.b16 %v1544
    %v1840 = vunpack.c.l.b16 %v1545
    %v1841 = vunpack.c.l.b16 %v1546
    %v1842 = vunpack.c.l.b16 %v1547
    %v1843 = vunpack.c.l.b16 %v1548
    %v1844 = vunpack.c.l.b16 %v1549
    %v1845 = vunpack.c.l.b16 %v1550
    %v1846 = vunpack.c.l.b16 %v1551
    %v1847 = vunpack.c.l.b16 %v1552
    %v1848 = vunpack.c.l.b16 %v1553
    %v1849 = vunpack.c.l.b16 %v1554
    %v1850 = vpack.c.b16 %v1707, %v1706
    %v1851 = vpack.c.b16 %v1709, %v1708
    %v1852 = vpack.c.b16 %v1711, %v1710
    %v1853 = vpack.c.b16 %v1713, %v1712
    %v1854 = vpack.c.b16 %v1715, %v1714
    %v1855 = vpack.c.b16 %v1717, %v1716
    %v1856 = vpack.c.b16 %v1719, %v1718
    %v1857 = vpack.c.b16 %v1721, %v1720
    %v1858 = vpack.c.b16 %v1723, %v1722
    %v1859 = vpack.c.b16 %v1725, %v1724
    %v1860 = vpack.c.b16 %v1727, %v1726
    %v1861 = vpack.c.b16 %v1729, %v1728
    %v1862 = vpack.c.b16 %v1731, %v1730
    %v1863 = vpack.c.b16 %v1733, %v1732
    %v1864 = vpack.c.b16 %v1735, %v1734
    %v1865 = vpack.c.b16 %v1737, %v1736
    %v1866 = vpack.c.b16 %v1739, %v1738
    %v1867 = vpack.c.b16 %v1741, %v1740
    %v1868 = vpack.c.b16 %v1743, %v1742
    %v1869 = vpack.c.b16 %v1745, %v1744
    %v1870 = vpack.c.b16 %v1747, %v1746
    %v1871 = vpack.c.b16 %v1749, %v1748
    %v1872 = vpack.c.b16 %v1751, %v1750
    %v1873 = vpack.c.b16 %v1753, %v1752
    %v1874 = vpack.c.b16 %v1755, %v1754
    %v1875 = vpack.c.b16 %v1757, %v1756
    %v1876 = vpack.c.b16 %v1759, %v1758
    %v1877 = vpack.c.b16 %v1761, %v1760
    %v1878 = vpack.c.b16 %v1763, %v1762
    %v1879 = vpack.c.b16 %v1765, %v1764
    %v1880 = vpack.c.b16 %v1767, %v1766
    %v1881 = vpack.c.b16 %v1769, %v1768
    %v1882 = vpack.c.b16 %v1771, %v1770
    %v1883 = vpack.c.b16 %v1773, %v1772
    %v1884 = vpack.c.b16 %v1775, %v1774
    %v1885 = vpack.c.b16 %v1777, %v1776
    %v1886 = vpack.c.b16 %v1779, %v1778
    %v1887 = vpack.c.b16 %v1781, %v1780
    %v1888 = vpack.c.b16 %v1783, %v1782
    %v1889 = vpack.c.b16 %v1785, %v1784
    %v1890 = vpack.c.b16 %v1787, %v1786
    %v1891 = vpack.c.b16 %v1789, %v1788
    %v1892 = vpack.c.b16 %v1791, %v1790
    %v1893 = vpack.c.b16 %v1793, %v1792
    %v1894 = vpack.c.b16 %v1795, %v1794
    %v1895 = vpack.c.b16 %v1797, %v1796
    %v1896 = vpack.c.b16 %v1799, %v1798
    %v1897 = vpack.c.b16 %v1801, %v1800
    %v1898 = vpack.c.b16 %v1803, %v1802
    %v1899 = vpack.c.b16 %v1805, %v1804
    %v1900 = vpack.c.b16 %v1807, %v1806
    %v1901 = vpack.c.b16 %v1809, %v1808
    %v1902 = vpack.c.b16 %v1811, %v1810
    %v1903 = vpack.c.b16 %v1813, %v1812
    %v1904 = vpack.c.b16 %v1815, %v1814
    %v1905 = vpack.c.b16 %v1817, %v1816
    %v1906 = vpack.c.b16 %v1819, %v1818
    %v1907 = vpack.c.b16 %v1821, %v1820
    %v1908 = vpack.c.b16 %v1823, %v1822
    %v1909 = vpack.c.b16 %v1825, %v1824
    %v1910 = vpack.c.b16 %v1827, %v1826
    %v1911 = vpack.c.b16 %v1829, %v1828
    %v1912 = vpack.c.b16 %v1831, %v1830
    %v1913 = vpack.c.b16 %v1833, %v1832
    %v1914 = vpack.c.b16 %v1835, %v1834
    %v1915 = vpack.c.b16 %v1837, %v1836
    %v1916 = vpack.c.b16 %v1839, %v1838
    %v1917 = vpack.c.b16 %v1841, %v1840
    %v1918 = vpack.c.b16 %v1843, %v1842
    %v1919 = vpack.c.b16 %v1845, %v1844
    %v1920 = vpack.c.b16 %v1847, %v1846
    %v1921 = vpack.c.b16 %v1849, %v1848
    %1994 = vmatprep.subr.bf16.mxu0 0
    %1995 = vmatpush1.bf16.msra.mxu0 %v1850
    %1996 = vmatprep.subr.bf16.mxu0 0
    %1997 = vmatpush1.bf16.msra.mxu0 %v1851
    %1998 = vmatprep.subr.bf16.mxu0 0
    %1999 = vmatpush1.bf16.msra.mxu0 %v1852
    %2000 = vmatprep.subr.bf16.mxu0 0
    %2001 = vmatpush1.bf16.msra.mxu0 %v1853
    %2002 = vmatprep.subr.bf16.mxu0 0
    %2003 = vmatpush1.bf16.msra.mxu0 %v1854
    %2004 = vmatprep.subr.bf16.mxu0 0
    %2005 = vmatpush1.bf16.msra.mxu0 %v1855
    %2006 = vmatprep.subr.bf16.mxu0 0
    %2007 = vmatpush1.bf16.msra.mxu0 %v1856
    %2008 = vmatprep.subr.bf16.mxu0 0
    %2009 = vmatpush1.bf16.msra.mxu0 %v1857
    %2010 = vmatprep.subr.bf16.mxu0 0
    %2011 = vmatpush1.bf16.msra.mxu0 %v1858
    %2012 = vmatprep.subr.bf16.mxu0 0
    %2013 = vmatpush1.bf16.msra.mxu0 %v1859
    %2014 = vmatprep.subr.bf16.mxu0 0
    %2015 = vmatpush1.bf16.msra.mxu0 %v1860
    %2016 = vmatprep.subr.bf16.mxu0 0
    %2017 = vmatpush1.bf16.msra.mxu0 %v1861
    %2018 = vmatprep.subr.bf16.mxu0 0
    %2019 = vmatpush1.bf16.msra.mxu0 %v1862
    %2020 = vmatprep.subr.bf16.mxu0 0
    %2021 = vmatpush1.bf16.msra.mxu0 %v1863
    %2022 = vmatprep.subr.bf16.mxu0 0
    %2023 = vmatpush1.bf16.msra.mxu0 %v1864
    %2024 = vmatprep.subr.bf16.mxu0 0
    %2025 = vmatpush1.bf16.msra.mxu0 %v1865
    %2026 = vmatprep.mubr.bf16.mxu0 %v1286
    %2027 = vmatmul.mubr.bf16.gmra.mrb[0].mxu0 %v1285
    %v2028 = vpop.f32.mrb[0].mxu0
    %v2029 = vadd.f32 %v1560, %v2028
    %v2030 = vpop.f32.mrb[0].mxu0
    %v2031 = vpop.f32.mrb[0].mxu0
    %v2032 = vadd.f32 %v1560, %v2031
    %v2033 = vpop.f32.mrb[0].mxu0
    %2034 = vmatprep.mubr.bf16.mxu0 %v1295
    %2035 = vmatmul.mubr.bf16.gmra.mrb[0].mxu0 %v1294
    %v2036 = vpop.f32.mrb[0].mxu0
    %v2037 = vadd.f32 %v1560, %v2036
    %v2038 = vpop.f32.mrb[0].mxu0
    %v2039 = vpop.f32.mrb[0].mxu0
    %v2040 = vadd.f32 %v1560, %v2039
    %v2041 = vpop.f32.mrb[0].mxu0
    %2042 = vmatprep.mubr.bf16.mxu0 %v1304
    %2043 = vmatmul.mubr.bf16.gmra.mrb[0].mxu0 %v1303
    %v2044 = vpop.f32.mrb[0].mxu0
    %v2045 = vadd.f32 %v1560, %v2044
    %v2046 = vpop.f32.mrb[0].mxu0
    %v2047 = vpop.f32.mrb[0].mxu0
    %v2048 = vadd.f32 %v1560, %v2047
    %v2049 = vpop.f32.mrb[0].mxu0
    %2050 = vmatprep.mubr.bf16.mxu0 %v1313
    %2051 = vmatmul.mubr.bf16.gmra.mrb[0].mxu0 %v1312
    %v2052 = vpop.f32.mrb[0].mxu0
    %v2053 = vadd.f32 %v1560, %v2052
    %v2054 = vpop.f32.mrb[0].mxu0
    %v2055 = vpop.f32.mrb[0].mxu0
    %v2056 = vadd.f32 %v1560, %v2055
    %v2057 = vpop.f32.mrb[0].mxu0
    %2058 = vmatprep.mubr.bf16.mxu0 %v1322
    %2059 = vmatmul.mubr.bf16.gmra.mrb[0].mxu0 %v1321
    %v2060 = vpop.f32.mrb[0].mxu0
    %v2061 = vadd.f32 %v1560, %v2060
    %v2062 = vpop.f32.mrb[0].mxu0
    %v2063 = vpop.f32.mrb[0].mxu0
    %v2064 = vadd.f32 %v1560, %v2063
    %v2065 = vpop.f32.mrb[0].mxu0
    %2066 = vmatprep.mubr.bf16.mxu0 %v1331
    %2067 = vmatmul.mubr.bf16.gmra.mrb[0].mxu0 %v1330
    %v2068 = vpop.f32.mrb[0].mxu0
    %v2069 = vadd.f32 %v1560, %v2068
    %v2070 = vpop.f32.mrb[0].mxu0
    %v2071 = vpop.f32.mrb[0].mxu0
    %v2072 = vadd.f32 %v1560, %v2071
    %v2073 = vpop.f32.mrb[0].mxu0
    %2074 = vmatprep.mubr.bf16.mxu0 %v1340
    %2075 = vmatmul.mubr.bf16.gmra.mrb[0].mxu0 %v1339
    %v2076 = vpop.f32.mrb[0].mxu0
    %v2077 = vadd.f32 %v1560, %v2076
    %v2078 = vpop.f32.mrb[0].mxu0
    %v2079 = vpop.f32.mrb[0].mxu0
    %v2080 = vadd.f32 %v1560, %v2079
    %v2081 = vpop.f32.mrb[0].mxu0
    %2082 = vmatprep.mubr.bf16.mxu0 %v1349
    %2083 = vmatmul.mubr.bf16.gmra.mrb[0].mxu0 %v1348
    %v2084 = vpop.f32.mrb[0].mxu0
    %v2085 = vadd.f32 %v1560, %v2084
    %v2086 = vpop.f32.mrb[0].mxu0
    %v2087 = vpop.f32.mrb[0].mxu0
    %v2088 = vadd.f32 %v1560, %v2087
    %v2089 = vpop.f32.mrb[0].mxu0
    %2090 = vmatprep.mubr.bf16.mxu0 %v1358
    %2091 = vmatmul.mubr.bf16.gmra.mrb[0].mxu0 %v1357
    %v2092 = vpop.f32.mrb[0].mxu0
    %v2093 = vadd.f32 %v1560, %v2092
    %v2094 = vpop.f32.mrb[0].mxu0
    %v2095 = vpop.f32.mrb[0].mxu0
    %v2096 = vadd.f32 %v1560, %v2095
    %v2097 = vpop.f32.mrb[0].mxu0
    %2098 = vmatprep.mubr.bf16.mxu0 %v1367
    %2099 = vmatmul.mubr.bf16.gmra.mrb[0].mxu0 %v1366
    %v2100 = vpop.f32.mrb[0].mxu0
    %v2101 = vadd.f32 %v1560, %v2100
    %v2102 = vpop.f32.mrb[0].mxu0
    %v2103 = vpop.f32.mrb[0].mxu0
    %v2104 = vadd.f32 %v1560, %v2103
    %v2105 = vpop.f32.mrb[0].mxu0
    %2106 = vmatprep.mubr.bf16.mxu0 %v1376
    %2107 = vmatmul.mubr.bf16.gmra.mrb[0].mxu0 %v1375
    %v2108 = vpop.f32.mrb[0].mxu0
    %v2109 = vadd.f32 %v1560, %v2108
    %v2110 = vpop.f32.mrb[0].mxu0
    %v2111 = vpop.f32.mrb[0].mxu0
    %v2112 = vadd.f32 %v1560, %v2111
    %v2113 = vpop.f32.mrb[0].mxu0
    %2114 = vmatprep.mubr.bf16.mxu0 %v1385
    %2115 = vmatmul.mubr.bf16.gmra.mrb[0].mxu0 %v1384
    %v2116 = vpop.f32.mrb[0].mxu0
    %v2117 = vadd.f32 %v1560, %v2116
    %v2118 = vpop.f32.mrb[0].mxu0
    %v2119 = vpop.f32.mrb[0].mxu0
    %v2120 = vadd.f32 %v1560, %v2119
    %v2121 = vpop.f32.mrb[0].mxu0
    %2122 = vmatprep.mubr.bf16.mxu0 %v1394
    %2123 = vmatmul.mubr.bf16.gmra.mrb[0].mxu0 %v1393
    %v2124 = vpop.f32.mrb[0].mxu0
    %v2125 = vadd.f32 %v1560, %v2124
    %v2126 = vpop.f32.mrb[0].mxu0
    %v2127 = vpop.f32.mrb[0].mxu0
    %v2128 = vadd.f32 %v1560, %v2127
    %v2129 = vpop.f32.mrb[0].mxu0
    %2130 = vmatprep.mubr.bf16.mxu0 %v1403
    %2131 = vmatmul.mubr.bf16.gmra.mrb[0].mxu0 %v1402
    %v2132 = vpop.f32.mrb[0].mxu0
    %v2133 = vadd.f32 %v1560, %v2132
    %v2134 = vpop.f32.mrb[0].mxu0
    %v2135 = vpop.f32.mrb[0].mxu0
    %v2136 = vadd.f32 %v1560, %v2135
    %v2137 = vpop.f32.mrb[0].mxu0
    %2138 = vdwg.mxu0
    %2139 = vmatprep.subr.bf16.mxu0 0
    %2140 = vmatpush1.bf16.msra.mxu0 %v1866
    %2141 = vmatprep.subr.bf16.mxu0 0
    %2142 = vmatpush1.bf16.msra.mxu0 %v1867
    %2143 = vmatprep.subr.bf16.mxu0 0
    %2144 = vmatpush1.bf16.msra.mxu0 %v1868
    %2145 = vmatprep.subr.bf16.mxu0 0
    %2146 = vmatpush1.bf16.msra.mxu0 %v1869
    %2147 = vmatprep.subr.bf16.mxu0 0
    %2148 = vmatpush1.bf16.msra.mxu0 %v1870
    %2149 = vmatprep.subr.bf16.mxu0 0
    %2150 = vmatpush1.bf16.msra.mxu0 %v1871
    %2151 = vmatprep.subr.bf16.mxu0 0
    %2152 = vmatpush1.bf16.msra.mxu0 %v1872
    %2153 = vmatprep.subr.bf16.mxu0 0
    %2154 = vmatpush1.bf16.msra.mxu0 %v1873
    %2155 = vmatprep.subr.bf16.mxu0 0
    %2156 = vmatpush1.bf16.msra.mxu0 %v1874
    %2157 = vmatprep.subr.bf16.mxu0 0
    %2158 = vmatpush1.bf16.msra.mxu0 %v1875
    %2159 = vmatprep.subr.bf16.mxu0 0
    %2160 = vmatpush1.bf16.msra.mxu0 %v1876
    %2161 = vmatprep.subr.bf16.mxu0 0
    %2162 = vmatpush1.bf16.msra.mxu0 %v1877
    %2163 = vmatprep.subr.bf16.mxu0 0
    %2164 = vmatpush1.bf16.msra.mxu0 %v1878
    %2165 = vmatprep.subr.bf16.mxu0 0
    %2166 = vmatpush1.bf16.msra.mxu0 %v1879
    %2167 = vmatprep.subr.bf16.mxu0 0
    %2168 = vmatpush1.bf16.msra.mxu0 %v1880
    %2169 = vmatprep.subr.bf16.mxu0 0
    %2170 = vmatpush1.bf16.msra.mxu0 %v1881
    %2171 = vmatprep.mubr.bf16.mxu0 %v1288
    %2172 = vmatmul.mubr.bf16.gmra.mrb[0].mxu0 %v1287
    %v2173 = vpop.f32.mrb[0].mxu0
    %v2174 = vadd.f32 %v2029, %v2173
    %v2175 = vpop.f32.mrb[0].mxu0
    %v2176 = vpop.f32.mrb[0].mxu0
    %v2177 = vadd.f32 %v2032, %v2176
    %v2178 = vpop.f32.mrb[0].mxu0
    %2179 = vmatprep.mubr.bf16.mxu0 %v1297
    %2180 = vmatmul.mubr.bf16.gmra.mrb[0].mxu0 %v1296
    %v2181 = vpop.f32.mrb[0].mxu0
    %v2182 = vadd.f32 %v2037, %v2181
    %v2183 = vpop.f32.mrb[0].mxu0
    %v2184 = vpop.f32.mrb[0].mxu0
    %v2185 = vadd.f32 %v2040, %v2184
    %v2186 = vpop.f32.mrb[0].mxu0
    %2187 = vmatprep.mubr.bf16.mxu0 %v1306
    %2188 = vmatmul.mubr.bf16.gmra.mrb[0].mxu0 %v1305
    %v2189 = vpop.f32.mrb[0].mxu0
    %v2190 = vadd.f32 %v2045, %v2189
    %v2191 = vpop.f32.mrb[0].mxu0
    %v2192 = vpop.f32.mrb[0].mxu0
    %v2193 = vadd.f32 %v2048, %v2192
    %v2194 = vpop.f32.mrb[0].mxu0
    %2195 = vmatprep.mubr.bf16.mxu0 %v1315
    %2196 = vmatmul.mubr.bf16.gmra.mrb[0].mxu0 %v1314
    %v2197 = vpop.f32.mrb[0].mxu0
    %v2198 = vadd.f32 %v2053, %v2197
    %v2199 = vpop.f32.mrb[0].mxu0
    %v2200 = vpop.f32.mrb[0].mxu0
    %v2201 = vadd.f32 %v2056, %v2200
    %v2202 = vpop.f32.mrb[0].mxu0
    %2203 = vmatprep.mubr.bf16.mxu0 %v1324
    %2204 = vmatmul.mubr.bf16.gmra.mrb[0].mxu0 %v1323
    %v2205 = vpop.f32.mrb[0].mxu0
    %v2206 = vadd.f32 %v2061, %v2205
    %v2207 = vpop.f32.mrb[0].mxu0
    %v2208 = vpop.f32.mrb[0].mxu0
    %v2209 = vadd.f32 %v2064, %v2208
    %v2210 = vpop.f32.mrb[0].mxu0
    %2211 = vmatprep.mubr.bf16.mxu0 %v1333
    %2212 = vmatmul.mubr.bf16.gmra.mrb[0].mxu0 %v1332
    %v2213 = vpop.f32.mrb[0].mxu0
    %v2214 = vadd.f32 %v2069, %v2213
    %v2215 = vpop.f32.mrb[0].mxu0
    %v2216 = vpop.f32.mrb[0].mxu0
    %v2217 = vadd.f32 %v2072, %v2216
    %v2218 = vpop.f32.mrb[0].mxu0
    %2219 = vmatprep.mubr.bf16.mxu0 %v1342
    %2220 = vmatmul.mubr.bf16.gmra.mrb[0].mxu0 %v1341
    %v2221 = vpop.f32.mrb[0].mxu0
    %v2222 = vadd.f32 %v2077, %v2221
    %v2223 = vpop.f32.mrb[0].mxu0
    %v2224 = vpop.f32.mrb[0].mxu0
    %v2225 = vadd.f32 %v2080, %v2224
    %v2226 = vpop.f32.mrb[0].mxu0
    %2227 = vmatprep.mubr.bf16.mxu0 %v1351
    %2228 = vmatmul.mubr.bf16.gmra.mrb[0].mxu0 %v1350
    %v2229 = vpop.f32.mrb[0].mxu0
    %v2230 = vadd.f32 %v2085, %v2229
    %v2231 = vpop.f32.mrb[0].mxu0
    %v2232 = vpop.f32.mrb[0].mxu0
    %v2233 = vadd.f32 %v2088, %v2232
    %v2234 = vpop.f32.mrb[0].mxu0
    %2235 = vmatprep.mubr.bf16.mxu0 %v1360
    %2236 = vmatmul.mubr.bf16.gmra.mrb[0].mxu0 %v1359
    %v2237 = vpop.f32.mrb[0].mxu0
    %v2238 = vadd.f32 %v2093, %v2237
    %v2239 = vpop.f32.mrb[0].mxu0
    %v2240 = vpop.f32.mrb[0].mxu0
    %v2241 = vadd.f32 %v2096, %v2240
    %v2242 = vpop.f32.mrb[0].mxu0
    %2243 = vmatprep.mubr.bf16.mxu0 %v1369
    %2244 = vmatmul.mubr.bf16.gmra.mrb[0].mxu0 %v1368
    %v2245 = vpop.f32.mrb[0].mxu0
    %v2246 = vadd.f32 %v2101, %v2245
    %v2247 = vpop.f32.mrb[0].mxu0
    %v2248 = vpop.f32.mrb[0].mxu0
    %v2249 = vadd.f32 %v2104, %v2248
    %v2250 = vpop.f32.mrb[0].mxu0
    %2251 = vmatprep.mubr.bf16.mxu0 %v1378
    %2252 = vmatmul.mubr.bf16.gmra.mrb[0].mxu0 %v1377
    %v2253 = vpop.f32.mrb[0].mxu0
    %v2254 = vadd.f32 %v2109, %v2253
    %v2255 = vpop.f32.mrb[0].mxu0
    %v2256 = vpop.f32.mrb[0].mxu0
    %v2257 = vadd.f32 %v2112, %v2256
    %v2258 = vpop.f32.mrb[0].mxu0
    %2259 = vmatprep.mubr.bf16.mxu0 %v1387
    %2260 = vmatmul.mubr.bf16.gmra.mrb[0].mxu0 %v1386
    %v2261 = vpop.f32.mrb[0].mxu0
    %v2262 = vadd.f32 %v2117, %v2261
    %v2263 = vpop.f32.mrb[0].mxu0
    %v2264 = vpop.f32.mrb[0].mxu0
    %v2265 = vadd.f32 %v2120, %v2264
    %v2266 = vpop.f32.mrb[0].mxu0
    %2267 = vmatprep.mubr.bf16.mxu0 %v1396
    %2268 = vmatmul.mubr.bf16.gmra.mrb[0].mxu0 %v1395
    %v2269 = vpop.f32.mrb[0].mxu0
    %v2270 = vadd.f32 %v2125, %v2269
    %v2271 = vpop.f32.mrb[0].mxu0
    %v2272 = vpop.f32.mrb[0].mxu0
    %v2273 = vadd.f32 %v2128, %v2272
    %v2274 = vpop.f32.mrb[0].mxu0
    %2275 = vmatprep.mubr.bf16.mxu0 %v1405
    %2276 = vmatmul.mubr.bf16.gmra.mrb[0].mxu0 %v1404
    %v2277 = vpop.f32.mrb[0].mxu0
    %v2278 = vadd.f32 %v2133, %v2277
    %v2279 = vpop.f32.mrb[0].mxu0
    %v2280 = vpop.f32.mrb[0].mxu0
    %v2281 = vadd.f32 %v2136, %v2280
    %v2282 = vpop.f32.mrb[0].mxu0
    %2283 = vdwg.mxu0
    %2284 = vmatprep.subr.bf16.mxu0 0
    %2285 = vmatpush1.bf16.msra.mxu0 %v1882
    %2286 = vmatprep.subr.bf16.mxu0 0
    %2287 = vmatpush1.bf16.msra.mxu0 %v1883
    %2288 = vmatprep.subr.bf16.mxu0 0
    %2289 = vmatpush1.bf16.msra.mxu0 %v1884
    %2290 = vmatprep.subr.bf16.mxu0 0
    %2291 = vmatpush1.bf16.msra.mxu0 %v1885
    %2292 = vmatprep.subr.bf16.mxu0 0
    %2293 = vmatpush1.bf16.msra.mxu0 %v1886
    %2294 = vmatprep.subr.bf16.mxu0 0
    %2295 = vmatpush1.bf16.msra.mxu0 %v1887
    %2296 = vmatprep.subr.bf16.mxu0 0
    %2297 = vmatpush1.bf16.msra.mxu0 %v1888
    %2298 = vmatprep.subr.bf16.mxu0 0
    %2299 = vmatpush1.bf16.msra.mxu0 %v1889
    %2300 = vmatprep.subr.bf16.mxu0 0
    %2301 = vmatpush1.bf16.msra.mxu0 %v1890
    %2302 = vmatprep.subr.bf16.mxu0 0
    %2303 = vmatpush1.bf16.msra.mxu0 %v1891
    %2304 = vmatprep.subr.bf16.mxu0 0
    %2305 = vmatpush1.bf16.msra.mxu0 %v1892
    %2306 = vmatprep.subr.bf16.mxu0 0
    %2307 = vmatpush1.bf16.msra.mxu0 %v1893
    %2308 = vmatprep.subr.bf16.mxu0 0
    %2309 = vmatpush1.bf16.msra.mxu0 %v1894
    %2310 = vmatprep.subr.bf16.mxu0 0
    %2311 = vmatpush1.bf16.msra.mxu0 %v1895
    %2312 = vmatprep.subr.bf16.mxu0 0
    %2313 = vmatpush1.bf16.msra.mxu0 %v1896
    %2314 = vmatprep.subr.bf16.mxu0 0
    %2315 = vmatpush1.bf16.msra.mxu0 %v1897
    %2316 = vmatprep.mubr.bf16.mxu0 %v1290
    %2317 = vmatmul.mubr.bf16.gmra.mrb[0].mxu0 %v1289
    %v2318 = vpop.f32.mrb[0].mxu0
    %v2319 = vadd.f32 %v2174, %v2318
    %v2320 = vpop.f32.mrb[0].mxu0
    %v2321 = vpop.f32.mrb[0].mxu0
    %v2322 = vadd.f32 %v2177, %v2321
    %v2323 = vpop.f32.mrb[0].mxu0
    %2324 = vmatprep.mubr.bf16.mxu0 %v1299
    %2325 = vmatmul.mubr.bf16.gmra.mrb[0].mxu0 %v1298
    %v2326 = vpop.f32.mrb[0].mxu0
    %v2327 = vadd.f32 %v2182, %v2326
    %v2328 = vpop.f32.mrb[0].mxu0
    %v2329 = vpop.f32.mrb[0].mxu0
    %v2330 = vadd.f32 %v2185, %v2329
    %v2331 = vpop.f32.mrb[0].mxu0
    %2332 = vmatprep.mubr.bf16.mxu0 %v1308
    %2333 = vmatmul.mubr.bf16.gmra.mrb[0].mxu0 %v1307
    %v2334 = vpop.f32.mrb[0].mxu0
    %v2335 = vadd.f32 %v2190, %v2334
    %v2336 = vpop.f32.mrb[0].mxu0
    %v2337 = vpop.f32.mrb[0].mxu0
    %v2338 = vadd.f32 %v2193, %v2337
    %v2339 = vpop.f32.mrb[0].mxu0
    %2340 = vmatprep.mubr.bf16.mxu0 %v1317
    %2341 = vmatmul.mubr.bf16.gmra.mrb[0].mxu0 %v1316
    %v2342 = vpop.f32.mrb[0].mxu0
    %v2343 = vadd.f32 %v2198, %v2342
    %v2344 = vpop.f32.mrb[0].mxu0
    %v2345 = vpop.f32.mrb[0].mxu0
    %v2346 = vadd.f32 %v2201, %v2345
    %v2347 = vpop.f32.mrb[0].mxu0
    %2348 = vmatprep.mubr.bf16.mxu0 %v1326
    %2349 = vmatmul.mubr.bf16.gmra.mrb[0].mxu0 %v1325
    %v2350 = vpop.f32.mrb[0].mxu0
    %v2351 = vadd.f32 %v2206, %v2350
    %v2352 = vpop.f32.mrb[0].mxu0
    %v2353 = vpop.f32.mrb[0].mxu0
    %v2354 = vadd.f32 %v2209, %v2353
    %v2355 = vpop.f32.mrb[0].mxu0
    %2356 = vmatprep.mubr.bf16.mxu0 %v1335
    %2357 = vmatmul.mubr.bf16.gmra.mrb[0].mxu0 %v1334
    %v2358 = vpop.f32.mrb[0].mxu0
    %v2359 = vadd.f32 %v2214, %v2358
    %v2360 = vpop.f32.mrb[0].mxu0
    %v2361 = vpop.f32.mrb[0].mxu0
    %v2362 = vadd.f32 %v2217, %v2361
    %v2363 = vpop.f32.mrb[0].mxu0
    %2364 = vmatprep.mubr.bf16.mxu0 %v1344
    %2365 = vmatmul.mubr.bf16.gmra.mrb[0].mxu0 %v1343
    %v2366 = vpop.f32.mrb[0].mxu0
    %v2367 = vadd.f32 %v2222, %v2366
    %v2368 = vpop.f32.mrb[0].mxu0
    %v2369 = vpop.f32.mrb[0].mxu0
    %v2370 = vadd.f32 %v2225, %v2369
    %v2371 = vpop.f32.mrb[0].mxu0
    %2372 = vmatprep.mubr.bf16.mxu0 %v1353
    %2373 = vmatmul.mubr.bf16.gmra.mrb[0].mxu0 %v1352
    %v2374 = vpop.f32.mrb[0].mxu0
    %v2375 = vadd.f32 %v2230, %v2374
    %v2376 = vpop.f32.mrb[0].mxu0
    %v2377 = vpop.f32.mrb[0].mxu0
    %v2378 = vadd.f32 %v2233, %v2377
    %v2379 = vpop.f32.mrb[0].mxu0
    %2380 = vmatprep.mubr.bf16.mxu0 %v1362
    %2381 = vmatmul.mubr.bf16.gmra.mrb[0].mxu0 %v1361
    %v2382 = vpop.f32.mrb[0].mxu0
    %v2383 = vadd.f32 %v2238, %v2382
    %v2384 = vpop.f32.mrb[0].mxu0
    %v2385 = vpop.f32.mrb[0].mxu0
    %v2386 = vadd.f32 %v2241, %v2385
    %v2387 = vpop.f32.mrb[0].mxu0
    %2388 = vmatprep.mubr.bf16.mxu0 %v1371
    %2389 = vmatmul.mubr.bf16.gmra.mrb[0].mxu0 %v1370
    %v2390 = vpop.f32.mrb[0].mxu0
    %v2391 = vadd.f32 %v2246, %v2390
    %v2392 = vpop.f32.mrb[0].mxu0
    %v2393 = vpop.f32.mrb[0].mxu0
    %v2394 = vadd.f32 %v2249, %v2393
    %v2395 = vpop.f32.mrb[0].mxu0
    %2396 = vmatprep.mubr.bf16.mxu0 %v1380
    %2397 = vmatmul.mubr.bf16.gmra.mrb[0].mxu0 %v1379
    %v2398 = vpop.f32.mrb[0].mxu0
    %v2399 = vadd.f32 %v2254, %v2398
    %v2400 = vpop.f32.mrb[0].mxu0
    %v2401 = vpop.f32.mrb[0].mxu0
    %v2402 = vadd.f32 %v2257, %v2401
    %v2403 = vpop.f32.mrb[0].mxu0
    %2404 = vmatprep.mubr.bf16.mxu0 %v1389
    %2405 = vmatmul.mubr.bf16.gmra.mrb[0].mxu0 %v1388
    %v2406 = vpop.f32.mrb[0].mxu0
    %v2407 = vadd.f32 %v2262, %v2406
    %v2408 = vpop.f32.mrb[0].mxu0
    %v2409 = vpop.f32.mrb[0].mxu0
    %v2410 = vadd.f32 %v2265, %v2409
    %v2411 = vpop.f32.mrb[0].mxu0
    %2412 = vmatprep.mubr.bf16.mxu0 %v1398
    %2413 = vmatmul.mubr.bf16.gmra.mrb[0].mxu0 %v1397
    %v2414 = vpop.f32.mrb[0].mxu0
    %v2415 = vadd.f32 %v2270, %v2414
    %v2416 = vpop.f32.mrb[0].mxu0
    %v2417 = vpop.f32.mrb[0].mxu0
    %v2418 = vadd.f32 %v2273, %v2417
    %v2419 = vpop.f32.mrb[0].mxu0
    %2420 = vmatprep.mubr.bf16.mxu0 %v1407
    %2421 = vmatmul.mubr.bf16.gmra.mrb[0].mxu0 %v1406
    %v2422 = vpop.f32.mrb[0].mxu0
    %v2423 = vadd.f32 %v2278, %v2422
    %v2424 = vpop.f32.mrb[0].mxu0
    %v2425 = vpop.f32.mrb[0].mxu0
    %v2426 = vadd.f32 %v2281, %v2425
    %v2427 = vpop.f32.mrb[0].mxu0
    %2428 = vdwg.mxu0
    %2429 = vmatprep.subr.bf16.mxu0 0
    %2430 = vmatpush1.bf16.msra.mxu0 %v1898
    %2431 = vmatprep.subr.bf16.mxu0 0
    %2432 = vmatpush1.bf16.msra.mxu0 %v1899
    %2433 = vmatprep.subr.bf16.mxu0 0
    %2434 = vmatpush1.bf16.msra.mxu0 %v1900
    %2435 = vmatprep.subr.bf16.mxu0 0
    %2436 = vmatpush1.bf16.msra.mxu0 %v1901
    %2437 = vmatprep.subr.bf16.mxu0 0
    %2438 = vmatpush1.bf16.msra.mxu0 %v1902
    %2439 = vmatprep.subr.bf16.mxu0 0
    %2440 = vmatpush1.bf16.msra.mxu0 %v1903
    %2441 = vmatprep.subr.bf16.mxu0 0
    %2442 = vmatpush1.bf16.msra.mxu0 %v1904
    %2443 = vmatprep.subr.bf16.mxu0 0
    %2444 = vmatpush1.bf16.msra.mxu0 %v1905
    %2445 = vmatprep.subr.bf16.mxu0 0
    %2446 = vmatpush1.bf16.msra.mxu0 %v1906
    %2447 = vmatprep.subr.bf16.mxu0 0
    %2448 = vmatpush1.bf16.msra.mxu0 %v1907
    %2449 = vmatprep.subr.bf16.mxu0 0
    %2450 = vmatpush1.bf16.msra.mxu0 %v1908
    %2451 = vmatprep.subr.bf16.mxu0 0
    %2452 = vmatpush1.bf16.msra.mxu0 %v1909
    %2453 = vmatprep.subr.bf16.mxu0 0
    %2454 = vmatpush1.bf16.msra.mxu0 %v1910
    %2455 = vmatprep.subr.bf16.mxu0 0
    %2456 = vmatpush1.bf16.msra.mxu0 %v1911
    %2457 = vmatprep.subr.bf16.mxu0 0
    %2458 = vmatpush1.bf16.msra.mxu0 %v1912
    %2459 = vmatprep.subr.bf16.mxu0 0
    %2460 = vmatpush1.bf16.msra.mxu0 %v1913
    %2461 = vmatprep.mubr.bf16.mxu0 %v1292
    %2462 = vmatmul.mubr.bf16.gmra.mrb[0].mxu0 %v1291
    %v2463 = vpop.f32.mrb[0].mxu0
    %v2464 = vadd.f32 %v2319, %v2463
    %v2465 = vpop.f32.mrb[0].mxu0
    %v2466 = vpop.f32.mrb[0].mxu0
    %v2467 = vadd.f32 %v2322, %v2466
    %v2468 = vpop.f32.mrb[0].mxu0
    %2469 = vmatprep.mubr.bf16.mxu0 %v1301
    %2470 = vmatmul.mubr.bf16.gmra.mrb[0].mxu0 %v1300
    %v2471 = vpop.f32.mrb[0].mxu0
    %v2472 = vadd.f32 %v2327, %v2471
    %v2473 = vpop.f32.mrb[0].mxu0
    %v2474 = vpop.f32.mrb[0].mxu0
    %v2475 = vadd.f32 %v2330, %v2474
    %v2476 = vpop.f32.mrb[0].mxu0
    %2477 = vmatprep.mubr.bf16.mxu0 %v1310
    %2478 = vmatmul.mubr.bf16.gmra.mrb[0].mxu0 %v1309
    %v2479 = vpop.f32.mrb[0].mxu0
    %v2480 = vadd.f32 %v2335, %v2479
    %v2481 = vpop.f32.mrb[0].mxu0
    %v2482 = vpop.f32.mrb[0].mxu0
    %v2483 = vadd.f32 %v2338, %v2482
    %v2484 = vpop.f32.mrb[0].mxu0
    %2485 = vmatprep.mubr.bf16.mxu0 %v1319
    %2486 = vmatmul.mubr.bf16.gmra.mrb[0].mxu0 %v1318
    %v2487 = vpop.f32.mrb[0].mxu0
    %v2488 = vadd.f32 %v2343, %v2487
    %v2489 = vpop.f32.mrb[0].mxu0
    %v2490 = vpop.f32.mrb[0].mxu0
    %v2491 = vadd.f32 %v2346, %v2490
    %v2492 = vpop.f32.mrb[0].mxu0
    %2493 = vmatprep.mubr.bf16.mxu0 %v1328
    %2494 = vmatmul.mubr.bf16.gmra.mrb[0].mxu0 %v1327
    %v2495 = vpop.f32.mrb[0].mxu0
    %v2496 = vadd.f32 %v2351, %v2495
    %v2497 = vpop.f32.mrb[0].mxu0
    %v2498 = vpop.f32.mrb[0].mxu0
    %v2499 = vadd.f32 %v2354, %v2498
    %v2500 = vpop.f32.mrb[0].mxu0
    %2501 = vmatprep.mubr.bf16.mxu0 %v1337
    %2502 = vmatmul.mubr.bf16.gmra.mrb[0].mxu0 %v1336
    %v2503 = vpop.f32.mrb[0].mxu0
    %v2504 = vadd.f32 %v2359, %v2503
    %v2505 = vpop.f32.mrb[0].mxu0
    %v2506 = vpop.f32.mrb[0].mxu0
    %v2507 = vadd.f32 %v2362, %v2506
    %v2508 = vpop.f32.mrb[0].mxu0
    %2509 = vmatprep.mubr.bf16.mxu0 %v1346
    %2510 = vmatmul.mubr.bf16.gmra.mrb[0].mxu0 %v1345
    %v2511 = vpop.f32.mrb[0].mxu0
    %v2512 = vadd.f32 %v2367, %v2511
    %v2513 = vpop.f32.mrb[0].mxu0
    %v2514 = vpop.f32.mrb[0].mxu0
    %v2515 = vadd.f32 %v2370, %v2514
    %v2516 = vpop.f32.mrb[0].mxu0
    %2517 = vmatprep.mubr.bf16.mxu0 %v1355
    %2518 = vmatmul.mubr.bf16.gmra.mrb[0].mxu0 %v1354
    %v2519 = vpop.f32.mrb[0].mxu0
    %v2520 = vadd.f32 %v2375, %v2519
    %v2521 = vpop.f32.mrb[0].mxu0
    %v2522 = vpop.f32.mrb[0].mxu0
    %v2523 = vadd.f32 %v2378, %v2522
    %v2524 = vpop.f32.mrb[0].mxu0
    %2525 = vmatprep.mubr.bf16.mxu0 %v1364
    %2526 = vmatmul.mubr.bf16.gmra.mrb[0].mxu0 %v1363
    %v2527 = vpop.f32.mrb[0].mxu0
    %v2528 = vadd.f32 %v2383, %v2527
    %v2529 = vpop.f32.mrb[0].mxu0
    %v2530 = vpop.f32.mrb[0].mxu0
    %v2531 = vadd.f32 %v2386, %v2530
    %v2532 = vpop.f32.mrb[0].mxu0
    %2533 = vmatprep.mubr.bf16.mxu0 %v1373
    %2534 = vmatmul.mubr.bf16.gmra.mrb[0].mxu0 %v1372
    %v2535 = vpop.f32.mrb[0].mxu0
    %v2536 = vadd.f32 %v2391, %v2535
    %v2537 = vpop.f32.mrb[0].mxu0
    %v2538 = vpop.f32.mrb[0].mxu0
    %v2539 = vadd.f32 %v2394, %v2538
    %v2540 = vpop.f32.mrb[0].mxu0
    %2541 = vmatprep.mubr.bf16.mxu0 %v1382
    %2542 = vmatmul.mubr.bf16.gmra.mrb[0].mxu0 %v1381
    %v2543 = vpop.f32.mrb[0].mxu0
    %v2544 = vadd.f32 %v2399, %v2543
    %v2545 = vpop.f32.mrb[0].mxu0
    %v2546 = vpop.f32.mrb[0].mxu0
    %v2547 = vadd.f32 %v2402, %v2546
    %v2548 = vpop.f32.mrb[0].mxu0
    %2549 = vmatprep.mubr.bf16.mxu0 %v1391
    %2550 = vmatmul.mubr.bf16.gmra.mrb[0].mxu0 %v1390
    %v2551 = vpop.f32.mrb[0].mxu0
    %v2552 = vadd.f32 %v2407, %v2551
    %v2553 = vpop.f32.mrb[0].mxu0
    %v2554 = vpop.f32.mrb[0].mxu0
    %v2555 = vadd.f32 %v2410, %v2554
    %v2556 = vpop.f32.mrb[0].mxu0
    %2557 = vmatprep.mubr.bf16.mxu0 %v1400
    %2558 = vmatmul.mubr.bf16.gmra.mrb[0].mxu0 %v1399
    %v2559 = vpop.f32.mrb[0].mxu0
    %v2560 = vadd.f32 %v2415, %v2559
    %v2561 = vpop.f32.mrb[0].mxu0
    %v2562 = vpop.f32.mrb[0].mxu0
    %v2563 = vadd.f32 %v2418, %v2562
    %v2564 = vpop.f32.mrb[0].mxu0
    %2565 = vmatprep.mubr.bf16.mxu0 %v1409
    %2566 = vmatmul.mubr.bf16.gmra.mrb[0].mxu0 %v1408
    %v2567 = vpop.f32.mrb[0].mxu0
    %v2568 = vadd.f32 %v2423, %v2567
    %v2569 = vpop.f32.mrb[0].mxu0
    %v2570 = vpop.f32.mrb[0].mxu0
    %v2571 = vadd.f32 %v2426, %v2570
    %v2572 = vpop.f32.mrb[0].mxu0
    %2573 = vdwg.mxu0
    %2574 = vmatprep.subr.bf16.mxu0 0
    %2575 = vmatpush1.bf16.msra.mxu0 %v1914
    %2576 = vmatprep.subr.bf16.mxu0 0
    %2577 = vmatpush1.bf16.msra.mxu0 %v1915
    %2578 = vmatprep.subr.bf16.mxu0 0
    %2579 = vmatpush1.bf16.msra.mxu0 %v1916
    %2580 = vmatprep.subr.bf16.mxu0 0
    %2581 = vmatpush1.bf16.msra.mxu0 %v1917
    %2582 = vmatprep.subr.bf16.mxu0 0
    %2583 = vmatpush1.bf16.msra.mxu0 %v1918
    %2584 = vmatprep.subr.bf16.mxu0 0
    %2585 = vmatpush1.bf16.msra.mxu0 %v1919
    %2586 = vmatprep.subr.bf16.mxu0 0
    %2587 = vmatpush1.bf16.msra.mxu0 %v1920
    %2588 = vmatprep.subr.bf16.mxu0 0
    %2589 = vmatpush1.bf16.msra.mxu0 %v1921
    %2590 = vmatprep.subr.bf16.mxu0 0
    %2591 = vmatpush1.bf16.msra.mxu0 0
    %2592 = vmatprep.subr.bf16.mxu0 0
    %2593 = vmatpush1.bf16.msra.mxu0 0
    %2594 = vmatprep.subr.bf16.mxu0 0
    %2595 = vmatpush1.bf16.msra.mxu0 0
    %2596 = vmatprep.subr.bf16.mxu0 0
    %2597 = vmatpush1.bf16.msra.mxu0 0
    %2598 = vmatprep.subr.bf16.mxu0 0
    %2599 = vmatpush1.bf16.msra.mxu0 0
    %2600 = vmatprep.subr.bf16.mxu0 0
    %2601 = vmatpush1.bf16.msra.mxu0 0
    %2602 = vmatprep.subr.bf16.mxu0 0
    %2603 = vmatpush1.bf16.msra.mxu0 0
    %2604 = vmatprep.subr.bf16.mxu0 0
    %2605 = vmatpush1.bf16.msra.mxu0 0
    %2606 = vmatprep.mubr.bf16.mxu0 0
    %2607 = vmatmul.mubr.bf16.gmra.mrb[0].mxu0 %v1293
    %v2608 = vpop.f32.mrb[0].mxu0
    %v2609 = vadd.f32 %v2464, %v2608
    %v2610 = vpop.f32.mrb[0].mxu0
    %v2611 = vpop.f32.mrb[0].mxu0
    %v2612 = vadd.f32 %v2467, %v2611
    %v2613 = vpop.f32.mrb[0].mxu0
    %2614 = vmatprep.mubr.bf16.mxu0 0
    %2615 = vmatmul.mubr.bf16.gmra.mrb[0].mxu0 %v1302
    %v2616 = vpop.f32.mrb[0].mxu0
    %v2617 = vadd.f32 %v2472, %v2616
    %v2618 = vpop.f32.mrb[0].mxu0
    %v2619 = vpop.f32.mrb[0].mxu0
    %v2620 = vadd.f32 %v2475, %v2619
    %v2621 = vpop.f32.mrb[0].mxu0
    %2622 = vmatprep.mubr.bf16.mxu0 0
    %2623 = vmatmul.mubr.bf16.gmra.mrb[0].mxu0 %v1311
    %v2624 = vpop.f32.mrb[0].mxu0
    %v2625 = vadd.f32 %v2480, %v2624
    %v2626 = vpop.f32.mrb[0].mxu0
    %v2627 = vpop.f32.mrb[0].mxu0
    %v2628 = vadd.f32 %v2483, %v2627
    %v2629 = vpop.f32.mrb[0].mxu0
    %2630 = vmatprep.mubr.bf16.mxu0 0
    %2631 = vmatmul.mubr.bf16.gmra.mrb[0].mxu0 %v1320
    %v2632 = vpop.f32.mrb[0].mxu0
    %v2633 = vadd.f32 %v2488, %v2632
    %v2634 = vpop.f32.mrb[0].mxu0
    %v2635 = vpop.f32.mrb[0].mxu0
    %v2636 = vadd.f32 %v2491, %v2635
    %v2637 = vpop.f32.mrb[0].mxu0
    %2638 = vmatprep.mubr.bf16.mxu0 0
    %2639 = vmatmul.mubr.bf16.gmra.mrb[0].mxu0 %v1329
    %v2640 = vpop.f32.mrb[0].mxu0
    %v2641 = vadd.f32 %v2496, %v2640
    %v2642 = vpop.f32.mrb[0].mxu0
    %v2643 = vpop.f32.mrb[0].mxu0
    %v2644 = vadd.f32 %v2499, %v2643
    %v2645 = vpop.f32.mrb[0].mxu0
    %2646 = vmatprep.mubr.bf16.mxu0 0
    %2647 = vmatmul.mubr.bf16.gmra.mrb[0].mxu0 %v1338
    %v2648 = vpop.f32.mrb[0].mxu0
    %v2649 = vadd.f32 %v2504, %v2648
    %v2650 = vpop.f32.mrb[0].mxu0
    %v2651 = vpop.f32.mrb[0].mxu0
    %v2652 = vadd.f32 %v2507, %v2651
    %v2653 = vpop.f32.mrb[0].mxu0
    %2654 = vmatprep.mubr.bf16.mxu0 0
    %2655 = vmatmul.mubr.bf16.gmra.mrb[0].mxu0 %v1347
    %v2656 = vpop.f32.mrb[0].mxu0
    %v2657 = vadd.f32 %v2512, %v2656
    %v2658 = vpop.f32.mrb[0].mxu0
    %v2659 = vpop.f32.mrb[0].mxu0
    %v2660 = vadd.f32 %v2515, %v2659
    %v2661 = vpop.f32.mrb[0].mxu0
    %2662 = vmatprep.mubr.bf16.mxu0 0
    %2663 = vmatmul.mubr.bf16.gmra.mrb[0].mxu0 %v1356
    %v2664 = vpop.f32.mrb[0].mxu0
    %v2665 = vadd.f32 %v2520, %v2664
    %v2666 = vpop.f32.mrb[0].mxu0
    %v2667 = vpop.f32.mrb[0].mxu0
    %v2668 = vadd.f32 %v2523, %v2667
    %v2669 = vpop.f32.mrb[0].mxu0
    %2670 = vmatprep.mubr.bf16.mxu0 0
    %2671 = vmatmul.mubr.bf16.gmra.mrb[0].mxu0 %v1365
    %v2672 = vpop.f32.mrb[0].mxu0
    %v2673 = vadd.f32 %v2528, %v2672
    %v2674 = vpop.f32.mrb[0].mxu0
    %v2675 = vpop.f32.mrb[0].mxu0
    %v2676 = vadd.f32 %v2531, %v2675
    %v2677 = vpop.f32.mrb[0].mxu0
    %2678 = vmatprep.mubr.bf16.mxu0 0
    %2679 = vmatmul.mubr.bf16.gmra.mrb[0].mxu0 %v1374
    %v2680 = vpop.f32.mrb[0].mxu0
    %v2681 = vadd.f32 %v2536, %v2680
    %v2682 = vpop.f32.mrb[0].mxu0
    %v2683 = vpop.f32.mrb[0].mxu0
    %v2684 = vadd.f32 %v2539, %v2683
    %v2685 = vpop.f32.mrb[0].mxu0
    %2686 = vmatprep.mubr.bf16.mxu0 0
    %2687 = vmatmul.mubr.bf16.gmra.mrb[0].mxu0 %v1383
    %v2688 = vpop.f32.mrb[0].mxu0
    %v2689 = vadd.f32 %v2544, %v2688
    %v2690 = vpop.f32.mrb[0].mxu0
    %v2691 = vpop.f32.mrb[0].mxu0
    %v2692 = vadd.f32 %v2547, %v2691
    %v2693 = vpop.f32.mrb[0].mxu0
    %2694 = vmatprep.mubr.bf16.mxu0 0
    %2695 = vmatmul.mubr.bf16.gmra.mrb[0].mxu0 %v1392
    %v2696 = vpop.f32.mrb[0].mxu0
    %v2697 = vadd.f32 %v2552, %v2696
    %v2698 = vpop.f32.mrb[0].mxu0
    %v2699 = vpop.f32.mrb[0].mxu0
    %v2700 = vadd.f32 %v2555, %v2699
    %v2701 = vpop.f32.mrb[0].mxu0
    %2702 = vmatprep.mubr.bf16.mxu0 0
    %2703 = vmatmul.mubr.bf16.gmra.mrb[0].mxu0 %v1401
    %v2704 = vpop.f32.mrb[0].mxu0
    %v2705 = vadd.f32 %v2560, %v2704
    %v2706 = vpop.f32.mrb[0].mxu0
    %v2707 = vpop.f32.mrb[0].mxu0
    %v2708 = vadd.f32 %v2563, %v2707
    %v2709 = vpop.f32.mrb[0].mxu0
    %2710 = vmatprep.mubr.bf16.mxu0 0
    %2711 = vmatmul.mubr.bf16.gmra.mrb[0].mxu0 %v1410
    %v2712 = vpop.f32.mrb[0].mxu0
    %v2713 = vadd.f32 %v2568, %v2712
    %v2714 = vpop.f32.mrb[0].mxu0
    %v2715 = vpop.f32.mrb[0].mxu0
    %v2716 = vadd.f32 %v2571, %v2715
    %v2717 = vpop.f32.mrb[0].mxu0
    %2718 = vdwg.mxu0
    %v2719 = vmax.f32 %v2609, 0.0
    %v2720 = vmax.f32 %v2612, 0.0
    %v2721 = vmax.f32 %v2617, 0.0
    %v2722 = vmax.f32 %v2620, 0.0
    %v2723 = vmax.f32 %v2625, 0.0
    %v2724 = vmax.f32 %v2628, 0.0
    %v2725 = vmax.f32 %v2633, 0.0
    %v2726 = vmax.f32 %v2636, 0.0
    %v2727 = vmax.f32 %v2641, 0.0
    %v2728 = vmax.f32 %v2644, 0.0
    %v2729 = vmax.f32 %v2649, 0.0
    %v2730 = vmax.f32 %v2652, 0.0
    %v2731 = vmax.f32 %v2657, 0.0
    %v2732 = vmax.f32 %v2660, 0.0
    %v2733 = vmax.f32 %v2665, 0.0
    %v2734 = vmax.f32 %v2668, 0.0
    %v2735 = vmax.f32 %v2673, 0.0
    %v2736 = vmax.f32 %v2676, 0.0
    %v2737 = vmax.f32 %v2681, 0.0
    %v2738 = vmax.f32 %v2684, 0.0
    %v2739 = vmax.f32 %v2689, 0.0
    %v2740 = vmax.f32 %v2692, 0.0
    %v2741 = vmax.f32 %v2697, 0.0
    %v2742 = vmax.f32 %v2700, 0.0
    %v2743 = vmax.f32 %v2705, 0.0
    %v2744 = vmax.f32 %v2708, 0.0
    %v2745 = vmax.f32 %v2713, 0.0
    %v2746 = vmax.f32 %v2716, 0.0
    %2748 = vset.pattern.permute.xlu0 0
    %2749 = vperm.xlu0 %2748, %v145
    %v2750 = vpop.permute.xlu0 %2749
    %2753 = vset.pattern.permute.xlu0 0
    %2754 = vperm.xlu0 %2753, %v146
    %v2755 = vpop.permute.xlu0 %2754
    %2758 = vset.pattern.permute.xlu0 0
    %2759 = vperm.xlu0 %2758, %v147
    %v2760 = vpop.permute.xlu0 %2759
    %2763 = vset.pattern.permute.xlu0 0
    %2764 = vperm.xlu0 %2763, %v148
    %v2765 = vpop.permute.xlu0 %2764
    %2768 = vset.pattern.permute.xlu0 0
    %2769 = vperm.xlu0 %2768, %v149
    %v2770 = vpop.permute.xlu0 %2769
    %2773 = vset.pattern.permute.xlu0 0
    %2774 = vperm.xlu0 %2773, %v150
    %v2775 = vpop.permute.xlu0 %2774
    %2778 = vset.pattern.permute.xlu0 0
    %2779 = vperm.xlu0 %2778, %v151
    %v2780 = vpop.permute.xlu0 %2779
    %2783 = vset.pattern.permute.xlu0 0
    %2784 = vperm.xlu0 %2783, %v152
    %v2785 = vpop.permute.xlu0 %2784
    %2788 = vset.pattern.permute.xlu0 0
    %2789 = vperm.xlu0 %2788, %v153
    %v2790 = vpop.permute.xlu0 %2789
    %2793 = vset.pattern.permute.xlu0 0
    %2794 = vperm.xlu0 %2793, %v154
    %v2795 = vpop.permute.xlu0 %2794
    %2798 = vset.pattern.permute.xlu0 0
    %2799 = vperm.xlu0 %2798, %v155
    %v2800 = vpop.permute.xlu0 %2799
    %2803 = vset.pattern.permute.xlu0 0
    %2804 = vperm.xlu0 %2803, %v156
    %v2805 = vpop.permute.xlu0 %2804
    %2808 = vset.pattern.permute.xlu0 0
    %2809 = vperm.xlu0 %2808, %v157
    %v2810 = vpop.permute.xlu0 %2809
    %2813 = vset.pattern.permute.xlu0 0
    %2814 = vperm.xlu0 %2813, %v158
    %v2815 = vpop.permute.xlu0 %2814
    %2818 = vset.pattern.permute.xlu0 0
    %2819 = vperm.xlu0 %2818, %v159
    %v2820 = vpop.permute.xlu0 %2819
    %2823 = vset.pattern.permute.xlu0 0
    %2824 = vperm.xlu0 %2823, %v160
    %v2825 = vpop.permute.xlu0 %2824
    %2828 = vset.pattern.permute.xlu0 0
    %2829 = vperm.xlu0 %2828, %v161
    %v2830 = vpop.permute.xlu0 %2829
    %2833 = vset.pattern.permute.xlu0 0
    %2834 = vperm.xlu0 %2833, %v162
    %v2835 = vpop.permute.xlu0 %2834
    %2838 = vset.pattern.permute.xlu0 0
    %2839 = vperm.xlu0 %2838, %v163
    %v2840 = vpop.permute.xlu0 %2839
    %2843 = vset.pattern.permute.xlu0 0
    %2844 = vperm.xlu0 %2843, %v164
    %v2845 = vpop.permute.xlu0 %2844
    %2848 = vset.pattern.permute.xlu0 0
    %2849 = vperm.xlu0 %2848, %v165
    %v2850 = vpop.permute.xlu0 %2849
    %2853 = vset.pattern.permute.xlu0 0
    %2854 = vperm.xlu0 %2853, %v166
    %v2855 = vpop.permute.xlu0 %2854
    %2858 = vset.pattern.permute.xlu0 0
    %2859 = vperm.xlu0 %2858, %v167
    %v2860 = vpop.permute.xlu0 %2859
    %2863 = vset.pattern.permute.xlu0 0
    %2864 = vperm.xlu0 %2863, %v168
    %v2865 = vpop.permute.xlu0 %2864
    %2868 = vset.pattern.permute.xlu0 0
    %2869 = vperm.xlu0 %2868, %v169
    %v2870 = vpop.permute.xlu0 %2869
    %2873 = vset.pattern.permute.xlu0 0
    %2874 = vperm.xlu0 %2873, %v170
    %v2875 = vpop.permute.xlu0 %2874
    %2878 = vset.pattern.permute.xlu0 0
    %2879 = vperm.xlu0 %2878, %v171
    %v2880 = vpop.permute.xlu0 %2879
    %2883 = vset.pattern.permute.xlu0 0
    %2884 = vperm.xlu0 %2883, %v172
    %v2885 = vpop.permute.xlu0 %2884
    %v2887 = vmul.f32 %v2719, %v2750
    %v2888 = vmul.f32 %v2720, %v2755
    %v2889 = vmul.f32 %v2721, %v2760
    %v2890 = vmul.f32 %v2722, %v2765
    %v2891 = vmul.f32 %v2723, %v2770
    %v2892 = vmul.f32 %v2724, %v2775
    %v2893 = vmul.f32 %v2725, %v2780
    %v2894 = vmul.f32 %v2726, %v2785
    %v2895 = vmul.f32 %v2727, %v2790
    %v2896 = vmul.f32 %v2728, %v2795
    %v2897 = vmul.f32 %v2729, %v2800
    %v2898 = vmul.f32 %v2730, %v2805
    %v2899 = vmul.f32 %v2731, %v2810
    %v2900 = vmul.f32 %v2732, %v2815
    %v2901 = vmul.f32 %v2733, %v2820
    %v2902 = vmul.f32 %v2734, %v2825
    %v2903 = vmul.f32 %v2735, %v2830
    %v2904 = vmul.f32 %v2736, %v2835
    %v2905 = vmul.f32 %v2737, %v2840
    %v2906 = vmul.f32 %v2738, %v2845
    %v2907 = vmul.f32 %v2739, %v2850
    %v2908 = vmul.f32 %v2740, %v2855
    %v2909 = vmul.f32 %v2741, %v2860
    %v2910 = vmul.f32 %v2742, %v2865
    %v2911 = vmul.f32 %v2743, %v2870
    %v2912 = vmul.f32 %v2744, %v2875
    %v2913 = vmul.f32 %v2745, %v2880
    %v2914 = vmul.f32 %v2746, %v2885
    %v2915 = vpack.c.bf16 %v2888, %v2887
    %v2916 = vpack.c.bf16 %v2890, %v2889
    %v2917 = vpack.c.bf16 %v2892, %v2891
    %v2918 = vpack.c.bf16 %v2894, %v2893
    %v2919 = vpack.c.bf16 %v2896, %v2895
    %v2920 = vpack.c.bf16 %v2898, %v2897
    %v2921 = vpack.c.bf16 %v2900, %v2899
    %v2922 = vpack.c.bf16 %v2902, %v2901
    %v2923 = vpack.c.bf16 %v2904, %v2903
    %v2924 = vpack.c.bf16 %v2906, %v2905
    %v2925 = vpack.c.bf16 %v2908, %v2907
    %v2926 = vpack.c.bf16 %v2910, %v2909
    %v2927 = vpack.c.bf16 %v2912, %v2911
    %v2928 = vpack.c.bf16 %v2914, %v2913
    %v2930 = vshrl.u32 %v2915, 16
    %v2932 = vrot.slane %v2930, 2
    %v2933 = vshll.u32 %v2915, 16
    %v2935 = vrot.slane %v2933, 3
    %v2936 = vor.u32 %v2932, %v2935
    %v2938 = vshrl.u32 %v2916, 16
    %v2940 = vrot.slane %v2938, 2
    %v2941 = vshll.u32 %v2916, 16
    %v2943 = vrot.slane %v2941, 3
    %v2944 = vor.u32 %v2940, %v2943
    %v2945 = vsel %vm1034, %v2936, %v2944
    %v2947 = vshrl.u32 %v2917, 16
    %v2949 = vrot.slane %v2947, 2
    %v2950 = vshll.u32 %v2917, 16
    %v2952 = vrot.slane %v2950, 3
    %v2953 = vor.u32 %v2949, %v2952
    %v2954 = vsel %vm1034, %v2944, %v2953
    %v2956 = vshrl.u32 %v2918, 16
    %v2958 = vrot.slane %v2956, 2
    %v2959 = vshll.u32 %v2918, 16
    %v2961 = vrot.slane %v2959, 3
    %v2962 = vor.u32 %v2958, %v2961
    %v2963 = vsel %vm1034, %v2953, %v2962
    %v2965 = vshrl.u32 %v2919, 16
    %v2967 = vrot.slane %v2965, 2
    %v2968 = vshll.u32 %v2919, 16
    %v2970 = vrot.slane %v2968, 3
    %v2971 = vor.u32 %v2967, %v2970
    %v2972 = vsel %vm1034, %v2962, %v2971
    %v2974 = vshrl.u32 %v2920, 16
    %v2976 = vrot.slane %v2974, 2
    %v2977 = vshll.u32 %v2920, 16
    %v2979 = vrot.slane %v2977, 3
    %v2980 = vor.u32 %v2976, %v2979
    %v2981 = vsel %vm1034, %v2971, %v2980
    %v2983 = vshrl.u32 %v2921, 16
    %v2985 = vrot.slane %v2983, 2
    %v2986 = vshll.u32 %v2921, 16
    %v2988 = vrot.slane %v2986, 3
    %v2989 = vor.u32 %v2985, %v2988
    %v2990 = vsel %vm1034, %v2980, %v2989
    %v2992 = vshrl.u32 %v2922, 16
    %v2994 = vrot.slane %v2992, 2
    %v2995 = vshll.u32 %v2922, 16
    %v2997 = vrot.slane %v2995, 3
    %v2998 = vor.u32 %v2994, %v2997
    %v2999 = vsel %vm1034, %v2989, %v2998
    %v3001 = vshrl.u32 %v2923, 16
    %v3003 = vrot.slane %v3001, 2
    %v3004 = vshll.u32 %v2923, 16
    %v3006 = vrot.slane %v3004, 3
    %v3007 = vor.u32 %v3003, %v3006
    %v3008 = vsel %vm1034, %v2998, %v3007
    %v3010 = vshrl.u32 %v2924, 16
    %v3012 = vrot.slane %v3010, 2
    %v3013 = vshll.u32 %v2924, 16
    %v3015 = vrot.slane %v3013, 3
    %v3016 = vor.u32 %v3012, %v3015
    %v3017 = vsel %vm1034, %v3007, %v3016
    %v3019 = vshrl.u32 %v2925, 16
    %v3021 = vrot.slane %v3019, 2
    %v3022 = vshll.u32 %v2925, 16
    %v3024 = vrot.slane %v3022, 3
    %v3025 = vor.u32 %v3021, %v3024
    %v3026 = vsel %vm1034, %v3016, %v3025
    %v3028 = vshrl.u32 %v2926, 16
    %v3030 = vrot.slane %v3028, 2
    %v3031 = vshll.u32 %v2926, 16
    %v3033 = vrot.slane %v3031, 3
    %v3034 = vor.u32 %v3030, %v3033
    %v3035 = vsel %vm1034, %v3025, %v3034
    %v3037 = vshrl.u32 %v2927, 16
    %v3039 = vrot.slane %v3037, 2
    %v3040 = vshll.u32 %v2927, 16
    %v3042 = vrot.slane %v3040, 3
    %v3043 = vor.u32 %v3039, %v3042
    %v3044 = vsel %vm1034, %v3034, %v3043
    %v3046 = vshrl.u32 %v2928, 16
    %v3048 = vrot.slane %v3046, 2
    %v3049 = vshll.u32 %v2928, 16
    %v3051 = vrot.slane %v3049, 3
    %v3052 = vor.u32 %v3048, %v3051
    %v3053 = vsel %vm1034, %v3043, %v3052
    %vm3069 = vcmask 1047557
    %vm3070 = vsmask.f32 7958
    %vm3071 = vmand %vm3069, %vm3070
    %v3072 = vld [vmem:[#allocation2] sm:$0xe0]
    %v3073 = vsel %vm3071, %v2936, %v3072
    %3074 = vst [vmem:[#allocation2] sm:$0xe0] %v3073
    %3075 = vst [vmem:[#allocation2 + $0x8] sm:$0xff] %v2945
    %3076 = vst [vmem:[#allocation2 + $0x10] sm:$0xff] %v2954
    %3077 = vst [vmem:[#allocation2 + $0x18] sm:$0xff] %v2963
    %3078 = vst [vmem:[#allocation2 + $0x20] sm:$0xff] %v2972
    %3079 = vst [vmem:[#allocation2 + $0x28] sm:$0xff] %v2981
    %3080 = vst [vmem:[#allocation2 + $0x30] sm:$0xff] %v2990
    %3081 = vst [vmem:[#allocation2 + $0x38] sm:$0xff] %v2999
    %3082 = vst [vmem:[#allocation2 + $0x40] sm:$0xff] %v3008
    %3083 = vst [vmem:[#allocation2 + $0x48] sm:$0xff] %v3017
    %3084 = vst [vmem:[#allocation2 + $0x50] sm:$0xff] %v3026
    %3085 = vst [vmem:[#allocation2 + $0x58] sm:$0xff] %v3035
    %3086 = vst [vmem:[#allocation2 + $0x60] sm:$0xff] %v3044
    %3087 = vst [vmem:[#allocation2 + $0x68] sm:$0xff] %v3053
    %vm3088 = vmand %vm961, %vm1034
    %v3089 = vld [vmem:[#allocation2 + $0x70] sm:$0x3f]
    %v3090 = vsel %vm3088, %v3052, %v3089
    %3091 = vst [vmem:[#allocation2 + $0x70] sm:$0x3f] %v3090
    %v3092 = vld [vmem:[#allocation2] sm:$0xff]
    %v3093 = vld [vmem:[#allocation2 + $0x8] sm:$0xff]
    %v3094 = vld [vmem:[#allocation2 + $0x10] sm:$0xff]
    %v3095 = vld [vmem:[#allocation2 + $0x18] sm:$0xff]
    %v3096 = vld [vmem:[#allocation2 + $0x20] sm:$0xff]
    %v3097 = vld [vmem:[#allocation2 + $0x28] sm:$0xff]
    %v3098 = vld [vmem:[#allocation2 + $0x30] sm:$0xff]
    %v3099 = vld [vmem:[#allocation2 + $0x38] sm:$0xff]
    %v3100 = vld [vmem:[#allocation2 + $0x40] sm:$0xff]
    %v3101 = vld [vmem:[#allocation2 + $0x48] sm:$0xff]
    %v3102 = vld [vmem:[#allocation2 + $0x50] sm:$0xff]
    %v3103 = vld [vmem:[#allocation2 + $0x58] sm:$0xff]
    %v3104 = vld [vmem:[#allocation2 + $0x60] sm:$0xff]
    %v3105 = vld [vmem:[#allocation2 + $0x68] sm:$0xff]
    %3106 = vst [vmem:[#allocation3] sm:$0xff] %v3092
    %3107 = vst [vmem:[#allocation3 + $0x48] sm:$0xff] %v3093
    %3108 = vst [vmem:[#allocation3 + $0x90] sm:$0xff] %v3094
    %3109 = vst [vmem:[#allocation3 + $0xd8] sm:$0xff] %v3095
    %3110 = vst [vmem:[#allocation3 + $0x120] sm:$0xff] %v3096
    %3111 = vst [vmem:[#allocation3 + $0x168] sm:$0xff] %v3097
    %3112 = vst [vmem:[#allocation3 + $0x1b0] sm:$0xff] %v3098
    %3113 = vst [vmem:[#allocation3 + $0x1f8] sm:$0xff] %v3099
    %3114 = vst [vmem:[#allocation3 + $0x240] sm:$0xff] %v3100
    %3115 = vst [vmem:[#allocation3 + $0x288] sm:$0xff] %v3101
    %3116 = vst [vmem:[#allocation3 + $0x2d0] sm:$0xff] %v3102
    %3117 = vst [vmem:[#allocation3 + $0x318] sm:$0xff] %v3103
    %3118 = vst [vmem:[#allocation3 + $0x360] sm:$0xff] %v3104
    %3119 = vst [vmem:[#allocation3 + $0x3a8] sm:$0xff] %v3105
    %v3120 = vld [vmem:[#allocation2] sm:$0xff]
    %v3121 = vld [vmem:[#allocation2 + $0x8] sm:$0xff]
    %v3122 = vld [vmem:[#allocation2 + $0x10] sm:$0xff]
    %v3123 = vld [vmem:[#allocation2 + $0x18] sm:$0xff]
    %v3124 = vld [vmem:[#allocation2 + $0x20] sm:$0xff]
    %v3125 = vld [vmem:[#allocation2 + $0x28] sm:$0xff]
    %v3126 = vld [vmem:[#allocation2 + $0x30] sm:$0xff]
    %v3127 = vld [vmem:[#allocation2 + $0x38] sm:$0xff]
    %v3128 = vld [vmem:[#allocation2 + $0x40] sm:$0xff]
    %v3129 = vld [vmem:[#allocation2 + $0x48] sm:$0xff]
    %v3130 = vld [vmem:[#allocation2 + $0x50] sm:$0xff]
    %v3131 = vld [vmem:[#allocation2 + $0x58] sm:$0xff]
    %v3132 = vld [vmem:[#allocation2 + $0x60] sm:$0xff]
    %v3133 = vld [vmem:[#allocation2 + $0x68] sm:$0xff]
    %v3134 = vld [vmem:[#allocation2 + $0x70] sm:$0x1]
    %v3136 = vshrl.u32 %v3120, 16
    %v3138 = vshll.u32 %v3120, 16
    %v3140 = vrot.slane %v3138, 1
    %v3141 = vor.u32 %v3136, %v3140
    %v3143 = vshll.u32 %v3121, 16
    %v3145 = vrot.slane %v3143, 1
    %v3146 = vsel %vm344, %v3141, %v3145
    %v3147 = vshrl.u32 %v3121, 16
    %v3149 = vor.u32 %v3147, %v3145
    %v3151 = vshll.u32 %v3122, 16
    %v3153 = vrot.slane %v3151, 1
    %v3154 = vsel %vm344, %v3149, %v3153
    %v3155 = vshrl.u32 %v3122, 16
    %v3157 = vor.u32 %v3155, %v3153
    %v3159 = vshll.u32 %v3123, 16
    %v3161 = vrot.slane %v3159, 1
    %v3162 = vsel %vm344, %v3157, %v3161
    %v3163 = vshrl.u32 %v3123, 16
    %v3165 = vor.u32 %v3163, %v3161
    %v3167 = vshll.u32 %v3124, 16
    %v3169 = vrot.slane %v3167, 1
    %v3170 = vsel %vm344, %v3165, %v3169
    %v3171 = vshrl.u32 %v3124, 16
    %v3173 = vor.u32 %v3171, %v3169
    %v3175 = vshll.u32 %v3125, 16
    %v3177 = vrot.slane %v3175, 1
    %v3178 = vsel %vm344, %v3173, %v3177
    %v3179 = vshrl.u32 %v3125, 16
    %v3181 = vor.u32 %v3179, %v3177
    %v3183 = vshll.u32 %v3126, 16
    %v3185 = vrot.slane %v3183, 1
    %v3186 = vsel %vm344, %v3181, %v3185
    %v3187 = vshrl.u32 %v3126, 16
    %v3189 = vor.u32 %v3187, %v3185
    %v3191 = vshll.u32 %v3127, 16
    %v3193 = vrot.slane %v3191, 1
    %v3194 = vsel %vm344, %v3189, %v3193
    %v3195 = vshrl.u32 %v3127, 16
    %v3197 = vor.u32 %v3195, %v3193
    %v3199 = vshll.u32 %v3128, 16
    %v3201 = vrot.slane %v3199, 1
    %v3202 = vsel %vm344, %v3197, %v3201
    %v3203 = vshrl.u32 %v3128, 16
    %v3205 = vor.u32 %v3203, %v3201
    %v3207 = vshll.u32 %v3129, 16
    %v3209 = vrot.slane %v3207, 1
    %v3210 = vsel %vm344, %v3205, %v3209
    %v3211 = vshrl.u32 %v3129, 16
    %v3213 = vor.u32 %v3211, %v3209
    %v3215 = vshll.u32 %v3130, 16
    %v3217 = vrot.slane %v3215, 1
    %v3218 = vsel %vm344, %v3213, %v3217
    %v3219 = vshrl.u32 %v3130, 16
    %v3221 = vor.u32 %v3219, %v3217
    %v3223 = vshll.u32 %v3131, 16
    %v3225 = vrot.slane %v3223, 1
    %v3226 = vsel %vm344, %v3221, %v3225
    %v3227 = vshrl.u32 %v3131, 16
    %v3229 = vor.u32 %v3227, %v3225
    %v3231 = vshll.u32 %v3132, 16
    %v3233 = vrot.slane %v3231, 1
    %v3234 = vsel %vm344, %v3229, %v3233
    %v3235 = vshrl.u32 %v3132, 16
    %v3237 = vor.u32 %v3235, %v3233
    %v3239 = vshll.u32 %v3133, 16
    %v3241 = vrot.slane %v3239, 1
    %v3242 = vsel %vm344, %v3237, %v3241
    %v3243 = vshrl.u32 %v3133, 16
    %v3245 = vor.u32 %v3243, %v3241
    %v3247 = vshll.u32 %v3134, 16
    %v3249 = vrot.slane %v3247, 1
    %v3250 = vsel %vm344, %v3245, %v3249
    %3265 = vst [vmem:[#allocation3 + $0x8] sm:$0xff] %v3146
    %3266 = vst [vmem:[#allocation3 + $0x50] sm:$0xff] %v3154
    %3267 = vst [vmem:[#allocation3 + $0x98] sm:$0xff] %v3162
    %3268 = vst [vmem:[#allocation3 + $0xe0] sm:$0xff] %v3170
    %3269 = vst [vmem:[#allocation3 + $0x128] sm:$0xff] %v3178
    %3270 = vst [vmem:[#allocation3 + $0x170] sm:$0xff] %v3186
    %3271 = vst [vmem:[#allocation3 + $0x1b8] sm:$0xff] %v3194
    %3272 = vst [vmem:[#allocation3 + $0x200] sm:$0xff] %v3202
    %3273 = vst [vmem:[#allocation3 + $0x248] sm:$0xff] %v3210
    %3274 = vst [vmem:[#allocation3 + $0x290] sm:$0xff] %v3218
    %3275 = vst [vmem:[#allocation3 + $0x2d8] sm:$0xff] %v3226
    %3276 = vst [vmem:[#allocation3 + $0x320] sm:$0xff] %v3234
    %3277 = vst [vmem:[#allocation3 + $0x368] sm:$0xff] %v3242
    %3278 = vst [vmem:[#allocation3 + $0x3b0] sm:$0xff] %v3250
    %v3279 = vld [vmem:[#allocation2] sm:$0xfe]
    %v3280 = vld [vmem:[#allocation2 + $0x8] sm:$0xff]
    %v3281 = vld [vmem:[#allocation2 + $0x10] sm:$0xff]
    %v3282 = vld [vmem:[#allocation2 + $0x18] sm:$0xff]
    %v3283 = vld [vmem:[#allocation2 + $0x20] sm:$0xff]
    %v3284 = vld [vmem:[#allocation2 + $0x28] sm:$0xff]
    %v3285 = vld [vmem:[#allocation2 + $0x30] sm:$0xff]
    %v3286 = vld [vmem:[#allocation2 + $0x38] sm:$0xff]
    %v3287 = vld [vmem:[#allocation2 + $0x40] sm:$0xff]
    %v3288 = vld [vmem:[#allocation2 + $0x48] sm:$0xff]
    %v3289 = vld [vmem:[#allocation2 + $0x50] sm:$0xff]
    %v3290 = vld [vmem:[#allocation2 + $0x58] sm:$0xff]
    %v3291 = vld [vmem:[#allocation2 + $0x60] sm:$0xff]
    %v3292 = vld [vmem:[#allocation2 + $0x68] sm:$0xff]
    %v3293 = vld [vmem:[#allocation2 + $0x70] sm:$0x1]
    %v3309 = vrot.slane %v3279, 1
    %v3310 = vrot.slane %v3280, 1
    %v3311 = vsel %vm519, %v3309, %v3310
    %v3312 = vrot.slane %v3281, 1
    %v3313 = vsel %vm519, %v3310, %v3312
    %v3314 = vrot.slane %v3282, 1
    %v3315 = vsel %vm519, %v3312, %v3314
    %v3316 = vrot.slane %v3283, 1
    %v3317 = vsel %vm519, %v3314, %v3316
    %v3318 = vrot.slane %v3284, 1
    %v3319 = vsel %vm519, %v3316, %v3318
    %v3320 = vrot.slane %v3285, 1
    %v3321 = vsel %vm519, %v3318, %v3320
    %v3322 = vrot.slane %v3286, 1
    %v3323 = vsel %vm519, %v3320, %v3322
    %v3324 = vrot.slane %v3287, 1
    %v3325 = vsel %vm519, %v3322, %v3324
    %v3326 = vrot.slane %v3288, 1
    %v3327 = vsel %vm519, %v3324, %v3326
    %v3328 = vrot.slane %v3289, 1
    %v3329 = vsel %vm519, %v3326, %v3328
    %v3330 = vrot.slane %v3290, 1
    %v3331 = vsel %vm519, %v3328, %v3330
    %v3332 = vrot.slane %v3291, 1
    %v3333 = vsel %vm519, %v3330, %v3332
    %v3334 = vrot.slane %v3292, 1
    %v3335 = vsel %vm519, %v3332, %v3334
    %v3336 = vrot.slane %v3293, 1
    %v3337 = vsel %vm519, %v3334, %v3336
    %3352 = vst [vmem:[#allocation3 + $0x10] sm:$0xff] %v3311
    %3353 = vst [vmem:[#allocation3 + $0x58] sm:$0xff] %v3313
    %3354 = vst [vmem:[#allocation3 + $0xa0] sm:$0xff] %v3315
    %3355 = vst [vmem:[#allocation3 + $0xe8] sm:$0xff] %v3317
    %3356 = vst [vmem:[#allocation3 + $0x130] sm:$0xff] %v3319
    %3357 = vst [vmem:[#allocation3 + $0x178] sm:$0xff] %v3321
    %3358 = vst [vmem:[#allocation3 + $0x1c0] sm:$0xff] %v3323
    %3359 = vst [vmem:[#allocation3 + $0x208] sm:$0xff] %v3325
    %3360 = vst [vmem:[#allocation3 + $0x250] sm:$0xff] %v3327
    %3361 = vst [vmem:[#allocation3 + $0x298] sm:$0xff] %v3329
    %3362 = vst [vmem:[#allocation3 + $0x2e0] sm:$0xff] %v3331
    %3363 = vst [vmem:[#allocation3 + $0x328] sm:$0xff] %v3333
    %3364 = vst [vmem:[#allocation3 + $0x370] sm:$0xff] %v3335
    %3365 = vst [vmem:[#allocation3 + $0x3b8] sm:$0xff] %v3337
    %v3366 = vld [vmem:[#allocation2] sm:$0xe0]
    %v3367 = vld [vmem:[#allocation2 + $0x8] sm:$0xff]
    %v3368 = vld [vmem:[#allocation2 + $0x10] sm:$0xff]
    %v3369 = vld [vmem:[#allocation2 + $0x18] sm:$0xff]
    %v3370 = vld [vmem:[#allocation2 + $0x20] sm:$0xff]
    %v3371 = vld [vmem:[#allocation2 + $0x28] sm:$0xff]
    %v3372 = vld [vmem:[#allocation2 + $0x30] sm:$0xff]
    %v3373 = vld [vmem:[#allocation2 + $0x38] sm:$0xff]
    %v3374 = vld [vmem:[#allocation2 + $0x40] sm:$0xff]
    %v3375 = vld [vmem:[#allocation2 + $0x48] sm:$0xff]
    %v3376 = vld [vmem:[#allocation2 + $0x50] sm:$0xff]
    %v3377 = vld [vmem:[#allocation2 + $0x58] sm:$0xff]
    %v3378 = vld [vmem:[#allocation2 + $0x60] sm:$0xff]
    %v3379 = vld [vmem:[#allocation2 + $0x68] sm:$0xff]
    %v3380 = vld [vmem:[#allocation2 + $0x70] sm:$0x1f]
    %v3396 = vrot.slane %v3366, 5
    %v3397 = vrot.slane %v3367, 5
    %v3398 = vsel %vm607, %v3396, %v3397
    %v3399 = vrot.slane %v3368, 5
    %v3400 = vsel %vm607, %v3397, %v3399
    %v3401 = vrot.slane %v3369, 5
    %v3402 = vsel %vm607, %v3399, %v3401
    %v3403 = vrot.slane %v3370, 5
    %v3404 = vsel %vm607, %v3401, %v3403
    %v3405 = vrot.slane %v3371, 5
    %v3406 = vsel %vm607, %v3403, %v3405
    %v3407 = vrot.slane %v3372, 5
    %v3408 = vsel %vm607, %v3405, %v3407
    %v3409 = vrot.slane %v3373, 5
    %v3410 = vsel %vm607, %v3407, %v3409
    %v3411 = vrot.slane %v3374, 5
    %v3412 = vsel %vm607, %v3409, %v3411
    %v3413 = vrot.slane %v3375, 5
    %v3414 = vsel %vm607, %v3411, %v3413
    %v3415 = vrot.slane %v3376, 5
    %v3416 = vsel %vm607, %v3413, %v3415
    %v3417 = vrot.slane %v3377, 5
    %v3418 = vsel %vm607, %v3415, %v3417
    %v3419 = vrot.slane %v3378, 5
    %v3420 = vsel %vm607, %v3417, %v3419
    %v3421 = vrot.slane %v3379, 5
    %v3422 = vsel %vm607, %v3419, %v3421
    %v3423 = vrot.slane %v3380, 5
    %v3424 = vsel %vm607, %v3421, %v3423
    %3439 = vst [vmem:[#allocation3 + $0x18] sm:$0xff] %v3398
    %3440 = vst [vmem:[#allocation3 + $0x60] sm:$0xff] %v3400
    %3441 = vst [vmem:[#allocation3 + $0xa8] sm:$0xff] %v3402
    %3442 = vst [vmem:[#allocation3 + $0xf0] sm:$0xff] %v3404
    %3443 = vst [vmem:[#allocation3 + $0x138] sm:$0xff] %v3406
    %3444 = vst [vmem:[#allocation3 + $0x180] sm:$0xff] %v3408
    %3445 = vst [vmem:[#allocation3 + $0x1c8] sm:$0xff] %v3410
    %3446 = vst [vmem:[#allocation3 + $0x210] sm:$0xff] %v3412
    %3447 = vst [vmem:[#allocation3 + $0x258] sm:$0xff] %v3414
    %3448 = vst [vmem:[#allocation3 + $0x2a0] sm:$0xff] %v3416
    %3449 = vst [vmem:[#allocation3 + $0x2e8] sm:$0xff] %v3418
    %3450 = vst [vmem:[#allocation3 + $0x330] sm:$0xff] %v3420
    %3451 = vst [vmem:[#allocation3 + $0x378] sm:$0xff] %v3422
    %3452 = vst [vmem:[#allocation3 + $0x3c0] sm:$0xff] %v3424
    %v3453 = vld [vmem:[#allocation2] sm:$0xe0]
    %v3454 = vld [vmem:[#allocation2 + $0x8] sm:$0xff]
    %v3455 = vld [vmem:[#allocation2 + $0x10] sm:$0xff]
    %v3456 = vld [vmem:[#allocation2 + $0x18] sm:$0xff]
    %v3457 = vld [vmem:[#allocation2 + $0x20] sm:$0xff]
    %v3458 = vld [vmem:[#allocation2 + $0x28] sm:$0xff]
    %v3459 = vld [vmem:[#allocation2 + $0x30] sm:$0xff]
    %v3460 = vld [vmem:[#allocation2 + $0x38] sm:$0xff]
    %v3461 = vld [vmem:[#allocation2 + $0x40] sm:$0xff]
    %v3462 = vld [vmem:[#allocation2 + $0x48] sm:$0xff]
    %v3463 = vld [vmem:[#allocation2 + $0x50] sm:$0xff]
    %v3464 = vld [vmem:[#allocation2 + $0x58] sm:$0xff]
    %v3465 = vld [vmem:[#allocation2 + $0x60] sm:$0xff]
    %v3466 = vld [vmem:[#allocation2 + $0x68] sm:$0xff]
    %v3467 = vld [vmem:[#allocation2 + $0x70] sm:$0x3f]
    %v3469 = vshrl.u32 %v3453, 16
    %v3471 = vrot.slane %v3469, 5
    %v3472 = vshll.u32 %v3453, 16
    %v3474 = vrot.slane %v3472, 6
    %v3475 = vor.u32 %v3471, %v3474
    %v3477 = vshrl.u32 %v3454, 16
    %v3479 = vrot.slane %v3477, 5
    %v3480 = vshll.u32 %v3454, 16
    %v3482 = vrot.slane %v3480, 6
    %v3483 = vor.u32 %v3479, %v3482
    %v3484 = vsel %vm680, %v3475, %v3483
    %v3486 = vshrl.u32 %v3455, 16
    %v3488 = vrot.slane %v3486, 5
    %v3489 = vshll.u32 %v3455, 16
    %v3491 = vrot.slane %v3489, 6
    %v3492 = vor.u32 %v3488, %v3491
    %v3493 = vsel %vm680, %v3483, %v3492
    %v3495 = vshrl.u32 %v3456, 16
    %v3497 = vrot.slane %v3495, 5
    %v3498 = vshll.u32 %v3456, 16
    %v3500 = vrot.slane %v3498, 6
    %v3501 = vor.u32 %v3497, %v3500
    %v3502 = vsel %vm680, %v3492, %v3501
    %v3504 = vshrl.u32 %v3457, 16
    %v3506 = vrot.slane %v3504, 5
    %v3507 = vshll.u32 %v3457, 16
    %v3509 = vrot.slane %v3507, 6
    %v3510 = vor.u32 %v3506, %v3509
    %v3511 = vsel %vm680, %v3501, %v3510
    %v3513 = vshrl.u32 %v3458, 16
    %v3515 = vrot.slane %v3513, 5
    %v3516 = vshll.u32 %v3458, 16
    %v3518 = vrot.slane %v3516, 6
    %v3519 = vor.u32 %v3515, %v3518
    %v3520 = vsel %vm680, %v3510, %v3519
    %v3522 = vshrl.u32 %v3459, 16
    %v3524 = vrot.slane %v3522, 5
    %v3525 = vshll.u32 %v3459, 16
    %v3527 = vrot.slane %v3525, 6
    %v3528 = vor.u32 %v3524, %v3527
    %v3529 = vsel %vm680, %v3519, %v3528
    %v3531 = vshrl.u32 %v3460, 16
    %v3533 = vrot.slane %v3531, 5
    %v3534 = vshll.u32 %v3460, 16
    %v3536 = vrot.slane %v3534, 6
    %v3537 = vor.u32 %v3533, %v3536
    %v3538 = vsel %vm680, %v3528, %v3537
    %v3540 = vshrl.u32 %v3461, 16
    %v3542 = vrot.slane %v3540, 5
    %v3543 = vshll.u32 %v3461, 16
    %v3545 = vrot.slane %v3543, 6
    %v3546 = vor.u32 %v3542, %v3545
    %v3547 = vsel %vm680, %v3537, %v3546
    %v3549 = vshrl.u32 %v3462, 16
    %v3551 = vrot.slane %v3549, 5
    %v3552 = vshll.u32 %v3462, 16
    %v3554 = vrot.slane %v3552, 6
    %v3555 = vor.u32 %v3551, %v3554
    %v3556 = vsel %vm680, %v3546, %v3555
    %v3558 = vshrl.u32 %v3463, 16
    %v3560 = vrot.slane %v3558, 5
    %v3561 = vshll.u32 %v3463, 16
    %v3563 = vrot.slane %v3561, 6
    %v3564 = vor.u32 %v3560, %v3563
    %v3565 = vsel %vm680, %v3555, %v3564
    %v3567 = vshrl.u32 %v3464, 16
    %v3569 = vrot.slane %v3567, 5
    %v3570 = vshll.u32 %v3464, 16
    %v3572 = vrot.slane %v3570, 6
    %v3573 = vor.u32 %v3569, %v3572
    %v3574 = vsel %vm680, %v3564, %v3573
    %v3576 = vshrl.u32 %v3465, 16
    %v3578 = vrot.slane %v3576, 5
    %v3579 = vshll.u32 %v3465, 16
    %v3581 = vrot.slane %v3579, 6
    %v3582 = vor.u32 %v3578, %v3581
    %v3583 = vsel %vm680, %v3573, %v3582
    %v3585 = vshrl.u32 %v3466, 16
    %v3587 = vrot.slane %v3585, 5
    %v3588 = vshll.u32 %v3466, 16
    %v3590 = vrot.slane %v3588, 6
    %v3591 = vor.u32 %v3587, %v3590
    %v3592 = vsel %vm680, %v3582, %v3591
    %v3594 = vshrl.u32 %v3467, 16
    %v3596 = vrot.slane %v3594, 5
    %v3597 = vshll.u32 %v3467, 16
    %v3599 = vrot.slane %v3597, 6
    %v3600 = vor.u32 %v3596, %v3599
    %v3601 = vsel %vm680, %v3591, %v3600
    %3616 = vst [vmem:[#allocation3 + $0x20] sm:$0xff] %v3484
    %3617 = vst [vmem:[#allocation3 + $0x68] sm:$0xff] %v3493
    %3618 = vst [vmem:[#allocation3 + $0xb0] sm:$0xff] %v3502
    %3619 = vst [vmem:[#allocation3 + $0xf8] sm:$0xff] %v3511
    %3620 = vst [vmem:[#allocation3 + $0x140] sm:$0xff] %v3520
    %3621 = vst [vmem:[#allocation3 + $0x188] sm:$0xff] %v3529
    %3622 = vst [vmem:[#allocation3 + $0x1d0] sm:$0xff] %v3538
    %3623 = vst [vmem:[#allocation3 + $0x218] sm:$0xff] %v3547
    %3624 = vst [vmem:[#allocation3 + $0x260] sm:$0xff] %v3556
    %3625 = vst [vmem:[#allocation3 + $0x2a8] sm:$0xff] %v3565
    %3626 = vst [vmem:[#allocation3 + $0x2f0] sm:$0xff] %v3574
    %3627 = vst [vmem:[#allocation3 + $0x338] sm:$0xff] %v3583
    %3628 = vst [vmem:[#allocation3 + $0x380] sm:$0xff] %v3592
    %3629 = vst [vmem:[#allocation3 + $0x3c8] sm:$0xff] %v3601
    %v3630 = vld [vmem:[#allocation2] sm:$0xc0]
    %v3631 = vld [vmem:[#allocation2 + $0x8] sm:$0xff]
    %v3632 = vld [vmem:[#allocation2 + $0x10] sm:$0xff]
    %v3633 = vld [vmem:[#allocation2 + $0x18] sm:$0xff]
    %v3634 = vld [vmem:[#allocation2 + $0x20] sm:$0xff]
    %v3635 = vld [vmem:[#allocation2 + $0x28] sm:$0xff]
    %v3636 = vld [vmem:[#allocation2 + $0x30] sm:$0xff]
    %v3637 = vld [vmem:[#allocation2 + $0x38] sm:$0xff]
    %v3638 = vld [vmem:[#allocation2 + $0x40] sm:$0xff]
    %v3639 = vld [vmem:[#allocation2 + $0x48] sm:$0xff]
    %v3640 = vld [vmem:[#allocation2 + $0x50] sm:$0xff]
    %v3641 = vld [vmem:[#allocation2 + $0x58] sm:$0xff]
    %v3642 = vld [vmem:[#allocation2 + $0x60] sm:$0xff]
    %v3643 = vld [vmem:[#allocation2 + $0x68] sm:$0xff]
    %v3644 = vld [vmem:[#allocation2 + $0x70] sm:$0x3f]
    %v3660 = vrot.slane %v3630, 6
    %v3661 = vrot.slane %v3631, 6
    %v3662 = vsel %vm873, %v3660, %v3661
    %v3663 = vrot.slane %v3632, 6
    %v3664 = vsel %vm873, %v3661, %v3663
    %v3665 = vrot.slane %v3633, 6
    %v3666 = vsel %vm873, %v3663, %v3665
    %v3667 = vrot.slane %v3634, 6
    %v3668 = vsel %vm873, %v3665, %v3667
    %v3669 = vrot.slane %v3635, 6
    %v3670 = vsel %vm873, %v3667, %v3669
    %v3671 = vrot.slane %v3636, 6
    %v3672 = vsel %vm873, %v3669, %v3671
    %v3673 = vrot.slane %v3637, 6
    %v3674 = vsel %vm873, %v3671, %v3673
    %v3675 = vrot.slane %v3638, 6
    %v3676 = vsel %vm873, %v3673, %v3675
    %v3677 = vrot.slane %v3639, 6
    %v3678 = vsel %vm873, %v3675, %v3677
    %v3679 = vrot.slane %v3640, 6
    %v3680 = vsel %vm873, %v3677, %v3679
    %v3681 = vrot.slane %v3641, 6
    %v3682 = vsel %vm873, %v3679, %v3681
    %v3683 = vrot.slane %v3642, 6
    %v3684 = vsel %vm873, %v3681, %v3683
    %v3685 = vrot.slane %v3643, 6
    %v3686 = vsel %vm873, %v3683, %v3685
    %v3687 = vrot.slane %v3644, 6
    %v3688 = vsel %vm873, %v3685, %v3687
    %3703 = vst [vmem:[#allocation3 + $0x28] sm:$0xff] %v3662
    %3704 = vst [vmem:[#allocation3 + $0x70] sm:$0xff] %v3664
    %3705 = vst [vmem:[#allocation3 + $0xb8] sm:$0xff] %v3666
    %3706 = vst [vmem:[#allocation3 + $0x100] sm:$0xff] %v3668
    %3707 = vst [vmem:[#allocation3 + $0x148] sm:$0xff] %v3670
    %3708 = vst [vmem:[#allocation3 + $0x190] sm:$0xff] %v3672
    %3709 = vst [vmem:[#allocation3 + $0x1d8] sm:$0xff] %v3674
    %3710 = vst [vmem:[#allocation3 + $0x220] sm:$0xff] %v3676
    %3711 = vst [vmem:[#allocation3 + $0x268] sm:$0xff] %v3678
    %3712 = vst [vmem:[#allocation3 + $0x2b0] sm:$0xff] %v3680
    %3713 = vst [vmem:[#allocation3 + $0x2f8] sm:$0xff] %v3682
    %3714 = vst [vmem:[#allocation3 + $0x340] sm:$0xff] %v3684
    %3715 = vst [vmem:[#allocation3 + $0x388] sm:$0xff] %v3686
    %3716 = vst [vmem:[#allocation3 + $0x3d0] sm:$0xff] %v3688
    %v3717 = vld [vmem:[#allocation2 + $0x8] sm:$0xfc]
    %v3718 = vld [vmem:[#allocation2 + $0x10] sm:$0xff]
    %v3719 = vld [vmem:[#allocation2 + $0x18] sm:$0xff]
    %v3720 = vld [vmem:[#allocation2 + $0x20] sm:$0xff]
    %v3721 = vld [vmem:[#allocation2 + $0x28] sm:$0xff]
    %v3722 = vld [vmem:[#allocation2 + $0x30] sm:$0xff]
    %v3723 = vld [vmem:[#allocation2 + $0x38] sm:$0xff]
    %v3724 = vld [vmem:[#allocation2 + $0x40] sm:$0xff]
    %v3725 = vld [vmem:[#allocation2 + $0x48] sm:$0xff]
    %v3726 = vld [vmem:[#allocation2 + $0x50] sm:$0xff]
    %v3727 = vld [vmem:[#allocation2 + $0x58] sm:$0xff]
    %v3728 = vld [vmem:[#allocation2 + $0x60] sm:$0xff]
    %v3729 = vld [vmem:[#allocation2 + $0x68] sm:$0xff]
    %v3730 = vld [vmem:[#allocation2 + $0x70] sm:$0xff]
    %v3731 = vld [vmem:[#allocation2 + $0x78] sm:$0x3]
    %v3747 = vrot.slane %v3717, 2
    %v3748 = vrot.slane %v3718, 2
    %v3749 = vsel %vm961, %v3747, %v3748
    %v3750 = vrot.slane %v3719, 2
    %v3751 = vsel %vm961, %v3748, %v3750
    %v3752 = vrot.slane %v3720, 2
    %v3753 = vsel %vm961, %v3750, %v3752
    %v3754 = vrot.slane %v3721, 2
    %v3755 = vsel %vm961, %v3752, %v3754
    %v3756 = vrot.slane %v3722, 2
    %v3757 = vsel %vm961, %v3754, %v3756
    %v3758 = vrot.slane %v3723, 2
    %v3759 = vsel %vm961, %v3756, %v3758
    %v3760 = vrot.slane %v3724, 2
    %v3761 = vsel %vm961, %v3758, %v3760
    %v3762 = vrot.slane %v3725, 2
    %v3763 = vsel %vm961, %v3760, %v3762
    %v3764 = vrot.slane %v3726, 2
    %v3765 = vsel %vm961, %v3762, %v3764
    %v3766 = vrot.slane %v3727, 2
    %v3767 = vsel %vm961, %v3764, %v3766
    %v3768 = vrot.slane %v3728, 2
    %v3769 = vsel %vm961, %v3766, %v3768
    %v3770 = vrot.slane %v3729, 2
    %v3771 = vsel %vm961, %v3768, %v3770
    %v3772 = vrot.slane %v3730, 2
    %v3773 = vsel %vm961, %v3770, %v3772
    %v3774 = vrot.slane %v3731, 2
    %v3775 = vsel %vm961, %v3772, %v3774
    %3790 = vst [vmem:[#allocation3 + $0x30] sm:$0xff] %v3749
    %3791 = vst [vmem:[#allocation3 + $0x78] sm:$0xff] %v3751
    %3792 = vst [vmem:[#allocation3 + $0xc0] sm:$0xff] %v3753
    %3793 = vst [vmem:[#allocation3 + $0x108] sm:$0xff] %v3755
    %3794 = vst [vmem:[#allocation3 + $0x150] sm:$0xff] %v3757
    %3795 = vst [vmem:[#allocation3 + $0x198] sm:$0xff] %v3759
    %3796 = vst [vmem:[#allocation3 + $0x1e0] sm:$0xff] %v3761
    %3797 = vst [vmem:[#allocation3 + $0x228] sm:$0xff] %v3763
    %3798 = vst [vmem:[#allocation3 + $0x270] sm:$0xff] %v3765
    %3799 = vst [vmem:[#allocation3 + $0x2b8] sm:$0xff] %v3767
    %3800 = vst [vmem:[#allocation3 + $0x300] sm:$0xff] %v3769
    %3801 = vst [vmem:[#allocation3 + $0x348] sm:$0xff] %v3771
    %3802 = vst [vmem:[#allocation3 + $0x390] sm:$0xff] %v3773
    %3803 = vst [vmem:[#allocation3 + $0x3d8] sm:$0xff] %v3775
    %v3804 = vld [vmem:[#allocation2 + $0x8] sm:$0xfc]
    %v3805 = vld [vmem:[#allocation2 + $0x10] sm:$0xff]
    %v3806 = vld [vmem:[#allocation2 + $0x18] sm:$0xff]
    %v3807 = vld [vmem:[#allocation2 + $0x20] sm:$0xff]
    %v3808 = vld [vmem:[#allocation2 + $0x28] sm:$0xff]
    %v3809 = vld [vmem:[#allocation2 + $0x30] sm:$0xff]
    %v3810 = vld [vmem:[#allocation2 + $0x38] sm:$0xff]
    %v3811 = vld [vmem:[#allocation2 + $0x40] sm:$0xff]
    %v3812 = vld [vmem:[#allocation2 + $0x48] sm:$0xff]
    %v3813 = vld [vmem:[#allocation2 + $0x50] sm:$0xff]
    %v3814 = vld [vmem:[#allocation2 + $0x58] sm:$0xff]
    %v3815 = vld [vmem:[#allocation2 + $0x60] sm:$0xff]
    %v3816 = vld [vmem:[#allocation2 + $0x68] sm:$0xff]
    %v3817 = vld [vmem:[#allocation2 + $0x70] sm:$0xff]
    %v3818 = vld [vmem:[#allocation2 + $0x78] sm:$0x7]
    %v3820 = vshrl.u32 %v3804, 16
    %v3822 = vrot.slane %v3820, 2
    %v3823 = vshll.u32 %v3804, 16
    %v3825 = vrot.slane %v3823, 3
    %v3826 = vor.u32 %v3822, %v3825
    %v3828 = vshrl.u32 %v3805, 16
    %v3830 = vrot.slane %v3828, 2
    %v3831 = vshll.u32 %v3805, 16
    %v3833 = vrot.slane %v3831, 3
    %v3834 = vor.u32 %v3830, %v3833
    %v3835 = vsel %vm1034, %v3826, %v3834
    %v3837 = vshrl.u32 %v3806, 16
    %v3839 = vrot.slane %v3837, 2
    %v3840 = vshll.u32 %v3806, 16
    %v3842 = vrot.slane %v3840, 3
    %v3843 = vor.u32 %v3839, %v3842
    %v3844 = vsel %vm1034, %v3834, %v3843
    %v3846 = vshrl.u32 %v3807, 16
    %v3848 = vrot.slane %v3846, 2
    %v3849 = vshll.u32 %v3807, 16
    %v3851 = vrot.slane %v3849, 3
    %v3852 = vor.u32 %v3848, %v3851
    %v3853 = vsel %vm1034, %v3843, %v3852
    %v3855 = vshrl.u32 %v3808, 16
    %v3857 = vrot.slane %v3855, 2
    %v3858 = vshll.u32 %v3808, 16
    %v3860 = vrot.slane %v3858, 3
    %v3861 = vor.u32 %v3857, %v3860
    %v3862 = vsel %vm1034, %v3852, %v3861
    %v3864 = vshrl.u32 %v3809, 16
    %v3866 = vrot.slane %v3864, 2
    %v3867 = vshll.u32 %v3809, 16
    %v3869 = vrot.slane %v3867, 3
    %v3870 = vor.u32 %v3866, %v3869
    %v3871 = vsel %vm1034, %v3861, %v3870
    %v3873 = vshrl.u32 %v3810, 16
    %v3875 = vrot.slane %v3873, 2
    %v3876 = vshll.u32 %v3810, 16
    %v3878 = vrot.slane %v3876, 3
    %v3879 = vor.u32 %v3875, %v3878
    %v3880 = vsel %vm1034, %v3870, %v3879
    %v3882 = vshrl.u32 %v3811, 16
    %v3884 = vrot.slane %v3882, 2
    %v3885 = vshll.u32 %v3811, 16
    %v3887 = vrot.slane %v3885, 3
    %v3888 = vor.u32 %v3884, %v3887
    %v3889 = vsel %vm1034, %v3879, %v3888
    %v3891 = vshrl.u32 %v3812, 16
    %v3893 = vrot.slane %v3891, 2
    %v3894 = vshll.u32 %v3812, 16
    %v3896 = vrot.slane %v3894, 3
    %v3897 = vor.u32 %v3893, %v3896
    %v3898 = vsel %vm1034, %v3888, %v3897
    %v3900 = vshrl.u32 %v3813, 16
    %v3902 = vrot.slane %v3900, 2
    %v3903 = vshll.u32 %v3813, 16
    %v3905 = vrot.slane %v3903, 3
    %v3906 = vor.u32 %v3902, %v3905
    %v3907 = vsel %vm1034, %v3897, %v3906
    %v3909 = vshrl.u32 %v3814, 16
    %v3911 = vrot.slane %v3909, 2
    %v3912 = vshll.u32 %v3814, 16
    %v3914 = vrot.slane %v3912, 3
    %v3915 = vor.u32 %v3911, %v3914
    %v3916 = vsel %vm1034, %v3906, %v3915
    %v3918 = vshrl.u32 %v3815, 16
    %v3920 = vrot.slane %v3918, 2
    %v3921 = vshll.u32 %v3815, 16
    %v3923 = vrot.slane %v3921, 3
    %v3924 = vor.u32 %v3920, %v3923
    %v3925 = vsel %vm1034, %v3915, %v3924
    %v3927 = vshrl.u32 %v3816, 16
    %v3929 = vrot.slane %v3927, 2
    %v3930 = vshll.u32 %v3816, 16
    %v3932 = vrot.slane %v3930, 3
    %v3933 = vor.u32 %v3929, %v3932
    %v3934 = vsel %vm1034, %v3924, %v3933
    %v3936 = vshrl.u32 %v3817, 16
    %v3938 = vrot.slane %v3936, 2
    %v3939 = vshll.u32 %v3817, 16
    %v3941 = vrot.slane %v3939, 3
    %v3942 = vor.u32 %v3938, %v3941
    %v3943 = vsel %vm1034, %v3933, %v3942
    %v3945 = vshrl.u32 %v3818, 16
    %v3947 = vrot.slane %v3945, 2
    %v3948 = vshll.u32 %v3818, 16
    %v3950 = vrot.slane %v3948, 3
    %v3951 = vor.u32 %v3947, %v3950
    %v3952 = vsel %vm1034, %v3942, %v3951
    %3967 = vst [vmem:[#allocation3 + $0x38] sm:$0xff] %v3835
    %3968 = vst [vmem:[#allocation3 + $0x80] sm:$0xff] %v3844
    %3969 = vst [vmem:[#allocation3 + $0xc8] sm:$0xff] %v3853
    %3970 = vst [vmem:[#allocation3 + $0x110] sm:$0xff] %v3862
    %3971 = vst [vmem:[#allocation3 + $0x158] sm:$0xff] %v3871
    %3972 = vst [vmem:[#allocation3 + $0x1a0] sm:$0xff] %v3880
    %3973 = vst [vmem:[#allocation3 + $0x1e8] sm:$0xff] %v3889
    %3974 = vst [vmem:[#allocation3 + $0x230] sm:$0xff] %v3898
    %3975 = vst [vmem:[#allocation3 + $0x278] sm:$0xff] %v3907
    %3976 = vst [vmem:[#allocation3 + $0x2c0] sm:$0xff] %v3916
    %3977 = vst [vmem:[#allocation3 + $0x308] sm:$0xff] %v3925
    %3978 = vst [vmem:[#allocation3 + $0x350] sm:$0xff] %v3934
    %3979 = vst [vmem:[#allocation3 + $0x398] sm:$0xff] %v3943
    %3980 = vst [vmem:[#allocation3 + $0x3e0] sm:$0xff] %v3952
    %v3981 = vld [vmem:[#allocation2 + $0x8] sm:$0xf8]
    %v3982 = vld [vmem:[#allocation2 + $0x10] sm:$0xff]
    %v3983 = vld [vmem:[#allocation2 + $0x18] sm:$0xff]
    %v3984 = vld [vmem:[#allocation2 + $0x20] sm:$0xff]
    %v3985 = vld [vmem:[#allocation2 + $0x28] sm:$0xff]
    %v3986 = vld [vmem:[#allocation2 + $0x30] sm:$0xff]
    %v3987 = vld [vmem:[#allocation2 + $0x38] sm:$0xff]
    %v3988 = vld [vmem:[#allocation2 + $0x40] sm:$0xff]
    %v3989 = vld [vmem:[#allocation2 + $0x48] sm:$0xff]
    %v3990 = vld [vmem:[#allocation2 + $0x50] sm:$0xff]
    %v3991 = vld [vmem:[#allocation2 + $0x58] sm:$0xff]
    %v3992 = vld [vmem:[#allocation2 + $0x60] sm:$0xff]
    %v3993 = vld [vmem:[#allocation2 + $0x68] sm:$0xff]
    %v3994 = vld [vmem:[#allocation2 + $0x70] sm:$0xff]
    %v3995 = vld [vmem:[#allocation2 + $0x78] sm:$0x7]
    %v4011 = vrot.slane %v3981, 3
    %v4012 = vrot.slane %v3982, 3
    %v4013 = vsel %vm1227, %v4011, %v4012
    %v4014 = vrot.slane %v3983, 3
    %v4015 = vsel %vm1227, %v4012, %v4014
    %v4016 = vrot.slane %v3984, 3
    %v4017 = vsel %vm1227, %v4014, %v4016
    %v4018 = vrot.slane %v3985, 3
    %v4019 = vsel %vm1227, %v4016, %v4018
    %v4020 = vrot.slane %v3986, 3
    %v4021 = vsel %vm1227, %v4018, %v4020
    %v4022 = vrot.slane %v3987, 3
    %v4023 = vsel %vm1227, %v4020, %v4022
    %v4024 = vrot.slane %v3988, 3
    %v4025 = vsel %vm1227, %v4022, %v4024
    %v4026 = vrot.slane %v3989, 3
    %v4027 = vsel %vm1227, %v4024, %v4026
    %v4028 = vrot.slane %v3990, 3
    %v4029 = vsel %vm1227, %v4026, %v4028
    %v4030 = vrot.slane %v3991, 3
    %v4031 = vsel %vm1227, %v4028, %v4030
    %v4032 = vrot.slane %v3992, 3
    %v4033 = vsel %vm1227, %v4030, %v4032
    %v4034 = vrot.slane %v3993, 3
    %v4035 = vsel %vm1227, %v4032, %v4034
    %v4036 = vrot.slane %v3994, 3
    %v4037 = vsel %vm1227, %v4034, %v4036
    %v4038 = vrot.slane %v3995, 3
    %v4039 = vsel %vm1227, %v4036, %v4038
    %4054 = vst [vmem:[#allocation3 + $0x40] sm:$0xff] %v4013
    %4055 = vst [vmem:[#allocation3 + $0x88] sm:$0xff] %v4015
    %4056 = vst [vmem:[#allocation3 + $0xd0] sm:$0xff] %v4017
    %4057 = vst [vmem:[#allocation3 + $0x118] sm:$0xff] %v4019
    %4058 = vst [vmem:[#allocation3 + $0x160] sm:$0xff] %v4021
    %4059 = vst [vmem:[#allocation3 + $0x1a8] sm:$0xff] %v4023
    %4060 = vst [vmem:[#allocation3 + $0x1f0] sm:$0xff] %v4025
    %4061 = vst [vmem:[#allocation3 + $0x238] sm:$0xff] %v4027
    %4062 = vst [vmem:[#allocation3 + $0x280] sm:$0xff] %v4029
    %4063 = vst [vmem:[#allocation3 + $0x2c8] sm:$0xff] %v4031
    %4064 = vst [vmem:[#allocation3 + $0x310] sm:$0xff] %v4033
    %4065 = vst [vmem:[#allocation3 + $0x358] sm:$0xff] %v4035
    %4066 = vst [vmem:[#allocation3 + $0x3a0] sm:$0xff] %v4037
    %4067 = vst [vmem:[#allocation3 + $0x3e8] sm:$0xff] %v4039
    %v4068 = vld [vmem:[#allocation3] sm:$0xff]
    %v4069 = vld [vmem:[#allocation3 + $0x8] sm:$0xff]
    %v4070 = vld [vmem:[#allocation3 + $0x10] sm:$0xff]
    %v4071 = vld [vmem:[#allocation3 + $0x18] sm:$0xff]
    %v4072 = vld [vmem:[#allocation3 + $0x20] sm:$0xff]
    %v4073 = vld [vmem:[#allocation3 + $0x28] sm:$0xff]
    %v4074 = vld [vmem:[#allocation3 + $0x30] sm:$0xff]
    %v4075 = vld [vmem:[#allocation3 + $0x38] sm:$0xff]
    %v4076 = vld [vmem:[#allocation3 + $0x40] sm:$0xff]
    %v4077 = vld [vmem:[#allocation3 + $0x48] sm:$0xff]
    %v4078 = vld [vmem:[#allocation3 + $0x50] sm:$0xff]
    %v4079 = vld [vmem:[#allocation3 + $0x58] sm:$0xff]
    %v4080 = vld [vmem:[#allocation3 + $0x60] sm:$0xff]
    %v4081 = vld [vmem:[#allocation3 + $0x68] sm:$0xff]
    %v4082 = vld [vmem:[#allocation3 + $0x70] sm:$0xff]
    %v4083 = vld [vmem:[#allocation3 + $0x78] sm:$0xff]
    %v4084 = vld [vmem:[#allocation3 + $0x80] sm:$0xff]
    %v4085 = vld [vmem:[#allocation3 + $0x88] sm:$0xff]
    %v4086 = vld [vmem:[#allocation3 + $0x90] sm:$0xff]
    %v4087 = vld [vmem:[#allocation3 + $0x98] sm:$0xff]
    %v4088 = vld [vmem:[#allocation3 + $0xa0] sm:$0xff]
    %v4089 = vld [vmem:[#allocation3 + $0xa8] sm:$0xff]
    %v4090 = vld [vmem:[#allocation3 + $0xb0] sm:$0xff]
    %v4091 = vld [vmem:[#allocation3 + $0xb8] sm:$0xff]
    %v4092 = vld [vmem:[#allocation3 + $0xc0] sm:$0xff]
    %v4093 = vld [vmem:[#allocation3 + $0xc8] sm:$0xff]
    %v4094 = vld [vmem:[#allocation3 + $0xd0] sm:$0xff]
    %v4095 = vld [vmem:[#allocation3 + $0xd8] sm:$0xff]
    %v4096 = vld [vmem:[#allocation3 + $0xe0] sm:$0xff]
    %v4097 = vld [vmem:[#allocation3 + $0xe8] sm:$0xff]
    %v4098 = vld [vmem:[#allocation3 + $0xf0] sm:$0xff]
    %v4099 = vld [vmem:[#allocation3 + $0xf8] sm:$0xff]
    %v4100 = vld [vmem:[#allocation3 + $0x100] sm:$0xff]
    %v4101 = vld [vmem:[#allocation3 + $0x108] sm:$0xff]
    %v4102 = vld [vmem:[#allocation3 + $0x110] sm:$0xff]
    %v4103 = vld [vmem:[#allocation3 + $0x118] sm:$0xff]
    %v4104 = vld [vmem:[#allocation3 + $0x120] sm:$0xff]
    %v4105 = vld [vmem:[#allocation3 + $0x128] sm:$0xff]
    %v4106 = vld [vmem:[#allocation3 + $0x130] sm:$0xff]
    %v4107 = vld [vmem:[#allocation3 + $0x138] sm:$0xff]
    %v4108 = vld [vmem:[#allocation3 + $0x140] sm:$0xff]
    %v4109 = vld [vmem:[#allocation3 + $0x148] sm:$0xff]
    %v4110 = vld [vmem:[#allocation3 + $0x150] sm:$0xff]
    %v4111 = vld [vmem:[#allocation3 + $0x158] sm:$0xff]
    %v4112 = vld [vmem:[#allocation3 + $0x160] sm:$0xff]
    %v4113 = vld [vmem:[#allocation3 + $0x168] sm:$0xff]
    %v4114 = vld [vmem:[#allocation3 + $0x170] sm:$0xff]
    %v4115 = vld [vmem:[#allocation3 + $0x178] sm:$0xff]
    %v4116 = vld [vmem:[#allocation3 + $0x180] sm:$0xff]
    %v4117 = vld [vmem:[#allocation3 + $0x188] sm:$0xff]
    %v4118 = vld [vmem:[#allocation3 + $0x190] sm:$0xff]
    %v4119 = vld [vmem:[#allocation3 + $0x198] sm:$0xff]
    %v4120 = vld [vmem:[#allocation3 + $0x1a0] sm:$0xff]
    %v4121 = vld [vmem:[#allocation3 + $0x1a8] sm:$0xff]
    %v4122 = vld [vmem:[#allocation3 + $0x1b0] sm:$0xff]
    %v4123 = vld [vmem:[#allocation3 + $0x1b8] sm:$0xff]
    %v4124 = vld [vmem:[#allocation3 + $0x1c0] sm:$0xff]
    %v4125 = vld [vmem:[#allocation3 + $0x1c8] sm:$0xff]
    %v4126 = vld [vmem:[#allocation3 + $0x1d0] sm:$0xff]
    %v4127 = vld [vmem:[#allocation3 + $0x1d8] sm:$0xff]
    %v4128 = vld [vmem:[#allocation3 + $0x1e0] sm:$0xff]
    %v4129 = vld [vmem:[#allocation3 + $0x1e8] sm:$0xff]
    %v4130 = vld [vmem:[#allocation3 + $0x1f0] sm:$0xff]
    %v4131 = vld [vmem:[#allocation3 + $0x1f8] sm:$0xff]
    %v4132 = vld [vmem:[#allocation3 + $0x200] sm:$0xff]
    %v4133 = vld [vmem:[#allocation3 + $0x208] sm:$0xff]
    %v4134 = vld [vmem:[#allocation3 + $0x210] sm:$0xff]
    %v4135 = vld [vmem:[#allocation3 + $0x218] sm:$0xff]
    %v4136 = vld [vmem:[#allocation3 + $0x220] sm:$0xff]
    %v4137 = vld [vmem:[#allocation3 + $0x228] sm:$0xff]
    %v4138 = vld [vmem:[#allocation3 + $0x230] sm:$0xff]
    %v4139 = vld [vmem:[#allocation3 + $0x238] sm:$0xff]
    %v4140 = vld [vmem:[#allocation3 + $0x240] sm:$0xff]
    %v4141 = vld [vmem:[#allocation3 + $0x248] sm:$0xff]
    %v4142 = vld [vmem:[#allocation3 + $0x250] sm:$0xff]
    %v4143 = vld [vmem:[#allocation3 + $0x258] sm:$0xff]
    %v4144 = vld [vmem:[#allocation3 + $0x260] sm:$0xff]
    %v4145 = vld [vmem:[#allocation3 + $0x268] sm:$0xff]
    %v4146 = vld [vmem:[#allocation3 + $0x270] sm:$0xff]
    %v4147 = vld [vmem:[#allocation3 + $0x278] sm:$0xff]
    %v4148 = vld [vmem:[#allocation3 + $0x280] sm:$0xff]
    %v4149 = vld [vmem:[#allocation3 + $0x288] sm:$0xff]
    %v4150 = vld [vmem:[#allocation3 + $0x290] sm:$0xff]
    %v4151 = vld [vmem:[#allocation3 + $0x298] sm:$0xff]
    %v4152 = vld [vmem:[#allocation3 + $0x2a0] sm:$0xff]
    %v4153 = vld [vmem:[#allocation3 + $0x2a8] sm:$0xff]
    %v4154 = vld [vmem:[#allocation3 + $0x2b0] sm:$0xff]
    %v4155 = vld [vmem:[#allocation3 + $0x2b8] sm:$0xff]
    %v4156 = vld [vmem:[#allocation3 + $0x2c0] sm:$0xff]
    %v4157 = vld [vmem:[#allocation3 + $0x2c8] sm:$0xff]
    %v4158 = vld [vmem:[#allocation3 + $0x2d0] sm:$0xff]
    %v4159 = vld [vmem:[#allocation3 + $0x2d8] sm:$0xff]
    %v4160 = vld [vmem:[#allocation3 + $0x2e0] sm:$0xff]
    %v4161 = vld [vmem:[#allocation3 + $0x2e8] sm:$0xff]
    %v4162 = vld [vmem:[#allocation3 + $0x2f0] sm:$0xff]
    %v4163 = vld [vmem:[#allocation3 + $0x2f8] sm:$0xff]
    %v4164 = vld [vmem:[#allocation3 + $0x300] sm:$0xff]
    %v4165 = vld [vmem:[#allocation3 + $0x308] sm:$0xff]
    %v4166 = vld [vmem:[#allocation3 + $0x310] sm:$0xff]
    %v4167 = vld [vmem:[#allocation3 + $0x318] sm:$0xff]
    %v4168 = vld [vmem:[#allocation3 + $0x320] sm:$0xff]
    %v4169 = vld [vmem:[#allocation3 + $0x328] sm:$0xff]
    %v4170 = vld [vmem:[#allocation3 + $0x330] sm:$0xff]
    %v4171 = vld [vmem:[#allocation3 + $0x338] sm:$0xff]
    %v4172 = vld [vmem:[#allocation3 + $0x340] sm:$0xff]
    %v4173 = vld [vmem:[#allocation3 + $0x348] sm:$0xff]
    %v4174 = vld [vmem:[#allocation3 + $0x350] sm:$0xff]
    %v4175 = vld [vmem:[#allocation3 + $0x358] sm:$0xff]
    %v4176 = vld [vmem:[#allocation3 + $0x360] sm:$0xff]
    %v4177 = vld [vmem:[#allocation3 + $0x368] sm:$0xff]
    %v4178 = vld [vmem:[#allocation3 + $0x370] sm:$0xff]
    %v4179 = vld [vmem:[#allocation3 + $0x378] sm:$0xff]
    %v4180 = vld [vmem:[#allocation3 + $0x380] sm:$0xff]
    %v4181 = vld [vmem:[#allocation3 + $0x388] sm:$0xff]
    %v4182 = vld [vmem:[#allocation3 + $0x390] sm:$0xff]
    %v4183 = vld [vmem:[#allocation3 + $0x398] sm:$0xff]
    %v4184 = vld [vmem:[#allocation3 + $0x3a0] sm:$0xff]
    %v4185 = vld [vmem:[#allocation3 + $0x3a8] sm:$0xff]
    %v4186 = vld [vmem:[#allocation3 + $0x3b0] sm:$0xff]
    %v4187 = vld [vmem:[#allocation3 + $0x3b8] sm:$0xff]
    %v4188 = vld [vmem:[#allocation3 + $0x3c0] sm:$0xff]
    %v4189 = vld [vmem:[#allocation3 + $0x3c8] sm:$0xff]
    %v4190 = vld [vmem:[#allocation3 + $0x3d0] sm:$0xff]
    %v4191 = vld [vmem:[#allocation3 + $0x3d8] sm:$0xff]
    %v4192 = vld [vmem:[#allocation3 + $0x3e0] sm:$0xff]
    %v4193 = vld [vmem:[#allocation3 + $0x3e8] sm:$0xff]
    %v4194 = vld [vmem:[#allocation9] sm:$0xf]
    %v4195 = vld [vmem:[#allocation9 + $0x4] sm:$0xf]
    %v4196 = vld [vmem:[#allocation9 + $0x8] sm:$0xf]
    %v4197 = vld [vmem:[#allocation9 + $0xc] sm:$0xf]
    %v4198 = vld [vmem:[#allocation9 + $0x10] sm:$0xf]
    %v4199 = vld [vmem:[#allocation9 + $0x14] sm:$0xf]
    %v4200 = vld [vmem:[#allocation9 + $0x18] sm:$0xf]
    %v4201 = vld [vmem:[#allocation9 + $0x1c] sm:$0xf]
    %v4202 = vld [vmem:[#allocation9 + $0x20] sm:$0xf]
    %v4203 = vld [vmem:[#allocation9 + $0x24] sm:$0xf]
    %v4204 = vld [vmem:[#allocation9 + $0x28] sm:$0xf]
    %v4205 = vld [vmem:[#allocation9 + $0x2c] sm:$0xf]
    %v4206 = vld [vmem:[#allocation9 + $0x30] sm:$0xf]
    %v4207 = vld [vmem:[#allocation9 + $0x34] sm:$0xf]
    %v4208 = vld [vmem:[#allocation9 + $0x38] sm:$0xf]
    %v4209 = vld [vmem:[#allocation9 + $0x3c] sm:$0xf]
    %v4210 = vld [vmem:[#allocation9 + $0x40] sm:$0xf]
    %v4211 = vld [vmem:[#allocation9 + $0x44] sm:$0xf]
    %v4212 = vld [vmem:[#allocation9 + $0x48] sm:$0xf]
    %v4213 = vld [vmem:[#allocation9 + $0x4c] sm:$0xf]
    %v4214 = vld [vmem:[#allocation9 + $0x50] sm:$0xf]
    %v4215 = vld [vmem:[#allocation9 + $0x54] sm:$0xf]
    %v4216 = vld [vmem:[#allocation9 + $0x58] sm:$0xf]
    %v4217 = vld [vmem:[#allocation9 + $0x5c] sm:$0xf]
    %v4218 = vld [vmem:[#allocation9 + $0x60] sm:$0xf]
    %v4219 = vld [vmem:[#allocation9 + $0x64] sm:$0xf]
    %v4220 = vld [vmem:[#allocation9 + $0x68] sm:$0xf]
    %v4221 = vld [vmem:[#allocation9 + $0x6c] sm:$0xf]
    %v4222 = vld [vmem:[#allocation9 + $0x70] sm:$0xf]
    %v4223 = vld [vmem:[#allocation9 + $0x74] sm:$0xf]
    %v4224 = vld [vmem:[#allocation9 + $0x78] sm:$0xf]
    %v4225 = vld [vmem:[#allocation9 + $0x7c] sm:$0xf]
    %v4226 = vld [vmem:[#allocation9 + $0x80] sm:$0xf]
    %v4227 = vld [vmem:[#allocation9 + $0x84] sm:$0xf]
    %v4228 = vld [vmem:[#allocation9 + $0x88] sm:$0xf]
    %v4229 = vld [vmem:[#allocation9 + $0x8c] sm:$0xf]
    %v4230 = vld [vmem:[#allocation9 + $0x90] sm:$0xf]
    %v4231 = vld [vmem:[#allocation9 + $0x94] sm:$0xf]
    %v4232 = vld [vmem:[#allocation9 + $0x98] sm:$0xf]
    %v4233 = vld [vmem:[#allocation9 + $0x9c] sm:$0xf]
    %v4234 = vld [vmem:[#allocation9 + $0xa0] sm:$0xf]
    %v4235 = vld [vmem:[#allocation9 + $0xa4] sm:$0xf]
    %v4236 = vld [vmem:[#allocation9 + $0xa8] sm:$0xf]
    %v4237 = vld [vmem:[#allocation9 + $0xac] sm:$0xf]
    %v4238 = vld [vmem:[#allocation9 + $0xb0] sm:$0xf]
    %v4239 = vld [vmem:[#allocation9 + $0xb4] sm:$0xf]
    %v4240 = vld [vmem:[#allocation9 + $0xb8] sm:$0xf]
    %v4241 = vld [vmem:[#allocation9 + $0xbc] sm:$0xf]
    %v4242 = vld [vmem:[#allocation9 + $0xc0] sm:$0xf]
    %v4243 = vld [vmem:[#allocation9 + $0xc4] sm:$0xf]
    %v4244 = vld [vmem:[#allocation9 + $0xc8] sm:$0xf]
    %v4245 = vld [vmem:[#allocation9 + $0xcc] sm:$0xf]
    %v4246 = vld [vmem:[#allocation9 + $0xd0] sm:$0xf]
    %v4247 = vld [vmem:[#allocation9 + $0xd4] sm:$0xf]
    %v4248 = vld [vmem:[#allocation9 + $0xd8] sm:$0xf]
    %v4249 = vld [vmem:[#allocation9 + $0xdc] sm:$0xf]
    %v4250 = vld [vmem:[#allocation9 + $0xe0] sm:$0xf]
    %v4251 = vld [vmem:[#allocation9 + $0xe4] sm:$0xf]
    %v4252 = vld [vmem:[#allocation9 + $0xe8] sm:$0xf]
    %v4253 = vld [vmem:[#allocation9 + $0xec] sm:$0xf]
    %v4254 = vld [vmem:[#allocation9 + $0xf0] sm:$0xf]
    %v4255 = vld [vmem:[#allocation9 + $0xf4] sm:$0xf]
    %v4256 = vld [vmem:[#allocation9 + $0xf8] sm:$0xf]
    %v4257 = vld [vmem:[#allocation9 + $0xfc] sm:$0xf]
    %v4258 = vld [vmem:[#allocation9 + $0x100] sm:$0xf]
    %v4259 = vld [vmem:[#allocation9 + $0x104] sm:$0xf]
    %v4260 = vld [vmem:[#allocation9 + $0x108] sm:$0xf]
    %v4261 = vld [vmem:[#allocation9 + $0x10c] sm:$0xf]
    %v4262 = vld [vmem:[#allocation9 + $0x110] sm:$0xf]
    %v4263 = vld [vmem:[#allocation9 + $0x114] sm:$0xf]
    %v4264 = vld [vmem:[#allocation9 + $0x118] sm:$0xf]
    %v4265 = vld [vmem:[#allocation9 + $0x11c] sm:$0xf]
    %v4266 = vld [vmem:[#allocation9 + $0x120] sm:$0xf]
    %v4267 = vld [vmem:[#allocation9 + $0x124] sm:$0xf]
    %v4268 = vld [vmem:[#allocation9 + $0x128] sm:$0xf]
    %v4269 = vld [vmem:[#allocation9 + $0x12c] sm:$0xf]
    %v4270 = vld [vmem:[#allocation9 + $0x130] sm:$0xf]
    %v4271 = vld [vmem:[#allocation9 + $0x134] sm:$0xf]
    %v4272 = vld [vmem:[#allocation9 + $0x138] sm:$0xf]
    %v4273 = vld [vmem:[#allocation9 + $0x13c] sm:$0xf]
    %v4274 = vld [vmem:[#allocation9 + $0x140] sm:$0xf]
    %v4275 = vld [vmem:[#allocation9 + $0x144] sm:$0xf]
    %v4276 = vld [vmem:[#allocation9 + $0x148] sm:$0xf]
    %v4277 = vld [vmem:[#allocation9 + $0x14c] sm:$0xf]
    %v4278 = vld [vmem:[#allocation9 + $0x150] sm:$0xf]
    %v4279 = vld [vmem:[#allocation9 + $0x154] sm:$0xf]
    %v4280 = vld [vmem:[#allocation9 + $0x158] sm:$0xf]
    %v4281 = vld [vmem:[#allocation9 + $0x15c] sm:$0xf]
    %v4282 = vld [vmem:[#allocation9 + $0x160] sm:$0xf]
    %v4283 = vld [vmem:[#allocation9 + $0x164] sm:$0xf]
    %v4284 = vld [vmem:[#allocation9 + $0x168] sm:$0xf]
    %v4285 = vld [vmem:[#allocation9 + $0x16c] sm:$0xf]
    %v4286 = vld [vmem:[#allocation9 + $0x170] sm:$0xf]
    %v4287 = vld [vmem:[#allocation9 + $0x174] sm:$0xf]
    %v4288 = vld [vmem:[#allocation9 + $0x178] sm:$0xf]
    %v4289 = vld [vmem:[#allocation9 + $0x17c] sm:$0xf]
    %v4290 = vld [vmem:[#allocation9 + $0x180] sm:$0xf]
    %v4291 = vld [vmem:[#allocation9 + $0x184] sm:$0xf]
    %v4292 = vld [vmem:[#allocation9 + $0x188] sm:$0xf]
    %v4293 = vld [vmem:[#allocation9 + $0x18c] sm:$0xf]
    %v4294 = vld [vmem:[#allocation9 + $0x190] sm:$0xf]
    %v4295 = vld [vmem:[#allocation9 + $0x194] sm:$0xf]
    %v4296 = vld [vmem:[#allocation9 + $0x198] sm:$0xf]
    %v4297 = vld [vmem:[#allocation9 + $0x19c] sm:$0xf]
    %v4298 = vld [vmem:[#allocation9 + $0x1a0] sm:$0xf]
    %v4299 = vld [vmem:[#allocation9 + $0x1a4] sm:$0xf]
    %v4300 = vld [vmem:[#allocation9 + $0x1a8] sm:$0xf]
    %v4301 = vld [vmem:[#allocation9 + $0x1ac] sm:$0xf]
    %v4302 = vld [vmem:[#allocation9 + $0x1b0] sm:$0xf]
    %v4303 = vld [vmem:[#allocation9 + $0x1b4] sm:$0xf]
    %v4304 = vld [vmem:[#allocation9 + $0x1b8] sm:$0xf]
    %v4305 = vld [vmem:[#allocation9 + $0x1bc] sm:$0xf]
    %v4306 = vld [vmem:[#allocation9 + $0x1c0] sm:$0xf]
    %v4307 = vld [vmem:[#allocation9 + $0x1c4] sm:$0xf]
    %v4308 = vld [vmem:[#allocation9 + $0x1c8] sm:$0xf]
    %v4309 = vld [vmem:[#allocation9 + $0x1cc] sm:$0xf]
    %v4310 = vld [vmem:[#allocation9 + $0x1d0] sm:$0xf]
    %v4311 = vld [vmem:[#allocation9 + $0x1d4] sm:$0xf]
    %v4312 = vld [vmem:[#allocation9 + $0x1d8] sm:$0xf]
    %v4313 = vld [vmem:[#allocation9 + $0x1dc] sm:$0xf]
    %v4314 = vld [vmem:[#allocation9 + $0x1e0] sm:$0xf]
    %v4315 = vld [vmem:[#allocation9 + $0x1e4] sm:$0xf]
    %v4316 = vld [vmem:[#allocation9 + $0x1e8] sm:$0xf]
    %v4317 = vld [vmem:[#allocation9 + $0x1ec] sm:$0xf]
    %v4318 = vld [vmem:[#allocation9 + $0x1f0] sm:$0xf]
    %v4319 = vld [vmem:[#allocation9 + $0x1f4] sm:$0xf]
    %v4320 = vld [vmem:[#allocation9 + $0x1f8] sm:$0xf]
    %v4321 = vld [vmem:[#allocation9 + $0x1fc] sm:$0xf]
    %v4322 = vld [vmem:[#allocation9 + $0x200] sm:$0xf]
    %v4323 = vld [vmem:[#allocation9 + $0x204] sm:$0xf]
    %v4324 = vld [vmem:[#allocation9 + $0x208] sm:$0xf]
    %v4325 = vld [vmem:[#allocation9 + $0x20c] sm:$0xf]
    %v4326 = vld [vmem:[#allocation9 + $0x210] sm:$0xf]
    %v4327 = vld [vmem:[#allocation9 + $0x214] sm:$0xf]
    %v4328 = vld [vmem:[#allocation9 + $0x218] sm:$0xf]
    %v4329 = vld [vmem:[#allocation9 + $0x21c] sm:$0xf]
    %v4330 = vld [vmem:[#allocation9 + $0x220] sm:$0xf]
    %v4331 = vld [vmem:[#allocation9 + $0x224] sm:$0xf]
    %v4332 = vld [vmem:[#allocation9 + $0x228] sm:$0xf]
    %v4333 = vld [vmem:[#allocation9 + $0x22c] sm:$0xf]
    %v4334 = vld [vmem:[#allocation9 + $0x230] sm:$0xf]
    %v4335 = vld [vmem:[#allocation9 + $0x234] sm:$0xf]
    %v4336 = vld [vmem:[#allocation9 + $0x238] sm:$0xf]
    %v4337 = vld [vmem:[#allocation9 + $0x23c] sm:$0xf]
    %v4338 = vld [vmem:[%s5] sm:$0x1]
    %v4340 = vlaneseq
    %v4341 = vshrl.u32 %v4340, 7
    %v4342 = vsub.s32 0, %v4341
    %v4343 = vrot.slane %v4338, %v4342
    %v4489 = vunpack.c.l.b16 %v4194
    %v4490 = vunpack.c.l.b16 %v4195
    %v4491 = vunpack.c.l.b16 %v4196
    %v4492 = vunpack.c.l.b16 %v4197
    %v4493 = vunpack.c.l.b16 %v4198
    %v4494 = vunpack.c.l.b16 %v4199
    %v4495 = vunpack.c.l.b16 %v4200
    %v4496 = vunpack.c.l.b16 %v4201
    %v4497 = vunpack.c.l.b16 %v4202
    %v4498 = vunpack.c.l.b16 %v4203
    %v4499 = vunpack.c.l.b16 %v4204
    %v4500 = vunpack.c.l.b16 %v4205
    %v4501 = vunpack.c.l.b16 %v4206
    %v4502 = vunpack.c.l.b16 %v4207
    %v4503 = vunpack.c.l.b16 %v4208
    %v4504 = vunpack.c.l.b16 %v4209
    %v4505 = vunpack.c.l.b16 %v4210
    %v4506 = vunpack.c.l.b16 %v4211
    %v4507 = vunpack.c.l.b16 %v4212
    %v4508 = vunpack.c.l.b16 %v4213
    %v4509 = vunpack.c.l.b16 %v4214
    %v4510 = vunpack.c.l.b16 %v4215
    %v4511 = vunpack.c.l.b16 %v4216
    %v4512 = vunpack.c.l.b16 %v4217
    %v4513 = vunpack.c.l.b16 %v4218
    %v4514 = vunpack.c.l.b16 %v4219
    %v4515 = vunpack.c.l.b16 %v4220
    %v4516 = vunpack.c.l.b16 %v4221
    %v4517 = vunpack.c.l.b16 %v4222
    %v4518 = vunpack.c.l.b16 %v4223
    %v4519 = vunpack.c.l.b16 %v4224
    %v4520 = vunpack.c.l.b16 %v4225
    %v4521 = vunpack.c.l.b16 %v4226
    %v4522 = vunpack.c.l.b16 %v4227
    %v4523 = vunpack.c.l.b16 %v4228
    %v4524 = vunpack.c.l.b16 %v4229
    %v4525 = vunpack.c.l.b16 %v4230
    %v4526 = vunpack.c.l.b16 %v4231
    %v4527 = vunpack.c.l.b16 %v4232
    %v4528 = vunpack.c.l.b16 %v4233
    %v4529 = vunpack.c.l.b16 %v4234
    %v4530 = vunpack.c.l.b16 %v4235
    %v4531 = vunpack.c.l.b16 %v4236
    %v4532 = vunpack.c.l.b16 %v4237
    %v4533 = vunpack.c.l.b16 %v4238
    %v4534 = vunpack.c.l.b16 %v4239
    %v4535 = vunpack.c.l.b16 %v4240
    %v4536 = vunpack.c.l.b16 %v4241
    %v4537 = vunpack.c.l.b16 %v4242
    %v4538 = vunpack.c.l.b16 %v4243
    %v4539 = vunpack.c.l.b16 %v4244
    %v4540 = vunpack.c.l.b16 %v4245
    %v4541 = vunpack.c.l.b16 %v4246
    %v4542 = vunpack.c.l.b16 %v4247
    %v4543 = vunpack.c.l.b16 %v4248
    %v4544 = vunpack.c.l.b16 %v4249
    %v4545 = vunpack.c.l.b16 %v4250
    %v4546 = vunpack.c.l.b16 %v4251
    %v4547 = vunpack.c.l.b16 %v4252
    %v4548 = vunpack.c.l.b16 %v4253
    %v4549 = vunpack.c.l.b16 %v4254
    %v4550 = vunpack.c.l.b16 %v4255
    %v4551 = vunpack.c.l.b16 %v4256
    %v4552 = vunpack.c.l.b16 %v4257
    %v4553 = vunpack.c.l.b16 %v4258
    %v4554 = vunpack.c.l.b16 %v4259
    %v4555 = vunpack.c.l.b16 %v4260
    %v4556 = vunpack.c.l.b16 %v4261
    %v4557 = vunpack.c.l.b16 %v4262
    %v4558 = vunpack.c.l.b16 %v4263
    %v4559 = vunpack.c.l.b16 %v4264
    %v4560 = vunpack.c.l.b16 %v4265
    %v4561 = vunpack.c.l.b16 %v4266
    %v4562 = vunpack.c.l.b16 %v4267
    %v4563 = vunpack.c.l.b16 %v4268
    %v4564 = vunpack.c.l.b16 %v4269
    %v4565 = vunpack.c.l.b16 %v4270
    %v4566 = vunpack.c.l.b16 %v4271
    %v4567 = vunpack.c.l.b16 %v4272
    %v4568 = vunpack.c.l.b16 %v4273
    %v4569 = vunpack.c.l.b16 %v4274
    %v4570 = vunpack.c.l.b16 %v4275
    %v4571 = vunpack.c.l.b16 %v4276
    %v4572 = vunpack.c.l.b16 %v4277
    %v4573 = vunpack.c.l.b16 %v4278
    %v4574 = vunpack.c.l.b16 %v4279
    %v4575 = vunpack.c.l.b16 %v4280
    %v4576 = vunpack.c.l.b16 %v4281
    %v4577 = vunpack.c.l.b16 %v4282
    %v4578 = vunpack.c.l.b16 %v4283
    %v4579 = vunpack.c.l.b16 %v4284
    %v4580 = vunpack.c.l.b16 %v4285
    %v4581 = vunpack.c.l.b16 %v4286
    %v4582 = vunpack.c.l.b16 %v4287
    %v4583 = vunpack.c.l.b16 %v4288
    %v4584 = vunpack.c.l.b16 %v4289
    %v4585 = vunpack.c.l.b16 %v4290
    %v4586 = vunpack.c.l.b16 %v4291
    %v4587 = vunpack.c.l.b16 %v4292
    %v4588 = vunpack.c.l.b16 %v4293
    %v4589 = vunpack.c.l.b16 %v4294
    %v4590 = vunpack.c.l.b16 %v4295
    %v4591 = vunpack.c.l.b16 %v4296
    %v4592 = vunpack.c.l.b16 %v4297
    %v4593 = vunpack.c.l.b16 %v4298
    %v4594 = vunpack.c.l.b16 %v4299
    %v4595 = vunpack.c.l.b16 %v4300
    %v4596 = vunpack.c.l.b16 %v4301
    %v4597 = vunpack.c.l.b16 %v4302
    %v4598 = vunpack.c.l.b16 %v4303
    %v4599 = vunpack.c.l.b16 %v4304
    %v4600 = vunpack.c.l.b16 %v4305
    %v4601 = vunpack.c.l.b16 %v4306
    %v4602 = vunpack.c.l.b16 %v4307
    %v4603 = vunpack.c.l.b16 %v4308
    %v4604 = vunpack.c.l.b16 %v4309
    %v4605 = vunpack.c.l.b16 %v4310
    %v4606 = vunpack.c.l.b16 %v4311
    %v4607 = vunpack.c.l.b16 %v4312
    %v4608 = vunpack.c.l.b16 %v4313
    %v4609 = vunpack.c.l.b16 %v4314
    %v4610 = vunpack.c.l.b16 %v4315
    %v4611 = vunpack.c.l.b16 %v4316
    %v4612 = vunpack.c.l.b16 %v4317
    %v4613 = vunpack.c.l.b16 %v4318
    %v4614 = vunpack.c.l.b16 %v4319
    %v4615 = vunpack.c.l.b16 %v4320
    %v4616 = vunpack.c.l.b16 %v4321
    %v4617 = vunpack.c.l.b16 %v4322
    %v4618 = vunpack.c.l.b16 %v4323
    %v4619 = vunpack.c.l.b16 %v4324
    %v4620 = vunpack.c.l.b16 %v4325
    %v4621 = vunpack.c.l.b16 %v4326
    %v4622 = vunpack.c.l.b16 %v4327
    %v4623 = vunpack.c.l.b16 %v4328
    %v4624 = vunpack.c.l.b16 %v4329
    %v4625 = vunpack.c.l.b16 %v4330
    %v4626 = vunpack.c.l.b16 %v4331
    %v4627 = vunpack.c.l.b16 %v4332
    %v4628 = vunpack.c.l.b16 %v4333
    %v4629 = vunpack.c.l.b16 %v4334
    %v4630 = vunpack.c.l.b16 %v4335
    %v4631 = vunpack.c.l.b16 %v4336
    %v4632 = vunpack.c.l.b16 %v4337
    %v4633 = vpack.c.b16 %v4490, %v4489
    %v4634 = vpack.c.b16 %v4492, %v4491
    %v4635 = vpack.c.b16 %v4494, %v4493
    %v4636 = vpack.c.b16 %v4496, %v4495
    %v4637 = vpack.c.b16 %v4498, %v4497
    %v4638 = vpack.c.b16 %v4500, %v4499
    %v4639 = vpack.c.b16 %v4502, %v4501
    %v4640 = vpack.c.b16 %v4504, %v4503
    %v4641 = vpack.c.b16 %v4506, %v4505
    %v4642 = vpack.c.b16 %v4508, %v4507
    %v4643 = vpack.c.b16 %v4510, %v4509
    %v4644 = vpack.c.b16 %v4512, %v4511
    %v4645 = vpack.c.b16 %v4514, %v4513
    %v4646 = vpack.c.b16 %v4516, %v4515
    %v4647 = vpack.c.b16 %v4518, %v4517
    %v4648 = vpack.c.b16 %v4520, %v4519
    %v4649 = vpack.c.b16 %v4522, %v4521
    %v4650 = vpack.c.b16 %v4524, %v4523
    %v4651 = vpack.c.b16 %v4526, %v4525
    %v4652 = vpack.c.b16 %v4528, %v4527
    %v4653 = vpack.c.b16 %v4530, %v4529
    %v4654 = vpack.c.b16 %v4532, %v4531
    %v4655 = vpack.c.b16 %v4534, %v4533
    %v4656 = vpack.c.b16 %v4536, %v4535
    %v4657 = vpack.c.b16 %v4538, %v4537
    %v4658 = vpack.c.b16 %v4540, %v4539
    %v4659 = vpack.c.b16 %v4542, %v4541
    %v4660 = vpack.c.b16 %v4544, %v4543
    %v4661 = vpack.c.b16 %v4546, %v4545
    %v4662 = vpack.c.b16 %v4548, %v4547
    %v4663 = vpack.c.b16 %v4550, %v4549
    %v4664 = vpack.c.b16 %v4552, %v4551
    %v4665 = vpack.c.b16 %v4554, %v4553
    %v4666 = vpack.c.b16 %v4556, %v4555
    %v4667 = vpack.c.b16 %v4558, %v4557
    %v4668 = vpack.c.b16 %v4560, %v4559
    %v4669 = vpack.c.b16 %v4562, %v4561
    %v4670 = vpack.c.b16 %v4564, %v4563
    %v4671 = vpack.c.b16 %v4566, %v4565
    %v4672 = vpack.c.b16 %v4568, %v4567
    %v4673 = vpack.c.b16 %v4570, %v4569
    %v4674 = vpack.c.b16 %v4572, %v4571
    %v4675 = vpack.c.b16 %v4574, %v4573
    %v4676 = vpack.c.b16 %v4576, %v4575
    %v4677 = vpack.c.b16 %v4578, %v4577
    %v4678 = vpack.c.b16 %v4580, %v4579
    %v4679 = vpack.c.b16 %v4582, %v4581
    %v4680 = vpack.c.b16 %v4584, %v4583
    %v4681 = vpack.c.b16 %v4586, %v4585
    %v4682 = vpack.c.b16 %v4588, %v4587
    %v4683 = vpack.c.b16 %v4590, %v4589
    %v4684 = vpack.c.b16 %v4592, %v4591
    %v4685 = vpack.c.b16 %v4594, %v4593
    %v4686 = vpack.c.b16 %v4596, %v4595
    %v4687 = vpack.c.b16 %v4598, %v4597
    %v4688 = vpack.c.b16 %v4600, %v4599
    %v4689 = vpack.c.b16 %v4602, %v4601
    %v4690 = vpack.c.b16 %v4604, %v4603
    %v4691 = vpack.c.b16 %v4606, %v4605
    %v4692 = vpack.c.b16 %v4608, %v4607
    %v4693 = vpack.c.b16 %v4610, %v4609
    %v4694 = vpack.c.b16 %v4612, %v4611
    %v4695 = vpack.c.b16 %v4614, %v4613
    %v4696 = vpack.c.b16 %v4616, %v4615
    %v4697 = vpack.c.b16 %v4618, %v4617
    %v4698 = vpack.c.b16 %v4620, %v4619
    %v4699 = vpack.c.b16 %v4622, %v4621
    %v4700 = vpack.c.b16 %v4624, %v4623
    %v4701 = vpack.c.b16 %v4626, %v4625
    %v4702 = vpack.c.b16 %v4628, %v4627
    %v4703 = vpack.c.b16 %v4630, %v4629
    %v4704 = vpack.c.b16 %v4632, %v4631
    %4777 = vmatprep.subr.bf16.mxu0 0
    %4778 = vmatpush1.bf16.msra.mxu0 %v4633
    %4779 = vmatprep.subr.bf16.mxu0 0
    %4780 = vmatpush1.bf16.msra.mxu0 %v4634
    %4781 = vmatprep.subr.bf16.mxu0 0
    %4782 = vmatpush1.bf16.msra.mxu0 %v4635
    %4783 = vmatprep.subr.bf16.mxu0 0
    %4784 = vmatpush1.bf16.msra.mxu0 %v4636
    %4785 = vmatprep.subr.bf16.mxu0 0
    %4786 = vmatpush1.bf16.msra.mxu0 %v4637
    %4787 = vmatprep.subr.bf16.mxu0 0
    %4788 = vmatpush1.bf16.msra.mxu0 %v4638
    %4789 = vmatprep.subr.bf16.mxu0 0
    %4790 = vmatpush1.bf16.msra.mxu0 %v4639
    %4791 = vmatprep.subr.bf16.mxu0 0
    %4792 = vmatpush1.bf16.msra.mxu0 %v4640
    %4793 = vmatprep.subr.bf16.mxu0 0
    %4794 = vmatpush1.bf16.msra.mxu0 %v4641
    %4795 = vmatprep.subr.bf16.mxu0 0
    %4796 = vmatpush1.bf16.msra.mxu0 %v4642
    %4797 = vmatprep.subr.bf16.mxu0 0
    %4798 = vmatpush1.bf16.msra.mxu0 %v4643
    %4799 = vmatprep.subr.bf16.mxu0 0
    %4800 = vmatpush1.bf16.msra.mxu0 %v4644
    %4801 = vmatprep.subr.bf16.mxu0 0
    %4802 = vmatpush1.bf16.msra.mxu0 %v4645
    %4803 = vmatprep.subr.bf16.mxu0 0
    %4804 = vmatpush1.bf16.msra.mxu0 %v4646
    %4805 = vmatprep.subr.bf16.mxu0 0
    %4806 = vmatpush1.bf16.msra.mxu0 %v4647
    %4807 = vmatprep.subr.bf16.mxu0 0
    %4808 = vmatpush1.bf16.msra.mxu0 %v4648
    %4809 = vmatprep.mubr.bf16.mxu0 %v4069
    %4810 = vmatmul.mubr.bf16.gmra.mrb[0].mxu0 %v4068
    %v4811 = vpop.f32.mrb[0].mxu0
    %v4812 = vadd.f32 %v4343, %v4811
    %v4813 = vpop.f32.mrb[0].mxu0
    %v4814 = vpop.f32.mrb[0].mxu0
    %v4815 = vadd.f32 %v4343, %v4814
    %v4816 = vpop.f32.mrb[0].mxu0
    %4817 = vmatprep.mubr.bf16.mxu0 %v4078
    %4818 = vmatmul.mubr.bf16.gmra.mrb[0].mxu0 %v4077
    %v4819 = vpop.f32.mrb[0].mxu0
    %v4820 = vadd.f32 %v4343, %v4819
    %v4821 = vpop.f32.mrb[0].mxu0
    %v4822 = vpop.f32.mrb[0].mxu0
    %v4823 = vadd.f32 %v4343, %v4822
    %v4824 = vpop.f32.mrb[0].mxu0
    %4825 = vmatprep.mubr.bf16.mxu0 %v4087
    %4826 = vmatmul.mubr.bf16.gmra.mrb[0].mxu0 %v4086
    %v4827 = vpop.f32.mrb[0].mxu0
    %v4828 = vadd.f32 %v4343, %v4827
    %v4829 = vpop.f32.mrb[0].mxu0
    %v4830 = vpop.f32.mrb[0].mxu0
    %v4831 = vadd.f32 %v4343, %v4830
    %v4832 = vpop.f32.mrb[0].mxu0
    %4833 = vmatprep.mubr.bf16.mxu0 %v4096
    %4834 = vmatmul.mubr.bf16.gmra.mrb[0].mxu0 %v4095
    %v4835 = vpop.f32.mrb[0].mxu0
    %v4836 = vadd.f32 %v4343, %v4835
    %v4837 = vpop.f32.mrb[0].mxu0
    %v4838 = vpop.f32.mrb[0].mxu0
    %v4839 = vadd.f32 %v4343, %v4838
    %v4840 = vpop.f32.mrb[0].mxu0
    %4841 = vmatprep.mubr.bf16.mxu0 %v4105
    %4842 = vmatmul.mubr.bf16.gmra.mrb[0].mxu0 %v4104
    %v4843 = vpop.f32.mrb[0].mxu0
    %v4844 = vadd.f32 %v4343, %v4843
    %v4845 = vpop.f32.mrb[0].mxu0
    %v4846 = vpop.f32.mrb[0].mxu0
    %v4847 = vadd.f32 %v4343, %v4846
    %v4848 = vpop.f32.mrb[0].mxu0
    %4849 = vmatprep.mubr.bf16.mxu0 %v4114
    %4850 = vmatmul.mubr.bf16.gmra.mrb[0].mxu0 %v4113
    %v4851 = vpop.f32.mrb[0].mxu0
    %v4852 = vadd.f32 %v4343, %v4851
    %v4853 = vpop.f32.mrb[0].mxu0
    %v4854 = vpop.f32.mrb[0].mxu0
    %v4855 = vadd.f32 %v4343, %v4854
    %v4856 = vpop.f32.mrb[0].mxu0
    %4857 = vmatprep.mubr.bf16.mxu0 %v4123
    %4858 = vmatmul.mubr.bf16.gmra.mrb[0].mxu0 %v4122
    %v4859 = vpop.f32.mrb[0].mxu0
    %v4860 = vadd.f32 %v4343, %v4859
    %v4861 = vpop.f32.mrb[0].mxu0
    %v4862 = vpop.f32.mrb[0].mxu0
    %v4863 = vadd.f32 %v4343, %v4862
    %v4864 = vpop.f32.mrb[0].mxu0
    %4865 = vmatprep.mubr.bf16.mxu0 %v4132
    %4866 = vmatmul.mubr.bf16.gmra.mrb[0].mxu0 %v4131
    %v4867 = vpop.f32.mrb[0].mxu0
    %v4868 = vadd.f32 %v4343, %v4867
    %v4869 = vpop.f32.mrb[0].mxu0
    %v4870 = vpop.f32.mrb[0].mxu0
    %v4871 = vadd.f32 %v4343, %v4870
    %v4872 = vpop.f32.mrb[0].mxu0
    %4873 = vmatprep.mubr.bf16.mxu0 %v4141
    %4874 = vmatmul.mubr.bf16.gmra.mrb[0].mxu0 %v4140
    %v4875 = vpop.f32.mrb[0].mxu0
    %v4876 = vadd.f32 %v4343, %v4875
    %v4877 = vpop.f32.mrb[0].mxu0
    %v4878 = vpop.f32.mrb[0].mxu0
    %v4879 = vadd.f32 %v4343, %v4878
    %v4880 = vpop.f32.mrb[0].mxu0
    %4881 = vmatprep.mubr.bf16.mxu0 %v4150
    %4882 = vmatmul.mubr.bf16.gmra.mrb[0].mxu0 %v4149
    %v4883 = vpop.f32.mrb[0].mxu0
    %v4884 = vadd.f32 %v4343, %v4883
    %v4885 = vpop.f32.mrb[0].mxu0
    %v4886 = vpop.f32.mrb[0].mxu0
    %v4887 = vadd.f32 %v4343, %v4886
    %v4888 = vpop.f32.mrb[0].mxu0
    %4889 = vmatprep.mubr.bf16.mxu0 %v4159
    %4890 = vmatmul.mubr.bf16.gmra.mrb[0].mxu0 %v4158
    %v4891 = vpop.f32.mrb[0].mxu0
    %v4892 = vadd.f32 %v4343, %v4891
    %v4893 = vpop.f32.mrb[0].mxu0
    %v4894 = vpop.f32.mrb[0].mxu0
    %v4895 = vadd.f32 %v4343, %v4894
    %v4896 = vpop.f32.mrb[0].mxu0
    %4897 = vmatprep.mubr.bf16.mxu0 %v4168
    %4898 = vmatmul.mubr.bf16.gmra.mrb[0].mxu0 %v4167
    %v4899 = vpop.f32.mrb[0].mxu0
    %v4900 = vadd.f32 %v4343, %v4899
    %v4901 = vpop.f32.mrb[0].mxu0
    %v4902 = vpop.f32.mrb[0].mxu0
    %v4903 = vadd.f32 %v4343, %v4902
    %v4904 = vpop.f32.mrb[0].mxu0
    %4905 = vmatprep.mubr.bf16.mxu0 %v4177
    %4906 = vmatmul.mubr.bf16.gmra.mrb[0].mxu0 %v4176
    %v4907 = vpop.f32.mrb[0].mxu0
    %v4908 = vadd.f32 %v4343, %v4907
    %v4909 = vpop.f32.mrb[0].mxu0
    %v4910 = vpop.f32.mrb[0].mxu0
    %v4911 = vadd.f32 %v4343, %v4910
    %v4912 = vpop.f32.mrb[0].mxu0
    %4913 = vmatprep.mubr.bf16.mxu0 %v4186
    %4914 = vmatmul.mubr.bf16.gmra.mrb[0].mxu0 %v4185
    %v4915 = vpop.f32.mrb[0].mxu0
    %v4916 = vadd.f32 %v4343, %v4915
    %v4917 = vpop.f32.mrb[0].mxu0
    %v4918 = vpop.f32.mrb[0].mxu0
    %v4919 = vadd.f32 %v4343, %v4918
    %v4920 = vpop.f32.mrb[0].mxu0
    %4921 = vdwg.mxu0
    %4922 = vmatprep.subr.bf16.mxu0 0
    %4923 = vmatpush1.bf16.msra.mxu0 %v4649
    %4924 = vmatprep.subr.bf16.mxu0 0
    %4925 = vmatpush1.bf16.msra.mxu0 %v4650
    %4926 = vmatprep.subr.bf16.mxu0 0
    %4927 = vmatpush1.bf16.msra.mxu0 %v4651
    %4928 = vmatprep.subr.bf16.mxu0 0
    %4929 = vmatpush1.bf16.msra.mxu0 %v4652
    %4930 = vmatprep.subr.bf16.mxu0 0
    %4931 = vmatpush1.bf16.msra.mxu0 %v4653
    %4932 = vmatprep.subr.bf16.mxu0 0
    %4933 = vmatpush1.bf16.msra.mxu0 %v4654
    %4934 = vmatprep.subr.bf16.mxu0 0
    %4935 = vmatpush1.bf16.msra.mxu0 %v4655
    %4936 = vmatprep.subr.bf16.mxu0 0
    %4937 = vmatpush1.bf16.msra.mxu0 %v4656
    %4938 = vmatprep.subr.bf16.mxu0 0
    %4939 = vmatpush1.bf16.msra.mxu0 %v4657
    %4940 = vmatprep.subr.bf16.mxu0 0
    %4941 = vmatpush1.bf16.msra.mxu0 %v4658
    %4942 = vmatprep.subr.bf16.mxu0 0
    %4943 = vmatpush1.bf16.msra.mxu0 %v4659
    %4944 = vmatprep.subr.bf16.mxu0 0
    %4945 = vmatpush1.bf16.msra.mxu0 %v4660
    %4946 = vmatprep.subr.bf16.mxu0 0
    %4947 = vmatpush1.bf16.msra.mxu0 %v4661
    %4948 = vmatprep.subr.bf16.mxu0 0
    %4949 = vmatpush1.bf16.msra.mxu0 %v4662
    %4950 = vmatprep.subr.bf16.mxu0 0
    %4951 = vmatpush1.bf16.msra.mxu0 %v4663
    %4952 = vmatprep.subr.bf16.mxu0 0
    %4953 = vmatpush1.bf16.msra.mxu0 %v4664
    %4954 = vmatprep.mubr.bf16.mxu0 %v4071
    %4955 = vmatmul.mubr.bf16.gmra.mrb[0].mxu0 %v4070
    %v4956 = vpop.f32.mrb[0].mxu0
    %v4957 = vadd.f32 %v4812, %v4956
    %v4958 = vpop.f32.mrb[0].mxu0
    %v4959 = vpop.f32.mrb[0].mxu0
    %v4960 = vadd.f32 %v4815, %v4959
    %v4961 = vpop.f32.mrb[0].mxu0
    %4962 = vmatprep.mubr.bf16.mxu0 %v4080
    %4963 = vmatmul.mubr.bf16.gmra.mrb[0].mxu0 %v4079
    %v4964 = vpop.f32.mrb[0].mxu0
    %v4965 = vadd.f32 %v4820, %v4964
    %v4966 = vpop.f32.mrb[0].mxu0
    %v4967 = vpop.f32.mrb[0].mxu0
    %v4968 = vadd.f32 %v4823, %v4967
    %v4969 = vpop.f32.mrb[0].mxu0
    %4970 = vmatprep.mubr.bf16.mxu0 %v4089
    %4971 = vmatmul.mubr.bf16.gmra.mrb[0].mxu0 %v4088
    %v4972 = vpop.f32.mrb[0].mxu0
    %v4973 = vadd.f32 %v4828, %v4972
    %v4974 = vpop.f32.mrb[0].mxu0
    %v4975 = vpop.f32.mrb[0].mxu0
    %v4976 = vadd.f32 %v4831, %v4975
    %v4977 = vpop.f32.mrb[0].mxu0
    %4978 = vmatprep.mubr.bf16.mxu0 %v4098
    %4979 = vmatmul.mubr.bf16.gmra.mrb[0].mxu0 %v4097
    %v4980 = vpop.f32.mrb[0].mxu0
    %v4981 = vadd.f32 %v4836, %v4980
    %v4982 = vpop.f32.mrb[0].mxu0
    %v4983 = vpop.f32.mrb[0].mxu0
    %v4984 = vadd.f32 %v4839, %v4983
    %v4985 = vpop.f32.mrb[0].mxu0
    %4986 = vmatprep.mubr.bf16.mxu0 %v4107
    %4987 = vmatmul.mubr.bf16.gmra.mrb[0].mxu0 %v4106
    %v4988 = vpop.f32.mrb[0].mxu0
    %v4989 = vadd.f32 %v4844, %v4988
    %v4990 = vpop.f32.mrb[0].mxu0
    %v4991 = vpop.f32.mrb[0].mxu0
    %v4992 = vadd.f32 %v4847, %v4991
    %v4993 = vpop.f32.mrb[0].mxu0
    %4994 = vmatprep.mubr.bf16.mxu0 %v4116
    %4995 = vmatmul.mubr.bf16.gmra.mrb[0].mxu0 %v4115
    %v4996 = vpop.f32.mrb[0].mxu0
    %v4997 = vadd.f32 %v4852, %v4996
    %v4998 = vpop.f32.mrb[0].mxu0
    %v4999 = vpop.f32.mrb[0].mxu0
    %v5000 = vadd.f32 %v4855, %v4999
    %v5001 = vpop.f32.mrb[0].mxu0
    %5002 = vmatprep.mubr.bf16.mxu0 %v4125
    %5003 = vmatmul.mubr.bf16.gmra.mrb[0].mxu0 %v4124
    %v5004 = vpop.f32.mrb[0].mxu0
    %v5005 = vadd.f32 %v4860, %v5004
    %v5006 = vpop.f32.mrb[0].mxu0
    %v5007 = vpop.f32.mrb[0].mxu0
    %v5008 = vadd.f32 %v4863, %v5007
    %v5009 = vpop.f32.mrb[0].mxu0
    %5010 = vmatprep.mubr.bf16.mxu0 %v4134
    %5011 = vmatmul.mubr.bf16.gmra.mrb[0].mxu0 %v4133
    %v5012 = vpop.f32.mrb[0].mxu0
    %v5013 = vadd.f32 %v4868, %v5012
    %v5014 = vpop.f32.mrb[0].mxu0
    %v5015 = vpop.f32.mrb[0].mxu0
    %v5016 = vadd.f32 %v4871, %v5015
    %v5017 = vpop.f32.mrb[0].mxu0
    %5018 = vmatprep.mubr.bf16.mxu0 %v4143
    %5019 = vmatmul.mubr.bf16.gmra.mrb[0].mxu0 %v4142
    %v5020 = vpop.f32.mrb[0].mxu0
    %v5021 = vadd.f32 %v4876, %v5020
    %v5022 = vpop.f32.mrb[0].mxu0
    %v5023 = vpop.f32.mrb[0].mxu0
    %v5024 = vadd.f32 %v4879, %v5023
    %v5025 = vpop.f32.mrb[0].mxu0
    %5026 = vmatprep.mubr.bf16.mxu0 %v4152
    %5027 = vmatmul.mubr.bf16.gmra.mrb[0].mxu0 %v4151
    %v5028 = vpop.f32.mrb[0].mxu0
    %v5029 = vadd.f32 %v4884, %v5028
    %v5030 = vpop.f32.mrb[0].mxu0
    %v5031 = vpop.f32.mrb[0].mxu0
    %v5032 = vadd.f32 %v4887, %v5031
    %v5033 = vpop.f32.mrb[0].mxu0
    %5034 = vmatprep.mubr.bf16.mxu0 %v4161
    %5035 = vmatmul.mubr.bf16.gmra.mrb[0].mxu0 %v4160
    %v5036 = vpop.f32.mrb[0].mxu0
    %v5037 = vadd.f32 %v4892, %v5036
    %v5038 = vpop.f32.mrb[0].mxu0
    %v5039 = vpop.f32.mrb[0].mxu0
    %v5040 = vadd.f32 %v4895, %v5039
    %v5041 = vpop.f32.mrb[0].mxu0
    %5042 = vmatprep.mubr.bf16.mxu0 %v4170
    %5043 = vmatmul.mubr.bf16.gmra.mrb[0].mxu0 %v4169
    %v5044 = vpop.f32.mrb[0].mxu0
    %v5045 = vadd.f32 %v4900, %v5044
    %v5046 = vpop.f32.mrb[0].mxu0
    %v5047 = vpop.f32.mrb[0].mxu0
    %v5048 = vadd.f32 %v4903, %v5047
    %v5049 = vpop.f32.mrb[0].mxu0
    %5050 = vmatprep.mubr.bf16.mxu0 %v4179
    %5051 = vmatmul.mubr.bf16.gmra.mrb[0].mxu0 %v4178
    %v5052 = vpop.f32.mrb[0].mxu0
    %v5053 = vadd.f32 %v4908, %v5052
    %v5054 = vpop.f32.mrb[0].mxu0
    %v5055 = vpop.f32.mrb[0].mxu0
    %v5056 = vadd.f32 %v4911, %v5055
    %v5057 = vpop.f32.mrb[0].mxu0
    %5058 = vmatprep.mubr.bf16.mxu0 %v4188
    %5059 = vmatmul.mubr.bf16.gmra.mrb[0].mxu0 %v4187
    %v5060 = vpop.f32.mrb[0].mxu0
    %v5061 = vadd.f32 %v4916, %v5060
    %v5062 = vpop.f32.mrb[0].mxu0
    %v5063 = vpop.f32.mrb[0].mxu0
    %v5064 = vadd.f32 %v4919, %v5063
    %v5065 = vpop.f32.mrb[0].mxu0
    %5066 = vdwg.mxu0
    %5067 = vmatprep.subr.bf16.mxu0 0
    %5068 = vmatpush1.bf16.msra.mxu0 %v4665
    %5069 = vmatprep.subr.bf16.mxu0 0
    %5070 = vmatpush1.bf16.msra.mxu0 %v4666
    %5071 = vmatprep.subr.bf16.mxu0 0
    %5072 = vmatpush1.bf16.msra.mxu0 %v4667
    %5073 = vmatprep.subr.bf16.mxu0 0
    %5074 = vmatpush1.bf16.msra.mxu0 %v4668
    %5075 = vmatprep.subr.bf16.mxu0 0
    %5076 = vmatpush1.bf16.msra.mxu0 %v4669
    %5077 = vmatprep.subr.bf16.mxu0 0
    %5078 = vmatpush1.bf16.msra.mxu0 %v4670
    %5079 = vmatprep.subr.bf16.mxu0 0
    %5080 = vmatpush1.bf16.msra.mxu0 %v4671
    %5081 = vmatprep.subr.bf16.mxu0 0
    %5082 = vmatpush1.bf16.msra.mxu0 %v4672
    %5083 = vmatprep.subr.bf16.mxu0 0
    %5084 = vmatpush1.bf16.msra.mxu0 %v4673
    %5085 = vmatprep.subr.bf16.mxu0 0
    %5086 = vmatpush1.bf16.msra.mxu0 %v4674
    %5087 = vmatprep.subr.bf16.mxu0 0
    %5088 = vmatpush1.bf16.msra.mxu0 %v4675
    %5089 = vmatprep.subr.bf16.mxu0 0
    %5090 = vmatpush1.bf16.msra.mxu0 %v4676
    %5091 = vmatprep.subr.bf16.mxu0 0
    %5092 = vmatpush1.bf16.msra.mxu0 %v4677
    %5093 = vmatprep.subr.bf16.mxu0 0
    %5094 = vmatpush1.bf16.msra.mxu0 %v4678
    %5095 = vmatprep.subr.bf16.mxu0 0
    %5096 = vmatpush1.bf16.msra.mxu0 %v4679
    %5097 = vmatprep.subr.bf16.mxu0 0
    %5098 = vmatpush1.bf16.msra.mxu0 %v4680
    %5099 = vmatprep.mubr.bf16.mxu0 %v4073
    %5100 = vmatmul.mubr.bf16.gmra.mrb[0].mxu0 %v4072
    %v5101 = vpop.f32.mrb[0].mxu0
    %v5102 = vadd.f32 %v4957, %v5101
    %v5103 = vpop.f32.mrb[0].mxu0
    %v5104 = vpop.f32.mrb[0].mxu0
    %v5105 = vadd.f32 %v4960, %v5104
    %v5106 = vpop.f32.mrb[0].mxu0
    %5107 = vmatprep.mubr.bf16.mxu0 %v4082
    %5108 = vmatmul.mubr.bf16.gmra.mrb[0].mxu0 %v4081
    %v5109 = vpop.f32.mrb[0].mxu0
    %v5110 = vadd.f32 %v4965, %v5109
    %v5111 = vpop.f32.mrb[0].mxu0
    %v5112 = vpop.f32.mrb[0].mxu0
    %v5113 = vadd.f32 %v4968, %v5112
    %v5114 = vpop.f32.mrb[0].mxu0
    %5115 = vmatprep.mubr.bf16.mxu0 %v4091
    %5116 = vmatmul.mubr.bf16.gmra.mrb[0].mxu0 %v4090
    %v5117 = vpop.f32.mrb[0].mxu0
    %v5118 = vadd.f32 %v4973, %v5117
    %v5119 = vpop.f32.mrb[0].mxu0
    %v5120 = vpop.f32.mrb[0].mxu0
    %v5121 = vadd.f32 %v4976, %v5120
    %v5122 = vpop.f32.mrb[0].mxu0
    %5123 = vmatprep.mubr.bf16.mxu0 %v4100
    %5124 = vmatmul.mubr.bf16.gmra.mrb[0].mxu0 %v4099
    %v5125 = vpop.f32.mrb[0].mxu0
    %v5126 = vadd.f32 %v4981, %v5125
    %v5127 = vpop.f32.mrb[0].mxu0
    %v5128 = vpop.f32.mrb[0].mxu0
    %v5129 = vadd.f32 %v4984, %v5128
    %v5130 = vpop.f32.mrb[0].mxu0
    %5131 = vmatprep.mubr.bf16.mxu0 %v4109
    %5132 = vmatmul.mubr.bf16.gmra.mrb[0].mxu0 %v4108
    %v5133 = vpop.f32.mrb[0].mxu0
    %v5134 = vadd.f32 %v4989, %v5133
    %v5135 = vpop.f32.mrb[0].mxu0
    %v5136 = vpop.f32.mrb[0].mxu0
    %v5137 = vadd.f32 %v4992, %v5136
    %v5138 = vpop.f32.mrb[0].mxu0
    %5139 = vmatprep.mubr.bf16.mxu0 %v4118
    %5140 = vmatmul.mubr.bf16.gmra.mrb[0].mxu0 %v4117
    %v5141 = vpop.f32.mrb[0].mxu0
    %v5142 = vadd.f32 %v4997, %v5141
    %v5143 = vpop.f32.mrb[0].mxu0
    %v5144 = vpop.f32.mrb[0].mxu0
    %v5145 = vadd.f32 %v5000, %v5144
    %v5146 = vpop.f32.mrb[0].mxu0
    %5147 = vmatprep.mubr.bf16.mxu0 %v4127
    %5148 = vmatmul.mubr.bf16.gmra.mrb[0].mxu0 %v4126
    %v5149 = vpop.f32.mrb[0].mxu0
    %v5150 = vadd.f32 %v5005, %v5149
    %v5151 = vpop.f32.mrb[0].mxu0
    %v5152 = vpop.f32.mrb[0].mxu0
    %v5153 = vadd.f32 %v5008, %v5152
    %v5154 = vpop.f32.mrb[0].mxu0
    %5155 = vmatprep.mubr.bf16.mxu0 %v4136
    %5156 = vmatmul.mubr.bf16.gmra.mrb[0].mxu0 %v4135
    %v5157 = vpop.f32.mrb[0].mxu0
    %v5158 = vadd.f32 %v5013, %v5157
    %v5159 = vpop.f32.mrb[0].mxu0
    %v5160 = vpop.f32.mrb[0].mxu0
    %v5161 = vadd.f32 %v5016, %v5160
    %v5162 = vpop.f32.mrb[0].mxu0
    %5163 = vmatprep.mubr.bf16.mxu0 %v4145
    %5164 = vmatmul.mubr.bf16.gmra.mrb[0].mxu0 %v4144
    %v5165 = vpop.f32.mrb[0].mxu0
    %v5166 = vadd.f32 %v5021, %v5165
    %v5167 = vpop.f32.mrb[0].mxu0
    %v5168 = vpop.f32.mrb[0].mxu0
    %v5169 = vadd.f32 %v5024, %v5168
    %v5170 = vpop.f32.mrb[0].mxu0
    %5171 = vmatprep.mubr.bf16.mxu0 %v4154
    %5172 = vmatmul.mubr.bf16.gmra.mrb[0].mxu0 %v4153
    %v5173 = vpop.f32.mrb[0].mxu0
    %v5174 = vadd.f32 %v5029, %v5173
    %v5175 = vpop.f32.mrb[0].mxu0
    %v5176 = vpop.f32.mrb[0].mxu0
    %v5177 = vadd.f32 %v5032, %v5176
    %v5178 = vpop.f32.mrb[0].mxu0
    %5179 = vmatprep.mubr.bf16.mxu0 %v4163
    %5180 = vmatmul.mubr.bf16.gmra.mrb[0].mxu0 %v4162
    %v5181 = vpop.f32.mrb[0].mxu0
    %v5182 = vadd.f32 %v5037, %v5181
    %v5183 = vpop.f32.mrb[0].mxu0
    %v5184 = vpop.f32.mrb[0].mxu0
    %v5185 = vadd.f32 %v5040, %v5184
    %v5186 = vpop.f32.mrb[0].mxu0
    %5187 = vmatprep.mubr.bf16.mxu0 %v4172
    %5188 = vmatmul.mubr.bf16.gmra.mrb[0].mxu0 %v4171
    %v5189 = vpop.f32.mrb[0].mxu0
    %v5190 = vadd.f32 %v5045, %v5189
    %v5191 = vpop.f32.mrb[0].mxu0
    %v5192 = vpop.f32.mrb[0].mxu0
    %v5193 = vadd.f32 %v5048, %v5192
    %v5194 = vpop.f32.mrb[0].mxu0
    %5195 = vmatprep.mubr.bf16.mxu0 %v4181
    %5196 = vmatmul.mubr.bf16.gmra.mrb[0].mxu0 %v4180
    %v5197 = vpop.f32.mrb[0].mxu0
    %v5198 = vadd.f32 %v5053, %v5197
    %v5199 = vpop.f32.mrb[0].mxu0
    %v5200 = vpop.f32.mrb[0].mxu0
    %v5201 = vadd.f32 %v5056, %v5200
    %v5202 = vpop.f32.mrb[0].mxu0
    %5203 = vmatprep.mubr.bf16.mxu0 %v4190
    %5204 = vmatmul.mubr.bf16.gmra.mrb[0].mxu0 %v4189
    %v5205 = vpop.f32.mrb[0].mxu0
    %v5206 = vadd.f32 %v5061, %v5205
    %v5207 = vpop.f32.mrb[0].mxu0
    %v5208 = vpop.f32.mrb[0].mxu0
    %v5209 = vadd.f32 %v5064, %v5208
    %v5210 = vpop.f32.mrb[0].mxu0
    %5211 = vdwg.mxu0
    %5212 = vmatprep.subr.bf16.mxu0 0
    %5213 = vmatpush1.bf16.msra.mxu0 %v4681
    %5214 = vmatprep.subr.bf16.mxu0 0
    %5215 = vmatpush1.bf16.msra.mxu0 %v4682
    %5216 = vmatprep.subr.bf16.mxu0 0
    %5217 = vmatpush1.bf16.msra.mxu0 %v4683
    %5218 = vmatprep.subr.bf16.mxu0 0
    %5219 = vmatpush1.bf16.msra.mxu0 %v4684
    %5220 = vmatprep.subr.bf16.mxu0 0
    %5221 = vmatpush1.bf16.msra.mxu0 %v4685
    %5222 = vmatprep.subr.bf16.mxu0 0
    %5223 = vmatpush1.bf16.msra.mxu0 %v4686
    %5224 = vmatprep.subr.bf16.mxu0 0
    %5225 = vmatpush1.bf16.msra.mxu0 %v4687
    %5226 = vmatprep.subr.bf16.mxu0 0
    %5227 = vmatpush1.bf16.msra.mxu0 %v4688
    %5228 = vmatprep.subr.bf16.mxu0 0
    %5229 = vmatpush1.bf16.msra.mxu0 %v4689
    %5230 = vmatprep.subr.bf16.mxu0 0
    %5231 = vmatpush1.bf16.msra.mxu0 %v4690
    %5232 = vmatprep.subr.bf16.mxu0 0
    %5233 = vmatpush1.bf16.msra.mxu0 %v4691
    %5234 = vmatprep.subr.bf16.mxu0 0
    %5235 = vmatpush1.bf16.msra.mxu0 %v4692
    %5236 = vmatprep.subr.bf16.mxu0 0
    %5237 = vmatpush1.bf16.msra.mxu0 %v4693
    %5238 = vmatprep.subr.bf16.mxu0 0
    %5239 = vmatpush1.bf16.msra.mxu0 %v4694
    %5240 = vmatprep.subr.bf16.mxu0 0
    %5241 = vmatpush1.bf16.msra.mxu0 %v4695
    %5242 = vmatprep.subr.bf16.mxu0 0
    %5243 = vmatpush1.bf16.msra.mxu0 %v4696
    %5244 = vmatprep.mubr.bf16.mxu0 %v4075
    %5245 = vmatmul.mubr.bf16.gmra.mrb[0].mxu0 %v4074
    %v5246 = vpop.f32.mrb[0].mxu0
    %v5247 = vadd.f32 %v5102, %v5246
    %v5248 = vpop.f32.mrb[0].mxu0
    %v5249 = vpop.f32.mrb[0].mxu0
    %v5250 = vadd.f32 %v5105, %v5249
    %v5251 = vpop.f32.mrb[0].mxu0
    %5252 = vmatprep.mubr.bf16.mxu0 %v4084
    %5253 = vmatmul.mubr.bf16.gmra.mrb[0].mxu0 %v4083
    %v5254 = vpop.f32.mrb[0].mxu0
    %v5255 = vadd.f32 %v5110, %v5254
    %v5256 = vpop.f32.mrb[0].mxu0
    %v5257 = vpop.f32.mrb[0].mxu0
    %v5258 = vadd.f32 %v5113, %v5257
    %v5259 = vpop.f32.mrb[0].mxu0
    %5260 = vmatprep.mubr.bf16.mxu0 %v4093
    %5261 = vmatmul.mubr.bf16.gmra.mrb[0].mxu0 %v4092
    %v5262 = vpop.f32.mrb[0].mxu0
    %v5263 = vadd.f32 %v5118, %v5262
    %v5264 = vpop.f32.mrb[0].mxu0
    %v5265 = vpop.f32.mrb[0].mxu0
    %v5266 = vadd.f32 %v5121, %v5265
    %v5267 = vpop.f32.mrb[0].mxu0
    %5268 = vmatprep.mubr.bf16.mxu0 %v4102
    %5269 = vmatmul.mubr.bf16.gmra.mrb[0].mxu0 %v4101
    %v5270 = vpop.f32.mrb[0].mxu0
    %v5271 = vadd.f32 %v5126, %v5270
    %v5272 = vpop.f32.mrb[0].mxu0
    %v5273 = vpop.f32.mrb[0].mxu0
    %v5274 = vadd.f32 %v5129, %v5273
    %v5275 = vpop.f32.mrb[0].mxu0
    %5276 = vmatprep.mubr.bf16.mxu0 %v4111
    %5277 = vmatmul.mubr.bf16.gmra.mrb[0].mxu0 %v4110
    %v5278 = vpop.f32.mrb[0].mxu0
    %v5279 = vadd.f32 %v5134, %v5278
    %v5280 = vpop.f32.mrb[0].mxu0
    %v5281 = vpop.f32.mrb[0].mxu0
    %v5282 = vadd.f32 %v5137, %v5281
    %v5283 = vpop.f32.mrb[0].mxu0
    %5284 = vmatprep.mubr.bf16.mxu0 %v4120
    %5285 = vmatmul.mubr.bf16.gmra.mrb[0].mxu0 %v4119
    %v5286 = vpop.f32.mrb[0].mxu0
    %v5287 = vadd.f32 %v5142, %v5286
    %v5288 = vpop.f32.mrb[0].mxu0
    %v5289 = vpop.f32.mrb[0].mxu0
    %v5290 = vadd.f32 %v5145, %v5289
    %v5291 = vpop.f32.mrb[0].mxu0
    %5292 = vmatprep.mubr.bf16.mxu0 %v4129
    %5293 = vmatmul.mubr.bf16.gmra.mrb[0].mxu0 %v4128
    %v5294 = vpop.f32.mrb[0].mxu0
    %v5295 = vadd.f32 %v5150, %v5294
    %v5296 = vpop.f32.mrb[0].mxu0
    %v5297 = vpop.f32.mrb[0].mxu0
    %v5298 = vadd.f32 %v5153, %v5297
    %v5299 = vpop.f32.mrb[0].mxu0
    %5300 = vmatprep.mubr.bf16.mxu0 %v4138
    %5301 = vmatmul.mubr.bf16.gmra.mrb[0].mxu0 %v4137
    %v5302 = vpop.f32.mrb[0].mxu0
    %v5303 = vadd.f32 %v5158, %v5302
    %v5304 = vpop.f32.mrb[0].mxu0
    %v5305 = vpop.f32.mrb[0].mxu0
    %v5306 = vadd.f32 %v5161, %v5305
    %v5307 = vpop.f32.mrb[0].mxu0
    %5308 = vmatprep.mubr.bf16.mxu0 %v4147
    %5309 = vmatmul.mubr.bf16.gmra.mrb[0].mxu0 %v4146
    %v5310 = vpop.f32.mrb[0].mxu0
    %v5311 = vadd.f32 %v5166, %v5310
    %v5312 = vpop.f32.mrb[0].mxu0
    %v5313 = vpop.f32.mrb[0].mxu0
    %v5314 = vadd.f32 %v5169, %v5313
    %v5315 = vpop.f32.mrb[0].mxu0
    %5316 = vmatprep.mubr.bf16.mxu0 %v4156
    %5317 = vmatmul.mubr.bf16.gmra.mrb[0].mxu0 %v4155
    %v5318 = vpop.f32.mrb[0].mxu0
    %v5319 = vadd.f32 %v5174, %v5318
    %v5320 = vpop.f32.mrb[0].mxu0
    %v5321 = vpop.f32.mrb[0].mxu0
    %v5322 = vadd.f32 %v5177, %v5321
    %v5323 = vpop.f32.mrb[0].mxu0
    %5324 = vmatprep.mubr.bf16.mxu0 %v4165
    %5325 = vmatmul.mubr.bf16.gmra.mrb[0].mxu0 %v4164
    %v5326 = vpop.f32.mrb[0].mxu0
    %v5327 = vadd.f32 %v5182, %v5326
    %v5328 = vpop.f32.mrb[0].mxu0
    %v5329 = vpop.f32.mrb[0].mxu0
    %v5330 = vadd.f32 %v5185, %v5329
    %v5331 = vpop.f32.mrb[0].mxu0
    %5332 = vmatprep.mubr.bf16.mxu0 %v4174
    %5333 = vmatmul.mubr.bf16.gmra.mrb[0].mxu0 %v4173
    %v5334 = vpop.f32.mrb[0].mxu0
    %v5335 = vadd.f32 %v5190, %v5334
    %v5336 = vpop.f32.mrb[0].mxu0
    %v5337 = vpop.f32.mrb[0].mxu0
    %v5338 = vadd.f32 %v5193, %v5337
    %v5339 = vpop.f32.mrb[0].mxu0
    %5340 = vmatprep.mubr.bf16.mxu0 %v4183
    %5341 = vmatmul.mubr.bf16.gmra.mrb[0].mxu0 %v4182
    %v5342 = vpop.f32.mrb[0].mxu0
    %v5343 = vadd.f32 %v5198, %v5342
    %v5344 = vpop.f32.mrb[0].mxu0
    %v5345 = vpop.f32.mrb[0].mxu0
    %v5346 = vadd.f32 %v5201, %v5345
    %v5347 = vpop.f32.mrb[0].mxu0
    %5348 = vmatprep.mubr.bf16.mxu0 %v4192
    %5349 = vmatmul.mubr.bf16.gmra.mrb[0].mxu0 %v4191
    %v5350 = vpop.f32.mrb[0].mxu0
    %v5351 = vadd.f32 %v5206, %v5350
    %v5352 = vpop.f32.mrb[0].mxu0
    %v5353 = vpop.f32.mrb[0].mxu0
    %v5354 = vadd.f32 %v5209, %v5353
    %v5355 = vpop.f32.mrb[0].mxu0
    %5356 = vdwg.mxu0
    %5357 = vmatprep.subr.bf16.mxu0 0
    %5358 = vmatpush1.bf16.msra.mxu0 %v4697
    %5359 = vmatprep.subr.bf16.mxu0 0
    %5360 = vmatpush1.bf16.msra.mxu0 %v4698
    %5361 = vmatprep.subr.bf16.mxu0 0
    %5362 = vmatpush1.bf16.msra.mxu0 %v4699
    %5363 = vmatprep.subr.bf16.mxu0 0
    %5364 = vmatpush1.bf16.msra.mxu0 %v4700
    %5365 = vmatprep.subr.bf16.mxu0 0
    %5366 = vmatpush1.bf16.msra.mxu0 %v4701
    %5367 = vmatprep.subr.bf16.mxu0 0
    %5368 = vmatpush1.bf16.msra.mxu0 %v4702
    %5369 = vmatprep.subr.bf16.mxu0 0
    %5370 = vmatpush1.bf16.msra.mxu0 %v4703
    %5371 = vmatprep.subr.bf16.mxu0 0
    %5372 = vmatpush1.bf16.msra.mxu0 %v4704
    %5373 = vmatprep.subr.bf16.mxu0 0
    %5374 = vmatpush1.bf16.msra.mxu0 0
    %5375 = vmatprep.subr.bf16.mxu0 0
    %5376 = vmatpush1.bf16.msra.mxu0 0
    %5377 = vmatprep.subr.bf16.mxu0 0
    %5378 = vmatpush1.bf16.msra.mxu0 0
    %5379 = vmatprep.subr.bf16.mxu0 0
    %5380 = vmatpush1.bf16.msra.mxu0 0
    %5381 = vmatprep.subr.bf16.mxu0 0
    %5382 = vmatpush1.bf16.msra.mxu0 0
    %5383 = vmatprep.subr.bf16.mxu0 0
    %5384 = vmatpush1.bf16.msra.mxu0 0
    %5385 = vmatprep.subr.bf16.mxu0 0
    %5386 = vmatpush1.bf16.msra.mxu0 0
    %5387 = vmatprep.subr.bf16.mxu0 0
    %5388 = vmatpush1.bf16.msra.mxu0 0
    %5389 = vmatprep.mubr.bf16.mxu0 0
    %5390 = vmatmul.mubr.bf16.gmra.mrb[0].mxu0 %v4076
    %v5391 = vpop.f32.mrb[0].mxu0
    %v5392 = vadd.f32 %v5247, %v5391
    %v5393 = vpop.f32.mrb[0].mxu0
    %v5394 = vpop.f32.mrb[0].mxu0
    %v5395 = vadd.f32 %v5250, %v5394
    %v5396 = vpop.f32.mrb[0].mxu0
    %5397 = vmatprep.mubr.bf16.mxu0 0
    %5398 = vmatmul.mubr.bf16.gmra.mrb[0].mxu0 %v4085
    %v5399 = vpop.f32.mrb[0].mxu0
    %v5400 = vadd.f32 %v5255, %v5399
    %v5401 = vpop.f32.mrb[0].mxu0
    %v5402 = vpop.f32.mrb[0].mxu0
    %v5403 = vadd.f32 %v5258, %v5402
    %v5404 = vpop.f32.mrb[0].mxu0
    %5405 = vmatprep.mubr.bf16.mxu0 0
    %5406 = vmatmul.mubr.bf16.gmra.mrb[0].mxu0 %v4094
    %v5407 = vpop.f32.mrb[0].mxu0
    %v5408 = vadd.f32 %v5263, %v5407
    %v5409 = vpop.f32.mrb[0].mxu0
    %v5410 = vpop.f32.mrb[0].mxu0
    %v5411 = vadd.f32 %v5266, %v5410
    %v5412 = vpop.f32.mrb[0].mxu0
    %5413 = vmatprep.mubr.bf16.mxu0 0
    %5414 = vmatmul.mubr.bf16.gmra.mrb[0].mxu0 %v4103
    %v5415 = vpop.f32.mrb[0].mxu0
    %v5416 = vadd.f32 %v5271, %v5415
    %v5417 = vpop.f32.mrb[0].mxu0
    %v5418 = vpop.f32.mrb[0].mxu0
    %v5419 = vadd.f32 %v5274, %v5418
    %v5420 = vpop.f32.mrb[0].mxu0
    %5421 = vmatprep.mubr.bf16.mxu0 0
    %5422 = vmatmul.mubr.bf16.gmra.mrb[0].mxu0 %v4112
    %v5423 = vpop.f32.mrb[0].mxu0
    %v5424 = vadd.f32 %v5279, %v5423
    %v5425 = vpop.f32.mrb[0].mxu0
    %v5426 = vpop.f32.mrb[0].mxu0
    %v5427 = vadd.f32 %v5282, %v5426
    %v5428 = vpop.f32.mrb[0].mxu0
    %5429 = vmatprep.mubr.bf16.mxu0 0
    %5430 = vmatmul.mubr.bf16.gmra.mrb[0].mxu0 %v4121
    %v5431 = vpop.f32.mrb[0].mxu0
    %v5432 = vadd.f32 %v5287, %v5431
    %v5433 = vpop.f32.mrb[0].mxu0
    %v5434 = vpop.f32.mrb[0].mxu0
    %v5435 = vadd.f32 %v5290, %v5434
    %v5436 = vpop.f32.mrb[0].mxu0
    %5437 = vmatprep.mubr.bf16.mxu0 0
    %5438 = vmatmul.mubr.bf16.gmra.mrb[0].mxu0 %v4130
    %v5439 = vpop.f32.mrb[0].mxu0
    %v5440 = vadd.f32 %v5295, %v5439
    %v5441 = vpop.f32.mrb[0].mxu0
    %v5442 = vpop.f32.mrb[0].mxu0
    %v5443 = vadd.f32 %v5298, %v5442
    %v5444 = vpop.f32.mrb[0].mxu0
    %5445 = vmatprep.mubr.bf16.mxu0 0
    %5446 = vmatmul.mubr.bf16.gmra.mrb[0].mxu0 %v4139
    %v5447 = vpop.f32.mrb[0].mxu0
    %v5448 = vadd.f32 %v5303, %v5447
    %v5449 = vpop.f32.mrb[0].mxu0
    %v5450 = vpop.f32.mrb[0].mxu0
    %v5451 = vadd.f32 %v5306, %v5450
    %v5452 = vpop.f32.mrb[0].mxu0
    %5453 = vmatprep.mubr.bf16.mxu0 0
    %5454 = vmatmul.mubr.bf16.gmra.mrb[0].mxu0 %v4148
    %v5455 = vpop.f32.mrb[0].mxu0
    %v5456 = vadd.f32 %v5311, %v5455
    %v5457 = vpop.f32.mrb[0].mxu0
    %v5458 = vpop.f32.mrb[0].mxu0
    %v5459 = vadd.f32 %v5314, %v5458
    %v5460 = vpop.f32.mrb[0].mxu0
    %5461 = vmatprep.mubr.bf16.mxu0 0
    %5462 = vmatmul.mubr.bf16.gmra.mrb[0].mxu0 %v4157
    %v5463 = vpop.f32.mrb[0].mxu0
    %v5464 = vadd.f32 %v5319, %v5463
    %v5465 = vpop.f32.mrb[0].mxu0
    %v5466 = vpop.f32.mrb[0].mxu0
    %v5467 = vadd.f32 %v5322, %v5466
    %v5468 = vpop.f32.mrb[0].mxu0
    %5469 = vmatprep.mubr.bf16.mxu0 0
    %5470 = vmatmul.mubr.bf16.gmra.mrb[0].mxu0 %v4166
    %v5471 = vpop.f32.mrb[0].mxu0
    %v5472 = vadd.f32 %v5327, %v5471
    %v5473 = vpop.f32.mrb[0].mxu0
    %v5474 = vpop.f32.mrb[0].mxu0
    %v5475 = vadd.f32 %v5330, %v5474
    %v5476 = vpop.f32.mrb[0].mxu0
    %5477 = vmatprep.mubr.bf16.mxu0 0
    %5478 = vmatmul.mubr.bf16.gmra.mrb[0].mxu0 %v4175
    %v5479 = vpop.f32.mrb[0].mxu0
    %v5480 = vadd.f32 %v5335, %v5479
    %v5481 = vpop.f32.mrb[0].mxu0
    %v5482 = vpop.f32.mrb[0].mxu0
    %v5483 = vadd.f32 %v5338, %v5482
    %v5484 = vpop.f32.mrb[0].mxu0
    %5485 = vmatprep.mubr.bf16.mxu0 0
    %5486 = vmatmul.mubr.bf16.gmra.mrb[0].mxu0 %v4184
    %v5487 = vpop.f32.mrb[0].mxu0
    %v5488 = vadd.f32 %v5343, %v5487
    %v5489 = vpop.f32.mrb[0].mxu0
    %v5490 = vpop.f32.mrb[0].mxu0
    %v5491 = vadd.f32 %v5346, %v5490
    %v5492 = vpop.f32.mrb[0].mxu0
    %5493 = vmatprep.mubr.bf16.mxu0 0
    %5494 = vmatmul.mubr.bf16.gmra.mrb[0].mxu0 %v4193
    %v5495 = vpop.f32.mrb[0].mxu0
    %v5496 = vadd.f32 %v5351, %v5495
    %v5497 = vpop.f32.mrb[0].mxu0
    %v5498 = vpop.f32.mrb[0].mxu0
    %v5499 = vadd.f32 %v5354, %v5498
    %v5500 = vpop.f32.mrb[0].mxu0
    %5501 = vdwg.mxu0
    %v5502 = vmax.f32 %v5392, 0.0
    %v5503 = vmax.f32 %v5395, 0.0
    %v5504 = vmax.f32 %v5400, 0.0
    %v5505 = vmax.f32 %v5403, 0.0
    %v5506 = vmax.f32 %v5408, 0.0
    %v5507 = vmax.f32 %v5411, 0.0
    %v5508 = vmax.f32 %v5416, 0.0
    %v5509 = vmax.f32 %v5419, 0.0
    %v5510 = vmax.f32 %v5424, 0.0
    %v5511 = vmax.f32 %v5427, 0.0
    %v5512 = vmax.f32 %v5432, 0.0
    %v5513 = vmax.f32 %v5435, 0.0
    %v5514 = vmax.f32 %v5440, 0.0
    %v5515 = vmax.f32 %v5443, 0.0
    %v5516 = vmax.f32 %v5448, 0.0
    %v5517 = vmax.f32 %v5451, 0.0
    %v5518 = vmax.f32 %v5456, 0.0
    %v5519 = vmax.f32 %v5459, 0.0
    %v5520 = vmax.f32 %v5464, 0.0
    %v5521 = vmax.f32 %v5467, 0.0
    %v5522 = vmax.f32 %v5472, 0.0
    %v5523 = vmax.f32 %v5475, 0.0
    %v5524 = vmax.f32 %v5480, 0.0
    %v5525 = vmax.f32 %v5483, 0.0
    %v5526 = vmax.f32 %v5488, 0.0
    %v5527 = vmax.f32 %v5491, 0.0
    %v5528 = vmax.f32 %v5496, 0.0
    %v5529 = vmax.f32 %v5499, 0.0
    %v5530 = vmul.f32 %v5502, %v2750
    %v5531 = vmul.f32 %v5503, %v2755
    %v5532 = vmul.f32 %v5504, %v2760
    %v5533 = vmul.f32 %v5505, %v2765
    %v5534 = vmul.f32 %v5506, %v2770
    %v5535 = vmul.f32 %v5507, %v2775
    %v5536 = vmul.f32 %v5508, %v2780
    %v5537 = vmul.f32 %v5509, %v2785
    %v5538 = vmul.f32 %v5510, %v2790
    %v5539 = vmul.f32 %v5511, %v2795
    %v5540 = vmul.f32 %v5512, %v2800
    %v5541 = vmul.f32 %v5513, %v2805
    %v5542 = vmul.f32 %v5514, %v2810
    %v5543 = vmul.f32 %v5515, %v2815
    %v5544 = vmul.f32 %v5516, %v2820
    %v5545 = vmul.f32 %v5517, %v2825
    %v5546 = vmul.f32 %v5518, %v2830
    %v5547 = vmul.f32 %v5519, %v2835
    %v5548 = vmul.f32 %v5520, %v2840
    %v5549 = vmul.f32 %v5521, %v2845
    %v5550 = vmul.f32 %v5522, %v2850
    %v5551 = vmul.f32 %v5523, %v2855
    %v5552 = vmul.f32 %v5524, %v2860
    %v5553 = vmul.f32 %v5525, %v2865
    %v5554 = vmul.f32 %v5526, %v2870
    %v5555 = vmul.f32 %v5527, %v2875
    %v5556 = vmul.f32 %v5528, %v2880
    %v5557 = vmul.f32 %v5529, %v2885
    %v5558 = vpack.c.bf16 %v5531, %v5530
    %v5559 = vpack.c.bf16 %v5533, %v5532
    %v5560 = vpack.c.bf16 %v5535, %v5534
    %v5561 = vpack.c.bf16 %v5537, %v5536
    %v5562 = vpack.c.bf16 %v5539, %v5538
    %v5563 = vpack.c.bf16 %v5541, %v5540
    %v5564 = vpack.c.bf16 %v5543, %v5542
    %v5565 = vpack.c.bf16 %v5545, %v5544
    %v5566 = vpack.c.bf16 %v5547, %v5546
    %v5567 = vpack.c.bf16 %v5549, %v5548
    %v5568 = vpack.c.bf16 %v5551, %v5550
    %v5569 = vpack.c.bf16 %v5553, %v5552
    %v5570 = vpack.c.bf16 %v5555, %v5554
    %v5571 = vpack.c.bf16 %v5557, %v5556
    %v5573 = vshrl.u32 %v5558, 16
    %v5575 = vrot.slane %v5573, 2
    %v5576 = vshll.u32 %v5558, 16
    %v5578 = vrot.slane %v5576, 3
    %v5579 = vor.u32 %v5575, %v5578
    %v5581 = vshrl.u32 %v5559, 16
    %v5583 = vrot.slane %v5581, 2
    %v5584 = vshll.u32 %v5559, 16
    %v5586 = vrot.slane %v5584, 3
    %v5587 = vor.u32 %v5583, %v5586
    %v5588 = vsel %vm1034, %v5579, %v5587
    %v5590 = vshrl.u32 %v5560, 16
    %v5592 = vrot.slane %v5590, 2
    %v5593 = vshll.u32 %v5560, 16
    %v5595 = vrot.slane %v5593, 3
    %v5596 = vor.u32 %v5592, %v5595
    %v5597 = vsel %vm1034, %v5587, %v5596
    %v5599 = vshrl.u32 %v5561, 16
    %v5601 = vrot.slane %v5599, 2
    %v5602 = vshll.u32 %v5561, 16
    %v5604 = vrot.slane %v5602, 3
    %v5605 = vor.u32 %v5601, %v5604
    %v5606 = vsel %vm1034, %v5596, %v5605
    %v5608 = vshrl.u32 %v5562, 16
    %v5610 = vrot.slane %v5608, 2
    %v5611 = vshll.u32 %v5562, 16
    %v5613 = vrot.slane %v5611, 3
    %v5614 = vor.u32 %v5610, %v5613
    %v5615 = vsel %vm1034, %v5605, %v5614
    %v5617 = vshrl.u32 %v5563, 16
    %v5619 = vrot.slane %v5617, 2
    %v5620 = vshll.u32 %v5563, 16
    %v5622 = vrot.slane %v5620, 3
    %v5623 = vor.u32 %v5619, %v5622
    %v5624 = vsel %vm1034, %v5614, %v5623
    %v5626 = vshrl.u32 %v5564, 16
    %v5628 = vrot.slane %v5626, 2
    %v5629 = vshll.u32 %v5564, 16
    %v5631 = vrot.slane %v5629, 3
    %v5632 = vor.u32 %v5628, %v5631
    %v5633 = vsel %vm1034, %v5623, %v5632
    %v5635 = vshrl.u32 %v5565, 16
    %v5637 = vrot.slane %v5635, 2
    %v5638 = vshll.u32 %v5565, 16
    %v5640 = vrot.slane %v5638, 3
    %v5641 = vor.u32 %v5637, %v5640
    %v5642 = vsel %vm1034, %v5632, %v5641
    %v5644 = vshrl.u32 %v5566, 16
    %v5646 = vrot.slane %v5644, 2
    %v5647 = vshll.u32 %v5566, 16
    %v5649 = vrot.slane %v5647, 3
    %v5650 = vor.u32 %v5646, %v5649
    %v5651 = vsel %vm1034, %v5641, %v5650
    %v5653 = vshrl.u32 %v5567, 16
    %v5655 = vrot.slane %v5653, 2
    %v5656 = vshll.u32 %v5567, 16
    %v5658 = vrot.slane %v5656, 3
    %v5659 = vor.u32 %v5655, %v5658
    %v5660 = vsel %vm1034, %v5650, %v5659
    %v5662 = vshrl.u32 %v5568, 16
    %v5664 = vrot.slane %v5662, 2
    %v5665 = vshll.u32 %v5568, 16
    %v5667 = vrot.slane %v5665, 3
    %v5668 = vor.u32 %v5664, %v5667
    %v5669 = vsel %vm1034, %v5659, %v5668
    %v5671 = vshrl.u32 %v5569, 16
    %v5673 = vrot.slane %v5671, 2
    %v5674 = vshll.u32 %v5569, 16
    %v5676 = vrot.slane %v5674, 3
    %v5677 = vor.u32 %v5673, %v5676
    %v5678 = vsel %vm1034, %v5668, %v5677
    %v5680 = vshrl.u32 %v5570, 16
    %v5682 = vrot.slane %v5680, 2
    %v5683 = vshll.u32 %v5570, 16
    %v5685 = vrot.slane %v5683, 3
    %v5686 = vor.u32 %v5682, %v5685
    %v5687 = vsel %vm1034, %v5677, %v5686
    %v5689 = vshrl.u32 %v5571, 16
    %v5691 = vrot.slane %v5689, 2
    %v5692 = vshll.u32 %v5571, 16
    %v5694 = vrot.slane %v5692, 3
    %v5695 = vor.u32 %v5691, %v5694
    %v5696 = vsel %vm1034, %v5686, %v5695
    %v5712 = vld [vmem:[#allocation2] sm:$0xe0]
    %v5713 = vsel %vm3071, %v5579, %v5712
    %5714 = vst [vmem:[#allocation2] sm:$0xe0] %v5713
    %5715 = vst [vmem:[#allocation2 + $0x8] sm:$0xff] %v5588
    %5716 = vst [vmem:[#allocation2 + $0x10] sm:$0xff] %v5597
    %5717 = vst [vmem:[#allocation2 + $0x18] sm:$0xff] %v5606
    %5718 = vst [vmem:[#allocation2 + $0x20] sm:$0xff] %v5615
    %5719 = vst [vmem:[#allocation2 + $0x28] sm:$0xff] %v5624
    %5720 = vst [vmem:[#allocation2 + $0x30] sm:$0xff] %v5633
    %5721 = vst [vmem:[#allocation2 + $0x38] sm:$0xff] %v5642
    %5722 = vst [vmem:[#allocation2 + $0x40] sm:$0xff] %v5651
    %5723 = vst [vmem:[#allocation2 + $0x48] sm:$0xff] %v5660
    %5724 = vst [vmem:[#allocation2 + $0x50] sm:$0xff] %v5669
    %5725 = vst [vmem:[#allocation2 + $0x58] sm:$0xff] %v5678
    %5726 = vst [vmem:[#allocation2 + $0x60] sm:$0xff] %v5687
    %5727 = vst [vmem:[#allocation2 + $0x68] sm:$0xff] %v5696
    %v5728 = vld [vmem:[#allocation2 + $0x70] sm:$0x3f]
    %v5729 = vsel %vm3088, %v5695, %v5728
    %5730 = vst [vmem:[#allocation2 + $0x70] sm:$0x3f] %v5729
    %v5731 = vld [vmem:[#allocation2] sm:$0xff]
    %v5732 = vld [vmem:[#allocation2 + $0x8] sm:$0xff]
    %v5733 = vld [vmem:[#allocation2 + $0x10] sm:$0xff]
    %v5734 = vld [vmem:[#allocation2 + $0x18] sm:$0xff]
    %v5735 = vld [vmem:[#allocation2 + $0x20] sm:$0xff]
    %v5736 = vld [vmem:[#allocation2 + $0x28] sm:$0xff]
    %v5737 = vld [vmem:[#allocation2 + $0x30] sm:$0xff]
    %v5738 = vld [vmem:[#allocation2 + $0x38] sm:$0xff]
    %v5739 = vld [vmem:[#allocation2 + $0x40] sm:$0xff]
    %v5740 = vld [vmem:[#allocation2 + $0x48] sm:$0xff]
    %v5741 = vld [vmem:[#allocation2 + $0x50] sm:$0xff]
    %v5742 = vld [vmem:[#allocation2 + $0x58] sm:$0xff]
    %v5743 = vld [vmem:[#allocation2 + $0x60] sm:$0xff]
    %v5744 = vld [vmem:[#allocation2 + $0x68] sm:$0xff]
    %5745 = vst [vmem:[#allocation3] sm:$0xff] %v5731
    %5746 = vst [vmem:[#allocation3 + $0x48] sm:$0xff] %v5732
    %5747 = vst [vmem:[#allocation3 + $0x90] sm:$0xff] %v5733
    %5748 = vst [vmem:[#allocation3 + $0xd8] sm:$0xff] %v5734
    %5749 = vst [vmem:[#allocation3 + $0x120] sm:$0xff] %v5735
    %5750 = vst [vmem:[#allocation3 + $0x168] sm:$0xff] %v5736
    %5751 = vst [vmem:[#allocation3 + $0x1b0] sm:$0xff] %v5737
    %5752 = vst [vmem:[#allocation3 + $0x1f8] sm:$0xff] %v5738
    %5753 = vst [vmem:[#allocation3 + $0x240] sm:$0xff] %v5739
    %5754 = vst [vmem:[#allocation3 + $0x288] sm:$0xff] %v5740
    %5755 = vst [vmem:[#allocation3 + $0x2d0] sm:$0xff] %v5741
    %5756 = vst [vmem:[#allocation3 + $0x318] sm:$0xff] %v5742
    %5757 = vst [vmem:[#allocation3 + $0x360] sm:$0xff] %v5743
    %5758 = vst [vmem:[#allocation3 + $0x3a8] sm:$0xff] %v5744
    %v5759 = vld [vmem:[#allocation2] sm:$0xff]
    %v5760 = vld [vmem:[#allocation2 + $0x8] sm:$0xff]
    %v5761 = vld [vmem:[#allocation2 + $0x10] sm:$0xff]
    %v5762 = vld [vmem:[#allocation2 + $0x18] sm:$0xff]
    %v5763 = vld [vmem:[#allocation2 + $0x20] sm:$0xff]
    %v5764 = vld [vmem:[#allocation2 + $0x28] sm:$0xff]
    %v5765 = vld [vmem:[#allocation2 + $0x30] sm:$0xff]
    %v5766 = vld [vmem:[#allocation2 + $0x38] sm:$0xff]
    %v5767 = vld [vmem:[#allocation2 + $0x40] sm:$0xff]
    %v5768 = vld [vmem:[#allocation2 + $0x48] sm:$0xff]
    %v5769 = vld [vmem:[#allocation2 + $0x50] sm:$0xff]
    %v5770 = vld [vmem:[#allocation2 + $0x58] sm:$0xff]
    %v5771 = vld [vmem:[#allocation2 + $0x60] sm:$0xff]
    %v5772 = vld [vmem:[#allocation2 + $0x68] sm:$0xff]
    %v5773 = vld [vmem:[#allocation2 + $0x70] sm:$0x1]
    %v5775 = vshrl.u32 %v5759, 16
    %v5777 = vshll.u32 %v5759, 16
    %v5779 = vrot.slane %v5777, 1
    %v5780 = vor.u32 %v5775, %v5779
    %v5782 = vshll.u32 %v5760, 16
    %v5784 = vrot.slane %v5782, 1
    %v5785 = vsel %vm344, %v5780, %v5784
    %v5786 = vshrl.u32 %v5760, 16
    %v5788 = vor.u32 %v5786, %v5784
    %v5790 = vshll.u32 %v5761, 16
    %v5792 = vrot.slane %v5790, 1
    %v5793 = vsel %vm344, %v5788, %v5792
    %v5794 = vshrl.u32 %v5761, 16
    %v5796 = vor.u32 %v5794, %v5792
    %v5798 = vshll.u32 %v5762, 16
    %v5800 = vrot.slane %v5798, 1
    %v5801 = vsel %vm344, %v5796, %v5800
    %v5802 = vshrl.u32 %v5762, 16
    %v5804 = vor.u32 %v5802, %v5800
    %v5806 = vshll.u32 %v5763, 16
    %v5808 = vrot.slane %v5806, 1
    %v5809 = vsel %vm344, %v5804, %v5808
    %v5810 = vshrl.u32 %v5763, 16
    %v5812 = vor.u32 %v5810, %v5808
    %v5814 = vshll.u32 %v5764, 16
    %v5816 = vrot.slane %v5814, 1
    %v5817 = vsel %vm344, %v5812, %v5816
    %v5818 = vshrl.u32 %v5764, 16
    %v5820 = vor.u32 %v5818, %v5816
    %v5822 = vshll.u32 %v5765, 16
    %v5824 = vrot.slane %v5822, 1
    %v5825 = vsel %vm344, %v5820, %v5824
    %v5826 = vshrl.u32 %v5765, 16
    %v5828 = vor.u32 %v5826, %v5824
    %v5830 = vshll.u32 %v5766, 16
    %v5832 = vrot.slane %v5830, 1
    %v5833 = vsel %vm344, %v5828, %v5832
    %v5834 = vshrl.u32 %v5766, 16
    %v5836 = vor.u32 %v5834, %v5832
    %v5838 = vshll.u32 %v5767, 16
    %v5840 = vrot.slane %v5838, 1
    %v5841 = vsel %vm344, %v5836, %v5840
    %v5842 = vshrl.u32 %v5767, 16
    %v5844 = vor.u32 %v5842, %v5840
    %v5846 = vshll.u32 %v5768, 16
    %v5848 = vrot.slane %v5846, 1
    %v5849 = vsel %vm344, %v5844, %v5848
    %v5850 = vshrl.u32 %v5768, 16
    %v5852 = vor.u32 %v5850, %v5848
    %v5854 = vshll.u32 %v5769, 16
    %v5856 = vrot.slane %v5854, 1
    %v5857 = vsel %vm344, %v5852, %v5856
    %v5858 = vshrl.u32 %v5769, 16
    %v5860 = vor.u32 %v5858, %v5856
    %v5862 = vshll.u32 %v5770, 16
    %v5864 = vrot.slane %v5862, 1
    %v5865 = vsel %vm344, %v5860, %v5864
    %v5866 = vshrl.u32 %v5770, 16
    %v5868 = vor.u32 %v5866, %v5864
    %v5870 = vshll.u32 %v5771, 16
    %v5872 = vrot.slane %v5870, 1
    %v5873 = vsel %vm344, %v5868, %v5872
    %v5874 = vshrl.u32 %v5771, 16
    %v5876 = vor.u32 %v5874, %v5872
    %v5878 = vshll.u32 %v5772, 16
    %v5880 = vrot.slane %v5878, 1
    %v5881 = vsel %vm344, %v5876, %v5880
    %v5882 = vshrl.u32 %v5772, 16
    %v5884 = vor.u32 %v5882, %v5880
    %v5886 = vshll.u32 %v5773, 16
    %v5888 = vrot.slane %v5886, 1
    %v5889 = vsel %vm344, %v5884, %v5888
    %5904 = vst [vmem:[#allocation3 + $0x8] sm:$0xff] %v5785
    %5905 = vst [vmem:[#allocation3 + $0x50] sm:$0xff] %v5793
    %5906 = vst [vmem:[#allocation3 + $0x98] sm:$0xff] %v5801
    %5907 = vst [vmem:[#allocation3 + $0xe0] sm:$0xff] %v5809
    %5908 = vst [vmem:[#allocation3 + $0x128] sm:$0xff] %v5817
    %5909 = vst [vmem:[#allocation3 + $0x170] sm:$0xff] %v5825
    %5910 = vst [vmem:[#allocation3 + $0x1b8] sm:$0xff] %v5833
    %5911 = vst [vmem:[#allocation3 + $0x200] sm:$0xff] %v5841
    %5912 = vst [vmem:[#allocation3 + $0x248] sm:$0xff] %v5849
    %5913 = vst [vmem:[#allocation3 + $0x290] sm:$0xff] %v5857
    %5914 = vst [vmem:[#allocation3 + $0x2d8] sm:$0xff] %v5865
    %5915 = vst [vmem:[#allocation3 + $0x320] sm:$0xff] %v5873
    %5916 = vst [vmem:[#allocation3 + $0x368] sm:$0xff] %v5881
    %5917 = vst [vmem:[#allocation3 + $0x3b0] sm:$0xff] %v5889
    %v5918 = vld [vmem:[#allocation2] sm:$0xfe]
    %v5919 = vld [vmem:[#allocation2 + $0x8] sm:$0xff]
    %v5920 = vld [vmem:[#allocation2 + $0x10] sm:$0xff]
    %v5921 = vld [vmem:[#allocation2 + $0x18] sm:$0xff]
    %v5922 = vld [vmem:[#allocation2 + $0x20] sm:$0xff]
    %v5923 = vld [vmem:[#allocation2 + $0x28] sm:$0xff]
    %v5924 = vld [vmem:[#allocation2 + $0x30] sm:$0xff]
    %v5925 = vld [vmem:[#allocation2 + $0x38] sm:$0xff]
    %v5926 = vld [vmem:[#allocation2 + $0x40] sm:$0xff]
    %v5927 = vld [vmem:[#allocation2 + $0x48] sm:$0xff]
    %v5928 = vld [vmem:[#allocation2 + $0x50] sm:$0xff]
    %v5929 = vld [vmem:[#allocation2 + $0x58] sm:$0xff]
    %v5930 = vld [vmem:[#allocation2 + $0x60] sm:$0xff]
    %v5931 = vld [vmem:[#allocation2 + $0x68] sm:$0xff]
    %v5932 = vld [vmem:[#allocation2 + $0x70] sm:$0x1]
    %v5948 = vrot.slane %v5918, 1
    %v5949 = vrot.slane %v5919, 1
    %v5950 = vsel %vm519, %v5948, %v5949
    %v5951 = vrot.slane %v5920, 1
    %v5952 = vsel %vm519, %v5949, %v5951
    %v5953 = vrot.slane %v5921, 1
    %v5954 = vsel %vm519, %v5951, %v5953
    %v5955 = vrot.slane %v5922, 1
    %v5956 = vsel %vm519, %v5953, %v5955
    %v5957 = vrot.slane %v5923, 1
    %v5958 = vsel %vm519, %v5955, %v5957
    %v5959 = vrot.slane %v5924, 1
    %v5960 = vsel %vm519, %v5957, %v5959
    %v5961 = vrot.slane %v5925, 1
    %v5962 = vsel %vm519, %v5959, %v5961
    %v5963 = vrot.slane %v5926, 1
    %v5964 = vsel %vm519, %v5961, %v5963
    %v5965 = vrot.slane %v5927, 1
    %v5966 = vsel %vm519, %v5963, %v5965
    %v5967 = vrot.slane %v5928, 1
    %v5968 = vsel %vm519, %v5965, %v5967
    %v5969 = vrot.slane %v5929, 1
    %v5970 = vsel %vm519, %v5967, %v5969
    %v5971 = vrot.slane %v5930, 1
    %v5972 = vsel %vm519, %v5969, %v5971
    %v5973 = vrot.slane %v5931, 1
    %v5974 = vsel %vm519, %v5971, %v5973
    %v5975 = vrot.slane %v5932, 1
    %v5976 = vsel %vm519, %v5973, %v5975
    %5991 = vst [vmem:[#allocation3 + $0x10] sm:$0xff] %v5950
    %5992 = vst [vmem:[#allocation3 + $0x58] sm:$0xff] %v5952
    %5993 = vst [vmem:[#allocation3 + $0xa0] sm:$0xff] %v5954
    %5994 = vst [vmem:[#allocation3 + $0xe8] sm:$0xff] %v5956
    %5995 = vst [vmem:[#allocation3 + $0x130] sm:$0xff] %v5958
    %5996 = vst [vmem:[#allocation3 + $0x178] sm:$0xff] %v5960
    %5997 = vst [vmem:[#allocation3 + $0x1c0] sm:$0xff] %v5962
    %5998 = vst [vmem:[#allocation3 + $0x208] sm:$0xff] %v5964
    %5999 = vst [vmem:[#allocation3 + $0x250] sm:$0xff] %v5966
    %6000 = vst [vmem:[#allocation3 + $0x298] sm:$0xff] %v5968
    %6001 = vst [vmem:[#allocation3 + $0x2e0] sm:$0xff] %v5970
    %6002 = vst [vmem:[#allocation3 + $0x328] sm:$0xff] %v5972
    %6003 = vst [vmem:[#allocation3 + $0x370] sm:$0xff] %v5974
    %6004 = vst [vmem:[#allocation3 + $0x3b8] sm:$0xff] %v5976
    %v6005 = vld [vmem:[#allocation2] sm:$0xe0]
    %v6006 = vld [vmem:[#allocation2 + $0x8] sm:$0xff]
    %v6007 = vld [vmem:[#allocation2 + $0x10] sm:$0xff]
    %v6008 = vld [vmem:[#allocation2 + $0x18] sm:$0xff]
    %v6009 = vld [vmem:[#allocation2 + $0x20] sm:$0xff]
    %v6010 = vld [vmem:[#allocation2 + $0x28] sm:$0xff]
    %v6011 = vld [vmem:[#allocation2 + $0x30] sm:$0xff]
    %v6012 = vld [vmem:[#allocation2 + $0x38] sm:$0xff]
    %v6013 = vld [vmem:[#allocation2 + $0x40] sm:$0xff]
    %v6014 = vld [vmem:[#allocation2 + $0x48] sm:$0xff]
    %v6015 = vld [vmem:[#allocation2 + $0x50] sm:$0xff]
    %v6016 = vld [vmem:[#allocation2 + $0x58] sm:$0xff]
    %v6017 = vld [vmem:[#allocation2 + $0x60] sm:$0xff]
    %v6018 = vld [vmem:[#allocation2 + $0x68] sm:$0xff]
    %v6019 = vld [vmem:[#allocation2 + $0x70] sm:$0x1f]
    %v6035 = vrot.slane %v6005, 5
    %v6036 = vrot.slane %v6006, 5
    %v6037 = vsel %vm607, %v6035, %v6036
    %v6038 = vrot.slane %v6007, 5
    %v6039 = vsel %vm607, %v6036, %v6038
    %v6040 = vrot.slane %v6008, 5
    %v6041 = vsel %vm607, %v6038, %v6040
    %v6042 = vrot.slane %v6009, 5
    %v6043 = vsel %vm607, %v6040, %v6042
    %v6044 = vrot.slane %v6010, 5
    %v6045 = vsel %vm607, %v6042, %v6044
    %v6046 = vrot.slane %v6011, 5
    %v6047 = vsel %vm607, %v6044, %v6046
    %v6048 = vrot.slane %v6012, 5
    %v6049 = vsel %vm607, %v6046, %v6048
    %v6050 = vrot.slane %v6013, 5
    %v6051 = vsel %vm607, %v6048, %v6050
    %v6052 = vrot.slane %v6014, 5
    %v6053 = vsel %vm607, %v6050, %v6052
    %v6054 = vrot.slane %v6015, 5
    %v6055 = vsel %vm607, %v6052, %v6054
    %v6056 = vrot.slane %v6016, 5
    %v6057 = vsel %vm607, %v6054, %v6056
    %v6058 = vrot.slane %v6017, 5
    %v6059 = vsel %vm607, %v6056, %v6058
    %v6060 = vrot.slane %v6018, 5
    %v6061 = vsel %vm607, %v6058, %v6060
    %v6062 = vrot.slane %v6019, 5
    %v6063 = vsel %vm607, %v6060, %v6062
    %6078 = vst [vmem:[#allocation3 + $0x18] sm:$0xff] %v6037
    %6079 = vst [vmem:[#allocation3 + $0x60] sm:$0xff] %v6039
    %6080 = vst [vmem:[#allocation3 + $0xa8] sm:$0xff] %v6041
    %6081 = vst [vmem:[#allocation3 + $0xf0] sm:$0xff] %v6043
    %6082 = vst [vmem:[#allocation3 + $0x138] sm:$0xff] %v6045
    %6083 = vst [vmem:[#allocation3 + $0x180] sm:$0xff] %v6047
    %6084 = vst [vmem:[#allocation3 + $0x1c8] sm:$0xff] %v6049
    %6085 = vst [vmem:[#allocation3 + $0x210] sm:$0xff] %v6051
    %6086 = vst [vmem:[#allocation3 + $0x258] sm:$0xff] %v6053
    %6087 = vst [vmem:[#allocation3 + $0x2a0] sm:$0xff] %v6055
    %6088 = vst [vmem:[#allocation3 + $0x2e8] sm:$0xff] %v6057
    %6089 = vst [vmem:[#allocation3 + $0x330] sm:$0xff] %v6059
    %6090 = vst [vmem:[#allocation3 + $0x378] sm:$0xff] %v6061
    %6091 = vst [vmem:[#allocation3 + $0x3c0] sm:$0xff] %v6063
    %v6092 = vld [vmem:[#allocation2] sm:$0xe0]
    %v6093 = vld [vmem:[#allocation2 + $0x8] sm:$0xff]
    %v6094 = vld [vmem:[#allocation2 + $0x10] sm:$0xff]
    %v6095 = vld [vmem:[#allocation2 + $0x18] sm:$0xff]
    %v6096 = vld [vmem:[#allocation2 + $0x20] sm:$0xff]
    %v6097 = vld [vmem:[#allocation2 + $0x28] sm:$0xff]
    %v6098 = vld [vmem:[#allocation2 + $0x30] sm:$0xff]
    %v6099 = vld [vmem:[#allocation2 + $0x38] sm:$0xff]
    %v6100 = vld [vmem:[#allocation2 + $0x40] sm:$0xff]
    %v6101 = vld [vmem:[#allocation2 + $0x48] sm:$0xff]
    %v6102 = vld [vmem:[#allocation2 + $0x50] sm:$0xff]
    %v6103 = vld [vmem:[#allocation2 + $0x58] sm:$0xff]
    %v6104 = vld [vmem:[#allocation2 + $0x60] sm:$0xff]
    %v6105 = vld [vmem:[#allocation2 + $0x68] sm:$0xff]
    %v6106 = vld [vmem:[#allocation2 + $0x70] sm:$0x3f]
    %v6108 = vshrl.u32 %v6092, 16
    %v6110 = vrot.slane %v6108, 5
    %v6111 = vshll.u32 %v6092, 16
    %v6113 = vrot.slane %v6111, 6
    %v6114 = vor.u32 %v6110, %v6113
    %v6116 = vshrl.u32 %v6093, 16
    %v6118 = vrot.slane %v6116, 5
    %v6119 = vshll.u32 %v6093, 16
    %v6121 = vrot.slane %v6119, 6
    %v6122 = vor.u32 %v6118, %v6121
    %v6123 = vsel %vm680, %v6114, %v6122
    %v6125 = vshrl.u32 %v6094, 16
    %v6127 = vrot.slane %v6125, 5
    %v6128 = vshll.u32 %v6094, 16
    %v6130 = vrot.slane %v6128, 6
    %v6131 = vor.u32 %v6127, %v6130
    %v6132 = vsel %vm680, %v6122, %v6131
    %v6134 = vshrl.u32 %v6095, 16
    %v6136 = vrot.slane %v6134, 5
    %v6137 = vshll.u32 %v6095, 16
    %v6139 = vrot.slane %v6137, 6
    %v6140 = vor.u32 %v6136, %v6139
    %v6141 = vsel %vm680, %v6131, %v6140
    %v6143 = vshrl.u32 %v6096, 16
    %v6145 = vrot.slane %v6143, 5
    %v6146 = vshll.u32 %v6096, 16
    %v6148 = vrot.slane %v6146, 6
    %v6149 = vor.u32 %v6145, %v6148
    %v6150 = vsel %vm680, %v6140, %v6149
    %v6152 = vshrl.u32 %v6097, 16
    %v6154 = vrot.slane %v6152, 5
    %v6155 = vshll.u32 %v6097, 16
    %v6157 = vrot.slane %v6155, 6
    %v6158 = vor.u32 %v6154, %v6157
    %v6159 = vsel %vm680, %v6149, %v6158
    %v6161 = vshrl.u32 %v6098, 16
    %v6163 = vrot.slane %v6161, 5
    %v6164 = vshll.u32 %v6098, 16
    %v6166 = vrot.slane %v6164, 6
    %v6167 = vor.u32 %v6163, %v6166
    %v6168 = vsel %vm680, %v6158, %v6167
    %v6170 = vshrl.u32 %v6099, 16
    %v6172 = vrot.slane %v6170, 5
    %v6173 = vshll.u32 %v6099, 16
    %v6175 = vrot.slane %v6173, 6
    %v6176 = vor.u32 %v6172, %v6175
    %v6177 = vsel %vm680, %v6167, %v6176
    %v6179 = vshrl.u32 %v6100, 16
    %v6181 = vrot.slane %v6179, 5
    %v6182 = vshll.u32 %v6100, 16
    %v6184 = vrot.slane %v6182, 6
    %v6185 = vor.u32 %v6181, %v6184
    %v6186 = vsel %vm680, %v6176, %v6185
    %v6188 = vshrl.u32 %v6101, 16
    %v6190 = vrot.slane %v6188, 5
    %v6191 = vshll.u32 %v6101, 16
    %v6193 = vrot.slane %v6191, 6
    %v6194 = vor.u32 %v6190, %v6193
    %v6195 = vsel %vm680, %v6185, %v6194
    %v6197 = vshrl.u32 %v6102, 16
    %v6199 = vrot.slane %v6197, 5
    %v6200 = vshll.u32 %v6102, 16
    %v6202 = vrot.slane %v6200, 6
    %v6203 = vor.u32 %v6199, %v6202
    %v6204 = vsel %vm680, %v6194, %v6203
    %v6206 = vshrl.u32 %v6103, 16
    %v6208 = vrot.slane %v6206, 5
    %v6209 = vshll.u32 %v6103, 16
    %v6211 = vrot.slane %v6209, 6
    %v6212 = vor.u32 %v6208, %v6211
    %v6213 = vsel %vm680, %v6203, %v6212
    %v6215 = vshrl.u32 %v6104, 16
    %v6217 = vrot.slane %v6215, 5
    %v6218 = vshll.u32 %v6104, 16
    %v6220 = vrot.slane %v6218, 6
    %v6221 = vor.u32 %v6217, %v6220
    %v6222 = vsel %vm680, %v6212, %v6221
    %v6224 = vshrl.u32 %v6105, 16
    %v6226 = vrot.slane %v6224, 5
    %v6227 = vshll.u32 %v6105, 16
    %v6229 = vrot.slane %v6227, 6
    %v6230 = vor.u32 %v6226, %v6229
    %v6231 = vsel %vm680, %v6221, %v6230
    %v6233 = vshrl.u32 %v6106, 16
    %v6235 = vrot.slane %v6233, 5
    %v6236 = vshll.u32 %v6106, 16
    %v6238 = vrot.slane %v6236, 6
    %v6239 = vor.u32 %v6235, %v6238
    %v6240 = vsel %vm680, %v6230, %v6239
    %6255 = vst [vmem:[#allocation3 + $0x20] sm:$0xff] %v6123
    %6256 = vst [vmem:[#allocation3 + $0x68] sm:$0xff] %v6132
    %6257 = vst [vmem:[#allocation3 + $0xb0] sm:$0xff] %v6141
    %6258 = vst [vmem:[#allocation3 + $0xf8] sm:$0xff] %v6150
    %6259 = vst [vmem:[#allocation3 + $0x140] sm:$0xff] %v6159
    %6260 = vst [vmem:[#allocation3 + $0x188] sm:$0xff] %v6168
    %6261 = vst [vmem:[#allocation3 + $0x1d0] sm:$0xff] %v6177
    %6262 = vst [vmem:[#allocation3 + $0x218] sm:$0xff] %v6186
    %6263 = vst [vmem:[#allocation3 + $0x260] sm:$0xff] %v6195
    %6264 = vst [vmem:[#allocation3 + $0x2a8] sm:$0xff] %v6204
    %6265 = vst [vmem:[#allocation3 + $0x2f0] sm:$0xff] %v6213
    %6266 = vst [vmem:[#allocation3 + $0x338] sm:$0xff] %v6222
    %6267 = vst [vmem:[#allocation3 + $0x380] sm:$0xff] %v6231
    %6268 = vst [vmem:[#allocation3 + $0x3c8] sm:$0xff] %v6240
    %v6269 = vld [vmem:[#allocation2] sm:$0xc0]
    %v6270 = vld [vmem:[#allocation2 + $0x8] sm:$0xff]
    %v6271 = vld [vmem:[#allocation2 + $0x10] sm:$0xff]
    %v6272 = vld [vmem:[#allocation2 + $0x18] sm:$0xff]
    %v6273 = vld [vmem:[#allocation2 + $0x20] sm:$0xff]
    %v6274 = vld [vmem:[#allocation2 + $0x28] sm:$0xff]
    %v6275 = vld [vmem:[#allocation2 + $0x30] sm:$0xff]
    %v6276 = vld [vmem:[#allocation2 + $0x38] sm:$0xff]
    %v6277 = vld [vmem:[#allocation2 + $0x40] sm:$0xff]
    %v6278 = vld [vmem:[#allocation2 + $0x48] sm:$0xff]
    %v6279 = vld [vmem:[#allocation2 + $0x50] sm:$0xff]
    %v6280 = vld [vmem:[#allocation2 + $0x58] sm:$0xff]
    %v6281 = vld [vmem:[#allocation2 + $0x60] sm:$0xff]
    %v6282 = vld [vmem:[#allocation2 + $0x68] sm:$0xff]
    %v6283 = vld [vmem:[#allocation2 + $0x70] sm:$0x3f]
    %v6299 = vrot.slane %v6269, 6
    %v6300 = vrot.slane %v6270, 6
    %v6301 = vsel %vm873, %v6299, %v6300
    %v6302 = vrot.slane %v6271, 6
    %v6303 = vsel %vm873, %v6300, %v6302
    %v6304 = vrot.slane %v6272, 6
    %v6305 = vsel %vm873, %v6302, %v6304
    %v6306 = vrot.slane %v6273, 6
    %v6307 = vsel %vm873, %v6304, %v6306
    %v6308 = vrot.slane %v6274, 6
    %v6309 = vsel %vm873, %v6306, %v6308
    %v6310 = vrot.slane %v6275, 6
    %v6311 = vsel %vm873, %v6308, %v6310
    %v6312 = vrot.slane %v6276, 6
    %v6313 = vsel %vm873, %v6310, %v6312
    %v6314 = vrot.slane %v6277, 6
    %v6315 = vsel %vm873, %v6312, %v6314
    %v6316 = vrot.slane %v6278, 6
    %v6317 = vsel %vm873, %v6314, %v6316
    %v6318 = vrot.slane %v6279, 6
    %v6319 = vsel %vm873, %v6316, %v6318
    %v6320 = vrot.slane %v6280, 6
    %v6321 = vsel %vm873, %v6318, %v6320
    %v6322 = vrot.slane %v6281, 6
    %v6323 = vsel %vm873, %v6320, %v6322
    %v6324 = vrot.slane %v6282, 6
    %v6325 = vsel %vm873, %v6322, %v6324
    %v6326 = vrot.slane %v6283, 6
    %v6327 = vsel %vm873, %v6324, %v6326
    %6342 = vst [vmem:[#allocation3 + $0x28] sm:$0xff] %v6301
    %6343 = vst [vmem:[#allocation3 + $0x70] sm:$0xff] %v6303
    %6344 = vst [vmem:[#allocation3 + $0xb8] sm:$0xff] %v6305
    %6345 = vst [vmem:[#allocation3 + $0x100] sm:$0xff] %v6307
    %6346 = vst [vmem:[#allocation3 + $0x148] sm:$0xff] %v6309
    %6347 = vst [vmem:[#allocation3 + $0x190] sm:$0xff] %v6311
    %6348 = vst [vmem:[#allocation3 + $0x1d8] sm:$0xff] %v6313
    %6349 = vst [vmem:[#allocation3 + $0x220] sm:$0xff] %v6315
    %6350 = vst [vmem:[#allocation3 + $0x268] sm:$0xff] %v6317
    %6351 = vst [vmem:[#allocation3 + $0x2b0] sm:$0xff] %v6319
    %6352 = vst [vmem:[#allocation3 + $0x2f8] sm:$0xff] %v6321
    %6353 = vst [vmem:[#allocation3 + $0x340] sm:$0xff] %v6323
    %6354 = vst [vmem:[#allocation3 + $0x388] sm:$0xff] %v6325
    %6355 = vst [vmem:[#allocation3 + $0x3d0] sm:$0xff] %v6327
    %v6356 = vld [vmem:[#allocation2 + $0x8] sm:$0xfc]
    %v6357 = vld [vmem:[#allocation2 + $0x10] sm:$0xff]
    %v6358 = vld [vmem:[#allocation2 + $0x18] sm:$0xff]
    %v6359 = vld [vmem:[#allocation2 + $0x20] sm:$0xff]
    %v6360 = vld [vmem:[#allocation2 + $0x28] sm:$0xff]
    %v6361 = vld [vmem:[#allocation2 + $0x30] sm:$0xff]
    %v6362 = vld [vmem:[#allocation2 + $0x38] sm:$0xff]
    %v6363 = vld [vmem:[#allocation2 + $0x40] sm:$0xff]
    %v6364 = vld [vmem:[#allocation2 + $0x48] sm:$0xff]
    %v6365 = vld [vmem:[#allocation2 + $0x50] sm:$0xff]
    %v6366 = vld [vmem:[#allocation2 + $0x58] sm:$0xff]
    %v6367 = vld [vmem:[#allocation2 + $0x60] sm:$0xff]
    %v6368 = vld [vmem:[#allocation2 + $0x68] sm:$0xff]
    %v6369 = vld [vmem:[#allocation2 + $0x70] sm:$0xff]
    %v6370 = vld [vmem:[#allocation2 + $0x78] sm:$0x3]
    %v6386 = vrot.slane %v6356, 2
    %v6387 = vrot.slane %v6357, 2
    %v6388 = vsel %vm961, %v6386, %v6387
    %v6389 = vrot.slane %v6358, 2
    %v6390 = vsel %vm961, %v6387, %v6389
    %v6391 = vrot.slane %v6359, 2
    %v6392 = vsel %vm961, %v6389, %v6391
    %v6393 = vrot.slane %v6360, 2
    %v6394 = vsel %vm961, %v6391, %v6393
    %v6395 = vrot.slane %v6361, 2
    %v6396 = vsel %vm961, %v6393, %v6395
    %v6397 = vrot.slane %v6362, 2
    %v6398 = vsel %vm961, %v6395, %v6397
    %v6399 = vrot.slane %v6363, 2
    %v6400 = vsel %vm961, %v6397, %v6399
    %v6401 = vrot.slane %v6364, 2
    %v6402 = vsel %vm961, %v6399, %v6401
    %v6403 = vrot.slane %v6365, 2
    %v6404 = vsel %vm961, %v6401, %v6403
    %v6405 = vrot.slane %v6366, 2
    %v6406 = vsel %vm961, %v6403, %v6405
    %v6407 = vrot.slane %v6367, 2
    %v6408 = vsel %vm961, %v6405, %v6407
    %v6409 = vrot.slane %v6368, 2
    %v6410 = vsel %vm961, %v6407, %v6409
    %v6411 = vrot.slane %v6369, 2
    %v6412 = vsel %vm961, %v6409, %v6411
    %v6413 = vrot.slane %v6370, 2
    %v6414 = vsel %vm961, %v6411, %v6413
    %6429 = vst [vmem:[#allocation3 + $0x30] sm:$0xff] %v6388
    %6430 = vst [vmem:[#allocation3 + $0x78] sm:$0xff] %v6390
    %6431 = vst [vmem:[#allocation3 + $0xc0] sm:$0xff] %v6392
    %6432 = vst [vmem:[#allocation3 + $0x108] sm:$0xff] %v6394
    %6433 = vst [vmem:[#allocation3 + $0x150] sm:$0xff] %v6396
    %6434 = vst [vmem:[#allocation3 + $0x198] sm:$0xff] %v6398
    %6435 = vst [vmem:[#allocation3 + $0x1e0] sm:$0xff] %v6400
    %6436 = vst [vmem:[#allocation3 + $0x228] sm:$0xff] %v6402
    %6437 = vst [vmem:[#allocation3 + $0x270] sm:$0xff] %v6404
    %6438 = vst [vmem:[#allocation3 + $0x2b8] sm:$0xff] %v6406
    %6439 = vst [vmem:[#allocation3 + $0x300] sm:$0xff] %v6408
    %6440 = vst [vmem:[#allocation3 + $0x348] sm:$0xff] %v6410
    %6441 = vst [vmem:[#allocation3 + $0x390] sm:$0xff] %v6412
    %6442 = vst [vmem:[#allocation3 + $0x3d8] sm:$0xff] %v6414
    %v6443 = vld [vmem:[#allocation2 + $0x8] sm:$0xfc]
    %v6444 = vld [vmem:[#allocation2 + $0x10] sm:$0xff]
    %v6445 = vld [vmem:[#allocation2 + $0x18] sm:$0xff]
    %v6446 = vld [vmem:[#allocation2 + $0x20] sm:$0xff]
    %v6447 = vld [vmem:[#allocation2 + $0x28] sm:$0xff]
    %v6448 = vld [vmem:[#allocation2 + $0x30] sm:$0xff]
    %v6449 = vld [vmem:[#allocation2 + $0x38] sm:$0xff]
    %v6450 = vld [vmem:[#allocation2 + $0x40] sm:$0xff]
    %v6451 = vld [vmem:[#allocation2 + $0x48] sm:$0xff]
    %v6452 = vld [vmem:[#allocation2 + $0x50] sm:$0xff]
    %v6453 = vld [vmem:[#allocation2 + $0x58] sm:$0xff]
    %v6454 = vld [vmem:[#allocation2 + $0x60] sm:$0xff]
    %v6455 = vld [vmem:[#allocation2 + $0x68] sm:$0xff]
    %v6456 = vld [vmem:[#allocation2 + $0x70] sm:$0xff]
    %v6457 = vld [vmem:[#allocation2 + $0x78] sm:$0x7]
    %v6459 = vshrl.u32 %v6443, 16
    %v6461 = vrot.slane %v6459, 2
    %v6462 = vshll.u32 %v6443, 16
    %v6464 = vrot.slane %v6462, 3
    %v6465 = vor.u32 %v6461, %v6464
    %v6467 = vshrl.u32 %v6444, 16
    %v6469 = vrot.slane %v6467, 2
    %v6470 = vshll.u32 %v6444, 16
    %v6472 = vrot.slane %v6470, 3
    %v6473 = vor.u32 %v6469, %v6472
    %v6474 = vsel %vm1034, %v6465, %v6473
    %v6476 = vshrl.u32 %v6445, 16
    %v6478 = vrot.slane %v6476, 2
    %v6479 = vshll.u32 %v6445, 16
    %v6481 = vrot.slane %v6479, 3
    %v6482 = vor.u32 %v6478, %v6481
    %v6483 = vsel %vm1034, %v6473, %v6482
    %v6485 = vshrl.u32 %v6446, 16
    %v6487 = vrot.slane %v6485, 2
    %v6488 = vshll.u32 %v6446, 16
    %v6490 = vrot.slane %v6488, 3
    %v6491 = vor.u32 %v6487, %v6490
    %v6492 = vsel %vm1034, %v6482, %v6491
    %v6494 = vshrl.u32 %v6447, 16
    %v6496 = vrot.slane %v6494, 2
    %v6497 = vshll.u32 %v6447, 16
    %v6499 = vrot.slane %v6497, 3
    %v6500 = vor.u32 %v6496, %v6499
    %v6501 = vsel %vm1034, %v6491, %v6500
    %v6503 = vshrl.u32 %v6448, 16
    %v6505 = vrot.slane %v6503, 2
    %v6506 = vshll.u32 %v6448, 16
    %v6508 = vrot.slane %v6506, 3
    %v6509 = vor.u32 %v6505, %v6508
    %v6510 = vsel %vm1034, %v6500, %v6509
    %v6512 = vshrl.u32 %v6449, 16
    %v6514 = vrot.slane %v6512, 2
    %v6515 = vshll.u32 %v6449, 16
    %v6517 = vrot.slane %v6515, 3
    %v6518 = vor.u32 %v6514, %v6517
    %v6519 = vsel %vm1034, %v6509, %v6518
    %v6521 = vshrl.u32 %v6450, 16
    %v6523 = vrot.slane %v6521, 2
    %v6524 = vshll.u32 %v6450, 16
    %v6526 = vrot.slane %v6524, 3
    %v6527 = vor.u32 %v6523, %v6526
    %v6528 = vsel %vm1034, %v6518, %v6527
    %v6530 = vshrl.u32 %v6451, 16
    %v6532 = vrot.slane %v6530, 2
    %v6533 = vshll.u32 %v6451, 16
    %v6535 = vrot.slane %v6533, 3
    %v6536 = vor.u32 %v6532, %v6535
    %v6537 = vsel %vm1034, %v6527, %v6536
    %v6539 = vshrl.u32 %v6452, 16
    %v6541 = vrot.slane %v6539, 2
    %v6542 = vshll.u32 %v6452, 16
    %v6544 = vrot.slane %v6542, 3
    %v6545 = vor.u32 %v6541, %v6544
    %v6546 = vsel %vm1034, %v6536, %v6545
    %v6548 = vshrl.u32 %v6453, 16
    %v6550 = vrot.slane %v6548, 2
    %v6551 = vshll.u32 %v6453, 16
    %v6553 = vrot.slane %v6551, 3
    %v6554 = vor.u32 %v6550, %v6553
    %v6555 = vsel %vm1034, %v6545, %v6554
    %v6557 = vshrl.u32 %v6454, 16
    %v6559 = vrot.slane %v6557, 2
    %v6560 = vshll.u32 %v6454, 16
    %v6562 = vrot.slane %v6560, 3
    %v6563 = vor.u32 %v6559, %v6562
    %v6564 = vsel %vm1034, %v6554, %v6563
    %v6566 = vshrl.u32 %v6455, 16
    %v6568 = vrot.slane %v6566, 2
    %v6569 = vshll.u32 %v6455, 16
    %v6571 = vrot.slane %v6569, 3
    %v6572 = vor.u32 %v6568, %v6571
    %v6573 = vsel %vm1034, %v6563, %v6572
    %v6575 = vshrl.u32 %v6456, 16
    %v6577 = vrot.slane %v6575, 2
    %v6578 = vshll.u32 %v6456, 16
    %v6580 = vrot.slane %v6578, 3
    %v6581 = vor.u32 %v6577, %v6580
    %v6582 = vsel %vm1034, %v6572, %v6581
    %v6584 = vshrl.u32 %v6457, 16
    %v6586 = vrot.slane %v6584, 2
    %v6587 = vshll.u32 %v6457, 16
    %v6589 = vrot.slane %v6587, 3
    %v6590 = vor.u32 %v6586, %v6589
    %v6591 = vsel %vm1034, %v6581, %v6590
    %6606 = vst [vmem:[#allocation3 + $0x38] sm:$0xff] %v6474
    %6607 = vst [vmem:[#allocation3 + $0x80] sm:$0xff] %v6483
    %6608 = vst [vmem:[#allocation3 + $0xc8] sm:$0xff] %v6492
    %6609 = vst [vmem:[#allocation3 + $0x110] sm:$0xff] %v6501
    %6610 = vst [vmem:[#allocation3 + $0x158] sm:$0xff] %v6510
    %6611 = vst [vmem:[#allocation3 + $0x1a0] sm:$0xff] %v6519
    %6612 = vst [vmem:[#allocation3 + $0x1e8] sm:$0xff] %v6528
    %6613 = vst [vmem:[#allocation3 + $0x230] sm:$0xff] %v6537
    %6614 = vst [vmem:[#allocation3 + $0x278] sm:$0xff] %v6546
    %6615 = vst [vmem:[#allocation3 + $0x2c0] sm:$0xff] %v6555
    %6616 = vst [vmem:[#allocation3 + $0x308] sm:$0xff] %v6564
    %6617 = vst [vmem:[#allocation3 + $0x350] sm:$0xff] %v6573
    %6618 = vst [vmem:[#allocation3 + $0x398] sm:$0xff] %v6582
    %6619 = vst [vmem:[#allocation3 + $0x3e0] sm:$0xff] %v6591
    %v6620 = vld [vmem:[#allocation2 + $0x8] sm:$0xf8]
    %v6621 = vld [vmem:[#allocation2 + $0x10] sm:$0xff]
    %v6622 = vld [vmem:[#allocation2 + $0x18] sm:$0xff]
    %v6623 = vld [vmem:[#allocation2 + $0x20] sm:$0xff]
    %v6624 = vld [vmem:[#allocation2 + $0x28] sm:$0xff]
    %v6625 = vld [vmem:[#allocation2 + $0x30] sm:$0xff]
    %v6626 = vld [vmem:[#allocation2 + $0x38] sm:$0xff]
    %v6627 = vld [vmem:[#allocation2 + $0x40] sm:$0xff]
    %v6628 = vld [vmem:[#allocation2 + $0x48] sm:$0xff]
    %v6629 = vld [vmem:[#allocation2 + $0x50] sm:$0xff]
    %v6630 = vld [vmem:[#allocation2 + $0x58] sm:$0xff]
    %v6631 = vld [vmem:[#allocation2 + $0x60] sm:$0xff]
    %v6632 = vld [vmem:[#allocation2 + $0x68] sm:$0xff]
    %v6633 = vld [vmem:[#allocation2 + $0x70] sm:$0xff]
    %v6634 = vld [vmem:[#allocation2 + $0x78] sm:$0x7]
    %v6650 = vrot.slane %v6620, 3
    %v6651 = vrot.slane %v6621, 3
    %v6652 = vsel %vm1227, %v6650, %v6651
    %v6653 = vrot.slane %v6622, 3
    %v6654 = vsel %vm1227, %v6651, %v6653
    %v6655 = vrot.slane %v6623, 3
    %v6656 = vsel %vm1227, %v6653, %v6655
    %v6657 = vrot.slane %v6624, 3
    %v6658 = vsel %vm1227, %v6655, %v6657
    %v6659 = vrot.slane %v6625, 3
    %v6660 = vsel %vm1227, %v6657, %v6659
    %v6661 = vrot.slane %v6626, 3
    %v6662 = vsel %vm1227, %v6659, %v6661
    %v6663 = vrot.slane %v6627, 3
    %v6664 = vsel %vm1227, %v6661, %v6663
    %v6665 = vrot.slane %v6628, 3
    %v6666 = vsel %vm1227, %v6663, %v6665
    %v6667 = vrot.slane %v6629, 3
    %v6668 = vsel %vm1227, %v6665, %v6667
    %v6669 = vrot.slane %v6630, 3
    %v6670 = vsel %vm1227, %v6667, %v6669
    %v6671 = vrot.slane %v6631, 3
    %v6672 = vsel %vm1227, %v6669, %v6671
    %v6673 = vrot.slane %v6632, 3
    %v6674 = vsel %vm1227, %v6671, %v6673
    %v6675 = vrot.slane %v6633, 3
    %v6676 = vsel %vm1227, %v6673, %v6675
    %v6677 = vrot.slane %v6634, 3
    %v6678 = vsel %vm1227, %v6675, %v6677
    %6693 = vst [vmem:[#allocation3 + $0x40] sm:$0xff] %v6652
    %6694 = vst [vmem:[#allocation3 + $0x88] sm:$0xff] %v6654
    %6695 = vst [vmem:[#allocation3 + $0xd0] sm:$0xff] %v6656
    %6696 = vst [vmem:[#allocation3 + $0x118] sm:$0xff] %v6658
    %6697 = vst [vmem:[#allocation3 + $0x160] sm:$0xff] %v6660
    %6698 = vst [vmem:[#allocation3 + $0x1a8] sm:$0xff] %v6662
    %6699 = vst [vmem:[#allocation3 + $0x1f0] sm:$0xff] %v6664
    %6700 = vst [vmem:[#allocation3 + $0x238] sm:$0xff] %v6666
    %6701 = vst [vmem:[#allocation3 + $0x280] sm:$0xff] %v6668
    %6702 = vst [vmem:[#allocation3 + $0x2c8] sm:$0xff] %v6670
    %6703 = vst [vmem:[#allocation3 + $0x310] sm:$0xff] %v6672
    %6704 = vst [vmem:[#allocation3 + $0x358] sm:$0xff] %v6674
    %6705 = vst [vmem:[#allocation3 + $0x3a0] sm:$0xff] %v6676
    %6706 = vst [vmem:[#allocation3 + $0x3e8] sm:$0xff] %v6678
    %v6707 = vld [vmem:[#allocation3] sm:$0xff]
    %v6708 = vld [vmem:[#allocation3 + $0x8] sm:$0xff]
    %v6709 = vld [vmem:[#allocation3 + $0x10] sm:$0xff]
    %v6710 = vld [vmem:[#allocation3 + $0x18] sm:$0xff]
    %v6711 = vld [vmem:[#allocation3 + $0x20] sm:$0xff]
    %v6712 = vld [vmem:[#allocation3 + $0x28] sm:$0xff]
    %v6713 = vld [vmem:[#allocation3 + $0x30] sm:$0xff]
    %v6714 = vld [vmem:[#allocation3 + $0x38] sm:$0xff]
    %v6715 = vld [vmem:[#allocation3 + $0x40] sm:$0xff]
    %v6716 = vld [vmem:[#allocation3 + $0x48] sm:$0xff]
    %v6717 = vld [vmem:[#allocation3 + $0x50] sm:$0xff]
    %v6718 = vld [vmem:[#allocation3 + $0x58] sm:$0xff]
    %v6719 = vld [vmem:[#allocation3 + $0x60] sm:$0xff]
    %v6720 = vld [vmem:[#allocation3 + $0x68] sm:$0xff]
    %v6721 = vld [vmem:[#allocation3 + $0x70] sm:$0xff]
    %v6722 = vld [vmem:[#allocation3 + $0x78] sm:$0xff]
    %v6723 = vld [vmem:[#allocation3 + $0x80] sm:$0xff]
    %v6724 = vld [vmem:[#allocation3 + $0x88] sm:$0xff]
    %v6725 = vld [vmem:[#allocation3 + $0x90] sm:$0xff]
    %v6726 = vld [vmem:[#allocation3 + $0x98] sm:$0xff]
    %v6727 = vld [vmem:[#allocation3 + $0xa0] sm:$0xff]
    %v6728 = vld [vmem:[#allocation3 + $0xa8] sm:$0xff]
    %v6729 = vld [vmem:[#allocation3 + $0xb0] sm:$0xff]
    %v6730 = vld [vmem:[#allocation3 + $0xb8] sm:$0xff]
    %v6731 = vld [vmem:[#allocation3 + $0xc0] sm:$0xff]
    %v6732 = vld [vmem:[#allocation3 + $0xc8] sm:$0xff]
    %v6733 = vld [vmem:[#allocation3 + $0xd0] sm:$0xff]
    %v6734 = vld [vmem:[#allocation3 + $0xd8] sm:$0xff]
    %v6735 = vld [vmem:[#allocation3 + $0xe0] sm:$0xff]
    %v6736 = vld [vmem:[#allocation3 + $0xe8] sm:$0xff]
    %v6737 = vld [vmem:[#allocation3 + $0xf0] sm:$0xff]
    %v6738 = vld [vmem:[#allocation3 + $0xf8] sm:$0xff]
    %v6739 = vld [vmem:[#allocation3 + $0x100] sm:$0xff]
    %v6740 = vld [vmem:[#allocation3 + $0x108] sm:$0xff]
    %v6741 = vld [vmem:[#allocation3 + $0x110] sm:$0xff]
    %v6742 = vld [vmem:[#allocation3 + $0x118] sm:$0xff]
    %v6743 = vld [vmem:[#allocation3 + $0x120] sm:$0xff]
    %v6744 = vld [vmem:[#allocation3 + $0x128] sm:$0xff]
    %v6745 = vld [vmem:[#allocation3 + $0x130] sm:$0xff]
    %v6746 = vld [vmem:[#allocation3 + $0x138] sm:$0xff]
    %v6747 = vld [vmem:[#allocation3 + $0x140] sm:$0xff]
    %v6748 = vld [vmem:[#allocation3 + $0x148] sm:$0xff]
    %v6749 = vld [vmem:[#allocation3 + $0x150] sm:$0xff]
    %v6750 = vld [vmem:[#allocation3 + $0x158] sm:$0xff]
    %v6751 = vld [vmem:[#allocation3 + $0x160] sm:$0xff]
    %v6752 = vld [vmem:[#allocation3 + $0x168] sm:$0xff]
    %v6753 = vld [vmem:[#allocation3 + $0x170] sm:$0xff]
    %v6754 = vld [vmem:[#allocation3 + $0x178] sm:$0xff]
    %v6755 = vld [vmem:[#allocation3 + $0x180] sm:$0xff]
    %v6756 = vld [vmem:[#allocation3 + $0x188] sm:$0xff]
    %v6757 = vld [vmem:[#allocation3 + $0x190] sm:$0xff]
    %v6758 = vld [vmem:[#allocation3 + $0x198] sm:$0xff]
    %v6759 = vld [vmem:[#allocation3 + $0x1a0] sm:$0xff]
    %v6760 = vld [vmem:[#allocation3 + $0x1a8] sm:$0xff]
    %v6761 = vld [vmem:[#allocation3 + $0x1b0] sm:$0xff]
    %v6762 = vld [vmem:[#allocation3 + $0x1b8] sm:$0xff]
    %v6763 = vld [vmem:[#allocation3 + $0x1c0] sm:$0xff]
    %v6764 = vld [vmem:[#allocation3 + $0x1c8] sm:$0xff]
    %v6765 = vld [vmem:[#allocation3 + $0x1d0] sm:$0xff]
    %v6766 = vld [vmem:[#allocation3 + $0x1d8] sm:$0xff]
    %v6767 = vld [vmem:[#allocation3 + $0x1e0] sm:$0xff]
    %v6768 = vld [vmem:[#allocation3 + $0x1e8] sm:$0xff]
    %v6769 = vld [vmem:[#allocation3 + $0x1f0] sm:$0xff]
    %v6770 = vld [vmem:[#allocation3 + $0x1f8] sm:$0xff]
    %v6771 = vld [vmem:[#allocation3 + $0x200] sm:$0xff]
    %v6772 = vld [vmem:[#allocation3 + $0x208] sm:$0xff]
    %v6773 = vld [vmem:[#allocation3 + $0x210] sm:$0xff]
    %v6774 = vld [vmem:[#allocation3 + $0x218] sm:$0xff]
    %v6775 = vld [vmem:[#allocation3 + $0x220] sm:$0xff]
    %v6776 = vld [vmem:[#allocation3 + $0x228] sm:$0xff]
    %v6777 = vld [vmem:[#allocation3 + $0x230] sm:$0xff]
    %v6778 = vld [vmem:[#allocation3 + $0x238] sm:$0xff]
    %v6779 = vld [vmem:[#allocation3 + $0x240] sm:$0xff]
    %v6780 = vld [vmem:[#allocation3 + $0x248] sm:$0xff]
    %v6781 = vld [vmem:[#allocation3 + $0x250] sm:$0xff]
    %v6782 = vld [vmem:[#allocation3 + $0x258] sm:$0xff]
    %v6783 = vld [vmem:[#allocation3 + $0x260] sm:$0xff]
    %v6784 = vld [vmem:[#allocation3 + $0x268] sm:$0xff]
    %v6785 = vld [vmem:[#allocation3 + $0x270] sm:$0xff]
    %v6786 = vld [vmem:[#allocation3 + $0x278] sm:$0xff]
    %v6787 = vld [vmem:[#allocation3 + $0x280] sm:$0xff]
    %v6788 = vld [vmem:[#allocation3 + $0x288] sm:$0xff]
    %v6789 = vld [vmem:[#allocation3 + $0x290] sm:$0xff]
    %v6790 = vld [vmem:[#allocation3 + $0x298] sm:$0xff]
    %v6791 = vld [vmem:[#allocation3 + $0x2a0] sm:$0xff]
    %v6792 = vld [vmem:[#allocation3 + $0x2a8] sm:$0xff]
    %v6793 = vld [vmem:[#allocation3 + $0x2b0] sm:$0xff]
    %v6794 = vld [vmem:[#allocation3 + $0x2b8] sm:$0xff]
    %v6795 = vld [vmem:[#allocation3 + $0x2c0] sm:$0xff]
    %v6796 = vld [vmem:[#allocation3 + $0x2c8] sm:$0xff]
    %v6797 = vld [vmem:[#allocation3 + $0x2d0] sm:$0xff]
    %v6798 = vld [vmem:[#allocation3 + $0x2d8] sm:$0xff]
    %v6799 = vld [vmem:[#allocation3 + $0x2e0] sm:$0xff]
    %v6800 = vld [vmem:[#allocation3 + $0x2e8] sm:$0xff]
    %v6801 = vld [vmem:[#allocation3 + $0x2f0] sm:$0xff]
    %v6802 = vld [vmem:[#allocation3 + $0x2f8] sm:$0xff]
    %v6803 = vld [vmem:[#allocation3 + $0x300] sm:$0xff]
    %v6804 = vld [vmem:[#allocation3 + $0x308] sm:$0xff]
    %v6805 = vld [vmem:[#allocation3 + $0x310] sm:$0xff]
    %v6806 = vld [vmem:[#allocation3 + $0x318] sm:$0xff]
    %v6807 = vld [vmem:[#allocation3 + $0x320] sm:$0xff]
    %v6808 = vld [vmem:[#allocation3 + $0x328] sm:$0xff]
    %v6809 = vld [vmem:[#allocation3 + $0x330] sm:$0xff]
    %v6810 = vld [vmem:[#allocation3 + $0x338] sm:$0xff]
    %v6811 = vld [vmem:[#allocation3 + $0x340] sm:$0xff]
    %v6812 = vld [vmem:[#allocation3 + $0x348] sm:$0xff]
    %v6813 = vld [vmem:[#allocation3 + $0x350] sm:$0xff]
    %v6814 = vld [vmem:[#allocation3 + $0x358] sm:$0xff]
    %v6815 = vld [vmem:[#allocation3 + $0x360] sm:$0xff]
    %v6816 = vld [vmem:[#allocation3 + $0x368] sm:$0xff]
    %v6817 = vld [vmem:[#allocation3 + $0x370] sm:$0xff]
    %v6818 = vld [vmem:[#allocation3 + $0x378] sm:$0xff]
    %v6819 = vld [vmem:[#allocation3 + $0x380] sm:$0xff]
    %v6820 = vld [vmem:[#allocation3 + $0x388] sm:$0xff]
    %v6821 = vld [vmem:[#allocation3 + $0x390] sm:$0xff]
    %v6822 = vld [vmem:[#allocation3 + $0x398] sm:$0xff]
    %v6823 = vld [vmem:[#allocation3 + $0x3a0] sm:$0xff]
    %v6824 = vld [vmem:[#allocation3 + $0x3a8] sm:$0xff]
    %v6825 = vld [vmem:[#allocation3 + $0x3b0] sm:$0xff]
    %v6826 = vld [vmem:[#allocation3 + $0x3b8] sm:$0xff]
    %v6827 = vld [vmem:[#allocation3 + $0x3c0] sm:$0xff]
    %v6828 = vld [vmem:[#allocation3 + $0x3c8] sm:$0xff]
    %v6829 = vld [vmem:[#allocation3 + $0x3d0] sm:$0xff]
    %v6830 = vld [vmem:[#allocation3 + $0x3d8] sm:$0xff]
    %v6831 = vld [vmem:[#allocation3 + $0x3e0] sm:$0xff]
    %v6832 = vld [vmem:[#allocation3 + $0x3e8] sm:$0xff]
    %v6833 = vld [vmem:[#allocation10] sm:$0xf]
    %v6834 = vld [vmem:[#allocation10 + $0x4] sm:$0xf]
    %v6835 = vld [vmem:[#allocation10 + $0x8] sm:$0xf]
    %v6836 = vld [vmem:[#allocation10 + $0xc] sm:$0xf]
    %v6837 = vld [vmem:[#allocation10 + $0x10] sm:$0xf]
    %v6838 = vld [vmem:[#allocation10 + $0x14] sm:$0xf]
    %v6839 = vld [vmem:[#allocation10 + $0x18] sm:$0xf]
    %v6840 = vld [vmem:[#allocation10 + $0x1c] sm:$0xf]
    %v6841 = vld [vmem:[#allocation10 + $0x20] sm:$0xf]
    %v6842 = vld [vmem:[#allocation10 + $0x24] sm:$0xf]
    %v6843 = vld [vmem:[#allocation10 + $0x28] sm:$0xf]
    %v6844 = vld [vmem:[#allocation10 + $0x2c] sm:$0xf]
    %v6845 = vld [vmem:[#allocation10 + $0x30] sm:$0xf]
    %v6846 = vld [vmem:[#allocation10 + $0x34] sm:$0xf]
    %v6847 = vld [vmem:[#allocation10 + $0x38] sm:$0xf]
    %v6848 = vld [vmem:[#allocation10 + $0x3c] sm:$0xf]
    %v6849 = vld [vmem:[#allocation10 + $0x40] sm:$0xf]
    %v6850 = vld [vmem:[#allocation10 + $0x44] sm:$0xf]
    %v6851 = vld [vmem:[#allocation10 + $0x48] sm:$0xf]
    %v6852 = vld [vmem:[#allocation10 + $0x4c] sm:$0xf]
    %v6853 = vld [vmem:[#allocation10 + $0x50] sm:$0xf]
    %v6854 = vld [vmem:[#allocation10 + $0x54] sm:$0xf]
    %v6855 = vld [vmem:[#allocation10 + $0x58] sm:$0xf]
    %v6856 = vld [vmem:[#allocation10 + $0x5c] sm:$0xf]
    %v6857 = vld [vmem:[#allocation10 + $0x60] sm:$0xf]
    %v6858 = vld [vmem:[#allocation10 + $0x64] sm:$0xf]
    %v6859 = vld [vmem:[#allocation10 + $0x68] sm:$0xf]
    %v6860 = vld [vmem:[#allocation10 + $0x6c] sm:$0xf]
    %v6861 = vld [vmem:[#allocation10 + $0x70] sm:$0xf]
    %v6862 = vld [vmem:[#allocation10 + $0x74] sm:$0xf]
    %v6863 = vld [vmem:[#allocation10 + $0x78] sm:$0xf]
    %v6864 = vld [vmem:[#allocation10 + $0x7c] sm:$0xf]
    %v6865 = vld [vmem:[#allocation10 + $0x80] sm:$0xf]
    %v6866 = vld [vmem:[#allocation10 + $0x84] sm:$0xf]
    %v6867 = vld [vmem:[#allocation10 + $0x88] sm:$0xf]
    %v6868 = vld [vmem:[#allocation10 + $0x8c] sm:$0xf]
    %v6869 = vld [vmem:[#allocation10 + $0x90] sm:$0xf]
    %v6870 = vld [vmem:[#allocation10 + $0x94] sm:$0xf]
    %v6871 = vld [vmem:[#allocation10 + $0x98] sm:$0xf]
    %v6872 = vld [vmem:[#allocation10 + $0x9c] sm:$0xf]
    %v6873 = vld [vmem:[#allocation10 + $0xa0] sm:$0xf]
    %v6874 = vld [vmem:[#allocation10 + $0xa4] sm:$0xf]
    %v6875 = vld [vmem:[#allocation10 + $0xa8] sm:$0xf]
    %v6876 = vld [vmem:[#allocation10 + $0xac] sm:$0xf]
    %v6877 = vld [vmem:[#allocation10 + $0xb0] sm:$0xf]
    %v6878 = vld [vmem:[#allocation10 + $0xb4] sm:$0xf]
    %v6879 = vld [vmem:[#allocation10 + $0xb8] sm:$0xf]
    %v6880 = vld [vmem:[#allocation10 + $0xbc] sm:$0xf]
    %v6881 = vld [vmem:[#allocation10 + $0xc0] sm:$0xf]
    %v6882 = vld [vmem:[#allocation10 + $0xc4] sm:$0xf]
    %v6883 = vld [vmem:[#allocation10 + $0xc8] sm:$0xf]
    %v6884 = vld [vmem:[#allocation10 + $0xcc] sm:$0xf]
    %v6885 = vld [vmem:[#allocation10 + $0xd0] sm:$0xf]
    %v6886 = vld [vmem:[#allocation10 + $0xd4] sm:$0xf]
    %v6887 = vld [vmem:[#allocation10 + $0xd8] sm:$0xf]
    %v6888 = vld [vmem:[#allocation10 + $0xdc] sm:$0xf]
    %v6889 = vld [vmem:[#allocation10 + $0xe0] sm:$0xf]
    %v6890 = vld [vmem:[#allocation10 + $0xe4] sm:$0xf]
    %v6891 = vld [vmem:[#allocation10 + $0xe8] sm:$0xf]
    %v6892 = vld [vmem:[#allocation10 + $0xec] sm:$0xf]
    %v6893 = vld [vmem:[#allocation10 + $0xf0] sm:$0xf]
    %v6894 = vld [vmem:[#allocation10 + $0xf4] sm:$0xf]
    %v6895 = vld [vmem:[#allocation10 + $0xf8] sm:$0xf]
    %v6896 = vld [vmem:[#allocation10 + $0xfc] sm:$0xf]
    %v6897 = vld [vmem:[#allocation10 + $0x100] sm:$0xf]
    %v6898 = vld [vmem:[#allocation10 + $0x104] sm:$0xf]
    %v6899 = vld [vmem:[#allocation10 + $0x108] sm:$0xf]
    %v6900 = vld [vmem:[#allocation10 + $0x10c] sm:$0xf]
    %v6901 = vld [vmem:[#allocation10 + $0x110] sm:$0xf]
    %v6902 = vld [vmem:[#allocation10 + $0x114] sm:$0xf]
    %v6903 = vld [vmem:[#allocation10 + $0x118] sm:$0xf]
    %v6904 = vld [vmem:[#allocation10 + $0x11c] sm:$0xf]
    %v6905 = vld [vmem:[#allocation10 + $0x120] sm:$0xf]
    %v6906 = vld [vmem:[#allocation10 + $0x124] sm:$0xf]
    %v6907 = vld [vmem:[#allocation10 + $0x128] sm:$0xf]
    %v6908 = vld [vmem:[#allocation10 + $0x12c] sm:$0xf]
    %v6909 = vld [vmem:[#allocation10 + $0x130] sm:$0xf]
    %v6910 = vld [vmem:[#allocation10 + $0x134] sm:$0xf]
    %v6911 = vld [vmem:[#allocation10 + $0x138] sm:$0xf]
    %v6912 = vld [vmem:[#allocation10 + $0x13c] sm:$0xf]
    %v6913 = vld [vmem:[#allocation10 + $0x140] sm:$0xf]
    %v6914 = vld [vmem:[#allocation10 + $0x144] sm:$0xf]
    %v6915 = vld [vmem:[#allocation10 + $0x148] sm:$0xf]
    %v6916 = vld [vmem:[#allocation10 + $0x14c] sm:$0xf]
    %v6917 = vld [vmem:[#allocation10 + $0x150] sm:$0xf]
    %v6918 = vld [vmem:[#allocation10 + $0x154] sm:$0xf]
    %v6919 = vld [vmem:[#allocation10 + $0x158] sm:$0xf]
    %v6920 = vld [vmem:[#allocation10 + $0x15c] sm:$0xf]
    %v6921 = vld [vmem:[#allocation10 + $0x160] sm:$0xf]
    %v6922 = vld [vmem:[#allocation10 + $0x164] sm:$0xf]
    %v6923 = vld [vmem:[#allocation10 + $0x168] sm:$0xf]
    %v6924 = vld [vmem:[#allocation10 + $0x16c] sm:$0xf]
    %v6925 = vld [vmem:[#allocation10 + $0x170] sm:$0xf]
    %v6926 = vld [vmem:[#allocation10 + $0x174] sm:$0xf]
    %v6927 = vld [vmem:[#allocation10 + $0x178] sm:$0xf]
    %v6928 = vld [vmem:[#allocation10 + $0x17c] sm:$0xf]
    %v6929 = vld [vmem:[#allocation10 + $0x180] sm:$0xf]
    %v6930 = vld [vmem:[#allocation10 + $0x184] sm:$0xf]
    %v6931 = vld [vmem:[#allocation10 + $0x188] sm:$0xf]
    %v6932 = vld [vmem:[#allocation10 + $0x18c] sm:$0xf]
    %v6933 = vld [vmem:[#allocation10 + $0x190] sm:$0xf]
    %v6934 = vld [vmem:[#allocation10 + $0x194] sm:$0xf]
    %v6935 = vld [vmem:[#allocation10 + $0x198] sm:$0xf]
    %v6936 = vld [vmem:[#allocation10 + $0x19c] sm:$0xf]
    %v6937 = vld [vmem:[#allocation10 + $0x1a0] sm:$0xf]
    %v6938 = vld [vmem:[#allocation10 + $0x1a4] sm:$0xf]
    %v6939 = vld [vmem:[#allocation10 + $0x1a8] sm:$0xf]
    %v6940 = vld [vmem:[#allocation10 + $0x1ac] sm:$0xf]
    %v6941 = vld [vmem:[#allocation10 + $0x1b0] sm:$0xf]
    %v6942 = vld [vmem:[#allocation10 + $0x1b4] sm:$0xf]
    %v6943 = vld [vmem:[#allocation10 + $0x1b8] sm:$0xf]
    %v6944 = vld [vmem:[#allocation10 + $0x1bc] sm:$0xf]
    %v6945 = vld [vmem:[#allocation10 + $0x1c0] sm:$0xf]
    %v6946 = vld [vmem:[#allocation10 + $0x1c4] sm:$0xf]
    %v6947 = vld [vmem:[#allocation10 + $0x1c8] sm:$0xf]
    %v6948 = vld [vmem:[#allocation10 + $0x1cc] sm:$0xf]
    %v6949 = vld [vmem:[#allocation10 + $0x1d0] sm:$0xf]
    %v6950 = vld [vmem:[#allocation10 + $0x1d4] sm:$0xf]
    %v6951 = vld [vmem:[#allocation10 + $0x1d8] sm:$0xf]
    %v6952 = vld [vmem:[#allocation10 + $0x1dc] sm:$0xf]
    %v6953 = vld [vmem:[#allocation10 + $0x1e0] sm:$0xf]
    %v6954 = vld [vmem:[#allocation10 + $0x1e4] sm:$0xf]
    %v6955 = vld [vmem:[#allocation10 + $0x1e8] sm:$0xf]
    %v6956 = vld [vmem:[#allocation10 + $0x1ec] sm:$0xf]
    %v6957 = vld [vmem:[#allocation10 + $0x1f0] sm:$0xf]
    %v6958 = vld [vmem:[#allocation10 + $0x1f4] sm:$0xf]
    %v6959 = vld [vmem:[#allocation10 + $0x1f8] sm:$0xf]
    %v6960 = vld [vmem:[#allocation10 + $0x1fc] sm:$0xf]
    %v6961 = vld [vmem:[#allocation10 + $0x200] sm:$0xf]
    %v6962 = vld [vmem:[#allocation10 + $0x204] sm:$0xf]
    %v6963 = vld [vmem:[#allocation10 + $0x208] sm:$0xf]
    %v6964 = vld [vmem:[#allocation10 + $0x20c] sm:$0xf]
    %v6965 = vld [vmem:[#allocation10 + $0x210] sm:$0xf]
    %v6966 = vld [vmem:[#allocation10 + $0x214] sm:$0xf]
    %v6967 = vld [vmem:[#allocation10 + $0x218] sm:$0xf]
    %v6968 = vld [vmem:[#allocation10 + $0x21c] sm:$0xf]
    %v6969 = vld [vmem:[#allocation10 + $0x220] sm:$0xf]
    %v6970 = vld [vmem:[#allocation10 + $0x224] sm:$0xf]
    %v6971 = vld [vmem:[#allocation10 + $0x228] sm:$0xf]
    %v6972 = vld [vmem:[#allocation10 + $0x22c] sm:$0xf]
    %v6973 = vld [vmem:[#allocation10 + $0x230] sm:$0xf]
    %v6974 = vld [vmem:[#allocation10 + $0x234] sm:$0xf]
    %v6975 = vld [vmem:[#allocation10 + $0x238] sm:$0xf]
    %v6976 = vld [vmem:[#allocation10 + $0x23c] sm:$0xf]
    %v6977 = vld [vmem:[%s7] sm:$0x1]
    %v6979 = vlaneseq
    %v6980 = vshrl.u32 %v6979, 7
    %v6981 = vsub.s32 0, %v6980
    %v6982 = vrot.slane %v6977, %v6981
    %v7128 = vunpack.c.l.b16 %v6833
    %v7129 = vunpack.c.l.b16 %v6834
    %v7130 = vunpack.c.l.b16 %v6835
    %v7131 = vunpack.c.l.b16 %v6836
    %v7132 = vunpack.c.l.b16 %v6837
    %v7133 = vunpack.c.l.b16 %v6838
    %v7134 = vunpack.c.l.b16 %v6839
    %v7135 = vunpack.c.l.b16 %v6840
    %v7136 = vunpack.c.l.b16 %v6841
    %v7137 = vunpack.c.l.b16 %v6842
    %v7138 = vunpack.c.l.b16 %v6843
    %v7139 = vunpack.c.l.b16 %v6844
    %v7140 = vunpack.c.l.b16 %v6845
    %v7141 = vunpack.c.l.b16 %v6846
    %v7142 = vunpack.c.l.b16 %v6847
    %v7143 = vunpack.c.l.b16 %v6848
    %v7144 = vunpack.c.l.b16 %v6849
    %v7145 = vunpack.c.l.b16 %v6850
    %v7146 = vunpack.c.l.b16 %v6851
    %v7147 = vunpack.c.l.b16 %v6852
    %v7148 = vunpack.c.l.b16 %v6853
    %v7149 = vunpack.c.l.b16 %v6854
    %v7150 = vunpack.c.l.b16 %v6855
    %v7151 = vunpack.c.l.b16 %v6856
    %v7152 = vunpack.c.l.b16 %v6857
    %v7153 = vunpack.c.l.b16 %v6858
    %v7154 = vunpack.c.l.b16 %v6859
    %v7155 = vunpack.c.l.b16 %v6860
    %v7156 = vunpack.c.l.b16 %v6861
    %v7157 = vunpack.c.l.b16 %v6862
    %v7158 = vunpack.c.l.b16 %v6863
    %v7159 = vunpack.c.l.b16 %v6864
    %v7160 = vunpack.c.l.b16 %v6865
    %v7161 = vunpack.c.l.b16 %v6866
    %v7162 = vunpack.c.l.b16 %v6867
    %v7163 = vunpack.c.l.b16 %v6868
    %v7164 = vunpack.c.l.b16 %v6869
    %v7165 = vunpack.c.l.b16 %v6870
    %v7166 = vunpack.c.l.b16 %v6871
    %v7167 = vunpack.c.l.b16 %v6872
    %v7168 = vunpack.c.l.b16 %v6873
    %v7169 = vunpack.c.l.b16 %v6874
    %v7170 = vunpack.c.l.b16 %v6875
    %v7171 = vunpack.c.l.b16 %v6876
    %v7172 = vunpack.c.l.b16 %v6877
    %v7173 = vunpack.c.l.b16 %v6878
    %v7174 = vunpack.c.l.b16 %v6879
    %v7175 = vunpack.c.l.b16 %v6880
    %v7176 = vunpack.c.l.b16 %v6881
    %v7177 = vunpack.c.l.b16 %v6882
    %v7178 = vunpack.c.l.b16 %v6883
    %v7179 = vunpack.c.l.b16 %v6884
    %v7180 = vunpack.c.l.b16 %v6885
    %v7181 = vunpack.c.l.b16 %v6886
    %v7182 = vunpack.c.l.b16 %v6887
    %v7183 = vunpack.c.l.b16 %v6888
    %v7184 = vunpack.c.l.b16 %v6889
    %v7185 = vunpack.c.l.b16 %v6890
    %v7186 = vunpack.c.l.b16 %v6891
    %v7187 = vunpack.c.l.b16 %v6892
    %v7188 = vunpack.c.l.b16 %v6893
    %v7189 = vunpack.c.l.b16 %v6894
    %v7190 = vunpack.c.l.b16 %v6895
    %v7191 = vunpack.c.l.b16 %v6896
    %v7192 = vunpack.c.l.b16 %v6897
    %v7193 = vunpack.c.l.b16 %v6898
    %v7194 = vunpack.c.l.b16 %v6899
    %v7195 = vunpack.c.l.b16 %v6900
    %v7196 = vunpack.c.l.b16 %v6901
    %v7197 = vunpack.c.l.b16 %v6902
    %v7198 = vunpack.c.l.b16 %v6903
    %v7199 = vunpack.c.l.b16 %v6904
    %v7200 = vunpack.c.l.b16 %v6905
    %v7201 = vunpack.c.l.b16 %v6906
    %v7202 = vunpack.c.l.b16 %v6907
    %v7203 = vunpack.c.l.b16 %v6908
    %v7204 = vunpack.c.l.b16 %v6909
    %v7205 = vunpack.c.l.b16 %v6910
    %v7206 = vunpack.c.l.b16 %v6911
    %v7207 = vunpack.c.l.b16 %v6912
    %v7208 = vunpack.c.l.b16 %v6913
    %v7209 = vunpack.c.l.b16 %v6914
    %v7210 = vunpack.c.l.b16 %v6915
    %v7211 = vunpack.c.l.b16 %v6916
    %v7212 = vunpack.c.l.b16 %v6917
    %v7213 = vunpack.c.l.b16 %v6918
    %v7214 = vunpack.c.l.b16 %v6919
    %v7215 = vunpack.c.l.b16 %v6920
    %v7216 = vunpack.c.l.b16 %v6921
    %v7217 = vunpack.c.l.b16 %v6922
    %v7218 = vunpack.c.l.b16 %v6923
    %v7219 = vunpack.c.l.b16 %v6924
    %v7220 = vunpack.c.l.b16 %v6925
    %v7221 = vunpack.c.l.b16 %v6926
    %v7222 = vunpack.c.l.b16 %v6927
    %v7223 = vunpack.c.l.b16 %v6928
    %v7224 = vunpack.c.l.b16 %v6929
    %v7225 = vunpack.c.l.b16 %v6930
    %v7226 = vunpack.c.l.b16 %v6931
    %v7227 = vunpack.c.l.b16 %v6932
    %v7228 = vunpack.c.l.b16 %v6933
    %v7229 = vunpack.c.l.b16 %v6934
    %v7230 = vunpack.c.l.b16 %v6935
    %v7231 = vunpack.c.l.b16 %v6936
    %v7232 = vunpack.c.l.b16 %v6937
    %v7233 = vunpack.c.l.b16 %v6938
    %v7234 = vunpack.c.l.b16 %v6939
    %v7235 = vunpack.c.l.b16 %v6940
    %v7236 = vunpack.c.l.b16 %v6941
    %v7237 = vunpack.c.l.b16 %v6942
    %v7238 = vunpack.c.l.b16 %v6943
    %v7239 = vunpack.c.l.b16 %v6944
    %v7240 = vunpack.c.l.b16 %v6945
    %v7241 = vunpack.c.l.b16 %v6946
    %v7242 = vunpack.c.l.b16 %v6947
    %v7243 = vunpack.c.l.b16 %v6948
    %v7244 = vunpack.c.l.b16 %v6949
    %v7245 = vunpack.c.l.b16 %v6950
    %v7246 = vunpack.c.l.b16 %v6951
    %v7247 = vunpack.c.l.b16 %v6952
    %v7248 = vunpack.c.l.b16 %v6953
    %v7249 = vunpack.c.l.b16 %v6954
    %v7250 = vunpack.c.l.b16 %v6955
    %v7251 = vunpack.c.l.b16 %v6956
    %v7252 = vunpack.c.l.b16 %v6957
    %v7253 = vunpack.c.l.b16 %v6958
    %v7254 = vunpack.c.l.b16 %v6959
    %v7255 = vunpack.c.l.b16 %v6960
    %v7256 = vunpack.c.l.b16 %v6961
    %v7257 = vunpack.c.l.b16 %v6962
    %v7258 = vunpack.c.l.b16 %v6963
    %v7259 = vunpack.c.l.b16 %v6964
    %v7260 = vunpack.c.l.b16 %v6965
    %v7261 = vunpack.c.l.b16 %v6966
    %v7262 = vunpack.c.l.b16 %v6967
    %v7263 = vunpack.c.l.b16 %v6968
    %v7264 = vunpack.c.l.b16 %v6969
    %v7265 = vunpack.c.l.b16 %v6970
    %v7266 = vunpack.c.l.b16 %v6971
    %v7267 = vunpack.c.l.b16 %v6972
    %v7268 = vunpack.c.l.b16 %v6973
    %v7269 = vunpack.c.l.b16 %v6974
    %v7270 = vunpack.c.l.b16 %v6975
    %v7271 = vunpack.c.l.b16 %v6976
    %v7272 = vpack.c.b16 %v7129, %v7128
    %v7273 = vpack.c.b16 %v7131, %v7130
    %v7274 = vpack.c.b16 %v7133, %v7132
    %v7275 = vpack.c.b16 %v7135, %v7134
    %v7276 = vpack.c.b16 %v7137, %v7136
    %v7277 = vpack.c.b16 %v7139, %v7138
    %v7278 = vpack.c.b16 %v7141, %v7140
    %v7279 = vpack.c.b16 %v7143, %v7142
    %v7280 = vpack.c.b16 %v7145, %v7144
    %v7281 = vpack.c.b16 %v7147, %v7146
    %v7282 = vpack.c.b16 %v7149, %v7148
    %v7283 = vpack.c.b16 %v7151, %v7150
    %v7284 = vpack.c.b16 %v7153, %v7152
    %v7285 = vpack.c.b16 %v7155, %v7154
    %v7286 = vpack.c.b16 %v7157, %v7156
    %v7287 = vpack.c.b16 %v7159, %v7158
    %v7288 = vpack.c.b16 %v7161, %v7160
    %v7289 = vpack.c.b16 %v7163, %v7162
    %v7290 = vpack.c.b16 %v7165, %v7164
    %v7291 = vpack.c.b16 %v7167, %v7166
    %v7292 = vpack.c.b16 %v7169, %v7168
    %v7293 = vpack.c.b16 %v7171, %v7170
    %v7294 = vpack.c.b16 %v7173, %v7172
    %v7295 = vpack.c.b16 %v7175, %v7174
    %v7296 = vpack.c.b16 %v7177, %v7176
    %v7297 = vpack.c.b16 %v7179, %v7178
    %v7298 = vpack.c.b16 %v7181, %v7180
    %v7299 = vpack.c.b16 %v7183, %v7182
    %v7300 = vpack.c.b16 %v7185, %v7184
    %v7301 = vpack.c.b16 %v7187, %v7186
    %v7302 = vpack.c.b16 %v7189, %v7188
    %v7303 = vpack.c.b16 %v7191, %v7190
    %v7304 = vpack.c.b16 %v7193, %v7192
    %v7305 = vpack.c.b16 %v7195, %v7194
    %v7306 = vpack.c.b16 %v7197, %v7196
    %v7307 = vpack.c.b16 %v7199, %v7198
    %v7308 = vpack.c.b16 %v7201, %v7200
    %v7309 = vpack.c.b16 %v7203, %v7202
    %v7310 = vpack.c.b16 %v7205, %v7204
    %v7311 = vpack.c.b16 %v7207, %v7206
    %v7312 = vpack.c.b16 %v7209, %v7208
    %v7313 = vpack.c.b16 %v7211, %v7210
    %v7314 = vpack.c.b16 %v7213, %v7212
    %v7315 = vpack.c.b16 %v7215, %v7214
    %v7316 = vpack.c.b16 %v7217, %v7216
    %v7317 = vpack.c.b16 %v7219, %v7218
    %v7318 = vpack.c.b16 %v7221, %v7220
    %v7319 = vpack.c.b16 %v7223, %v7222
    %v7320 = vpack.c.b16 %v7225, %v7224
    %v7321 = vpack.c.b16 %v7227, %v7226
    %v7322 = vpack.c.b16 %v7229, %v7228
    %v7323 = vpack.c.b16 %v7231, %v7230
    %v7324 = vpack.c.b16 %v7233, %v7232
    %v7325 = vpack.c.b16 %v7235, %v7234
    %v7326 = vpack.c.b16 %v7237, %v7236
    %v7327 = vpack.c.b16 %v7239, %v7238
    %v7328 = vpack.c.b16 %v7241, %v7240
    %v7329 = vpack.c.b16 %v7243, %v7242
    %v7330 = vpack.c.b16 %v7245, %v7244
    %v7331 = vpack.c.b16 %v7247, %v7246
    %v7332 = vpack.c.b16 %v7249, %v7248
    %v7333 = vpack.c.b16 %v7251, %v7250
    %v7334 = vpack.c.b16 %v7253, %v7252
    %v7335 = vpack.c.b16 %v7255, %v7254
    %v7336 = vpack.c.b16 %v7257, %v7256
    %v7337 = vpack.c.b16 %v7259, %v7258
    %v7338 = vpack.c.b16 %v7261, %v7260
    %v7339 = vpack.c.b16 %v7263, %v7262
    %v7340 = vpack.c.b16 %v7265, %v7264
    %v7341 = vpack.c.b16 %v7267, %v7266
    %v7342 = vpack.c.b16 %v7269, %v7268
    %v7343 = vpack.c.b16 %v7271, %v7270
    %7416 = vmatprep.subr.bf16.mxu0 0
    %7417 = vmatpush1.bf16.msra.mxu0 %v7272
    %7418 = vmatprep.subr.bf16.mxu0 0
    %7419 = vmatpush1.bf16.msra.mxu0 %v7273
    %7420 = vmatprep.subr.bf16.mxu0 0
    %7421 = vmatpush1.bf16.msra.mxu0 %v7274
    %7422 = vmatprep.subr.bf16.mxu0 0
    %7423 = vmatpush1.bf16.msra.mxu0 %v7275
    %7424 = vmatprep.subr.bf16.mxu0 0
    %7425 = vmatpush1.bf16.msra.mxu0 %v7276
    %7426 = vmatprep.subr.bf16.mxu0 0
    %7427 = vmatpush1.bf16.msra.mxu0 %v7277
    %7428 = vmatprep.subr.bf16.mxu0 0
    %7429 = vmatpush1.bf16.msra.mxu0 %v7278
    %7430 = vmatprep.subr.bf16.mxu0 0
    %7431 = vmatpush1.bf16.msra.mxu0 %v7279
    %7432 = vmatprep.subr.bf16.mxu0 0
    %7433 = vmatpush1.bf16.msra.mxu0 %v7280
    %7434 = vmatprep.subr.bf16.mxu0 0
    %7435 = vmatpush1.bf16.msra.mxu0 %v7281
    %7436 = vmatprep.subr.bf16.mxu0 0
    %7437 = vmatpush1.bf16.msra.mxu0 %v7282
    %7438 = vmatprep.subr.bf16.mxu0 0
    %7439 = vmatpush1.bf16.msra.mxu0 %v7283
    %7440 = vmatprep.subr.bf16.mxu0 0
    %7441 = vmatpush1.bf16.msra.mxu0 %v7284
    %7442 = vmatprep.subr.bf16.mxu0 0
    %7443 = vmatpush1.bf16.msra.mxu0 %v7285
    %7444 = vmatprep.subr.bf16.mxu0 0
    %7445 = vmatpush1.bf16.msra.mxu0 %v7286
    %7446 = vmatprep.subr.bf16.mxu0 0
    %7447 = vmatpush1.bf16.msra.mxu0 %v7287
    %7448 = vmatprep.mubr.bf16.mxu0 %v6708
    %7449 = vmatmul.mubr.bf16.gmra.mrb[0].mxu0 %v6707
    %v7450 = vpop.f32.mrb[0].mxu0
    %v7451 = vadd.f32 %v6982, %v7450
    %v7452 = vpop.f32.mrb[0].mxu0
    %v7453 = vpop.f32.mrb[0].mxu0
    %v7454 = vadd.f32 %v6982, %v7453
    %v7455 = vpop.f32.mrb[0].mxu0
    %7456 = vmatprep.mubr.bf16.mxu0 %v6717
    %7457 = vmatmul.mubr.bf16.gmra.mrb[0].mxu0 %v6716
    %v7458 = vpop.f32.mrb[0].mxu0
    %v7459 = vadd.f32 %v6982, %v7458
    %v7460 = vpop.f32.mrb[0].mxu0
    %v7461 = vpop.f32.mrb[0].mxu0
    %v7462 = vadd.f32 %v6982, %v7461
    %v7463 = vpop.f32.mrb[0].mxu0
    %7464 = vmatprep.mubr.bf16.mxu0 %v6726
    %7465 = vmatmul.mubr.bf16.gmra.mrb[0].mxu0 %v6725
    %v7466 = vpop.f32.mrb[0].mxu0
    %v7467 = vadd.f32 %v6982, %v7466
    %v7468 = vpop.f32.mrb[0].mxu0
    %v7469 = vpop.f32.mrb[0].mxu0
    %v7470 = vadd.f32 %v6982, %v7469
    %v7471 = vpop.f32.mrb[0].mxu0
    %7472 = vmatprep.mubr.bf16.mxu0 %v6735
    %7473 = vmatmul.mubr.bf16.gmra.mrb[0].mxu0 %v6734
    %v7474 = vpop.f32.mrb[0].mxu0
    %v7475 = vadd.f32 %v6982, %v7474
    %v7476 = vpop.f32.mrb[0].mxu0
    %v7477 = vpop.f32.mrb[0].mxu0
    %v7478 = vadd.f32 %v6982, %v7477
    %v7479 = vpop.f32.mrb[0].mxu0
    %7480 = vmatprep.mubr.bf16.mxu0 %v6744
    %7481 = vmatmul.mubr.bf16.gmra.mrb[0].mxu0 %v6743
    %v7482 = vpop.f32.mrb[0].mxu0
    %v7483 = vadd.f32 %v6982, %v7482
    %v7484 = vpop.f32.mrb[0].mxu0
    %v7485 = vpop.f32.mrb[0].mxu0
    %v7486 = vadd.f32 %v6982, %v7485
    %v7487 = vpop.f32.mrb[0].mxu0
    %7488 = vmatprep.mubr.bf16.mxu0 %v6753
    %7489 = vmatmul.mubr.bf16.gmra.mrb[0].mxu0 %v6752
    %v7490 = vpop.f32.mrb[0].mxu0
    %v7491 = vadd.f32 %v6982, %v7490
    %v7492 = vpop.f32.mrb[0].mxu0
    %v7493 = vpop.f32.mrb[0].mxu0
    %v7494 = vadd.f32 %v6982, %v7493
    %v7495 = vpop.f32.mrb[0].mxu0
    %7496 = vmatprep.mubr.bf16.mxu0 %v6762
    %7497 = vmatmul.mubr.bf16.gmra.mrb[0].mxu0 %v6761
    %v7498 = vpop.f32.mrb[0].mxu0
    %v7499 = vadd.f32 %v6982, %v7498
    %v7500 = vpop.f32.mrb[0].mxu0
    %v7501 = vpop.f32.mrb[0].mxu0
    %v7502 = vadd.f32 %v6982, %v7501
    %v7503 = vpop.f32.mrb[0].mxu0
    %7504 = vmatprep.mubr.bf16.mxu0 %v6771
    %7505 = vmatmul.mubr.bf16.gmra.mrb[0].mxu0 %v6770
    %v7506 = vpop.f32.mrb[0].mxu0
    %v7507 = vadd.f32 %v6982, %v7506
    %v7508 = vpop.f32.mrb[0].mxu0
    %v7509 = vpop.f32.mrb[0].mxu0
    %v7510 = vadd.f32 %v6982, %v7509
    %v7511 = vpop.f32.mrb[0].mxu0
    %7512 = vmatprep.mubr.bf16.mxu0 %v6780
    %7513 = vmatmul.mubr.bf16.gmra.mrb[0].mxu0 %v6779
    %v7514 = vpop.f32.mrb[0].mxu0
    %v7515 = vadd.f32 %v6982, %v7514
    %v7516 = vpop.f32.mrb[0].mxu0
    %v7517 = vpop.f32.mrb[0].mxu0
    %v7518 = vadd.f32 %v6982, %v7517
    %v7519 = vpop.f32.mrb[0].mxu0
    %7520 = vmatprep.mubr.bf16.mxu0 %v6789
    %7521 = vmatmul.mubr.bf16.gmra.mrb[0].mxu0 %v6788
    %v7522 = vpop.f32.mrb[0].mxu0
    %v7523 = vadd.f32 %v6982, %v7522
    %v7524 = vpop.f32.mrb[0].mxu0
    %v7525 = vpop.f32.mrb[0].mxu0
    %v7526 = vadd.f32 %v6982, %v7525
    %v7527 = vpop.f32.mrb[0].mxu0
    %7528 = vmatprep.mubr.bf16.mxu0 %v6798
    %7529 = vmatmul.mubr.bf16.gmra.mrb[0].mxu0 %v6797
    %v7530 = vpop.f32.mrb[0].mxu0
    %v7531 = vadd.f32 %v6982, %v7530
    %v7532 = vpop.f32.mrb[0].mxu0
    %v7533 = vpop.f32.mrb[0].mxu0
    %v7534 = vadd.f32 %v6982, %v7533
    %v7535 = vpop.f32.mrb[0].mxu0
    %7536 = vmatprep.mubr.bf16.mxu0 %v6807
    %7537 = vmatmul.mubr.bf16.gmra.mrb[0].mxu0 %v6806
    %v7538 = vpop.f32.mrb[0].mxu0
    %v7539 = vadd.f32 %v6982, %v7538
    %v7540 = vpop.f32.mrb[0].mxu0
    %v7541 = vpop.f32.mrb[0].mxu0
    %v7542 = vadd.f32 %v6982, %v7541
    %v7543 = vpop.f32.mrb[0].mxu0
    %7544 = vmatprep.mubr.bf16.mxu0 %v6816
    %7545 = vmatmul.mubr.bf16.gmra.mrb[0].mxu0 %v6815
    %v7546 = vpop.f32.mrb[0].mxu0
    %v7547 = vadd.f32 %v6982, %v7546
    %v7548 = vpop.f32.mrb[0].mxu0
    %v7549 = vpop.f32.mrb[0].mxu0
    %v7550 = vadd.f32 %v6982, %v7549
    %v7551 = vpop.f32.mrb[0].mxu0
    %7552 = vmatprep.mubr.bf16.mxu0 %v6825
    %7553 = vmatmul.mubr.bf16.gmra.mrb[0].mxu0 %v6824
    %v7554 = vpop.f32.mrb[0].mxu0
    %v7555 = vadd.f32 %v6982, %v7554
    %v7556 = vpop.f32.mrb[0].mxu0
    %v7557 = vpop.f32.mrb[0].mxu0
    %v7558 = vadd.f32 %v6982, %v7557
    %v7559 = vpop.f32.mrb[0].mxu0
    %7560 = vdwg.mxu0
    %7561 = vmatprep.subr.bf16.mxu0 0
    %7562 = vmatpush1.bf16.msra.mxu0 %v7288
    %7563 = vmatprep.subr.bf16.mxu0 0
    %7564 = vmatpush1.bf16.msra.mxu0 %v7289
    %7565 = vmatprep.subr.bf16.mxu0 0
    %7566 = vmatpush1.bf16.msra.mxu0 %v7290
    %7567 = vmatprep.subr.bf16.mxu0 0
    %7568 = vmatpush1.bf16.msra.mxu0 %v7291
    %7569 = vmatprep.subr.bf16.mxu0 0
    %7570 = vmatpush1.bf16.msra.mxu0 %v7292
    %7571 = vmatprep.subr.bf16.mxu0 0
    %7572 = vmatpush1.bf16.msra.mxu0 %v7293
    %7573 = vmatprep.subr.bf16.mxu0 0
    %7574 = vmatpush1.bf16.msra.mxu0 %v7294
    %7575 = vmatprep.subr.bf16.mxu0 0
    %7576 = vmatpush1.bf16.msra.mxu0 %v7295
    %7577 = vmatprep.subr.bf16.mxu0 0
    %7578 = vmatpush1.bf16.msra.mxu0 %v7296
    %7579 = vmatprep.subr.bf16.mxu0 0
    %7580 = vmatpush1.bf16.msra.mxu0 %v7297
    %7581 = vmatprep.subr.bf16.mxu0 0
    %7582 = vmatpush1.bf16.msra.mxu0 %v7298
    %7583 = vmatprep.subr.bf16.mxu0 0
    %7584 = vmatpush1.bf16.msra.mxu0 %v7299
    %7585 = vmatprep.subr.bf16.mxu0 0
    %7586 = vmatpush1.bf16.msra.mxu0 %v7300
    %7587 = vmatprep.subr.bf16.mxu0 0
    %7588 = vmatpush1.bf16.msra.mxu0 %v7301
    %7589 = vmatprep.subr.bf16.mxu0 0
    %7590 = vmatpush1.bf16.msra.mxu0 %v7302
    %7591 = vmatprep.subr.bf16.mxu0 0
    %7592 = vmatpush1.bf16.msra.mxu0 %v7303
    %7593 = vmatprep.mubr.bf16.mxu0 %v6710
    %7594 = vmatmul.mubr.bf16.gmra.mrb[0].mxu0 %v6709
    %v7595 = vpop.f32.mrb[0].mxu0
    %v7596 = vadd.f32 %v7451, %v7595
    %v7597 = vpop.f32.mrb[0].mxu0
    %v7598 = vpop.f32.mrb[0].mxu0
    %v7599 = vadd.f32 %v7454, %v7598
    %v7600 = vpop.f32.mrb[0].mxu0
    %7601 = vmatprep.mubr.bf16.mxu0 %v6719
    %7602 = vmatmul.mubr.bf16.gmra.mrb[0].mxu0 %v6718
    %v7603 = vpop.f32.mrb[0].mxu0
    %v7604 = vadd.f32 %v7459, %v7603
    %v7605 = vpop.f32.mrb[0].mxu0
    %v7606 = vpop.f32.mrb[0].mxu0
    %v7607 = vadd.f32 %v7462, %v7606
    %v7608 = vpop.f32.mrb[0].mxu0
    %7609 = vmatprep.mubr.bf16.mxu0 %v6728
    %7610 = vmatmul.mubr.bf16.gmra.mrb[0].mxu0 %v6727
    %v7611 = vpop.f32.mrb[0].mxu0
    %v7612 = vadd.f32 %v7467, %v7611
    %v7613 = vpop.f32.mrb[0].mxu0
    %v7614 = vpop.f32.mrb[0].mxu0
    %v7615 = vadd.f32 %v7470, %v7614
    %v7616 = vpop.f32.mrb[0].mxu0
    %7617 = vmatprep.mubr.bf16.mxu0 %v6737
    %7618 = vmatmul.mubr.bf16.gmra.mrb[0].mxu0 %v6736
    %v7619 = vpop.f32.mrb[0].mxu0
    %v7620 = vadd.f32 %v7475, %v7619
    %v7621 = vpop.f32.mrb[0].mxu0
    %v7622 = vpop.f32.mrb[0].mxu0
    %v7623 = vadd.f32 %v7478, %v7622
    %v7624 = vpop.f32.mrb[0].mxu0
    %7625 = vmatprep.mubr.bf16.mxu0 %v6746
    %7626 = vmatmul.mubr.bf16.gmra.mrb[0].mxu0 %v6745
    %v7627 = vpop.f32.mrb[0].mxu0
    %v7628 = vadd.f32 %v7483, %v7627
    %v7629 = vpop.f32.mrb[0].mxu0
    %v7630 = vpop.f32.mrb[0].mxu0
    %v7631 = vadd.f32 %v7486, %v7630
    %v7632 = vpop.f32.mrb[0].mxu0
    %7633 = vmatprep.mubr.bf16.mxu0 %v6755
    %7634 = vmatmul.mubr.bf16.gmra.mrb[0].mxu0 %v6754
    %v7635 = vpop.f32.mrb[0].mxu0
    %v7636 = vadd.f32 %v7491, %v7635
    %v7637 = vpop.f32.mrb[0].mxu0
    %v7638 = vpop.f32.mrb[0].mxu0
    %v7639 = vadd.f32 %v7494, %v7638
    %v7640 = vpop.f32.mrb[0].mxu0
    %7641 = vmatprep.mubr.bf16.mxu0 %v6764
    %7642 = vmatmul.mubr.bf16.gmra.mrb[0].mxu0 %v6763
    %v7643 = vpop.f32.mrb[0].mxu0
    %v7644 = vadd.f32 %v7499, %v7643
    %v7645 = vpop.f32.mrb[0].mxu0
    %v7646 = vpop.f32.mrb[0].mxu0
    %v7647 = vadd.f32 %v7502, %v7646
    %v7648 = vpop.f32.mrb[0].mxu0
    %7649 = vmatprep.mubr.bf16.mxu0 %v6773
    %7650 = vmatmul.mubr.bf16.gmra.mrb[0].mxu0 %v6772
    %v7651 = vpop.f32.mrb[0].mxu0
    %v7652 = vadd.f32 %v7507, %v7651
    %v7653 = vpop.f32.mrb[0].mxu0
    %v7654 = vpop.f32.mrb[0].mxu0
    %v7655 = vadd.f32 %v7510, %v7654
    %v7656 = vpop.f32.mrb[0].mxu0
    %7657 = vmatprep.mubr.bf16.mxu0 %v6782
    %7658 = vmatmul.mubr.bf16.gmra.mrb[0].mxu0 %v6781
    %v7659 = vpop.f32.mrb[0].mxu0
    %v7660 = vadd.f32 %v7515, %v7659
    %v7661 = vpop.f32.mrb[0].mxu0
    %v7662 = vpop.f32.mrb[0].mxu0
    %v7663 = vadd.f32 %v7518, %v7662
    %v7664 = vpop.f32.mrb[0].mxu0
    %7665 = vmatprep.mubr.bf16.mxu0 %v6791
    %7666 = vmatmul.mubr.bf16.gmra.mrb[0].mxu0 %v6790
    %v7667 = vpop.f32.mrb[0].mxu0
    %v7668 = vadd.f32 %v7523, %v7667
    %v7669 = vpop.f32.mrb[0].mxu0
    %v7670 = vpop.f32.mrb[0].mxu0
    %v7671 = vadd.f32 %v7526, %v7670
    %v7672 = vpop.f32.mrb[0].mxu0
    %7673 = vmatprep.mubr.bf16.mxu0 %v6800
    %7674 = vmatmul.mubr.bf16.gmra.mrb[0].mxu0 %v6799
    %v7675 = vpop.f32.mrb[0].mxu0
    %v7676 = vadd.f32 %v7531, %v7675
    %v7677 = vpop.f32.mrb[0].mxu0
    %v7678 = vpop.f32.mrb[0].mxu0
    %v7679 = vadd.f32 %v7534, %v7678
    %v7680 = vpop.f32.mrb[0].mxu0
    %7681 = vmatprep.mubr.bf16.mxu0 %v6809
    %7682 = vmatmul.mubr.bf16.gmra.mrb[0].mxu0 %v6808
    %v7683 = vpop.f32.mrb[0].mxu0
    %v7684 = vadd.f32 %v7539, %v7683
    %v7685 = vpop.f32.mrb[0].mxu0
    %v7686 = vpop.f32.mrb[0].mxu0
    %v7687 = vadd.f32 %v7542, %v7686
    %v7688 = vpop.f32.mrb[0].mxu0
    %7689 = vmatprep.mubr.bf16.mxu0 %v6818
    %7690 = vmatmul.mubr.bf16.gmra.mrb[0].mxu0 %v6817
    %v7691 = vpop.f32.mrb[0].mxu0
    %v7692 = vadd.f32 %v7547, %v7691
    %v7693 = vpop.f32.mrb[0].mxu0
    %v7694 = vpop.f32.mrb[0].mxu0
    %v7695 = vadd.f32 %v7550, %v7694
    %v7696 = vpop.f32.mrb[0].mxu0
    %7697 = vmatprep.mubr.bf16.mxu0 %v6827
    %7698 = vmatmul.mubr.bf16.gmra.mrb[0].mxu0 %v6826
    %v7699 = vpop.f32.mrb[0].mxu0
    %v7700 = vadd.f32 %v7555, %v7699
    %v7701 = vpop.f32.mrb[0].mxu0
    %v7702 = vpop.f32.mrb[0].mxu0
    %v7703 = vadd.f32 %v7558, %v7702
    %v7704 = vpop.f32.mrb[0].mxu0
    %7705 = vdwg.mxu0
    %7706 = vmatprep.subr.bf16.mxu0 0
    %7707 = vmatpush1.bf16.msra.mxu0 %v7304
    %7708 = vmatprep.subr.bf16.mxu0 0
    %7709 = vmatpush1.bf16.msra.mxu0 %v7305
    %7710 = vmatprep.subr.bf16.mxu0 0
    %7711 = vmatpush1.bf16.msra.mxu0 %v7306
    %7712 = vmatprep.subr.bf16.mxu0 0
    %7713 = vmatpush1.bf16.msra.mxu0 %v7307
    %7714 = vmatprep.subr.bf16.mxu0 0
    %7715 = vmatpush1.bf16.msra.mxu0 %v7308
    %7716 = vmatprep.subr.bf16.mxu0 0
    %7717 = vmatpush1.bf16.msra.mxu0 %v7309
    %7718 = vmatprep.subr.bf16.mxu0 0
    %7719 = vmatpush1.bf16.msra.mxu0 %v7310
    %7720 = vmatprep.subr.bf16.mxu0 0
    %7721 = vmatpush1.bf16.msra.mxu0 %v7311
    %7722 = vmatprep.subr.bf16.mxu0 0
    %7723 = vmatpush1.bf16.msra.mxu0 %v7312
    %7724 = vmatprep.subr.bf16.mxu0 0
    %7725 = vmatpush1.bf16.msra.mxu0 %v7313
    %7726 = vmatprep.subr.bf16.mxu0 0
    %7727 = vmatpush1.bf16.msra.mxu0 %v7314
    %7728 = vmatprep.subr.bf16.mxu0 0
    %7729 = vmatpush1.bf16.msra.mxu0 %v7315
    %7730 = vmatprep.subr.bf16.mxu0 0
    %7731 = vmatpush1.bf16.msra.mxu0 %v7316
    %7732 = vmatprep.subr.bf16.mxu0 0
    %7733 = vmatpush1.bf16.msra.mxu0 %v7317
    %7734 = vmatprep.subr.bf16.mxu0 0
    %7735 = vmatpush1.bf16.msra.mxu0 %v7318
    %7736 = vmatprep.subr.bf16.mxu0 0
    %7737 = vmatpush1.bf16.msra.mxu0 %v7319
    %7738 = vmatprep.mubr.bf16.mxu0 %v6712
    %7739 = vmatmul.mubr.bf16.gmra.mrb[0].mxu0 %v6711
    %v7740 = vpop.f32.mrb[0].mxu0
    %v7741 = vadd.f32 %v7596, %v7740
    %v7742 = vpop.f32.mrb[0].mxu0
    %v7743 = vpop.f32.mrb[0].mxu0
    %v7744 = vadd.f32 %v7599, %v7743
    %v7745 = vpop.f32.mrb[0].mxu0
    %7746 = vmatprep.mubr.bf16.mxu0 %v6721
    %7747 = vmatmul.mubr.bf16.gmra.mrb[0].mxu0 %v6720
    %v7748 = vpop.f32.mrb[0].mxu0
    %v7749 = vadd.f32 %v7604, %v7748
    %v7750 = vpop.f32.mrb[0].mxu0
    %v7751 = vpop.f32.mrb[0].mxu0
    %v7752 = vadd.f32 %v7607, %v7751
    %v7753 = vpop.f32.mrb[0].mxu0
    %7754 = vmatprep.mubr.bf16.mxu0 %v6730
    %7755 = vmatmul.mubr.bf16.gmra.mrb[0].mxu0 %v6729
    %v7756 = vpop.f32.mrb[0].mxu0
    %v7757 = vadd.f32 %v7612, %v7756
    %v7758 = vpop.f32.mrb[0].mxu0
    %v7759 = vpop.f32.mrb[0].mxu0
    %v7760 = vadd.f32 %v7615, %v7759
    %v7761 = vpop.f32.mrb[0].mxu0
    %7762 = vmatprep.mubr.bf16.mxu0 %v6739
    %7763 = vmatmul.mubr.bf16.gmra.mrb[0].mxu0 %v6738
    %v7764 = vpop.f32.mrb[0].mxu0
    %v7765 = vadd.f32 %v7620, %v7764
    %v7766 = vpop.f32.mrb[0].mxu0
    %v7767 = vpop.f32.mrb[0].mxu0
    %v7768 = vadd.f32 %v7623, %v7767
    %v7769 = vpop.f32.mrb[0].mxu0
    %7770 = vmatprep.mubr.bf16.mxu0 %v6748
    %7771 = vmatmul.mubr.bf16.gmra.mrb[0].mxu0 %v6747
    %v7772 = vpop.f32.mrb[0].mxu0
    %v7773 = vadd.f32 %v7628, %v7772
    %v7774 = vpop.f32.mrb[0].mxu0
    %v7775 = vpop.f32.mrb[0].mxu0
    %v7776 = vadd.f32 %v7631, %v7775
    %v7777 = vpop.f32.mrb[0].mxu0
    %7778 = vmatprep.mubr.bf16.mxu0 %v6757
    %7779 = vmatmul.mubr.bf16.gmra.mrb[0].mxu0 %v6756
    %v7780 = vpop.f32.mrb[0].mxu0
    %v7781 = vadd.f32 %v7636, %v7780
    %v7782 = vpop.f32.mrb[0].mxu0
    %v7783 = vpop.f32.mrb[0].mxu0
    %v7784 = vadd.f32 %v7639, %v7783
    %v7785 = vpop.f32.mrb[0].mxu0
    %7786 = vmatprep.mubr.bf16.mxu0 %v6766
    %7787 = vmatmul.mubr.bf16.gmra.mrb[0].mxu0 %v6765
    %v7788 = vpop.f32.mrb[0].mxu0
    %v7789 = vadd.f32 %v7644, %v7788
    %v7790 = vpop.f32.mrb[0].mxu0
    %v7791 = vpop.f32.mrb[0].mxu0
    %v7792 = vadd.f32 %v7647, %v7791
    %v7793 = vpop.f32.mrb[0].mxu0
    %7794 = vmatprep.mubr.bf16.mxu0 %v6775
    %7795 = vmatmul.mubr.bf16.gmra.mrb[0].mxu0 %v6774
    %v7796 = vpop.f32.mrb[0].mxu0
    %v7797 = vadd.f32 %v7652, %v7796
    %v7798 = vpop.f32.mrb[0].mxu0
    %v7799 = vpop.f32.mrb[0].mxu0
    %v7800 = vadd.f32 %v7655, %v7799
    %v7801 = vpop.f32.mrb[0].mxu0
    %7802 = vmatprep.mubr.bf16.mxu0 %v6784
    %7803 = vmatmul.mubr.bf16.gmra.mrb[0].mxu0 %v6783
    %v7804 = vpop.f32.mrb[0].mxu0
    %v7805 = vadd.f32 %v7660, %v7804
    %v7806 = vpop.f32.mrb[0].mxu0
    %v7807 = vpop.f32.mrb[0].mxu0
    %v7808 = vadd.f32 %v7663, %v7807
    %v7809 = vpop.f32.mrb[0].mxu0
    %7810 = vmatprep.mubr.bf16.mxu0 %v6793
    %7811 = vmatmul.mubr.bf16.gmra.mrb[0].mxu0 %v6792
    %v7812 = vpop.f32.mrb[0].mxu0
    %v7813 = vadd.f32 %v7668, %v7812
    %v7814 = vpop.f32.mrb[0].mxu0
    %v7815 = vpop.f32.mrb[0].mxu0
    %v7816 = vadd.f32 %v7671, %v7815
    %v7817 = vpop.f32.mrb[0].mxu0
    %7818 = vmatprep.mubr.bf16.mxu0 %v6802
    %7819 = vmatmul.mubr.bf16.gmra.mrb[0].mxu0 %v6801
    %v7820 = vpop.f32.mrb[0].mxu0
    %v7821 = vadd.f32 %v7676, %v7820
    %v7822 = vpop.f32.mrb[0].mxu0
    %v7823 = vpop.f32.mrb[0].mxu0
    %v7824 = vadd.f32 %v7679, %v7823
    %v7825 = vpop.f32.mrb[0].mxu0
    %7826 = vmatprep.mubr.bf16.mxu0 %v6811
    %7827 = vmatmul.mubr.bf16.gmra.mrb[0].mxu0 %v6810
    %v7828 = vpop.f32.mrb[0].mxu0
    %v7829 = vadd.f32 %v7684, %v7828
    %v7830 = vpop.f32.mrb[0].mxu0
    %v7831 = vpop.f32.mrb[0].mxu0
    %v7832 = vadd.f32 %v7687, %v7831
    %v7833 = vpop.f32.mrb[0].mxu0
    %7834 = vmatprep.mubr.bf16.mxu0 %v6820
    %7835 = vmatmul.mubr.bf16.gmra.mrb[0].mxu0 %v6819
    %v7836 = vpop.f32.mrb[0].mxu0
    %v7837 = vadd.f32 %v7692, %v7836
    %v7838 = vpop.f32.mrb[0].mxu0
    %v7839 = vpop.f32.mrb[0].mxu0
    %v7840 = vadd.f32 %v7695, %v7839
    %v7841 = vpop.f32.mrb[0].mxu0
    %7842 = vmatprep.mubr.bf16.mxu0 %v6829
    %7843 = vmatmul.mubr.bf16.gmra.mrb[0].mxu0 %v6828
    %v7844 = vpop.f32.mrb[0].mxu0
    %v7845 = vadd.f32 %v7700, %v7844
    %v7846 = vpop.f32.mrb[0].mxu0
    %v7847 = vpop.f32.mrb[0].mxu0
    %v7848 = vadd.f32 %v7703, %v7847
    %v7849 = vpop.f32.mrb[0].mxu0
    %7850 = vdwg.mxu0
    %7851 = vmatprep.subr.bf16.mxu0 0
    %7852 = vmatpush1.bf16.msra.mxu0 %v7320
    %7853 = vmatprep.subr.bf16.mxu0 0
    %7854 = vmatpush1.bf16.msra.mxu0 %v7321
    %7855 = vmatprep.subr.bf16.mxu0 0
    %7856 = vmatpush1.bf16.msra.mxu0 %v7322
    %7857 = vmatprep.subr.bf16.mxu0 0
    %7858 = vmatpush1.bf16.msra.mxu0 %v7323
    %7859 = vmatprep.subr.bf16.mxu0 0
    %7860 = vmatpush1.bf16.msra.mxu0 %v7324
    %7861 = vmatprep.subr.bf16.mxu0 0
    %7862 = vmatpush1.bf16.msra.mxu0 %v7325
    %7863 = vmatprep.subr.bf16.mxu0 0
    %7864 = vmatpush1.bf16.msra.mxu0 %v7326
    %7865 = vmatprep.subr.bf16.mxu0 0
    %7866 = vmatpush1.bf16.msra.mxu0 %v7327
    %7867 = vmatprep.subr.bf16.mxu0 0
    %7868 = vmatpush1.bf16.msra.mxu0 %v7328
    %7869 = vmatprep.subr.bf16.mxu0 0
    %7870 = vmatpush1.bf16.msra.mxu0 %v7329
    %7871 = vmatprep.subr.bf16.mxu0 0
    %7872 = vmatpush1.bf16.msra.mxu0 %v7330
    %7873 = vmatprep.subr.bf16.mxu0 0
    %7874 = vmatpush1.bf16.msra.mxu0 %v7331
    %7875 = vmatprep.subr.bf16.mxu0 0
    %7876 = vmatpush1.bf16.msra.mxu0 %v7332
    %7877 = vmatprep.subr.bf16.mxu0 0
    %7878 = vmatpush1.bf16.msra.mxu0 %v7333
    %7879 = vmatprep.subr.bf16.mxu0 0
    %7880 = vmatpush1.bf16.msra.mxu0 %v7334
    %7881 = vmatprep.subr.bf16.mxu0 0
    %7882 = vmatpush1.bf16.msra.mxu0 %v7335
    %7883 = vmatprep.mubr.bf16.mxu0 %v6714
    %7884 = vmatmul.mubr.bf16.gmra.mrb[0].mxu0 %v6713
    %v7885 = vpop.f32.mrb[0].mxu0
    %v7886 = vadd.f32 %v7741, %v7885
    %v7887 = vpop.f32.mrb[0].mxu0
    %v7888 = vpop.f32.mrb[0].mxu0
    %v7889 = vadd.f32 %v7744, %v7888
    %v7890 = vpop.f32.mrb[0].mxu0
    %7891 = vmatprep.mubr.bf16.mxu0 %v6723
    %7892 = vmatmul.mubr.bf16.gmra.mrb[0].mxu0 %v6722
    %v7893 = vpop.f32.mrb[0].mxu0
    %v7894 = vadd.f32 %v7749, %v7893
    %v7895 = vpop.f32.mrb[0].mxu0
    %v7896 = vpop.f32.mrb[0].mxu0
    %v7897 = vadd.f32 %v7752, %v7896
    %v7898 = vpop.f32.mrb[0].mxu0
    %7899 = vmatprep.mubr.bf16.mxu0 %v6732
    %7900 = vmatmul.mubr.bf16.gmra.mrb[0].mxu0 %v6731
    %v7901 = vpop.f32.mrb[0].mxu0
    %v7902 = vadd.f32 %v7757, %v7901
    %v7903 = vpop.f32.mrb[0].mxu0
    %v7904 = vpop.f32.mrb[0].mxu0
    %v7905 = vadd.f32 %v7760, %v7904
    %v7906 = vpop.f32.mrb[0].mxu0
    %7907 = vmatprep.mubr.bf16.mxu0 %v6741
    %7908 = vmatmul.mubr.bf16.gmra.mrb[0].mxu0 %v6740
    %v7909 = vpop.f32.mrb[0].mxu0
    %v7910 = vadd.f32 %v7765, %v7909
    %v7911 = vpop.f32.mrb[0].mxu0
    %v7912 = vpop.f32.mrb[0].mxu0
    %v7913 = vadd.f32 %v7768, %v7912
    %v7914 = vpop.f32.mrb[0].mxu0
    %7915 = vmatprep.mubr.bf16.mxu0 %v6750
    %7916 = vmatmul.mubr.bf16.gmra.mrb[0].mxu0 %v6749
    %v7917 = vpop.f32.mrb[0].mxu0
    %v7918 = vadd.f32 %v7773, %v7917
    %v7919 = vpop.f32.mrb[0].mxu0
    %v7920 = vpop.f32.mrb[0].mxu0
    %v7921 = vadd.f32 %v7776, %v7920
    %v7922 = vpop.f32.mrb[0].mxu0
    %7923 = vmatprep.mubr.bf16.mxu0 %v6759
    %7924 = vmatmul.mubr.bf16.gmra.mrb[0].mxu0 %v6758
    %v7925 = vpop.f32.mrb[0].mxu0
    %v7926 = vadd.f32 %v7781, %v7925
    %v7927 = vpop.f32.mrb[0].mxu0
    %v7928 = vpop.f32.mrb[0].mxu0
    %v7929 = vadd.f32 %v7784, %v7928
    %v7930 = vpop.f32.mrb[0].mxu0
    %7931 = vmatprep.mubr.bf16.mxu0 %v6768
    %7932 = vmatmul.mubr.bf16.gmra.mrb[0].mxu0 %v6767
    %v7933 = vpop.f32.mrb[0].mxu0
    %v7934 = vadd.f32 %v7789, %v7933
    %v7935 = vpop.f32.mrb[0].mxu0
    %v7936 = vpop.f32.mrb[0].mxu0
    %v7937 = vadd.f32 %v7792, %v7936
    %v7938 = vpop.f32.mrb[0].mxu0
    %7939 = vmatprep.mubr.bf16.mxu0 %v6777
    %7940 = vmatmul.mubr.bf16.gmra.mrb[0].mxu0 %v6776
    %v7941 = vpop.f32.mrb[0].mxu0
    %v7942 = vadd.f32 %v7797, %v7941
    %v7943 = vpop.f32.mrb[0].mxu0
    %v7944 = vpop.f32.mrb[0].mxu0
    %v7945 = vadd.f32 %v7800, %v7944
    %v7946 = vpop.f32.mrb[0].mxu0
    %7947 = vmatprep.mubr.bf16.mxu0 %v6786
    %7948 = vmatmul.mubr.bf16.gmra.mrb[0].mxu0 %v6785
    %v7949 = vpop.f32.mrb[0].mxu0
    %v7950 = vadd.f32 %v7805, %v7949
    %v7951 = vpop.f32.mrb[0].mxu0
    %v7952 = vpop.f32.mrb[0].mxu0
    %v7953 = vadd.f32 %v7808, %v7952
    %v7954 = vpop.f32.mrb[0].mxu0
    %7955 = vmatprep.mubr.bf16.mxu0 %v6795
    %7956 = vmatmul.mubr.bf16.gmra.mrb[0].mxu0 %v6794
    %v7957 = vpop.f32.mrb[0].mxu0
    %v7958 = vadd.f32 %v7813, %v7957
    %v7959 = vpop.f32.mrb[0].mxu0
    %v7960 = vpop.f32.mrb[0].mxu0
    %v7961 = vadd.f32 %v7816, %v7960
    %v7962 = vpop.f32.mrb[0].mxu0
    %7963 = vmatprep.mubr.bf16.mxu0 %v6804
    %7964 = vmatmul.mubr.bf16.gmra.mrb[0].mxu0 %v6803
    %v7965 = vpop.f32.mrb[0].mxu0
    %v7966 = vadd.f32 %v7821, %v7965
    %v7967 = vpop.f32.mrb[0].mxu0
    %v7968 = vpop.f32.mrb[0].mxu0
    %v7969 = vadd.f32 %v7824, %v7968
    %v7970 = vpop.f32.mrb[0].mxu0
    %7971 = vmatprep.mubr.bf16.mxu0 %v6813
    %7972 = vmatmul.mubr.bf16.gmra.mrb[0].mxu0 %v6812
    %v7973 = vpop.f32.mrb[0].mxu0
    %v7974 = vadd.f32 %v7829, %v7973
    %v7975 = vpop.f32.mrb[0].mxu0
    %v7976 = vpop.f32.mrb[0].mxu0
    %v7977 = vadd.f32 %v7832, %v7976
    %v7978 = vpop.f32.mrb[0].mxu0
    %7979 = vmatprep.mubr.bf16.mxu0 %v6822
    %7980 = vmatmul.mubr.bf16.gmra.mrb[0].mxu0 %v6821
    %v7981 = vpop.f32.mrb[0].mxu0
    %v7982 = vadd.f32 %v7837, %v7981
    %v7983 = vpop.f32.mrb[0].mxu0
    %v7984 = vpop.f32.mrb[0].mxu0
    %v7985 = vadd.f32 %v7840, %v7984
    %v7986 = vpop.f32.mrb[0].mxu0
    %7987 = vmatprep.mubr.bf16.mxu0 %v6831
    %7988 = vmatmul.mubr.bf16.gmra.mrb[0].mxu0 %v6830
    %v7989 = vpop.f32.mrb[0].mxu0
    %v7990 = vadd.f32 %v7845, %v7989
    %v7991 = vpop.f32.mrb[0].mxu0
    %v7992 = vpop.f32.mrb[0].mxu0
    %v7993 = vadd.f32 %v7848, %v7992
    %v7994 = vpop.f32.mrb[0].mxu0
    %7995 = vdwg.mxu0
    %7996 = vmatprep.subr.bf16.mxu0 0
    %7997 = vmatpush1.bf16.msra.mxu0 %v7336
    %7998 = vmatprep.subr.bf16.mxu0 0
    %7999 = vmatpush1.bf16.msra.mxu0 %v7337
    %8000 = vmatprep.subr.bf16.mxu0 0
    %8001 = vmatpush1.bf16.msra.mxu0 %v7338
    %8002 = vmatprep.subr.bf16.mxu0 0
    %8003 = vmatpush1.bf16.msra.mxu0 %v7339
    %8004 = vmatprep.subr.bf16.mxu0 0
    %8005 = vmatpush1.bf16.msra.mxu0 %v7340
    %8006 = vmatprep.subr.bf16.mxu0 0
    %8007 = vmatpush1.bf16.msra.mxu0 %v7341
    %8008 = vmatprep.subr.bf16.mxu0 0
    %8009 = vmatpush1.bf16.msra.mxu0 %v7342
    %8010 = vmatprep.subr.bf16.mxu0 0
    %8011 = vmatpush1.bf16.msra.mxu0 %v7343
    %8012 = vmatprep.subr.bf16.mxu0 0
    %8013 = vmatpush1.bf16.msra.mxu0 0
    %8014 = vmatprep.subr.bf16.mxu0 0
    %8015 = vmatpush1.bf16.msra.mxu0 0
    %8016 = vmatprep.subr.bf16.mxu0 0
    %8017 = vmatpush1.bf16.msra.mxu0 0
    %8018 = vmatprep.subr.bf16.mxu0 0
    %8019 = vmatpush1.bf16.msra.mxu0 0
    %8020 = vmatprep.subr.bf16.mxu0 0
    %8021 = vmatpush1.bf16.msra.mxu0 0
    %8022 = vmatprep.subr.bf16.mxu0 0
    %8023 = vmatpush1.bf16.msra.mxu0 0
    %8024 = vmatprep.subr.bf16.mxu0 0
    %8025 = vmatpush1.bf16.msra.mxu0 0
    %8026 = vmatprep.subr.bf16.mxu0 0
    %8027 = vmatpush1.bf16.msra.mxu0 0
    %8028 = vmatprep.mubr.bf16.mxu0 0
    %8029 = vmatmul.mubr.bf16.gmra.mrb[0].mxu0 %v6715
    %v8030 = vpop.f32.mrb[0].mxu0
    %v8031 = vadd.f32 %v7886, %v8030
    %v8032 = vpop.f32.mrb[0].mxu0
    %v8033 = vpop.f32.mrb[0].mxu0
    %v8034 = vadd.f32 %v7889, %v8033
    %v8035 = vpop.f32.mrb[0].mxu0
    %8036 = vmatprep.mubr.bf16.mxu0 0
    %8037 = vmatmul.mubr.bf16.gmra.mrb[0].mxu0 %v6724
    %v8038 = vpop.f32.mrb[0].mxu0
    %v8039 = vadd.f32 %v7894, %v8038
    %v8040 = vpop.f32.mrb[0].mxu0
    %v8041 = vpop.f32.mrb[0].mxu0
    %v8042 = vadd.f32 %v7897, %v8041
    %v8043 = vpop.f32.mrb[0].mxu0
    %8044 = vmatprep.mubr.bf16.mxu0 0
    %8045 = vmatmul.mubr.bf16.gmra.mrb[0].mxu0 %v6733
    %v8046 = vpop.f32.mrb[0].mxu0
    %v8047 = vadd.f32 %v7902, %v8046
    %v8048 = vpop.f32.mrb[0].mxu0
    %v8049 = vpop.f32.mrb[0].mxu0
    %v8050 = vadd.f32 %v7905, %v8049
    %v8051 = vpop.f32.mrb[0].mxu0
    %8052 = vmatprep.mubr.bf16.mxu0 0
    %8053 = vmatmul.mubr.bf16.gmra.mrb[0].mxu0 %v6742
    %v8054 = vpop.f32.mrb[0].mxu0
    %v8055 = vadd.f32 %v7910, %v8054
    %v8056 = vpop.f32.mrb[0].mxu0
    %v8057 = vpop.f32.mrb[0].mxu0
    %v8058 = vadd.f32 %v7913, %v8057
    %v8059 = vpop.f32.mrb[0].mxu0
    %8060 = vmatprep.mubr.bf16.mxu0 0
    %8061 = vmatmul.mubr.bf16.gmra.mrb[0].mxu0 %v6751
    %v8062 = vpop.f32.mrb[0].mxu0
    %v8063 = vadd.f32 %v7918, %v8062
    %v8064 = vpop.f32.mrb[0].mxu0
    %v8065 = vpop.f32.mrb[0].mxu0
    %v8066 = vadd.f32 %v7921, %v8065
    %v8067 = vpop.f32.mrb[0].mxu0
    %8068 = vmatprep.mubr.bf16.mxu0 0
    %8069 = vmatmul.mubr.bf16.gmra.mrb[0].mxu0 %v6760
    %v8070 = vpop.f32.mrb[0].mxu0
    %v8071 = vadd.f32 %v7926, %v8070
    %v8072 = vpop.f32.mrb[0].mxu0
    %v8073 = vpop.f32.mrb[0].mxu0
    %v8074 = vadd.f32 %v7929, %v8073
    %v8075 = vpop.f32.mrb[0].mxu0
    %8076 = vmatprep.mubr.bf16.mxu0 0
    %8077 = vmatmul.mubr.bf16.gmra.mrb[0].mxu0 %v6769
    %v8078 = vpop.f32.mrb[0].mxu0
    %v8079 = vadd.f32 %v7934, %v8078
    %v8080 = vpop.f32.mrb[0].mxu0
    %v8081 = vpop.f32.mrb[0].mxu0
    %v8082 = vadd.f32 %v7937, %v8081
    %v8083 = vpop.f32.mrb[0].mxu0
    %8084 = vmatprep.mubr.bf16.mxu0 0
    %8085 = vmatmul.mubr.bf16.gmra.mrb[0].mxu0 %v6778
    %v8086 = vpop.f32.mrb[0].mxu0
    %v8087 = vadd.f32 %v7942, %v8086
    %v8088 = vpop.f32.mrb[0].mxu0
    %v8089 = vpop.f32.mrb[0].mxu0
    %v8090 = vadd.f32 %v7945, %v8089
    %v8091 = vpop.f32.mrb[0].mxu0
    %8092 = vmatprep.mubr.bf16.mxu0 0
    %8093 = vmatmul.mubr.bf16.gmra.mrb[0].mxu0 %v6787
    %v8094 = vpop.f32.mrb[0].mxu0
    %v8095 = vadd.f32 %v7950, %v8094
    %v8096 = vpop.f32.mrb[0].mxu0
    %v8097 = vpop.f32.mrb[0].mxu0
    %v8098 = vadd.f32 %v7953, %v8097
    %v8099 = vpop.f32.mrb[0].mxu0
    %8100 = vmatprep.mubr.bf16.mxu0 0
    %8101 = vmatmul.mubr.bf16.gmra.mrb[0].mxu0 %v6796
    %v8102 = vpop.f32.mrb[0].mxu0
    %v8103 = vadd.f32 %v7958, %v8102
    %v8104 = vpop.f32.mrb[0].mxu0
    %v8105 = vpop.f32.mrb[0].mxu0
    %v8106 = vadd.f32 %v7961, %v8105
    %v8107 = vpop.f32.mrb[0].mxu0
    %8108 = vmatprep.mubr.bf16.mxu0 0
    %8109 = vmatmul.mubr.bf16.gmra.mrb[0].mxu0 %v6805
    %v8110 = vpop.f32.mrb[0].mxu0
    %v8111 = vadd.f32 %v7966, %v8110
    %v8112 = vpop.f32.mrb[0].mxu0
    %v8113 = vpop.f32.mrb[0].mxu0
    %v8114 = vadd.f32 %v7969, %v8113
    %v8115 = vpop.f32.mrb[0].mxu0
    %8116 = vmatprep.mubr.bf16.mxu0 0
    %8117 = vmatmul.mubr.bf16.gmra.mrb[0].mxu0 %v6814
    %v8118 = vpop.f32.mrb[0].mxu0
    %v8119 = vadd.f32 %v7974, %v8118
    %v8120 = vpop.f32.mrb[0].mxu0
    %v8121 = vpop.f32.mrb[0].mxu0
    %v8122 = vadd.f32 %v7977, %v8121
    %v8123 = vpop.f32.mrb[0].mxu0
    %8124 = vmatprep.mubr.bf16.mxu0 0
    %8125 = vmatmul.mubr.bf16.gmra.mrb[0].mxu0 %v6823
    %v8126 = vpop.f32.mrb[0].mxu0
    %v8127 = vadd.f32 %v7982, %v8126
    %v8128 = vpop.f32.mrb[0].mxu0
    %v8129 = vpop.f32.mrb[0].mxu0
    %v8130 = vadd.f32 %v7985, %v8129
    %v8131 = vpop.f32.mrb[0].mxu0
    %8132 = vmatprep.mubr.bf16.mxu0 0
    %8133 = vmatmul.mubr.bf16.gmra.mrb[0].mxu0 %v6832
    %v8134 = vpop.f32.mrb[0].mxu0
    %v8135 = vadd.f32 %v7990, %v8134
    %v8136 = vpop.f32.mrb[0].mxu0
    %v8137 = vpop.f32.mrb[0].mxu0
    %v8138 = vadd.f32 %v7993, %v8137
    %v8139 = vpop.f32.mrb[0].mxu0
    %8140 = vdwg.mxu0
    %v8141 = vmax.f32 %v8031, 0.0
    %v8142 = vmax.f32 %v8034, 0.0
    %v8143 = vmax.f32 %v8039, 0.0
    %v8144 = vmax.f32 %v8042, 0.0
    %v8145 = vmax.f32 %v8047, 0.0
    %v8146 = vmax.f32 %v8050, 0.0
    %v8147 = vmax.f32 %v8055, 0.0
    %v8148 = vmax.f32 %v8058, 0.0
    %v8149 = vmax.f32 %v8063, 0.0
    %v8150 = vmax.f32 %v8066, 0.0
    %v8151 = vmax.f32 %v8071, 0.0
    %v8152 = vmax.f32 %v8074, 0.0
    %v8153 = vmax.f32 %v8079, 0.0
    %v8154 = vmax.f32 %v8082, 0.0
    %v8155 = vmax.f32 %v8087, 0.0
    %v8156 = vmax.f32 %v8090, 0.0
    %v8157 = vmax.f32 %v8095, 0.0
    %v8158 = vmax.f32 %v8098, 0.0
    %v8159 = vmax.f32 %v8103, 0.0
    %v8160 = vmax.f32 %v8106, 0.0
    %v8161 = vmax.f32 %v8111, 0.0
    %v8162 = vmax.f32 %v8114, 0.0
    %v8163 = vmax.f32 %v8119, 0.0
    %v8164 = vmax.f32 %v8122, 0.0
    %v8165 = vmax.f32 %v8127, 0.0
    %v8166 = vmax.f32 %v8130, 0.0
    %v8167 = vmax.f32 %v8135, 0.0
    %v8168 = vmax.f32 %v8138, 0.0
    %v8169 = vmul.f32 %v8141, %v2750
    %v8170 = vmul.f32 %v8142, %v2755
    %v8171 = vmul.f32 %v8143, %v2760
    %v8172 = vmul.f32 %v8144, %v2765
    %v8173 = vmul.f32 %v8145, %v2770
    %v8174 = vmul.f32 %v8146, %v2775
    %v8175 = vmul.f32 %v8147, %v2780
    %v8176 = vmul.f32 %v8148, %v2785
    %v8177 = vmul.f32 %v8149, %v2790
    %v8178 = vmul.f32 %v8150, %v2795
    %v8179 = vmul.f32 %v8151, %v2800
    %v8180 = vmul.f32 %v8152, %v2805
    %v8181 = vmul.f32 %v8153, %v2810
    %v8182 = vmul.f32 %v8154, %v2815
    %v8183 = vmul.f32 %v8155, %v2820
    %v8184 = vmul.f32 %v8156, %v2825
    %v8185 = vmul.f32 %v8157, %v2830
    %v8186 = vmul.f32 %v8158, %v2835
    %v8187 = vmul.f32 %v8159, %v2840
    %v8188 = vmul.f32 %v8160, %v2845
    %v8189 = vmul.f32 %v8161, %v2850
    %v8190 = vmul.f32 %v8162, %v2855
    %v8191 = vmul.f32 %v8163, %v2860
    %v8192 = vmul.f32 %v8164, %v2865
    %v8193 = vmul.f32 %v8165, %v2870
    %v8194 = vmul.f32 %v8166, %v2875
    %v8195 = vmul.f32 %v8167, %v2880
    %v8196 = vmul.f32 %v8168, %v2885
    %v8197 = vpack.c.bf16 %v8170, %v8169
    %v8198 = vpack.c.bf16 %v8172, %v8171
    %v8199 = vpack.c.bf16 %v8174, %v8173
    %v8200 = vpack.c.bf16 %v8176, %v8175
    %v8201 = vpack.c.bf16 %v8178, %v8177
    %v8202 = vpack.c.bf16 %v8180, %v8179
    %v8203 = vpack.c.bf16 %v8182, %v8181
    %v8204 = vpack.c.bf16 %v8184, %v8183
    %v8205 = vpack.c.bf16 %v8186, %v8185
    %v8206 = vpack.c.bf16 %v8188, %v8187
    %v8207 = vpack.c.bf16 %v8190, %v8189
    %v8208 = vpack.c.bf16 %v8192, %v8191
    %v8209 = vpack.c.bf16 %v8194, %v8193
    %v8210 = vpack.c.bf16 %v8196, %v8195
    %v8212 = vshrl.u32 %v8197, 16
    %v8214 = vrot.slane %v8212, 2
    %v8215 = vshll.u32 %v8197, 16
    %v8217 = vrot.slane %v8215, 3
    %v8218 = vor.u32 %v8214, %v8217
    %v8220 = vshrl.u32 %v8198, 16
    %v8222 = vrot.slane %v8220, 2
    %v8223 = vshll.u32 %v8198, 16
    %v8225 = vrot.slane %v8223, 3
    %v8226 = vor.u32 %v8222, %v8225
    %v8227 = vsel %vm1034, %v8218, %v8226
    %v8229 = vshrl.u32 %v8199, 16
    %v8231 = vrot.slane %v8229, 2
    %v8232 = vshll.u32 %v8199, 16
    %v8234 = vrot.slane %v8232, 3
    %v8235 = vor.u32 %v8231, %v8234
    %v8236 = vsel %vm1034, %v8226, %v8235
    %v8238 = vshrl.u32 %v8200, 16
    %v8240 = vrot.slane %v8238, 2
    %v8241 = vshll.u32 %v8200, 16
    %v8243 = vrot.slane %v8241, 3
    %v8244 = vor.u32 %v8240, %v8243
    %v8245 = vsel %vm1034, %v8235, %v8244
    %v8247 = vshrl.u32 %v8201, 16
    %v8249 = vrot.slane %v8247, 2
    %v8250 = vshll.u32 %v8201, 16
    %v8252 = vrot.slane %v8250, 3
    %v8253 = vor.u32 %v8249, %v8252
    %v8254 = vsel %vm1034, %v8244, %v8253
    %v8256 = vshrl.u32 %v8202, 16
    %v8258 = vrot.slane %v8256, 2
    %v8259 = vshll.u32 %v8202, 16
    %v8261 = vrot.slane %v8259, 3
    %v8262 = vor.u32 %v8258, %v8261
    %v8263 = vsel %vm1034, %v8253, %v8262
    %v8265 = vshrl.u32 %v8203, 16
    %v8267 = vrot.slane %v8265, 2
    %v8268 = vshll.u32 %v8203, 16
    %v8270 = vrot.slane %v8268, 3
    %v8271 = vor.u32 %v8267, %v8270
    %v8272 = vsel %vm1034, %v8262, %v8271
    %v8274 = vshrl.u32 %v8204, 16
    %v8276 = vrot.slane %v8274, 2
    %v8277 = vshll.u32 %v8204, 16
    %v8279 = vrot.slane %v8277, 3
    %v8280 = vor.u32 %v8276, %v8279
    %v8281 = vsel %vm1034, %v8271, %v8280
    %v8283 = vshrl.u32 %v8205, 16
    %v8285 = vrot.slane %v8283, 2
    %v8286 = vshll.u32 %v8205, 16
    %v8288 = vrot.slane %v8286, 3
    %v8289 = vor.u32 %v8285, %v8288
    %v8290 = vsel %vm1034, %v8280, %v8289
    %v8292 = vshrl.u32 %v8206, 16
    %v8294 = vrot.slane %v8292, 2
    %v8295 = vshll.u32 %v8206, 16
    %v8297 = vrot.slane %v8295, 3
    %v8298 = vor.u32 %v8294, %v8297
    %v8299 = vsel %vm1034, %v8289, %v8298
    %v8301 = vshrl.u32 %v8207, 16
    %v8303 = vrot.slane %v8301, 2
    %v8304 = vshll.u32 %v8207, 16
    %v8306 = vrot.slane %v8304, 3
    %v8307 = vor.u32 %v8303, %v8306
    %v8308 = vsel %vm1034, %v8298, %v8307
    %v8310 = vshrl.u32 %v8208, 16
    %v8312 = vrot.slane %v8310, 2
    %v8313 = vshll.u32 %v8208, 16
    %v8315 = vrot.slane %v8313, 3
    %v8316 = vor.u32 %v8312, %v8315
    %v8317 = vsel %vm1034, %v8307, %v8316
    %v8319 = vshrl.u32 %v8209, 16
    %v8321 = vrot.slane %v8319, 2
    %v8322 = vshll.u32 %v8209, 16
    %v8324 = vrot.slane %v8322, 3
    %v8325 = vor.u32 %v8321, %v8324
    %v8326 = vsel %vm1034, %v8316, %v8325
    %v8328 = vshrl.u32 %v8210, 16
    %v8330 = vrot.slane %v8328, 2
    %v8331 = vshll.u32 %v8210, 16
    %v8333 = vrot.slane %v8331, 3
    %v8334 = vor.u32 %v8330, %v8333
    %v8335 = vsel %vm1034, %v8325, %v8334
    %v8351 = vld [vmem:[#allocation2] sm:$0xe0]
    %v8352 = vsel %vm3071, %v8218, %v8351
    %8353 = vst [vmem:[#allocation2] sm:$0xe0] %v8352
    %8354 = vst [vmem:[#allocation2 + $0x8] sm:$0xff] %v8227
    %8355 = vst [vmem:[#allocation2 + $0x10] sm:$0xff] %v8236
    %8356 = vst [vmem:[#allocation2 + $0x18] sm:$0xff] %v8245
    %8357 = vst [vmem:[#allocation2 + $0x20] sm:$0xff] %v8254
    %8358 = vst [vmem:[#allocation2 + $0x28] sm:$0xff] %v8263
    %8359 = vst [vmem:[#allocation2 + $0x30] sm:$0xff] %v8272
    %8360 = vst [vmem:[#allocation2 + $0x38] sm:$0xff] %v8281
    %8361 = vst [vmem:[#allocation2 + $0x40] sm:$0xff] %v8290
    %8362 = vst [vmem:[#allocation2 + $0x48] sm:$0xff] %v8299
    %8363 = vst [vmem:[#allocation2 + $0x50] sm:$0xff] %v8308
    %8364 = vst [vmem:[#allocation2 + $0x58] sm:$0xff] %v8317
    %8365 = vst [vmem:[#allocation2 + $0x60] sm:$0xff] %v8326
    %8366 = vst [vmem:[#allocation2 + $0x68] sm:$0xff] %v8335
    %v8367 = vld [vmem:[#allocation2 + $0x70] sm:$0x3f]
    %v8368 = vsel %vm3088, %v8334, %v8367
    %8369 = vst [vmem:[#allocation2 + $0x70] sm:$0x3f] %v8368
    %v8370 = vld [vmem:[#allocation2] sm:$0xff]
    %v8371 = vld [vmem:[#allocation2 + $0x8] sm:$0xff]
    %v8372 = vld [vmem:[#allocation2 + $0x10] sm:$0xff]
    %v8373 = vld [vmem:[#allocation2 + $0x18] sm:$0xff]
    %v8374 = vld [vmem:[#allocation2 + $0x20] sm:$0xff]
    %v8375 = vld [vmem:[#allocation2 + $0x28] sm:$0xff]
    %v8376 = vld [vmem:[#allocation2 + $0x30] sm:$0xff]
    %v8377 = vld [vmem:[#allocation2 + $0x38] sm:$0xff]
    %v8378 = vld [vmem:[#allocation2 + $0x40] sm:$0xff]
    %v8379 = vld [vmem:[#allocation2 + $0x48] sm:$0xff]
    %v8380 = vld [vmem:[#allocation2 + $0x50] sm:$0xff]
    %v8381 = vld [vmem:[#allocation2 + $0x58] sm:$0xff]
    %v8382 = vld [vmem:[#allocation2 + $0x60] sm:$0xff]
    %v8383 = vld [vmem:[#allocation2 + $0x68] sm:$0xff]
    %8384 = vst [vmem:[#allocation3] sm:$0xff] %v8370
    %8385 = vst [vmem:[#allocation3 + $0x48] sm:$0xff] %v8371
    %8386 = vst [vmem:[#allocation3 + $0x90] sm:$0xff] %v8372
    %8387 = vst [vmem:[#allocation3 + $0xd8] sm:$0xff] %v8373
    %8388 = vst [vmem:[#allocation3 + $0x120] sm:$0xff] %v8374
    %8389 = vst [vmem:[#allocation3 + $0x168] sm:$0xff] %v8375
    %8390 = vst [vmem:[#allocation3 + $0x1b0] sm:$0xff] %v8376
    %8391 = vst [vmem:[#allocation3 + $0x1f8] sm:$0xff] %v8377
    %8392 = vst [vmem:[#allocation3 + $0x240] sm:$0xff] %v8378
    %8393 = vst [vmem:[#allocation3 + $0x288] sm:$0xff] %v8379
    %8394 = vst [vmem:[#allocation3 + $0x2d0] sm:$0xff] %v8380
    %8395 = vst [vmem:[#allocation3 + $0x318] sm:$0xff] %v8381
    %8396 = vst [vmem:[#allocation3 + $0x360] sm:$0xff] %v8382
    %8397 = vst [vmem:[#allocation3 + $0x3a8] sm:$0xff] %v8383
    %v8398 = vld [vmem:[#allocation2] sm:$0xff]
    %v8399 = vld [vmem:[#allocation2 + $0x8] sm:$0xff]
    %v8400 = vld [vmem:[#allocation2 + $0x10] sm:$0xff]
    %v8401 = vld [vmem:[#allocation2 + $0x18] sm:$0xff]
    %v8402 = vld [vmem:[#allocation2 + $0x20] sm:$0xff]
    %v8403 = vld [vmem:[#allocation2 + $0x28] sm:$0xff]
    %v8404 = vld [vmem:[#allocation2 + $0x30] sm:$0xff]
    %v8405 = vld [vmem:[#allocation2 + $0x38] sm:$0xff]
    %v8406 = vld [vmem:[#allocation2 + $0x40] sm:$0xff]
    %v8407 = vld [vmem:[#allocation2 + $0x48] sm:$0xff]
    %v8408 = vld [vmem:[#allocation2 + $0x50] sm:$0xff]
    %v8409 = vld [vmem:[#allocation2 + $0x58] sm:$0xff]
    %v8410 = vld [vmem:[#allocation2 + $0x60] sm:$0xff]
    %v8411 = vld [vmem:[#allocation2 + $0x68] sm:$0xff]
    %v8412 = vld [vmem:[#allocation2 + $0x70] sm:$0x1]
    %v8414 = vshrl.u32 %v8398, 16
    %v8416 = vshll.u32 %v8398, 16
    %v8418 = vrot.slane %v8416, 1
    %v8419 = vor.u32 %v8414, %v8418
    %v8421 = vshll.u32 %v8399, 16
    %v8423 = vrot.slane %v8421, 1
    %v8424 = vsel %vm344, %v8419, %v8423
    %v8425 = vshrl.u32 %v8399, 16
    %v8427 = vor.u32 %v8425, %v8423
    %v8429 = vshll.u32 %v8400, 16
    %v8431 = vrot.slane %v8429, 1
    %v8432 = vsel %vm344, %v8427, %v8431
    %v8433 = vshrl.u32 %v8400, 16
    %v8435 = vor.u32 %v8433, %v8431
    %v8437 = vshll.u32 %v8401, 16
    %v8439 = vrot.slane %v8437, 1
    %v8440 = vsel %vm344, %v8435, %v8439
    %v8441 = vshrl.u32 %v8401, 16
    %v8443 = vor.u32 %v8441, %v8439
    %v8445 = vshll.u32 %v8402, 16
    %v8447 = vrot.slane %v8445, 1
    %v8448 = vsel %vm344, %v8443, %v8447
    %v8449 = vshrl.u32 %v8402, 16
    %v8451 = vor.u32 %v8449, %v8447
    %v8453 = vshll.u32 %v8403, 16
    %v8455 = vrot.slane %v8453, 1
    %v8456 = vsel %vm344, %v8451, %v8455
    %v8457 = vshrl.u32 %v8403, 16
    %v8459 = vor.u32 %v8457, %v8455
    %v8461 = vshll.u32 %v8404, 16
    %v8463 = vrot.slane %v8461, 1
    %v8464 = vsel %vm344, %v8459, %v8463
    %v8465 = vshrl.u32 %v8404, 16
    %v8467 = vor.u32 %v8465, %v8463
    %v8469 = vshll.u32 %v8405, 16
    %v8471 = vrot.slane %v8469, 1
    %v8472 = vsel %vm344, %v8467, %v8471
    %v8473 = vshrl.u32 %v8405, 16
    %v8475 = vor.u32 %v8473, %v8471
    %v8477 = vshll.u32 %v8406, 16
    %v8479 = vrot.slane %v8477, 1
    %v8480 = vsel %vm344, %v8475, %v8479
    %v8481 = vshrl.u32 %v8406, 16
    %v8483 = vor.u32 %v8481, %v8479
    %v8485 = vshll.u32 %v8407, 16
    %v8487 = vrot.slane %v8485, 1
    %v8488 = vsel %vm344, %v8483, %v8487
    %v8489 = vshrl.u32 %v8407, 16
    %v8491 = vor.u32 %v8489, %v8487
    %v8493 = vshll.u32 %v8408, 16
    %v8495 = vrot.slane %v8493, 1
    %v8496 = vsel %vm344, %v8491, %v8495
    %v8497 = vshrl.u32 %v8408, 16
    %v8499 = vor.u32 %v8497, %v8495
    %v8501 = vshll.u32 %v8409, 16
    %v8503 = vrot.slane %v8501, 1
    %v8504 = vsel %vm344, %v8499, %v8503
    %v8505 = vshrl.u32 %v8409, 16
    %v8507 = vor.u32 %v8505, %v8503
    %v8509 = vshll.u32 %v8410, 16
    %v8511 = vrot.slane %v8509, 1
    %v8512 = vsel %vm344, %v8507, %v8511
    %v8513 = vshrl.u32 %v8410, 16
    %v8515 = vor.u32 %v8513, %v8511
    %v8517 = vshll.u32 %v8411, 16
    %v8519 = vrot.slane %v8517, 1
    %v8520 = vsel %vm344, %v8515, %v8519
    %v8521 = vshrl.u32 %v8411, 16
    %v8523 = vor.u32 %v8521, %v8519
    %v8525 = vshll.u32 %v8412, 16
    %v8527 = vrot.slane %v8525, 1
    %v8528 = vsel %vm344, %v8523, %v8527
    %8543 = vst [vmem:[#allocation3 + $0x8] sm:$0xff] %v8424
    %8544 = vst [vmem:[#allocation3 + $0x50] sm:$0xff] %v8432
    %8545 = vst [vmem:[#allocation3 + $0x98] sm:$0xff] %v8440
    %8546 = vst [vmem:[#allocation3 + $0xe0] sm:$0xff] %v8448
    %8547 = vst [vmem:[#allocation3 + $0x128] sm:$0xff] %v8456
    %8548 = vst [vmem:[#allocation3 + $0x170] sm:$0xff] %v8464
    %8549 = vst [vmem:[#allocation3 + $0x1b8] sm:$0xff] %v8472
    %8550 = vst [vmem:[#allocation3 + $0x200] sm:$0xff] %v8480
    %8551 = vst [vmem:[#allocation3 + $0x248] sm:$0xff] %v8488
    %8552 = vst [vmem:[#allocation3 + $0x290] sm:$0xff] %v8496
    %8553 = vst [vmem:[#allocation3 + $0x2d8] sm:$0xff] %v8504
    %8554 = vst [vmem:[#allocation3 + $0x320] sm:$0xff] %v8512
    %8555 = vst [vmem:[#allocation3 + $0x368] sm:$0xff] %v8520
    %8556 = vst [vmem:[#allocation3 + $0x3b0] sm:$0xff] %v8528
    %v8557 = vld [vmem:[#allocation2] sm:$0xfe]
    %v8558 = vld [vmem:[#allocation2 + $0x8] sm:$0xff]
    %v8559 = vld [vmem:[#allocation2 + $0x10] sm:$0xff]
    %v8560 = vld [vmem:[#allocation2 + $0x18] sm:$0xff]
    %v8561 = vld [vmem:[#allocation2 + $0x20] sm:$0xff]
    %v8562 = vld [vmem:[#allocation2 + $0x28] sm:$0xff]
    %v8563 = vld [vmem:[#allocation2 + $0x30] sm:$0xff]
    %v8564 = vld [vmem:[#allocation2 + $0x38] sm:$0xff]
    %v8565 = vld [vmem:[#allocation2 + $0x40] sm:$0xff]
    %v8566 = vld [vmem:[#allocation2 + $0x48] sm:$0xff]
    %v8567 = vld [vmem:[#allocation2 + $0x50] sm:$0xff]
    %v8568 = vld [vmem:[#allocation2 + $0x58] sm:$0xff]
    %v8569 = vld [vmem:[#allocation2 + $0x60] sm:$0xff]
    %v8570 = vld [vmem:[#allocation2 + $0x68] sm:$0xff]
    %v8571 = vld [vmem:[#allocation2 + $0x70] sm:$0x1]
    %v8587 = vrot.slane %v8557, 1
    %v8588 = vrot.slane %v8558, 1
    %v8589 = vsel %vm519, %v8587, %v8588
    %v8590 = vrot.slane %v8559, 1
    %v8591 = vsel %vm519, %v8588, %v8590
    %v8592 = vrot.slane %v8560, 1
    %v8593 = vsel %vm519, %v8590, %v8592
    %v8594 = vrot.slane %v8561, 1
    %v8595 = vsel %vm519, %v8592, %v8594
    %v8596 = vrot.slane %v8562, 1
    %v8597 = vsel %vm519, %v8594, %v8596
    %v8598 = vrot.slane %v8563, 1
    %v8599 = vsel %vm519, %v8596, %v8598
    %v8600 = vrot.slane %v8564, 1
    %v8601 = vsel %vm519, %v8598, %v8600
    %v8602 = vrot.slane %v8565, 1
    %v8603 = vsel %vm519, %v8600, %v8602
    %v8604 = vrot.slane %v8566, 1
    %v8605 = vsel %vm519, %v8602, %v8604
    %v8606 = vrot.slane %v8567, 1
    %v8607 = vsel %vm519, %v8604, %v8606
    %v8608 = vrot.slane %v8568, 1
    %v8609 = vsel %vm519, %v8606, %v8608
    %v8610 = vrot.slane %v8569, 1
    %v8611 = vsel %vm519, %v8608, %v8610
    %v8612 = vrot.slane %v8570, 1
    %v8613 = vsel %vm519, %v8610, %v8612
    %v8614 = vrot.slane %v8571, 1
    %v8615 = vsel %vm519, %v8612, %v8614
    %8630 = vst [vmem:[#allocation3 + $0x10] sm:$0xff] %v8589
    %8631 = vst [vmem:[#allocation3 + $0x58] sm:$0xff] %v8591
    %8632 = vst [vmem:[#allocation3 + $0xa0] sm:$0xff] %v8593
    %8633 = vst [vmem:[#allocation3 + $0xe8] sm:$0xff] %v8595
    %8634 = vst [vmem:[#allocation3 + $0x130] sm:$0xff] %v8597
    %8635 = vst [vmem:[#allocation3 + $0x178] sm:$0xff] %v8599
    %8636 = vst [vmem:[#allocation3 + $0x1c0] sm:$0xff] %v8601
    %8637 = vst [vmem:[#allocation3 + $0x208] sm:$0xff] %v8603
    %8638 = vst [vmem:[#allocation3 + $0x250] sm:$0xff] %v8605
    %8639 = vst [vmem:[#allocation3 + $0x298] sm:$0xff] %v8607
    %8640 = vst [vmem:[#allocation3 + $0x2e0] sm:$0xff] %v8609
    %8641 = vst [vmem:[#allocation3 + $0x328] sm:$0xff] %v8611
    %8642 = vst [vmem:[#allocation3 + $0x370] sm:$0xff] %v8613
    %8643 = vst [vmem:[#allocation3 + $0x3b8] sm:$0xff] %v8615
    %v8644 = vld [vmem:[#allocation2] sm:$0xe0]
    %v8645 = vld [vmem:[#allocation2 + $0x8] sm:$0xff]
    %v8646 = vld [vmem:[#allocation2 + $0x10] sm:$0xff]
    %v8647 = vld [vmem:[#allocation2 + $0x18] sm:$0xff]
    %v8648 = vld [vmem:[#allocation2 + $0x20] sm:$0xff]
    %v8649 = vld [vmem:[#allocation2 + $0x28] sm:$0xff]
    %v8650 = vld [vmem:[#allocation2 + $0x30] sm:$0xff]
    %v8651 = vld [vmem:[#allocation2 + $0x38] sm:$0xff]
    %v8652 = vld [vmem:[#allocation2 + $0x40] sm:$0xff]
    %v8653 = vld [vmem:[#allocation2 + $0x48] sm:$0xff]
    %v8654 = vld [vmem:[#allocation2 + $0x50] sm:$0xff]
    %v8655 = vld [vmem:[#allocation2 + $0x58] sm:$0xff]
    %v8656 = vld [vmem:[#allocation2 + $0x60] sm:$0xff]
    %v8657 = vld [vmem:[#allocation2 + $0x68] sm:$0xff]
    %v8658 = vld [vmem:[#allocation2 + $0x70] sm:$0x1f]
    %v8674 = vrot.slane %v8644, 5
    %v8675 = vrot.slane %v8645, 5
    %v8676 = vsel %vm607, %v8674, %v8675
    %v8677 = vrot.slane %v8646, 5
    %v8678 = vsel %vm607, %v8675, %v8677
    %v8679 = vrot.slane %v8647, 5
    %v8680 = vsel %vm607, %v8677, %v8679
    %v8681 = vrot.slane %v8648, 5
    %v8682 = vsel %vm607, %v8679, %v8681
    %v8683 = vrot.slane %v8649, 5
    %v8684 = vsel %vm607, %v8681, %v8683
    %v8685 = vrot.slane %v8650, 5
    %v8686 = vsel %vm607, %v8683, %v8685
    %v8687 = vrot.slane %v8651, 5
    %v8688 = vsel %vm607, %v8685, %v8687
    %v8689 = vrot.slane %v8652, 5
    %v8690 = vsel %vm607, %v8687, %v8689
    %v8691 = vrot.slane %v8653, 5
    %v8692 = vsel %vm607, %v8689, %v8691
    %v8693 = vrot.slane %v8654, 5
    %v8694 = vsel %vm607, %v8691, %v8693
    %v8695 = vrot.slane %v8655, 5
    %v8696 = vsel %vm607, %v8693, %v8695
    %v8697 = vrot.slane %v8656, 5
    %v8698 = vsel %vm607, %v8695, %v8697
    %v8699 = vrot.slane %v8657, 5
    %v8700 = vsel %vm607, %v8697, %v8699
    %v8701 = vrot.slane %v8658, 5
    %v8702 = vsel %vm607, %v8699, %v8701
    %8717 = vst [vmem:[#allocation3 + $0x18] sm:$0xff] %v8676
    %8718 = vst [vmem:[#allocation3 + $0x60] sm:$0xff] %v8678
    %8719 = vst [vmem:[#allocation3 + $0xa8] sm:$0xff] %v8680
    %8720 = vst [vmem:[#allocation3 + $0xf0] sm:$0xff] %v8682
    %8721 = vst [vmem:[#allocation3 + $0x138] sm:$0xff] %v8684
    %8722 = vst [vmem:[#allocation3 + $0x180] sm:$0xff] %v8686
    %8723 = vst [vmem:[#allocation3 + $0x1c8] sm:$0xff] %v8688
    %8724 = vst [vmem:[#allocation3 + $0x210] sm:$0xff] %v8690
    %8725 = vst [vmem:[#allocation3 + $0x258] sm:$0xff] %v8692
    %8726 = vst [vmem:[#allocation3 + $0x2a0] sm:$0xff] %v8694
    %8727 = vst [vmem:[#allocation3 + $0x2e8] sm:$0xff] %v8696
    %8728 = vst [vmem:[#allocation3 + $0x330] sm:$0xff] %v8698
    %8729 = vst [vmem:[#allocation3 + $0x378] sm:$0xff] %v8700
    %8730 = vst [vmem:[#allocation3 + $0x3c0] sm:$0xff] %v8702
    %v8731 = vld [vmem:[#allocation2] sm:$0xe0]
    %v8732 = vld [vmem:[#allocation2 + $0x8] sm:$0xff]
    %v8733 = vld [vmem:[#allocation2 + $0x10] sm:$0xff]
    %v8734 = vld [vmem:[#allocation2 + $0x18] sm:$0xff]
    %v8735 = vld [vmem:[#allocation2 + $0x20] sm:$0xff]
    %v8736 = vld [vmem:[#allocation2 + $0x28] sm:$0xff]
    %v8737 = vld [vmem:[#allocation2 + $0x30] sm:$0xff]
    %v8738 = vld [vmem:[#allocation2 + $0x38] sm:$0xff]
    %v8739 = vld [vmem:[#allocation2 + $0x40] sm:$0xff]
    %v8740 = vld [vmem:[#allocation2 + $0x48] sm:$0xff]
    %v8741 = vld [vmem:[#allocation2 + $0x50] sm:$0xff]
    %v8742 = vld [vmem:[#allocation2 + $0x58] sm:$0xff]
    %v8743 = vld [vmem:[#allocation2 + $0x60] sm:$0xff]
    %v8744 = vld [vmem:[#allocation2 + $0x68] sm:$0xff]
    %v8745 = vld [vmem:[#allocation2 + $0x70] sm:$0x3f]
    %v8747 = vshrl.u32 %v8731, 16
    %v8749 = vrot.slane %v8747, 5
    %v8750 = vshll.u32 %v8731, 16
    %v8752 = vrot.slane %v8750, 6
    %v8753 = vor.u32 %v8749, %v8752
    %v8755 = vshrl.u32 %v8732, 16
    %v8757 = vrot.slane %v8755, 5
    %v8758 = vshll.u32 %v8732, 16
    %v8760 = vrot.slane %v8758, 6
    %v8761 = vor.u32 %v8757, %v8760
    %v8762 = vsel %vm680, %v8753, %v8761
    %v8764 = vshrl.u32 %v8733, 16
    %v8766 = vrot.slane %v8764, 5
    %v8767 = vshll.u32 %v8733, 16
    %v8769 = vrot.slane %v8767, 6
    %v8770 = vor.u32 %v8766, %v8769
    %v8771 = vsel %vm680, %v8761, %v8770
    %v8773 = vshrl.u32 %v8734, 16
    %v8775 = vrot.slane %v8773, 5
    %v8776 = vshll.u32 %v8734, 16
    %v8778 = vrot.slane %v8776, 6
    %v8779 = vor.u32 %v8775, %v8778
    %v8780 = vsel %vm680, %v8770, %v8779
    %v8782 = vshrl.u32 %v8735, 16
    %v8784 = vrot.slane %v8782, 5
    %v8785 = vshll.u32 %v8735, 16
    %v8787 = vrot.slane %v8785, 6
    %v8788 = vor.u32 %v8784, %v8787
    %v8789 = vsel %vm680, %v8779, %v8788
    %v8791 = vshrl.u32 %v8736, 16
    %v8793 = vrot.slane %v8791, 5
    %v8794 = vshll.u32 %v8736, 16
    %v8796 = vrot.slane %v8794, 6
    %v8797 = vor.u32 %v8793, %v8796
    %v8798 = vsel %vm680, %v8788, %v8797
    %v8800 = vshrl.u32 %v8737, 16
    %v8802 = vrot.slane %v8800, 5
    %v8803 = vshll.u32 %v8737, 16
    %v8805 = vrot.slane %v8803, 6
    %v8806 = vor.u32 %v8802, %v8805
    %v8807 = vsel %vm680, %v8797, %v8806
    %v8809 = vshrl.u32 %v8738, 16
    %v8811 = vrot.slane %v8809, 5
    %v8812 = vshll.u32 %v8738, 16
    %v8814 = vrot.slane %v8812, 6
    %v8815 = vor.u32 %v8811, %v8814
    %v8816 = vsel %vm680, %v8806, %v8815
    %v8818 = vshrl.u32 %v8739, 16
    %v8820 = vrot.slane %v8818, 5
    %v8821 = vshll.u32 %v8739, 16
    %v8823 = vrot.slane %v8821, 6
    %v8824 = vor.u32 %v8820, %v8823
    %v8825 = vsel %vm680, %v8815, %v8824
    %v8827 = vshrl.u32 %v8740, 16
    %v8829 = vrot.slane %v8827, 5
    %v8830 = vshll.u32 %v8740, 16
    %v8832 = vrot.slane %v8830, 6
    %v8833 = vor.u32 %v8829, %v8832
    %v8834 = vsel %vm680, %v8824, %v8833
    %v8836 = vshrl.u32 %v8741, 16
    %v8838 = vrot.slane %v8836, 5
    %v8839 = vshll.u32 %v8741, 16
    %v8841 = vrot.slane %v8839, 6
    %v8842 = vor.u32 %v8838, %v8841
    %v8843 = vsel %vm680, %v8833, %v8842
    %v8845 = vshrl.u32 %v8742, 16
    %v8847 = vrot.slane %v8845, 5
    %v8848 = vshll.u32 %v8742, 16
    %v8850 = vrot.slane %v8848, 6
    %v8851 = vor.u32 %v8847, %v8850
    %v8852 = vsel %vm680, %v8842, %v8851
    %v8854 = vshrl.u32 %v8743, 16
    %v8856 = vrot.slane %v8854, 5
    %v8857 = vshll.u32 %v8743, 16
    %v8859 = vrot.slane %v8857, 6
    %v8860 = vor.u32 %v8856, %v8859
    %v8861 = vsel %vm680, %v8851, %v8860
    %v8863 = vshrl.u32 %v8744, 16
    %v8865 = vrot.slane %v8863, 5
    %v8866 = vshll.u32 %v8744, 16
    %v8868 = vrot.slane %v8866, 6
    %v8869 = vor.u32 %v8865, %v8868
    %v8870 = vsel %vm680, %v8860, %v8869
    %v8872 = vshrl.u32 %v8745, 16
    %v8874 = vrot.slane %v8872, 5
    %v8875 = vshll.u32 %v8745, 16
    %v8877 = vrot.slane %v8875, 6
    %v8878 = vor.u32 %v8874, %v8877
    %v8879 = vsel %vm680, %v8869, %v8878
    %8894 = vst [vmem:[#allocation3 + $0x20] sm:$0xff] %v8762
    %8895 = vst [vmem:[#allocation3 + $0x68] sm:$0xff] %v8771
    %8896 = vst [vmem:[#allocation3 + $0xb0] sm:$0xff] %v8780
    %8897 = vst [vmem:[#allocation3 + $0xf8] sm:$0xff] %v8789
    %8898 = vst [vmem:[#allocation3 + $0x140] sm:$0xff] %v8798
    %8899 = vst [vmem:[#allocation3 + $0x188] sm:$0xff] %v8807
    %8900 = vst [vmem:[#allocation3 + $0x1d0] sm:$0xff] %v8816
    %8901 = vst [vmem:[#allocation3 + $0x218] sm:$0xff] %v8825
    %8902 = vst [vmem:[#allocation3 + $0x260] sm:$0xff] %v8834
    %8903 = vst [vmem:[#allocation3 + $0x2a8] sm:$0xff] %v8843
    %8904 = vst [vmem:[#allocation3 + $0x2f0] sm:$0xff] %v8852
    %8905 = vst [vmem:[#allocation3 + $0x338] sm:$0xff] %v8861
    %8906 = vst [vmem:[#allocation3 + $0x380] sm:$0xff] %v8870
    %8907 = vst [vmem:[#allocation3 + $0x3c8] sm:$0xff] %v8879
    %v8908 = vld [vmem:[#allocation2] sm:$0xc0]
    %v8909 = vld [vmem:[#allocation2 + $0x8] sm:$0xff]
    %v8910 = vld [vmem:[#allocation2 + $0x10] sm:$0xff]
    %v8911 = vld [vmem:[#allocation2 + $0x18] sm:$0xff]
    %v8912 = vld [vmem:[#allocation2 + $0x20] sm:$0xff]
    %v8913 = vld [vmem:[#allocation2 + $0x28] sm:$0xff]
    %v8914 = vld [vmem:[#allocation2 + $0x30] sm:$0xff]
    %v8915 = vld [vmem:[#allocation2 + $0x38] sm:$0xff]
    %v8916 = vld [vmem:[#allocation2 + $0x40] sm:$0xff]
    %v8917 = vld [vmem:[#allocation2 + $0x48] sm:$0xff]
    %v8918 = vld [vmem:[#allocation2 + $0x50] sm:$0xff]
    %v8919 = vld [vmem:[#allocation2 + $0x58] sm:$0xff]
    %v8920 = vld [vmem:[#allocation2 + $0x60] sm:$0xff]
    %v8921 = vld [vmem:[#allocation2 + $0x68] sm:$0xff]
    %v8922 = vld [vmem:[#allocation2 + $0x70] sm:$0x3f]
    %v8938 = vrot.slane %v8908, 6
    %v8939 = vrot.slane %v8909, 6
    %v8940 = vsel %vm873, %v8938, %v8939
    %v8941 = vrot.slane %v8910, 6
    %v8942 = vsel %vm873, %v8939, %v8941
    %v8943 = vrot.slane %v8911, 6
    %v8944 = vsel %vm873, %v8941, %v8943
    %v8945 = vrot.slane %v8912, 6
    %v8946 = vsel %vm873, %v8943, %v8945
    %v8947 = vrot.slane %v8913, 6
    %v8948 = vsel %vm873, %v8945, %v8947
    %v8949 = vrot.slane %v8914, 6
    %v8950 = vsel %vm873, %v8947, %v8949
    %v8951 = vrot.slane %v8915, 6
    %v8952 = vsel %vm873, %v8949, %v8951
    %v8953 = vrot.slane %v8916, 6
    %v8954 = vsel %vm873, %v8951, %v8953
    %v8955 = vrot.slane %v8917, 6
    %v8956 = vsel %vm873, %v8953, %v8955
    %v8957 = vrot.slane %v8918, 6
    %v8958 = vsel %vm873, %v8955, %v8957
    %v8959 = vrot.slane %v8919, 6
    %v8960 = vsel %vm873, %v8957, %v8959
    %v8961 = vrot.slane %v8920, 6
    %v8962 = vsel %vm873, %v8959, %v8961
    %v8963 = vrot.slane %v8921, 6
    %v8964 = vsel %vm873, %v8961, %v8963
    %v8965 = vrot.slane %v8922, 6
    %v8966 = vsel %vm873, %v8963, %v8965
    %8981 = vst [vmem:[#allocation3 + $0x28] sm:$0xff] %v8940
    %8982 = vst [vmem:[#allocation3 + $0x70] sm:$0xff] %v8942
    %8983 = vst [vmem:[#allocation3 + $0xb8] sm:$0xff] %v8944
    %8984 = vst [vmem:[#allocation3 + $0x100] sm:$0xff] %v8946
    %8985 = vst [vmem:[#allocation3 + $0x148] sm:$0xff] %v8948
    %8986 = vst [vmem:[#allocation3 + $0x190] sm:$0xff] %v8950
    %8987 = vst [vmem:[#allocation3 + $0x1d8] sm:$0xff] %v8952
    %8988 = vst [vmem:[#allocation3 + $0x220] sm:$0xff] %v8954
    %8989 = vst [vmem:[#allocation3 + $0x268] sm:$0xff] %v8956
    %8990 = vst [vmem:[#allocation3 + $0x2b0] sm:$0xff] %v8958
    %8991 = vst [vmem:[#allocation3 + $0x2f8] sm:$0xff] %v8960
    %8992 = vst [vmem:[#allocation3 + $0x340] sm:$0xff] %v8962
    %8993 = vst [vmem:[#allocation3 + $0x388] sm:$0xff] %v8964
    %8994 = vst [vmem:[#allocation3 + $0x3d0] sm:$0xff] %v8966
    %v8995 = vld [vmem:[#allocation2 + $0x8] sm:$0xfc]
    %v8996 = vld [vmem:[#allocation2 + $0x10] sm:$0xff]
    %v8997 = vld [vmem:[#allocation2 + $0x18] sm:$0xff]
    %v8998 = vld [vmem:[#allocation2 + $0x20] sm:$0xff]
    %v8999 = vld [vmem:[#allocation2 + $0x28] sm:$0xff]
    %v9000 = vld [vmem:[#allocation2 + $0x30] sm:$0xff]
    %v9001 = vld [vmem:[#allocation2 + $0x38] sm:$0xff]
    %v9002 = vld [vmem:[#allocation2 + $0x40] sm:$0xff]
    %v9003 = vld [vmem:[#allocation2 + $0x48] sm:$0xff]
    %v9004 = vld [vmem:[#allocation2 + $0x50] sm:$0xff]
    %v9005 = vld [vmem:[#allocation2 + $0x58] sm:$0xff]
    %v9006 = vld [vmem:[#allocation2 + $0x60] sm:$0xff]
    %v9007 = vld [vmem:[#allocation2 + $0x68] sm:$0xff]
    %v9008 = vld [vmem:[#allocation2 + $0x70] sm:$0xff]
    %v9009 = vld [vmem:[#allocation2 + $0x78] sm:$0x3]
    %v9025 = vrot.slane %v8995, 2
    %v9026 = vrot.slane %v8996, 2
    %v9027 = vsel %vm961, %v9025, %v9026
    %v9028 = vrot.slane %v8997, 2
    %v9029 = vsel %vm961, %v9026, %v9028
    %v9030 = vrot.slane %v8998, 2
    %v9031 = vsel %vm961, %v9028, %v9030
    %v9032 = vrot.slane %v8999, 2
    %v9033 = vsel %vm961, %v9030, %v9032
    %v9034 = vrot.slane %v9000, 2
    %v9035 = vsel %vm961, %v9032, %v9034
    %v9036 = vrot.slane %v9001, 2
    %v9037 = vsel %vm961, %v9034, %v9036
    %v9038 = vrot.slane %v9002, 2
    %v9039 = vsel %vm961, %v9036, %v9038
    %v9040 = vrot.slane %v9003, 2
    %v9041 = vsel %vm961, %v9038, %v9040
    %v9042 = vrot.slane %v9004, 2
    %v9043 = vsel %vm961, %v9040, %v9042
    %v9044 = vrot.slane %v9005, 2
    %v9045 = vsel %vm961, %v9042, %v9044
    %v9046 = vrot.slane %v9006, 2
    %v9047 = vsel %vm961, %v9044, %v9046
    %v9048 = vrot.slane %v9007, 2
    %v9049 = vsel %vm961, %v9046, %v9048
    %v9050 = vrot.slane %v9008, 2
    %v9051 = vsel %vm961, %v9048, %v9050
    %v9052 = vrot.slane %v9009, 2
    %v9053 = vsel %vm961, %v9050, %v9052
    %9068 = vst [vmem:[#allocation3 + $0x30] sm:$0xff] %v9027
    %9069 = vst [vmem:[#allocation3 + $0x78] sm:$0xff] %v9029
    %9070 = vst [vmem:[#allocation3 + $0xc0] sm:$0xff] %v9031
    %9071 = vst [vmem:[#allocation3 + $0x108] sm:$0xff] %v9033
    %9072 = vst [vmem:[#allocation3 + $0x150] sm:$0xff] %v9035
    %9073 = vst [vmem:[#allocation3 + $0x198] sm:$0xff] %v9037
    %9074 = vst [vmem:[#allocation3 + $0x1e0] sm:$0xff] %v9039
    %9075 = vst [vmem:[#allocation3 + $0x228] sm:$0xff] %v9041
    %9076 = vst [vmem:[#allocation3 + $0x270] sm:$0xff] %v9043
    %9077 = vst [vmem:[#allocation3 + $0x2b8] sm:$0xff] %v9045
    %9078 = vst [vmem:[#allocation3 + $0x300] sm:$0xff] %v9047
    %9079 = vst [vmem:[#allocation3 + $0x348] sm:$0xff] %v9049
    %9080 = vst [vmem:[#allocation3 + $0x390] sm:$0xff] %v9051
    %9081 = vst [vmem:[#allocation3 + $0x3d8] sm:$0xff] %v9053
    %v9082 = vld [vmem:[#allocation2 + $0x8] sm:$0xfc]
    %v9083 = vld [vmem:[#allocation2 + $0x10] sm:$0xff]
    %v9084 = vld [vmem:[#allocation2 + $0x18] sm:$0xff]
    %v9085 = vld [vmem:[#allocation2 + $0x20] sm:$0xff]
    %v9086 = vld [vmem:[#allocation2 + $0x28] sm:$0xff]
    %v9087 = vld [vmem:[#allocation2 + $0x30] sm:$0xff]
    %v9088 = vld [vmem:[#allocation2 + $0x38] sm:$0xff]
    %v9089 = vld [vmem:[#allocation2 + $0x40] sm:$0xff]
    %v9090 = vld [vmem:[#allocation2 + $0x48] sm:$0xff]
    %v9091 = vld [vmem:[#allocation2 + $0x50] sm:$0xff]
    %v9092 = vld [vmem:[#allocation2 + $0x58] sm:$0xff]
    %v9093 = vld [vmem:[#allocation2 + $0x60] sm:$0xff]
    %v9094 = vld [vmem:[#allocation2 + $0x68] sm:$0xff]
    %v9095 = vld [vmem:[#allocation2 + $0x70] sm:$0xff]
    %v9096 = vld [vmem:[#allocation2 + $0x78] sm:$0x7]
    %v9098 = vshrl.u32 %v9082, 16
    %v9100 = vrot.slane %v9098, 2
    %v9101 = vshll.u32 %v9082, 16
    %v9103 = vrot.slane %v9101, 3
    %v9104 = vor.u32 %v9100, %v9103
    %v9106 = vshrl.u32 %v9083, 16
    %v9108 = vrot.slane %v9106, 2
    %v9109 = vshll.u32 %v9083, 16
    %v9111 = vrot.slane %v9109, 3
    %v9112 = vor.u32 %v9108, %v9111
    %v9113 = vsel %vm1034, %v9104, %v9112
    %v9115 = vshrl.u32 %v9084, 16
    %v9117 = vrot.slane %v9115, 2
    %v9118 = vshll.u32 %v9084, 16
    %v9120 = vrot.slane %v9118, 3
    %v9121 = vor.u32 %v9117, %v9120
    %v9122 = vsel %vm1034, %v9112, %v9121
    %v9124 = vshrl.u32 %v9085, 16
    %v9126 = vrot.slane %v9124, 2
    %v9127 = vshll.u32 %v9085, 16
    %v9129 = vrot.slane %v9127, 3
    %v9130 = vor.u32 %v9126, %v9129
    %v9131 = vsel %vm1034, %v9121, %v9130
    %v9133 = vshrl.u32 %v9086, 16
    %v9135 = vrot.slane %v9133, 2
    %v9136 = vshll.u32 %v9086, 16
    %v9138 = vrot.slane %v9136, 3
    %v9139 = vor.u32 %v9135, %v9138
    %v9140 = vsel %vm1034, %v9130, %v9139
    %v9142 = vshrl.u32 %v9087, 16
    %v9144 = vrot.slane %v9142, 2
    %v9145 = vshll.u32 %v9087, 16
    %v9147 = vrot.slane %v9145, 3
    %v9148 = vor.u32 %v9144, %v9147
    %v9149 = vsel %vm1034, %v9139, %v9148
    %v9151 = vshrl.u32 %v9088, 16
    %v9153 = vrot.slane %v9151, 2
    %v9154 = vshll.u32 %v9088, 16
    %v9156 = vrot.slane %v9154, 3
    %v9157 = vor.u32 %v9153, %v9156
    %v9158 = vsel %vm1034, %v9148, %v9157
    %v9160 = vshrl.u32 %v9089, 16
    %v9162 = vrot.slane %v9160, 2
    %v9163 = vshll.u32 %v9089, 16
    %v9165 = vrot.slane %v9163, 3
    %v9166 = vor.u32 %v9162, %v9165
    %v9167 = vsel %vm1034, %v9157, %v9166
    %v9169 = vshrl.u32 %v9090, 16
    %v9171 = vrot.slane %v9169, 2
    %v9172 = vshll.u32 %v9090, 16
    %v9174 = vrot.slane %v9172, 3
    %v9175 = vor.u32 %v9171, %v9174
    %v9176 = vsel %vm1034, %v9166, %v9175
    %v9178 = vshrl.u32 %v9091, 16
    %v9180 = vrot.slane %v9178, 2
    %v9181 = vshll.u32 %v9091, 16
    %v9183 = vrot.slane %v9181, 3
    %v9184 = vor.u32 %v9180, %v9183
    %v9185 = vsel %vm1034, %v9175, %v9184
    %v9187 = vshrl.u32 %v9092, 16
    %v9189 = vrot.slane %v9187, 2
    %v9190 = vshll.u32 %v9092, 16
    %v9192 = vrot.slane %v9190, 3
    %v9193 = vor.u32 %v9189, %v9192
    %v9194 = vsel %vm1034, %v9184, %v9193
    %v9196 = vshrl.u32 %v9093, 16
    %v9198 = vrot.slane %v9196, 2
    %v9199 = vshll.u32 %v9093, 16
    %v9201 = vrot.slane %v9199, 3
    %v9202 = vor.u32 %v9198, %v9201
    %v9203 = vsel %vm1034, %v9193, %v9202
    %v9205 = vshrl.u32 %v9094, 16
    %v9207 = vrot.slane %v9205, 2
    %v9208 = vshll.u32 %v9094, 16
    %v9210 = vrot.slane %v9208, 3
    %v9211 = vor.u32 %v9207, %v9210
    %v9212 = vsel %vm1034, %v9202, %v9211
    %v9214 = vshrl.u32 %v9095, 16
    %v9216 = vrot.slane %v9214, 2
    %v9217 = vshll.u32 %v9095, 16
    %v9219 = vrot.slane %v9217, 3
    %v9220 = vor.u32 %v9216, %v9219
    %v9221 = vsel %vm1034, %v9211, %v9220
    %v9223 = vshrl.u32 %v9096, 16
    %v9225 = vrot.slane %v9223, 2
    %v9226 = vshll.u32 %v9096, 16
    %v9228 = vrot.slane %v9226, 3
    %v9229 = vor.u32 %v9225, %v9228
    %v9230 = vsel %vm1034, %v9220, %v9229
    %9245 = vst [vmem:[#allocation3 + $0x38] sm:$0xff] %v9113
    %9246 = vst [vmem:[#allocation3 + $0x80] sm:$0xff] %v9122
    %9247 = vst [vmem:[#allocation3 + $0xc8] sm:$0xff] %v9131
    %9248 = vst [vmem:[#allocation3 + $0x110] sm:$0xff] %v9140
    %9249 = vst [vmem:[#allocation3 + $0x158] sm:$0xff] %v9149
    %9250 = vst [vmem:[#allocation3 + $0x1a0] sm:$0xff] %v9158
    %9251 = vst [vmem:[#allocation3 + $0x1e8] sm:$0xff] %v9167
    %9252 = vst [vmem:[#allocation3 + $0x230] sm:$0xff] %v9176
    %9253 = vst [vmem:[#allocation3 + $0x278] sm:$0xff] %v9185
    %9254 = vst [vmem:[#allocation3 + $0x2c0] sm:$0xff] %v9194
    %9255 = vst [vmem:[#allocation3 + $0x308] sm:$0xff] %v9203
    %9256 = vst [vmem:[#allocation3 + $0x350] sm:$0xff] %v9212
    %9257 = vst [vmem:[#allocation3 + $0x398] sm:$0xff] %v9221
    %9258 = vst [vmem:[#allocation3 + $0x3e0] sm:$0xff] %v9230
    %v9259 = vld [vmem:[#allocation2 + $0x8] sm:$0xf8]
    %v9260 = vld [vmem:[#allocation2 + $0x10] sm:$0xff]
    %v9261 = vld [vmem:[#allocation2 + $0x18] sm:$0xff]
    %v9262 = vld [vmem:[#allocation2 + $0x20] sm:$0xff]
    %v9263 = vld [vmem:[#allocation2 + $0x28] sm:$0xff]
    %v9264 = vld [vmem:[#allocation2 + $0x30] sm:$0xff]
    %v9265 = vld [vmem:[#allocation2 + $0x38] sm:$0xff]
    %v9266 = vld [vmem:[#allocation2 + $0x40] sm:$0xff]
    %v9267 = vld [vmem:[#allocation2 + $0x48] sm:$0xff]
    %v9268 = vld [vmem:[#allocation2 + $0x50] sm:$0xff]
    %v9269 = vld [vmem:[#allocation2 + $0x58] sm:$0xff]
    %v9270 = vld [vmem:[#allocation2 + $0x60] sm:$0xff]
    %v9271 = vld [vmem:[#allocation2 + $0x68] sm:$0xff]
    %v9272 = vld [vmem:[#allocation2 + $0x70] sm:$0xff]
    %v9273 = vld [vmem:[#allocation2 + $0x78] sm:$0x7]
    %v9289 = vrot.slane %v9259, 3
    %v9290 = vrot.slane %v9260, 3
    %v9291 = vsel %vm1227, %v9289, %v9290
    %v9292 = vrot.slane %v9261, 3
    %v9293 = vsel %vm1227, %v9290, %v9292
    %v9294 = vrot.slane %v9262, 3
    %v9295 = vsel %vm1227, %v9292, %v9294
    %v9296 = vrot.slane %v9263, 3
    %v9297 = vsel %vm1227, %v9294, %v9296
    %v9298 = vrot.slane %v9264, 3
    %v9299 = vsel %vm1227, %v9296, %v9298
    %v9300 = vrot.slane %v9265, 3
    %v9301 = vsel %vm1227, %v9298, %v9300
    %v9302 = vrot.slane %v9266, 3
    %v9303 = vsel %vm1227, %v9300, %v9302
    %v9304 = vrot.slane %v9267, 3
    %v9305 = vsel %vm1227, %v9302, %v9304
    %v9306 = vrot.slane %v9268, 3
    %v9307 = vsel %vm1227, %v9304, %v9306
    %v9308 = vrot.slane %v9269, 3
    %v9309 = vsel %vm1227, %v9306, %v9308
    %v9310 = vrot.slane %v9270, 3
    %v9311 = vsel %vm1227, %v9308, %v9310
    %v9312 = vrot.slane %v9271, 3
    %v9313 = vsel %vm1227, %v9310, %v9312
    %v9314 = vrot.slane %v9272, 3
    %v9315 = vsel %vm1227, %v9312, %v9314
    %v9316 = vrot.slane %v9273, 3
    %v9317 = vsel %vm1227, %v9314, %v9316
    %9332 = vst [vmem:[#allocation3 + $0x40] sm:$0xff] %v9291
    %9333 = vst [vmem:[#allocation3 + $0x88] sm:$0xff] %v9293
    %9334 = vst [vmem:[#allocation3 + $0xd0] sm:$0xff] %v9295
    %9335 = vst [vmem:[#allocation3 + $0x118] sm:$0xff] %v9297
    %9336 = vst [vmem:[#allocation3 + $0x160] sm:$0xff] %v9299
    %9337 = vst [vmem:[#allocation3 + $0x1a8] sm:$0xff] %v9301
    %9338 = vst [vmem:[#allocation3 + $0x1f0] sm:$0xff] %v9303
    %9339 = vst [vmem:[#allocation3 + $0x238] sm:$0xff] %v9305
    %9340 = vst [vmem:[#allocation3 + $0x280] sm:$0xff] %v9307
    %9341 = vst [vmem:[#allocation3 + $0x2c8] sm:$0xff] %v9309
    %9342 = vst [vmem:[#allocation3 + $0x310] sm:$0xff] %v9311
    %9343 = vst [vmem:[#allocation3 + $0x358] sm:$0xff] %v9313
    %9344 = vst [vmem:[#allocation3 + $0x3a0] sm:$0xff] %v9315
    %9345 = vst [vmem:[#allocation3 + $0x3e8] sm:$0xff] %v9317
    %v9346 = vld [vmem:[#allocation3] sm:$0xff]
    %v9347 = vld [vmem:[#allocation3 + $0x8] sm:$0xff]
    %v9348 = vld [vmem:[#allocation3 + $0x10] sm:$0xff]
    %v9349 = vld [vmem:[#allocation3 + $0x18] sm:$0xff]
    %v9350 = vld [vmem:[#allocation3 + $0x20] sm:$0xff]
    %v9351 = vld [vmem:[#allocation3 + $0x28] sm:$0xff]
    %v9352 = vld [vmem:[#allocation3 + $0x30] sm:$0xff]
    %v9353 = vld [vmem:[#allocation3 + $0x38] sm:$0xff]
    %v9354 = vld [vmem:[#allocation3 + $0x40] sm:$0xff]
    %v9355 = vld [vmem:[#allocation3 + $0x48] sm:$0xff]
    %v9356 = vld [vmem:[#allocation3 + $0x50] sm:$0xff]
    %v9357 = vld [vmem:[#allocation3 + $0x58] sm:$0xff]
    %v9358 = vld [vmem:[#allocation3 + $0x60] sm:$0xff]
    %v9359 = vld [vmem:[#allocation3 + $0x68] sm:$0xff]
    %v9360 = vld [vmem:[#allocation3 + $0x70] sm:$0xff]
    %v9361 = vld [vmem:[#allocation3 + $0x78] sm:$0xff]
    %v9362 = vld [vmem:[#allocation3 + $0x80] sm:$0xff]
    %v9363 = vld [vmem:[#allocation3 + $0x88] sm:$0xff]
    %v9364 = vld [vmem:[#allocation3 + $0x90] sm:$0xff]
    %v9365 = vld [vmem:[#allocation3 + $0x98] sm:$0xff]
    %v9366 = vld [vmem:[#allocation3 + $0xa0] sm:$0xff]
    %v9367 = vld [vmem:[#allocation3 + $0xa8] sm:$0xff]
    %v9368 = vld [vmem:[#allocation3 + $0xb0] sm:$0xff]
    %v9369 = vld [vmem:[#allocation3 + $0xb8] sm:$0xff]
    %v9370 = vld [vmem:[#allocation3 + $0xc0] sm:$0xff]
    %v9371 = vld [vmem:[#allocation3 + $0xc8] sm:$0xff]
    %v9372 = vld [vmem:[#allocation3 + $0xd0] sm:$0xff]
    %v9373 = vld [vmem:[#allocation3 + $0xd8] sm:$0xff]
    %v9374 = vld [vmem:[#allocation3 + $0xe0] sm:$0xff]
    %v9375 = vld [vmem:[#allocation3 + $0xe8] sm:$0xff]
    %v9376 = vld [vmem:[#allocation3 + $0xf0] sm:$0xff]
    %v9377 = vld [vmem:[#allocation3 + $0xf8] sm:$0xff]
    %v9378 = vld [vmem:[#allocation3 + $0x100] sm:$0xff]
    %v9379 = vld [vmem:[#allocation3 + $0x108] sm:$0xff]
    %v9380 = vld [vmem:[#allocation3 + $0x110] sm:$0xff]
    %v9381 = vld [vmem:[#allocation3 + $0x118] sm:$0xff]
    %v9382 = vld [vmem:[#allocation3 + $0x120] sm:$0xff]
    %v9383 = vld [vmem:[#allocation3 + $0x128] sm:$0xff]
    %v9384 = vld [vmem:[#allocation3 + $0x130] sm:$0xff]
    %v9385 = vld [vmem:[#allocation3 + $0x138] sm:$0xff]
    %v9386 = vld [vmem:[#allocation3 + $0x140] sm:$0xff]
    %v9387 = vld [vmem:[#allocation3 + $0x148] sm:$0xff]
    %v9388 = vld [vmem:[#allocation3 + $0x150] sm:$0xff]
    %v9389 = vld [vmem:[#allocation3 + $0x158] sm:$0xff]
    %v9390 = vld [vmem:[#allocation3 + $0x160] sm:$0xff]
    %v9391 = vld [vmem:[#allocation3 + $0x168] sm:$0xff]
    %v9392 = vld [vmem:[#allocation3 + $0x170] sm:$0xff]
    %v9393 = vld [vmem:[#allocation3 + $0x178] sm:$0xff]
    %v9394 = vld [vmem:[#allocation3 + $0x180] sm:$0xff]
    %v9395 = vld [vmem:[#allocation3 + $0x188] sm:$0xff]
    %v9396 = vld [vmem:[#allocation3 + $0x190] sm:$0xff]
    %v9397 = vld [vmem:[#allocation3 + $0x198] sm:$0xff]
    %v9398 = vld [vmem:[#allocation3 + $0x1a0] sm:$0xff]
    %v9399 = vld [vmem:[#allocation3 + $0x1a8] sm:$0xff]
    %v9400 = vld [vmem:[#allocation3 + $0x1b0] sm:$0xff]
    %v9401 = vld [vmem:[#allocation3 + $0x1b8] sm:$0xff]
    %v9402 = vld [vmem:[#allocation3 + $0x1c0] sm:$0xff]
    %v9403 = vld [vmem:[#allocation3 + $0x1c8] sm:$0xff]
    %v9404 = vld [vmem:[#allocation3 + $0x1d0] sm:$0xff]
    %v9405 = vld [vmem:[#allocation3 + $0x1d8] sm:$0xff]
    %v9406 = vld [vmem:[#allocation3 + $0x1e0] sm:$0xff]
    %v9407 = vld [vmem:[#allocation3 + $0x1e8] sm:$0xff]
    %v9408 = vld [vmem:[#allocation3 + $0x1f0] sm:$0xff]
    %v9409 = vld [vmem:[#allocation3 + $0x1f8] sm:$0xff]
    %v9410 = vld [vmem:[#allocation3 + $0x200] sm:$0xff]
    %v9411 = vld [vmem:[#allocation3 + $0x208] sm:$0xff]
    %v9412 = vld [vmem:[#allocation3 + $0x210] sm:$0xff]
    %v9413 = vld [vmem:[#allocation3 + $0x218] sm:$0xff]
    %v9414 = vld [vmem:[#allocation3 + $0x220] sm:$0xff]
    %v9415 = vld [vmem:[#allocation3 + $0x228] sm:$0xff]
    %v9416 = vld [vmem:[#allocation3 + $0x230] sm:$0xff]
    %v9417 = vld [vmem:[#allocation3 + $0x238] sm:$0xff]
    %v9418 = vld [vmem:[#allocation3 + $0x240] sm:$0xff]
    %v9419 = vld [vmem:[#allocation3 + $0x248] sm:$0xff]
    %v9420 = vld [vmem:[#allocation3 + $0x250] sm:$0xff]
    %v9421 = vld [vmem:[#allocation3 + $0x258] sm:$0xff]
    %v9422 = vld [vmem:[#allocation3 + $0x260] sm:$0xff]
    %v9423 = vld [vmem:[#allocation3 + $0x268] sm:$0xff]
    %v9424 = vld [vmem:[#allocation3 + $0x270] sm:$0xff]
    %v9425 = vld [vmem:[#allocation3 + $0x278] sm:$0xff]
    %v9426 = vld [vmem:[#allocation3 + $0x280] sm:$0xff]
    %v9427 = vld [vmem:[#allocation3 + $0x288] sm:$0xff]
    %v9428 = vld [vmem:[#allocation3 + $0x290] sm:$0xff]
    %v9429 = vld [vmem:[#allocation3 + $0x298] sm:$0xff]
    %v9430 = vld [vmem:[#allocation3 + $0x2a0] sm:$0xff]
    %v9431 = vld [vmem:[#allocation3 + $0x2a8] sm:$0xff]
    %v9432 = vld [vmem:[#allocation3 + $0x2b0] sm:$0xff]
    %v9433 = vld [vmem:[#allocation3 + $0x2b8] sm:$0xff]
    %v9434 = vld [vmem:[#allocation3 + $0x2c0] sm:$0xff]
    %v9435 = vld [vmem:[#allocation3 + $0x2c8] sm:$0xff]
    %v9436 = vld [vmem:[#allocation3 + $0x2d0] sm:$0xff]
    %v9437 = vld [vmem:[#allocation3 + $0x2d8] sm:$0xff]
    %v9438 = vld [vmem:[#allocation3 + $0x2e0] sm:$0xff]
    %v9439 = vld [vmem:[#allocation3 + $0x2e8] sm:$0xff]
    %v9440 = vld [vmem:[#allocation3 + $0x2f0] sm:$0xff]
    %v9441 = vld [vmem:[#allocation3 + $0x2f8] sm:$0xff]
    %v9442 = vld [vmem:[#allocation3 + $0x300] sm:$0xff]
    %v9443 = vld [vmem:[#allocation3 + $0x308] sm:$0xff]
    %v9444 = vld [vmem:[#allocation3 + $0x310] sm:$0xff]
    %v9445 = vld [vmem:[#allocation3 + $0x318] sm:$0xff]
    %v9446 = vld [vmem:[#allocation3 + $0x320] sm:$0xff]
    %v9447 = vld [vmem:[#allocation3 + $0x328] sm:$0xff]
    %v9448 = vld [vmem:[#allocation3 + $0x330] sm:$0xff]
    %v9449 = vld [vmem:[#allocation3 + $0x338] sm:$0xff]
    %v9450 = vld [vmem:[#allocation3 + $0x340] sm:$0xff]
    %v9451 = vld [vmem:[#allocation3 + $0x348] sm:$0xff]
    %v9452 = vld [vmem:[#allocation3 + $0x350] sm:$0xff]
    %v9453 = vld [vmem:[#allocation3 + $0x358] sm:$0xff]
    %v9454 = vld [vmem:[#allocation3 + $0x360] sm:$0xff]
    %v9455 = vld [vmem:[#allocation3 + $0x368] sm:$0xff]
    %v9456 = vld [vmem:[#allocation3 + $0x370] sm:$0xff]
    %v9457 = vld [vmem:[#allocation3 + $0x378] sm:$0xff]
    %v9458 = vld [vmem:[#allocation3 + $0x380] sm:$0xff]
    %v9459 = vld [vmem:[#allocation3 + $0x388] sm:$0xff]
    %v9460 = vld [vmem:[#allocation3 + $0x390] sm:$0xff]
    %v9461 = vld [vmem:[#allocation3 + $0x398] sm:$0xff]
    %v9462 = vld [vmem:[#allocation3 + $0x3a0] sm:$0xff]
    %v9463 = vld [vmem:[#allocation3 + $0x3a8] sm:$0xff]
    %v9464 = vld [vmem:[#allocation3 + $0x3b0] sm:$0xff]
    %v9465 = vld [vmem:[#allocation3 + $0x3b8] sm:$0xff]
    %v9466 = vld [vmem:[#allocation3 + $0x3c0] sm:$0xff]
    %v9467 = vld [vmem:[#allocation3 + $0x3c8] sm:$0xff]
    %v9468 = vld [vmem:[#allocation3 + $0x3d0] sm:$0xff]
    %v9469 = vld [vmem:[#allocation3 + $0x3d8] sm:$0xff]
    %v9470 = vld [vmem:[#allocation3 + $0x3e0] sm:$0xff]
    %v9471 = vld [vmem:[#allocation3 + $0x3e8] sm:$0xff]
    %v9472 = vld [vmem:[#allocation12] sm:$0xf]
    %v9473 = vld [vmem:[#allocation12 + $0x4] sm:$0xf]
    %v9474 = vld [vmem:[#allocation12 + $0x8] sm:$0xf]
    %v9475 = vld [vmem:[#allocation12 + $0xc] sm:$0xf]
    %v9476 = vld [vmem:[#allocation12 + $0x10] sm:$0xf]
    %v9477 = vld [vmem:[#allocation12 + $0x14] sm:$0xf]
    %v9478 = vld [vmem:[#allocation12 + $0x18] sm:$0xf]
    %v9479 = vld [vmem:[#allocation12 + $0x1c] sm:$0xf]
    %v9480 = vld [vmem:[#allocation12 + $0x20] sm:$0xf]
    %v9481 = vld [vmem:[#allocation12 + $0x24] sm:$0xf]
    %v9482 = vld [vmem:[#allocation12 + $0x28] sm:$0xf]
    %v9483 = vld [vmem:[#allocation12 + $0x2c] sm:$0xf]
    %v9484 = vld [vmem:[#allocation12 + $0x30] sm:$0xf]
    %v9485 = vld [vmem:[#allocation12 + $0x34] sm:$0xf]
    %v9486 = vld [vmem:[#allocation12 + $0x38] sm:$0xf]
    %v9487 = vld [vmem:[#allocation12 + $0x3c] sm:$0xf]
    %v9488 = vld [vmem:[#allocation12 + $0x40] sm:$0xf]
    %v9489 = vld [vmem:[#allocation12 + $0x44] sm:$0xf]
    %v9490 = vld [vmem:[#allocation12 + $0x48] sm:$0xf]
    %v9491 = vld [vmem:[#allocation12 + $0x4c] sm:$0xf]
    %v9492 = vld [vmem:[#allocation12 + $0x50] sm:$0xf]
    %v9493 = vld [vmem:[#allocation12 + $0x54] sm:$0xf]
    %v9494 = vld [vmem:[#allocation12 + $0x58] sm:$0xf]
    %v9495 = vld [vmem:[#allocation12 + $0x5c] sm:$0xf]
    %v9496 = vld [vmem:[#allocation12 + $0x60] sm:$0xf]
    %v9497 = vld [vmem:[#allocation12 + $0x64] sm:$0xf]
    %v9498 = vld [vmem:[#allocation12 + $0x68] sm:$0xf]
    %v9499 = vld [vmem:[#allocation12 + $0x6c] sm:$0xf]
    %v9500 = vld [vmem:[#allocation12 + $0x70] sm:$0xf]
    %v9501 = vld [vmem:[#allocation12 + $0x74] sm:$0xf]
    %v9502 = vld [vmem:[#allocation12 + $0x78] sm:$0xf]
    %v9503 = vld [vmem:[#allocation12 + $0x7c] sm:$0xf]
    %v9504 = vld [vmem:[#allocation12 + $0x80] sm:$0xf]
    %v9505 = vld [vmem:[#allocation12 + $0x84] sm:$0xf]
    %v9506 = vld [vmem:[#allocation12 + $0x88] sm:$0xf]
    %v9507 = vld [vmem:[#allocation12 + $0x8c] sm:$0xf]
    %v9508 = vld [vmem:[#allocation12 + $0x90] sm:$0xf]
    %v9509 = vld [vmem:[#allocation12 + $0x94] sm:$0xf]
    %v9510 = vld [vmem:[#allocation12 + $0x98] sm:$0xf]
    %v9511 = vld [vmem:[#allocation12 + $0x9c] sm:$0xf]
    %v9512 = vld [vmem:[#allocation12 + $0xa0] sm:$0xf]
    %v9513 = vld [vmem:[#allocation12 + $0xa4] sm:$0xf]
    %v9514 = vld [vmem:[#allocation12 + $0xa8] sm:$0xf]
    %v9515 = vld [vmem:[#allocation12 + $0xac] sm:$0xf]
    %v9516 = vld [vmem:[#allocation12 + $0xb0] sm:$0xf]
    %v9517 = vld [vmem:[#allocation12 + $0xb4] sm:$0xf]
    %v9518 = vld [vmem:[#allocation12 + $0xb8] sm:$0xf]
    %v9519 = vld [vmem:[#allocation12 + $0xbc] sm:$0xf]
    %v9520 = vld [vmem:[#allocation12 + $0xc0] sm:$0xf]
    %v9521 = vld [vmem:[#allocation12 + $0xc4] sm:$0xf]
    %v9522 = vld [vmem:[#allocation12 + $0xc8] sm:$0xf]
    %v9523 = vld [vmem:[#allocation12 + $0xcc] sm:$0xf]
    %v9524 = vld [vmem:[#allocation12 + $0xd0] sm:$0xf]
    %v9525 = vld [vmem:[#allocation12 + $0xd4] sm:$0xf]
    %v9526 = vld [vmem:[#allocation12 + $0xd8] sm:$0xf]
    %v9527 = vld [vmem:[#allocation12 + $0xdc] sm:$0xf]
    %v9528 = vld [vmem:[#allocation12 + $0xe0] sm:$0xf]
    %v9529 = vld [vmem:[#allocation12 + $0xe4] sm:$0xf]
    %v9530 = vld [vmem:[#allocation12 + $0xe8] sm:$0xf]
    %v9531 = vld [vmem:[#allocation12 + $0xec] sm:$0xf]
    %v9532 = vld [vmem:[#allocation12 + $0xf0] sm:$0xf]
    %v9533 = vld [vmem:[#allocation12 + $0xf4] sm:$0xf]
    %v9534 = vld [vmem:[#allocation12 + $0xf8] sm:$0xf]
    %v9535 = vld [vmem:[#allocation12 + $0xfc] sm:$0xf]
    %v9536 = vld [vmem:[#allocation12 + $0x100] sm:$0xf]
    %v9537 = vld [vmem:[#allocation12 + $0x104] sm:$0xf]
    %v9538 = vld [vmem:[#allocation12 + $0x108] sm:$0xf]
    %v9539 = vld [vmem:[#allocation12 + $0x10c] sm:$0xf]
    %v9540 = vld [vmem:[#allocation12 + $0x110] sm:$0xf]
    %v9541 = vld [vmem:[#allocation12 + $0x114] sm:$0xf]
    %v9542 = vld [vmem:[#allocation12 + $0x118] sm:$0xf]
    %v9543 = vld [vmem:[#allocation12 + $0x11c] sm:$0xf]
    %v9544 = vld [vmem:[#allocation12 + $0x120] sm:$0xf]
    %v9545 = vld [vmem:[#allocation12 + $0x124] sm:$0xf]
    %v9546 = vld [vmem:[#allocation12 + $0x128] sm:$0xf]
    %v9547 = vld [vmem:[#allocation12 + $0x12c] sm:$0xf]
    %v9548 = vld [vmem:[#allocation12 + $0x130] sm:$0xf]
    %v9549 = vld [vmem:[#allocation12 + $0x134] sm:$0xf]
    %v9550 = vld [vmem:[#allocation12 + $0x138] sm:$0xf]
    %v9551 = vld [vmem:[#allocation12 + $0x13c] sm:$0xf]
    %v9552 = vld [vmem:[#allocation12 + $0x140] sm:$0xf]
    %v9553 = vld [vmem:[#allocation12 + $0x144] sm:$0xf]
    %v9554 = vld [vmem:[#allocation12 + $0x148] sm:$0xf]
    %v9555 = vld [vmem:[#allocation12 + $0x14c] sm:$0xf]
    %v9556 = vld [vmem:[#allocation12 + $0x150] sm:$0xf]
    %v9557 = vld [vmem:[#allocation12 + $0x154] sm:$0xf]
    %v9558 = vld [vmem:[#allocation12 + $0x158] sm:$0xf]
    %v9559 = vld [vmem:[#allocation12 + $0x15c] sm:$0xf]
    %v9560 = vld [vmem:[#allocation12 + $0x160] sm:$0xf]
    %v9561 = vld [vmem:[#allocation12 + $0x164] sm:$0xf]
    %v9562 = vld [vmem:[#allocation12 + $0x168] sm:$0xf]
    %v9563 = vld [vmem:[#allocation12 + $0x16c] sm:$0xf]
    %v9564 = vld [vmem:[#allocation12 + $0x170] sm:$0xf]
    %v9565 = vld [vmem:[#allocation12 + $0x174] sm:$0xf]
    %v9566 = vld [vmem:[#allocation12 + $0x178] sm:$0xf]
    %v9567 = vld [vmem:[#allocation12 + $0x17c] sm:$0xf]
    %v9568 = vld [vmem:[#allocation12 + $0x180] sm:$0xf]
    %v9569 = vld [vmem:[#allocation12 + $0x184] sm:$0xf]
    %v9570 = vld [vmem:[#allocation12 + $0x188] sm:$0xf]
    %v9571 = vld [vmem:[#allocation12 + $0x18c] sm:$0xf]
    %v9572 = vld [vmem:[#allocation12 + $0x190] sm:$0xf]
    %v9573 = vld [vmem:[#allocation12 + $0x194] sm:$0xf]
    %v9574 = vld [vmem:[#allocation12 + $0x198] sm:$0xf]
    %v9575 = vld [vmem:[#allocation12 + $0x19c] sm:$0xf]
    %v9576 = vld [vmem:[#allocation12 + $0x1a0] sm:$0xf]
    %v9577 = vld [vmem:[#allocation12 + $0x1a4] sm:$0xf]
    %v9578 = vld [vmem:[#allocation12 + $0x1a8] sm:$0xf]
    %v9579 = vld [vmem:[#allocation12 + $0x1ac] sm:$0xf]
    %v9580 = vld [vmem:[#allocation12 + $0x1b0] sm:$0xf]
    %v9581 = vld [vmem:[#allocation12 + $0x1b4] sm:$0xf]
    %v9582 = vld [vmem:[#allocation12 + $0x1b8] sm:$0xf]
    %v9583 = vld [vmem:[#allocation12 + $0x1bc] sm:$0xf]
    %v9584 = vld [vmem:[#allocation12 + $0x1c0] sm:$0xf]
    %v9585 = vld [vmem:[#allocation12 + $0x1c4] sm:$0xf]
    %v9586 = vld [vmem:[#allocation12 + $0x1c8] sm:$0xf]
    %v9587 = vld [vmem:[#allocation12 + $0x1cc] sm:$0xf]
    %v9588 = vld [vmem:[#allocation12 + $0x1d0] sm:$0xf]
    %v9589 = vld [vmem:[#allocation12 + $0x1d4] sm:$0xf]
    %v9590 = vld [vmem:[#allocation12 + $0x1d8] sm:$0xf]
    %v9591 = vld [vmem:[#allocation12 + $0x1dc] sm:$0xf]
    %v9592 = vld [vmem:[#allocation12 + $0x1e0] sm:$0xf]
    %v9593 = vld [vmem:[#allocation12 + $0x1e4] sm:$0xf]
    %v9594 = vld [vmem:[#allocation12 + $0x1e8] sm:$0xf]
    %v9595 = vld [vmem:[#allocation12 + $0x1ec] sm:$0xf]
    %v9596 = vld [vmem:[#allocation12 + $0x1f0] sm:$0xf]
    %v9597 = vld [vmem:[#allocation12 + $0x1f4] sm:$0xf]
    %v9598 = vld [vmem:[#allocation12 + $0x1f8] sm:$0xf]
    %v9599 = vld [vmem:[#allocation12 + $0x1fc] sm:$0xf]
    %v9600 = vld [vmem:[#allocation12 + $0x200] sm:$0xf]
    %v9601 = vld [vmem:[#allocation12 + $0x204] sm:$0xf]
    %v9602 = vld [vmem:[#allocation12 + $0x208] sm:$0xf]
    %v9603 = vld [vmem:[#allocation12 + $0x20c] sm:$0xf]
    %v9604 = vld [vmem:[#allocation12 + $0x210] sm:$0xf]
    %v9605 = vld [vmem:[#allocation12 + $0x214] sm:$0xf]
    %v9606 = vld [vmem:[#allocation12 + $0x218] sm:$0xf]
    %v9607 = vld [vmem:[#allocation12 + $0x21c] sm:$0xf]
    %v9608 = vld [vmem:[#allocation12 + $0x220] sm:$0xf]
    %v9609 = vld [vmem:[#allocation12 + $0x224] sm:$0xf]
    %v9610 = vld [vmem:[#allocation12 + $0x228] sm:$0xf]
    %v9611 = vld [vmem:[#allocation12 + $0x22c] sm:$0xf]
    %v9612 = vld [vmem:[#allocation12 + $0x230] sm:$0xf]
    %v9613 = vld [vmem:[#allocation12 + $0x234] sm:$0xf]
    %v9614 = vld [vmem:[#allocation12 + $0x238] sm:$0xf]
    %v9615 = vld [vmem:[#allocation12 + $0x23c] sm:$0xf]
    %v9616 = vld [vmem:[#allocation13] sm:$0x1]
    %v9618 = vlaneseq
    %v9619 = vshrl.u32 %v9618, 7
    %v9620 = vsub.s32 0, %v9619
    %v9621 = vrot.slane %v9616, %v9620
    %v9767 = vunpack.c.l.b16 %v9472
    %v9768 = vunpack.c.l.b16 %v9473
    %v9769 = vunpack.c.l.b16 %v9474
    %v9770 = vunpack.c.l.b16 %v9475
    %v9771 = vunpack.c.l.b16 %v9476
    %v9772 = vunpack.c.l.b16 %v9477
    %v9773 = vunpack.c.l.b16 %v9478
    %v9774 = vunpack.c.l.b16 %v9479
    %v9775 = vunpack.c.l.b16 %v9480
    %v9776 = vunpack.c.l.b16 %v9481
    %v9777 = vunpack.c.l.b16 %v9482
    %v9778 = vunpack.c.l.b16 %v9483
    %v9779 = vunpack.c.l.b16 %v9484
    %v9780 = vunpack.c.l.b16 %v9485
    %v9781 = vunpack.c.l.b16 %v9486
    %v9782 = vunpack.c.l.b16 %v9487
    %v9783 = vunpack.c.l.b16 %v9488
    %v9784 = vunpack.c.l.b16 %v9489
    %v9785 = vunpack.c.l.b16 %v9490
    %v9786 = vunpack.c.l.b16 %v9491
    %v9787 = vunpack.c.l.b16 %v9492
    %v9788 = vunpack.c.l.b16 %v9493
    %v9789 = vunpack.c.l.b16 %v9494
    %v9790 = vunpack.c.l.b16 %v9495
    %v9791 = vunpack.c.l.b16 %v9496
    %v9792 = vunpack.c.l.b16 %v9497
    %v9793 = vunpack.c.l.b16 %v9498
    %v9794 = vunpack.c.l.b16 %v9499
    %v9795 = vunpack.c.l.b16 %v9500
    %v9796 = vunpack.c.l.b16 %v9501
    %v9797 = vunpack.c.l.b16 %v9502
    %v9798 = vunpack.c.l.b16 %v9503
    %v9799 = vunpack.c.l.b16 %v9504
    %v9800 = vunpack.c.l.b16 %v9505
    %v9801 = vunpack.c.l.b16 %v9506
    %v9802 = vunpack.c.l.b16 %v9507
    %v9803 = vunpack.c.l.b16 %v9508
    %v9804 = vunpack.c.l.b16 %v9509
    %v9805 = vunpack.c.l.b16 %v9510
    %v9806 = vunpack.c.l.b16 %v9511
    %v9807 = vunpack.c.l.b16 %v9512
    %v9808 = vunpack.c.l.b16 %v9513
    %v9809 = vunpack.c.l.b16 %v9514
    %v9810 = vunpack.c.l.b16 %v9515
    %v9811 = vunpack.c.l.b16 %v9516
    %v9812 = vunpack.c.l.b16 %v9517
    %v9813 = vunpack.c.l.b16 %v9518
    %v9814 = vunpack.c.l.b16 %v9519
    %v9815 = vunpack.c.l.b16 %v9520
    %v9816 = vunpack.c.l.b16 %v9521
    %v9817 = vunpack.c.l.b16 %v9522
    %v9818 = vunpack.c.l.b16 %v9523
    %v9819 = vunpack.c.l.b16 %v9524
    %v9820 = vunpack.c.l.b16 %v9525
    %v9821 = vunpack.c.l.b16 %v9526
    %v9822 = vunpack.c.l.b16 %v9527
    %v9823 = vunpack.c.l.b16 %v9528
    %v9824 = vunpack.c.l.b16 %v9529
    %v9825 = vunpack.c.l.b16 %v9530
    %v9826 = vunpack.c.l.b16 %v9531
    %v9827 = vunpack.c.l.b16 %v9532
    %v9828 = vunpack.c.l.b16 %v9533
    %v9829 = vunpack.c.l.b16 %v9534
    %v9830 = vunpack.c.l.b16 %v9535
    %v9831 = vunpack.c.l.b16 %v9536
    %v9832 = vunpack.c.l.b16 %v9537
    %v9833 = vunpack.c.l.b16 %v9538
    %v9834 = vunpack.c.l.b16 %v9539
    %v9835 = vunpack.c.l.b16 %v9540
    %v9836 = vunpack.c.l.b16 %v9541
    %v9837 = vunpack.c.l.b16 %v9542
    %v9838 = vunpack.c.l.b16 %v9543
    %v9839 = vunpack.c.l.b16 %v9544
    %v9840 = vunpack.c.l.b16 %v9545
    %v9841 = vunpack.c.l.b16 %v9546
    %v9842 = vunpack.c.l.b16 %v9547
    %v9843 = vunpack.c.l.b16 %v9548
    %v9844 = vunpack.c.l.b16 %v9549
    %v9845 = vunpack.c.l.b16 %v9550
    %v9846 = vunpack.c.l.b16 %v9551
    %v9847 = vunpack.c.l.b16 %v9552
    %v9848 = vunpack.c.l.b16 %v9553
    %v9849 = vunpack.c.l.b16 %v9554
    %v9850 = vunpack.c.l.b16 %v9555
    %v9851 = vunpack.c.l.b16 %v9556
    %v9852 = vunpack.c.l.b16 %v9557
    %v9853 = vunpack.c.l.b16 %v9558
    %v9854 = vunpack.c.l.b16 %v9559
    %v9855 = vunpack.c.l.b16 %v9560
    %v9856 = vunpack.c.l.b16 %v9561
    %v9857 = vunpack.c.l.b16 %v9562
    %v9858 = vunpack.c.l.b16 %v9563
    %v9859 = vunpack.c.l.b16 %v9564
    %v9860 = vunpack.c.l.b16 %v9565
    %v9861 = vunpack.c.l.b16 %v9566
    %v9862 = vunpack.c.l.b16 %v9567
    %v9863 = vunpack.c.l.b16 %v9568
    %v9864 = vunpack.c.l.b16 %v9569
    %v9865 = vunpack.c.l.b16 %v9570
    %v9866 = vunpack.c.l.b16 %v9571
    %v9867 = vunpack.c.l.b16 %v9572
    %v9868 = vunpack.c.l.b16 %v9573
    %v9869 = vunpack.c.l.b16 %v9574
    %v9870 = vunpack.c.l.b16 %v9575
    %v9871 = vunpack.c.l.b16 %v9576
    %v9872 = vunpack.c.l.b16 %v9577
    %v9873 = vunpack.c.l.b16 %v9578
    %v9874 = vunpack.c.l.b16 %v9579
    %v9875 = vunpack.c.l.b16 %v9580
    %v9876 = vunpack.c.l.b16 %v9581
    %v9877 = vunpack.c.l.b16 %v9582
    %v9878 = vunpack.c.l.b16 %v9583
    %v9879 = vunpack.c.l.b16 %v9584
    %v9880 = vunpack.c.l.b16 %v9585
    %v9881 = vunpack.c.l.b16 %v9586
    %v9882 = vunpack.c.l.b16 %v9587
    %v9883 = vunpack.c.l.b16 %v9588
    %v9884 = vunpack.c.l.b16 %v9589
    %v9885 = vunpack.c.l.b16 %v9590
    %v9886 = vunpack.c.l.b16 %v9591
    %v9887 = vunpack.c.l.b16 %v9592
    %v9888 = vunpack.c.l.b16 %v9593
    %v9889 = vunpack.c.l.b16 %v9594
    %v9890 = vunpack.c.l.b16 %v9595
    %v9891 = vunpack.c.l.b16 %v9596
    %v9892 = vunpack.c.l.b16 %v9597
    %v9893 = vunpack.c.l.b16 %v9598
    %v9894 = vunpack.c.l.b16 %v9599
    %v9895 = vunpack.c.l.b16 %v9600
    %v9896 = vunpack.c.l.b16 %v9601
    %v9897 = vunpack.c.l.b16 %v9602
    %v9898 = vunpack.c.l.b16 %v9603
    %v9899 = vunpack.c.l.b16 %v9604
    %v9900 = vunpack.c.l.b16 %v9605
    %v9901 = vunpack.c.l.b16 %v9606
    %v9902 = vunpack.c.l.b16 %v9607
    %v9903 = vunpack.c.l.b16 %v9608
    %v9904 = vunpack.c.l.b16 %v9609
    %v9905 = vunpack.c.l.b16 %v9610
    %v9906 = vunpack.c.l.b16 %v9611
    %v9907 = vunpack.c.l.b16 %v9612
    %v9908 = vunpack.c.l.b16 %v9613
    %v9909 = vunpack.c.l.b16 %v9614
    %v9910 = vunpack.c.l.b16 %v9615
    %v9911 = vpack.c.b16 %v9768, %v9767
    %v9912 = vpack.c.b16 %v9770, %v9769
    %v9913 = vpack.c.b16 %v9772, %v9771
    %v9914 = vpack.c.b16 %v9774, %v9773
    %v9915 = vpack.c.b16 %v9776, %v9775
    %v9916 = vpack.c.b16 %v9778, %v9777
    %v9917 = vpack.c.b16 %v9780, %v9779
    %v9918 = vpack.c.b16 %v9782, %v9781
    %v9919 = vpack.c.b16 %v9784, %v9783
    %v9920 = vpack.c.b16 %v9786, %v9785
    %v9921 = vpack.c.b16 %v9788, %v9787
    %v9922 = vpack.c.b16 %v9790, %v9789
    %v9923 = vpack.c.b16 %v9792, %v9791
    %v9924 = vpack.c.b16 %v9794, %v9793
    %v9925 = vpack.c.b16 %v9796, %v9795
    %v9926 = vpack.c.b16 %v9798, %v9797
    %v9927 = vpack.c.b16 %v9800, %v9799
    %v9928 = vpack.c.b16 %v9802, %v9801
    %v9929 = vpack.c.b16 %v9804, %v9803
    %v9930 = vpack.c.b16 %v9806, %v9805
    %v9931 = vpack.c.b16 %v9808, %v9807
    %v9932 = vpack.c.b16 %v9810, %v9809
    %v9933 = vpack.c.b16 %v9812, %v9811
    %v9934 = vpack.c.b16 %v9814, %v9813
    %v9935 = vpack.c.b16 %v9816, %v9815
    %v9936 = vpack.c.b16 %v9818, %v9817
    %v9937 = vpack.c.b16 %v9820, %v9819
    %v9938 = vpack.c.b16 %v9822, %v9821
    %v9939 = vpack.c.b16 %v9824, %v9823
    %v9940 = vpack.c.b16 %v9826, %v9825
    %v9941 = vpack.c.b16 %v9828, %v9827
    %v9942 = vpack.c.b16 %v9830, %v9829
    %v9943 = vpack.c.b16 %v9832, %v9831
    %v9944 = vpack.c.b16 %v9834, %v9833
    %v9945 = vpack.c.b16 %v9836, %v9835
    %v9946 = vpack.c.b16 %v9838, %v9837
    %v9947 = vpack.c.b16 %v9840, %v9839
    %v9948 = vpack.c.b16 %v9842, %v9841
    %v9949 = vpack.c.b16 %v9844, %v9843
    %v9950 = vpack.c.b16 %v9846, %v9845
    %v9951 = vpack.c.b16 %v9848, %v9847
    %v9952 = vpack.c.b16 %v9850, %v9849
    %v9953 = vpack.c.b16 %v9852, %v9851
    %v9954 = vpack.c.b16 %v9854, %v9853
    %v9955 = vpack.c.b16 %v9856, %v9855
    %v9956 = vpack.c.b16 %v9858, %v9857
    %v9957 = vpack.c.b16 %v9860, %v9859
    %v9958 = vpack.c.b16 %v9862, %v9861
    %v9959 = vpack.c.b16 %v9864, %v9863
    %v9960 = vpack.c.b16 %v9866, %v9865
    %v9961 = vpack.c.b16 %v9868, %v9867
    %v9962 = vpack.c.b16 %v9870, %v9869
    %v9963 = vpack.c.b16 %v9872, %v9871
    %v9964 = vpack.c.b16 %v9874, %v9873
    %v9965 = vpack.c.b16 %v9876, %v9875
    %v9966 = vpack.c.b16 %v9878, %v9877
    %v9967 = vpack.c.b16 %v9880, %v9879
    %v9968 = vpack.c.b16 %v9882, %v9881
    %v9969 = vpack.c.b16 %v9884, %v9883
    %v9970 = vpack.c.b16 %v9886, %v9885
    %v9971 = vpack.c.b16 %v9888, %v9887
    %v9972 = vpack.c.b16 %v9890, %v9889
    %v9973 = vpack.c.b16 %v9892, %v9891
    %v9974 = vpack.c.b16 %v9894, %v9893
    %v9975 = vpack.c.b16 %v9896, %v9895
    %v9976 = vpack.c.b16 %v9898, %v9897
    %v9977 = vpack.c.b16 %v9900, %v9899
    %v9978 = vpack.c.b16 %v9902, %v9901
    %v9979 = vpack.c.b16 %v9904, %v9903
    %v9980 = vpack.c.b16 %v9906, %v9905
    %v9981 = vpack.c.b16 %v9908, %v9907
    %v9982 = vpack.c.b16 %v9910, %v9909
    %10055 = vmatprep.subr.bf16.mxu0 0
    %10056 = vmatpush1.bf16.msra.mxu0 %v9911
    %10057 = vmatprep.subr.bf16.mxu0 0
    %10058 = vmatpush1.bf16.msra.mxu0 %v9912
    %10059 = vmatprep.subr.bf16.mxu0 0
    %10060 = vmatpush1.bf16.msra.mxu0 %v9913
    %10061 = vmatprep.subr.bf16.mxu0 0
    %10062 = vmatpush1.bf16.msra.mxu0 %v9914
    %10063 = vmatprep.subr.bf16.mxu0 0
    %10064 = vmatpush1.bf16.msra.mxu0 %v9915
    %10065 = vmatprep.subr.bf16.mxu0 0
    %10066 = vmatpush1.bf16.msra.mxu0 %v9916
    %10067 = vmatprep.subr.bf16.mxu0 0
    %10068 = vmatpush1.bf16.msra.mxu0 %v9917
    %10069 = vmatprep.subr.bf16.mxu0 0
    %10070 = vmatpush1.bf16.msra.mxu0 %v9918
    %10071 = vmatprep.subr.bf16.mxu0 0
    %10072 = vmatpush1.bf16.msra.mxu0 %v9919
    %10073 = vmatprep.subr.bf16.mxu0 0
    %10074 = vmatpush1.bf16.msra.mxu0 %v9920
    %10075 = vmatprep.subr.bf16.mxu0 0
    %10076 = vmatpush1.bf16.msra.mxu0 %v9921
    %10077 = vmatprep.subr.bf16.mxu0 0
    %10078 = vmatpush1.bf16.msra.mxu0 %v9922
    %10079 = vmatprep.subr.bf16.mxu0 0
    %10080 = vmatpush1.bf16.msra.mxu0 %v9923
    %10081 = vmatprep.subr.bf16.mxu0 0
    %10082 = vmatpush1.bf16.msra.mxu0 %v9924
    %10083 = vmatprep.subr.bf16.mxu0 0
    %10084 = vmatpush1.bf16.msra.mxu0 %v9925
    %10085 = vmatprep.subr.bf16.mxu0 0
    %10086 = vmatpush1.bf16.msra.mxu0 %v9926
    %10087 = vmatprep.mubr.bf16.mxu0 %v9347
    %10088 = vmatmul.mubr.bf16.gmra.mrb[0].mxu0 %v9346
    %v10089 = vpop.f32.mrb[0].mxu0
    %v10090 = vadd.f32 %v9621, %v10089
    %v10091 = vpop.f32.mrb[0].mxu0
    %v10092 = vpop.f32.mrb[0].mxu0
    %v10093 = vadd.f32 %v9621, %v10092
    %v10094 = vpop.f32.mrb[0].mxu0
    %10095 = vmatprep.mubr.bf16.mxu0 %v9356
    %10096 = vmatmul.mubr.bf16.gmra.mrb[0].mxu0 %v9355
    %v10097 = vpop.f32.mrb[0].mxu0
    %v10098 = vadd.f32 %v9621, %v10097
    %v10099 = vpop.f32.mrb[0].mxu0
    %v10100 = vpop.f32.mrb[0].mxu0
    %v10101 = vadd.f32 %v9621, %v10100
    %v10102 = vpop.f32.mrb[0].mxu0
    %10103 = vmatprep.mubr.bf16.mxu0 %v9365
    %10104 = vmatmul.mubr.bf16.gmra.mrb[0].mxu0 %v9364
    %v10105 = vpop.f32.mrb[0].mxu0
    %v10106 = vadd.f32 %v9621, %v10105
    %v10107 = vpop.f32.mrb[0].mxu0
    %v10108 = vpop.f32.mrb[0].mxu0
    %v10109 = vadd.f32 %v9621, %v10108
    %v10110 = vpop.f32.mrb[0].mxu0
    %10111 = vmatprep.mubr.bf16.mxu0 %v9374
    %10112 = vmatmul.mubr.bf16.gmra.mrb[0].mxu0 %v9373
    %v10113 = vpop.f32.mrb[0].mxu0
    %v10114 = vadd.f32 %v9621, %v10113
    %v10115 = vpop.f32.mrb[0].mxu0
    %v10116 = vpop.f32.mrb[0].mxu0
    %v10117 = vadd.f32 %v9621, %v10116
    %v10118 = vpop.f32.mrb[0].mxu0
    %10119 = vmatprep.mubr.bf16.mxu0 %v9383
    %10120 = vmatmul.mubr.bf16.gmra.mrb[0].mxu0 %v9382
    %v10121 = vpop.f32.mrb[0].mxu0
    %v10122 = vadd.f32 %v9621, %v10121
    %v10123 = vpop.f32.mrb[0].mxu0
    %v10124 = vpop.f32.mrb[0].mxu0
    %v10125 = vadd.f32 %v9621, %v10124
    %v10126 = vpop.f32.mrb[0].mxu0
    %10127 = vmatprep.mubr.bf16.mxu0 %v9392
    %10128 = vmatmul.mubr.bf16.gmra.mrb[0].mxu0 %v9391
    %v10129 = vpop.f32.mrb[0].mxu0
    %v10130 = vadd.f32 %v9621, %v10129
    %v10131 = vpop.f32.mrb[0].mxu0
    %v10132 = vpop.f32.mrb[0].mxu0
    %v10133 = vadd.f32 %v9621, %v10132
    %v10134 = vpop.f32.mrb[0].mxu0
    %10135 = vmatprep.mubr.bf16.mxu0 %v9401
    %10136 = vmatmul.mubr.bf16.gmra.mrb[0].mxu0 %v9400
    %v10137 = vpop.f32.mrb[0].mxu0
    %v10138 = vadd.f32 %v9621, %v10137
    %v10139 = vpop.f32.mrb[0].mxu0
    %v10140 = vpop.f32.mrb[0].mxu0
    %v10141 = vadd.f32 %v9621, %v10140
    %v10142 = vpop.f32.mrb[0].mxu0
    %10143 = vmatprep.mubr.bf16.mxu0 %v9410
    %10144 = vmatmul.mubr.bf16.gmra.mrb[0].mxu0 %v9409
    %v10145 = vpop.f32.mrb[0].mxu0
    %v10146 = vadd.f32 %v9621, %v10145
    %v10147 = vpop.f32.mrb[0].mxu0
    %v10148 = vpop.f32.mrb[0].mxu0
    %v10149 = vadd.f32 %v9621, %v10148
    %v10150 = vpop.f32.mrb[0].mxu0
    %10151 = vmatprep.mubr.bf16.mxu0 %v9419
    %10152 = vmatmul.mubr.bf16.gmra.mrb[0].mxu0 %v9418
    %v10153 = vpop.f32.mrb[0].mxu0
    %v10154 = vadd.f32 %v9621, %v10153
    %v10155 = vpop.f32.mrb[0].mxu0
    %v10156 = vpop.f32.mrb[0].mxu0
    %v10157 = vadd.f32 %v9621, %v10156
    %v10158 = vpop.f32.mrb[0].mxu0
    %10159 = vmatprep.mubr.bf16.mxu0 %v9428
    %10160 = vmatmul.mubr.bf16.gmra.mrb[0].mxu0 %v9427
    %v10161 = vpop.f32.mrb[0].mxu0
    %v10162 = vadd.f32 %v9621, %v10161
    %v10163 = vpop.f32.mrb[0].mxu0
    %v10164 = vpop.f32.mrb[0].mxu0
    %v10165 = vadd.f32 %v9621, %v10164
    %v10166 = vpop.f32.mrb[0].mxu0
    %10167 = vmatprep.mubr.bf16.mxu0 %v9437
    %10168 = vmatmul.mubr.bf16.gmra.mrb[0].mxu0 %v9436
    %v10169 = vpop.f32.mrb[0].mxu0
    %v10170 = vadd.f32 %v9621, %v10169
    %v10171 = vpop.f32.mrb[0].mxu0
    %v10172 = vpop.f32.mrb[0].mxu0
    %v10173 = vadd.f32 %v9621, %v10172
    %v10174 = vpop.f32.mrb[0].mxu0
    %10175 = vmatprep.mubr.bf16.mxu0 %v9446
    %10176 = vmatmul.mubr.bf16.gmra.mrb[0].mxu0 %v9445
    %v10177 = vpop.f32.mrb[0].mxu0
    %v10178 = vadd.f32 %v9621, %v10177
    %v10179 = vpop.f32.mrb[0].mxu0
    %v10180 = vpop.f32.mrb[0].mxu0
    %v10181 = vadd.f32 %v9621, %v10180
    %v10182 = vpop.f32.mrb[0].mxu0
    %10183 = vmatprep.mubr.bf16.mxu0 %v9455
    %10184 = vmatmul.mubr.bf16.gmra.mrb[0].mxu0 %v9454
    %v10185 = vpop.f32.mrb[0].mxu0
    %v10186 = vadd.f32 %v9621, %v10185
    %v10187 = vpop.f32.mrb[0].mxu0
    %v10188 = vpop.f32.mrb[0].mxu0
    %v10189 = vadd.f32 %v9621, %v10188
    %v10190 = vpop.f32.mrb[0].mxu0
    %10191 = vmatprep.mubr.bf16.mxu0 %v9464
    %10192 = vmatmul.mubr.bf16.gmra.mrb[0].mxu0 %v9463
    %v10193 = vpop.f32.mrb[0].mxu0
    %v10194 = vadd.f32 %v9621, %v10193
    %v10195 = vpop.f32.mrb[0].mxu0
    %v10196 = vpop.f32.mrb[0].mxu0
    %v10197 = vadd.f32 %v9621, %v10196
    %v10198 = vpop.f32.mrb[0].mxu0
    %10199 = vdwg.mxu0
    %10200 = vmatprep.subr.bf16.mxu0 0
    %10201 = vmatpush1.bf16.msra.mxu0 %v9927
    %10202 = vmatprep.subr.bf16.mxu0 0
    %10203 = vmatpush1.bf16.msra.mxu0 %v9928
    %10204 = vmatprep.subr.bf16.mxu0 0
    %10205 = vmatpush1.bf16.msra.mxu0 %v9929
    %10206 = vmatprep.subr.bf16.mxu0 0
    %10207 = vmatpush1.bf16.msra.mxu0 %v9930
    %10208 = vmatprep.subr.bf16.mxu0 0
    %10209 = vmatpush1.bf16.msra.mxu0 %v9931
    %10210 = vmatprep.subr.bf16.mxu0 0
    %10211 = vmatpush1.bf16.msra.mxu0 %v9932
    %10212 = vmatprep.subr.bf16.mxu0 0
    %10213 = vmatpush1.bf16.msra.mxu0 %v9933
    %10214 = vmatprep.subr.bf16.mxu0 0
    %10215 = vmatpush1.bf16.msra.mxu0 %v9934
    %10216 = vmatprep.subr.bf16.mxu0 0
    %10217 = vmatpush1.bf16.msra.mxu0 %v9935
    %10218 = vmatprep.subr.bf16.mxu0 0
    %10219 = vmatpush1.bf16.msra.mxu0 %v9936
    %10220 = vmatprep.subr.bf16.mxu0 0
    %10221 = vmatpush1.bf16.msra.mxu0 %v9937
    %10222 = vmatprep.subr.bf16.mxu0 0
    %10223 = vmatpush1.bf16.msra.mxu0 %v9938
    %10224 = vmatprep.subr.bf16.mxu0 0
    %10225 = vmatpush1.bf16.msra.mxu0 %v9939
    %10226 = vmatprep.subr.bf16.mxu0 0
    %10227 = vmatpush1.bf16.msra.mxu0 %v9940
    %10228 = vmatprep.subr.bf16.mxu0 0
    %10229 = vmatpush1.bf16.msra.mxu0 %v9941
    %10230 = vmatprep.subr.bf16.mxu0 0
    %10231 = vmatpush1.bf16.msra.mxu0 %v9942
    %10232 = vmatprep.mubr.bf16.mxu0 %v9349
    %10233 = vmatmul.mubr.bf16.gmra.mrb[0].mxu0 %v9348
    %v10234 = vpop.f32.mrb[0].mxu0
    %v10235 = vadd.f32 %v10090, %v10234
    %v10236 = vpop.f32.mrb[0].mxu0
    %v10237 = vpop.f32.mrb[0].mxu0
    %v10238 = vadd.f32 %v10093, %v10237
    %v10239 = vpop.f32.mrb[0].mxu0
    %10240 = vmatprep.mubr.bf16.mxu0 %v9358
    %10241 = vmatmul.mubr.bf16.gmra.mrb[0].mxu0 %v9357
    %v10242 = vpop.f32.mrb[0].mxu0
    %v10243 = vadd.f32 %v10098, %v10242
    %v10244 = vpop.f32.mrb[0].mxu0
    %v10245 = vpop.f32.mrb[0].mxu0
    %v10246 = vadd.f32 %v10101, %v10245
    %v10247 = vpop.f32.mrb[0].mxu0
    %10248 = vmatprep.mubr.bf16.mxu0 %v9367
    %10249 = vmatmul.mubr.bf16.gmra.mrb[0].mxu0 %v9366
    %v10250 = vpop.f32.mrb[0].mxu0
    %v10251 = vadd.f32 %v10106, %v10250
    %v10252 = vpop.f32.mrb[0].mxu0
    %v10253 = vpop.f32.mrb[0].mxu0
    %v10254 = vadd.f32 %v10109, %v10253
    %v10255 = vpop.f32.mrb[0].mxu0
    %10256 = vmatprep.mubr.bf16.mxu0 %v9376
    %10257 = vmatmul.mubr.bf16.gmra.mrb[0].mxu0 %v9375
    %v10258 = vpop.f32.mrb[0].mxu0
    %v10259 = vadd.f32 %v10114, %v10258
    %v10260 = vpop.f32.mrb[0].mxu0
    %v10261 = vpop.f32.mrb[0].mxu0
    %v10262 = vadd.f32 %v10117, %v10261
    %v10263 = vpop.f32.mrb[0].mxu0
    %10264 = vmatprep.mubr.bf16.mxu0 %v9385
    %10265 = vmatmul.mubr.bf16.gmra.mrb[0].mxu0 %v9384
    %v10266 = vpop.f32.mrb[0].mxu0
    %v10267 = vadd.f32 %v10122, %v10266
    %v10268 = vpop.f32.mrb[0].mxu0
    %v10269 = vpop.f32.mrb[0].mxu0
    %v10270 = vadd.f32 %v10125, %v10269
    %v10271 = vpop.f32.mrb[0].mxu0
    %10272 = vmatprep.mubr.bf16.mxu0 %v9394
    %10273 = vmatmul.mubr.bf16.gmra.mrb[0].mxu0 %v9393
    %v10274 = vpop.f32.mrb[0].mxu0
    %v10275 = vadd.f32 %v10130, %v10274
    %v10276 = vpop.f32.mrb[0].mxu0
    %v10277 = vpop.f32.mrb[0].mxu0
    %v10278 = vadd.f32 %v10133, %v10277
    %v10279 = vpop.f32.mrb[0].mxu0
    %10280 = vmatprep.mubr.bf16.mxu0 %v9403
    %10281 = vmatmul.mubr.bf16.gmra.mrb[0].mxu0 %v9402
    %v10282 = vpop.f32.mrb[0].mxu0
    %v10283 = vadd.f32 %v10138, %v10282
    %v10284 = vpop.f32.mrb[0].mxu0
    %v10285 = vpop.f32.mrb[0].mxu0
    %v10286 = vadd.f32 %v10141, %v10285
    %v10287 = vpop.f32.mrb[0].mxu0
    %10288 = vmatprep.mubr.bf16.mxu0 %v9412
    %10289 = vmatmul.mubr.bf16.gmra.mrb[0].mxu0 %v9411
    %v10290 = vpop.f32.mrb[0].mxu0
    %v10291 = vadd.f32 %v10146, %v10290
    %v10292 = vpop.f32.mrb[0].mxu0
    %v10293 = vpop.f32.mrb[0].mxu0
    %v10294 = vadd.f32 %v10149, %v10293
    %v10295 = vpop.f32.mrb[0].mxu0
    %10296 = vmatprep.mubr.bf16.mxu0 %v9421
    %10297 = vmatmul.mubr.bf16.gmra.mrb[0].mxu0 %v9420
    %v10298 = vpop.f32.mrb[0].mxu0
    %v10299 = vadd.f32 %v10154, %v10298
    %v10300 = vpop.f32.mrb[0].mxu0
    %v10301 = vpop.f32.mrb[0].mxu0
    %v10302 = vadd.f32 %v10157, %v10301
    %v10303 = vpop.f32.mrb[0].mxu0
    %10304 = vmatprep.mubr.bf16.mxu0 %v9430
    %10305 = vmatmul.mubr.bf16.gmra.mrb[0].mxu0 %v9429
    %v10306 = vpop.f32.mrb[0].mxu0
    %v10307 = vadd.f32 %v10162, %v10306
    %v10308 = vpop.f32.mrb[0].mxu0
    %v10309 = vpop.f32.mrb[0].mxu0
    %v10310 = vadd.f32 %v10165, %v10309
    %v10311 = vpop.f32.mrb[0].mxu0
    %10312 = vmatprep.mubr.bf16.mxu0 %v9439
    %10313 = vmatmul.mubr.bf16.gmra.mrb[0].mxu0 %v9438
    %v10314 = vpop.f32.mrb[0].mxu0
    %v10315 = vadd.f32 %v10170, %v10314
    %v10316 = vpop.f32.mrb[0].mxu0
    %v10317 = vpop.f32.mrb[0].mxu0
    %v10318 = vadd.f32 %v10173, %v10317
    %v10319 = vpop.f32.mrb[0].mxu0
    %10320 = vmatprep.mubr.bf16.mxu0 %v9448
    %10321 = vmatmul.mubr.bf16.gmra.mrb[0].mxu0 %v9447
    %v10322 = vpop.f32.mrb[0].mxu0
    %v10323 = vadd.f32 %v10178, %v10322
    %v10324 = vpop.f32.mrb[0].mxu0
    %v10325 = vpop.f32.mrb[0].mxu0
    %v10326 = vadd.f32 %v10181, %v10325
    %v10327 = vpop.f32.mrb[0].mxu0
    %10328 = vmatprep.mubr.bf16.mxu0 %v9457
    %10329 = vmatmul.mubr.bf16.gmra.mrb[0].mxu0 %v9456
    %v10330 = vpop.f32.mrb[0].mxu0
    %v10331 = vadd.f32 %v10186, %v10330
    %v10332 = vpop.f32.mrb[0].mxu0
    %v10333 = vpop.f32.mrb[0].mxu0
    %v10334 = vadd.f32 %v10189, %v10333
    %v10335 = vpop.f32.mrb[0].mxu0
    %10336 = vmatprep.mubr.bf16.mxu0 %v9466
    %10337 = vmatmul.mubr.bf16.gmra.mrb[0].mxu0 %v9465
    %v10338 = vpop.f32.mrb[0].mxu0
    %v10339 = vadd.f32 %v10194, %v10338
    %v10340 = vpop.f32.mrb[0].mxu0
    %v10341 = vpop.f32.mrb[0].mxu0
    %v10342 = vadd.f32 %v10197, %v10341
    %v10343 = vpop.f32.mrb[0].mxu0
    %10344 = vdwg.mxu0
    %10345 = vmatprep.subr.bf16.mxu0 0
    %10346 = vmatpush1.bf16.msra.mxu0 %v9943
    %10347 = vmatprep.subr.bf16.mxu0 0
    %10348 = vmatpush1.bf16.msra.mxu0 %v9944
    %10349 = vmatprep.subr.bf16.mxu0 0
    %10350 = vmatpush1.bf16.msra.mxu0 %v9945
    %10351 = vmatprep.subr.bf16.mxu0 0
    %10352 = vmatpush1.bf16.msra.mxu0 %v9946
    %10353 = vmatprep.subr.bf16.mxu0 0
    %10354 = vmatpush1.bf16.msra.mxu0 %v9947
    %10355 = vmatprep.subr.bf16.mxu0 0
    %10356 = vmatpush1.bf16.msra.mxu0 %v9948
    %10357 = vmatprep.subr.bf16.mxu0 0
    %10358 = vmatpush1.bf16.msra.mxu0 %v9949
    %10359 = vmatprep.subr.bf16.mxu0 0
    %10360 = vmatpush1.bf16.msra.mxu0 %v9950
    %10361 = vmatprep.subr.bf16.mxu0 0
    %10362 = vmatpush1.bf16.msra.mxu0 %v9951
    %10363 = vmatprep.subr.bf16.mxu0 0
    %10364 = vmatpush1.bf16.msra.mxu0 %v9952
    %10365 = vmatprep.subr.bf16.mxu0 0
    %10366 = vmatpush1.bf16.msra.mxu0 %v9953
    %10367 = vmatprep.subr.bf16.mxu0 0
    %10368 = vmatpush1.bf16.msra.mxu0 %v9954
    %10369 = vmatprep.subr.bf16.mxu0 0
    %10370 = vmatpush1.bf16.msra.mxu0 %v9955
    %10371 = vmatprep.subr.bf16.mxu0 0
    %10372 = vmatpush1.bf16.msra.mxu0 %v9956
    %10373 = vmatprep.subr.bf16.mxu0 0
    %10374 = vmatpush1.bf16.msra.mxu0 %v9957
    %10375 = vmatprep.subr.bf16.mxu0 0
    %10376 = vmatpush1.bf16.msra.mxu0 %v9958
    %10377 = vmatprep.mubr.bf16.mxu0 %v9351
    %10378 = vmatmul.mubr.bf16.gmra.mrb[0].mxu0 %v9350
    %v10379 = vpop.f32.mrb[0].mxu0
    %v10380 = vadd.f32 %v10235, %v10379
    %v10381 = vpop.f32.mrb[0].mxu0
    %v10382 = vpop.f32.mrb[0].mxu0
    %v10383 = vadd.f32 %v10238, %v10382
    %v10384 = vpop.f32.mrb[0].mxu0
    %10385 = vmatprep.mubr.bf16.mxu0 %v9360
    %10386 = vmatmul.mubr.bf16.gmra.mrb[0].mxu0 %v9359
    %v10387 = vpop.f32.mrb[0].mxu0
    %v10388 = vadd.f32 %v10243, %v10387
    %v10389 = vpop.f32.mrb[0].mxu0
    %v10390 = vpop.f32.mrb[0].mxu0
    %v10391 = vadd.f32 %v10246, %v10390
    %v10392 = vpop.f32.mrb[0].mxu0
    %10393 = vmatprep.mubr.bf16.mxu0 %v9369
    %10394 = vmatmul.mubr.bf16.gmra.mrb[0].mxu0 %v9368
    %v10395 = vpop.f32.mrb[0].mxu0
    %v10396 = vadd.f32 %v10251, %v10395
    %v10397 = vpop.f32.mrb[0].mxu0
    %v10398 = vpop.f32.mrb[0].mxu0
    %v10399 = vadd.f32 %v10254, %v10398
    %v10400 = vpop.f32.mrb[0].mxu0
    %10401 = vmatprep.mubr.bf16.mxu0 %v9378
    %10402 = vmatmul.mubr.bf16.gmra.mrb[0].mxu0 %v9377
    %v10403 = vpop.f32.mrb[0].mxu0
    %v10404 = vadd.f32 %v10259, %v10403
    %v10405 = vpop.f32.mrb[0].mxu0
    %v10406 = vpop.f32.mrb[0].mxu0
    %v10407 = vadd.f32 %v10262, %v10406
    %v10408 = vpop.f32.mrb[0].mxu0
    %10409 = vmatprep.mubr.bf16.mxu0 %v9387
    %10410 = vmatmul.mubr.bf16.gmra.mrb[0].mxu0 %v9386
    %v10411 = vpop.f32.mrb[0].mxu0
    %v10412 = vadd.f32 %v10267, %v10411
    %v10413 = vpop.f32.mrb[0].mxu0
    %v10414 = vpop.f32.mrb[0].mxu0
    %v10415 = vadd.f32 %v10270, %v10414
    %v10416 = vpop.f32.mrb[0].mxu0
    %10417 = vmatprep.mubr.bf16.mxu0 %v9396
    %10418 = vmatmul.mubr.bf16.gmra.mrb[0].mxu0 %v9395
    %v10419 = vpop.f32.mrb[0].mxu0
    %v10420 = vadd.f32 %v10275, %v10419
    %v10421 = vpop.f32.mrb[0].mxu0
    %v10422 = vpop.f32.mrb[0].mxu0
    %v10423 = vadd.f32 %v10278, %v10422
    %v10424 = vpop.f32.mrb[0].mxu0
    %10425 = vmatprep.mubr.bf16.mxu0 %v9405
    %10426 = vmatmul.mubr.bf16.gmra.mrb[0].mxu0 %v9404
    %v10427 = vpop.f32.mrb[0].mxu0
    %v10428 = vadd.f32 %v10283, %v10427
    %v10429 = vpop.f32.mrb[0].mxu0
    %v10430 = vpop.f32.mrb[0].mxu0
    %v10431 = vadd.f32 %v10286, %v10430
    %v10432 = vpop.f32.mrb[0].mxu0
    %10433 = vmatprep.mubr.bf16.mxu0 %v9414
    %10434 = vmatmul.mubr.bf16.gmra.mrb[0].mxu0 %v9413
    %v10435 = vpop.f32.mrb[0].mxu0
    %v10436 = vadd.f32 %v10291, %v10435
    %v10437 = vpop.f32.mrb[0].mxu0
    %v10438 = vpop.f32.mrb[0].mxu0
    %v10439 = vadd.f32 %v10294, %v10438
    %v10440 = vpop.f32.mrb[0].mxu0
    %10441 = vmatprep.mubr.bf16.mxu0 %v9423
    %10442 = vmatmul.mubr.bf16.gmra.mrb[0].mxu0 %v9422
    %v10443 = vpop.f32.mrb[0].mxu0
    %v10444 = vadd.f32 %v10299, %v10443
    %v10445 = vpop.f32.mrb[0].mxu0
    %v10446 = vpop.f32.mrb[0].mxu0
    %v10447 = vadd.f32 %v10302, %v10446
    %v10448 = vpop.f32.mrb[0].mxu0
    %10449 = vmatprep.mubr.bf16.mxu0 %v9432
    %10450 = vmatmul.mubr.bf16.gmra.mrb[0].mxu0 %v9431
    %v10451 = vpop.f32.mrb[0].mxu0
    %v10452 = vadd.f32 %v10307, %v10451
    %v10453 = vpop.f32.mrb[0].mxu0
    %v10454 = vpop.f32.mrb[0].mxu0
    %v10455 = vadd.f32 %v10310, %v10454
    %v10456 = vpop.f32.mrb[0].mxu0
    %10457 = vmatprep.mubr.bf16.mxu0 %v9441
    %10458 = vmatmul.mubr.bf16.gmra.mrb[0].mxu0 %v9440
    %v10459 = vpop.f32.mrb[0].mxu0
    %v10460 = vadd.f32 %v10315, %v10459
    %v10461 = vpop.f32.mrb[0].mxu0
    %v10462 = vpop.f32.mrb[0].mxu0
    %v10463 = vadd.f32 %v10318, %v10462
    %v10464 = vpop.f32.mrb[0].mxu0
    %10465 = vmatprep.mubr.bf16.mxu0 %v9450
    %10466 = vmatmul.mubr.bf16.gmra.mrb[0].mxu0 %v9449
    %v10467 = vpop.f32.mrb[0].mxu0
    %v10468 = vadd.f32 %v10323, %v10467
    %v10469 = vpop.f32.mrb[0].mxu0
    %v10470 = vpop.f32.mrb[0].mxu0
    %v10471 = vadd.f32 %v10326, %v10470
    %v10472 = vpop.f32.mrb[0].mxu0
    %10473 = vmatprep.mubr.bf16.mxu0 %v9459
    %10474 = vmatmul.mubr.bf16.gmra.mrb[0].mxu0 %v9458
    %v10475 = vpop.f32.mrb[0].mxu0
    %v10476 = vadd.f32 %v10331, %v10475
    %v10477 = vpop.f32.mrb[0].mxu0
    %v10478 = vpop.f32.mrb[0].mxu0
    %v10479 = vadd.f32 %v10334, %v10478
    %v10480 = vpop.f32.mrb[0].mxu0
    %10481 = vmatprep.mubr.bf16.mxu0 %v9468
    %10482 = vmatmul.mubr.bf16.gmra.mrb[0].mxu0 %v9467
    %v10483 = vpop.f32.mrb[0].mxu0
    %v10484 = vadd.f32 %v10339, %v10483
    %v10485 = vpop.f32.mrb[0].mxu0
    %v10486 = vpop.f32.mrb[0].mxu0
    %v10487 = vadd.f32 %v10342, %v10486
    %v10488 = vpop.f32.mrb[0].mxu0
    %10489 = vdwg.mxu0
    %10490 = vmatprep.subr.bf16.mxu0 0
    %10491 = vmatpush1.bf16.msra.mxu0 %v9959
    %10492 = vmatprep.subr.bf16.mxu0 0
    %10493 = vmatpush1.bf16.msra.mxu0 %v9960
    %10494 = vmatprep.subr.bf16.mxu0 0
    %10495 = vmatpush1.bf16.msra.mxu0 %v9961
    %10496 = vmatprep.subr.bf16.mxu0 0
    %10497 = vmatpush1.bf16.msra.mxu0 %v9962
    %10498 = vmatprep.subr.bf16.mxu0 0
    %10499 = vmatpush1.bf16.msra.mxu0 %v9963
    %10500 = vmatprep.subr.bf16.mxu0 0
    %10501 = vmatpush1.bf16.msra.mxu0 %v9964
    %10502 = vmatprep.subr.bf16.mxu0 0
    %10503 = vmatpush1.bf16.msra.mxu0 %v9965
    %10504 = vmatprep.subr.bf16.mxu0 0
    %10505 = vmatpush1.bf16.msra.mxu0 %v9966
    %10506 = vmatprep.subr.bf16.mxu0 0
    %10507 = vmatpush1.bf16.msra.mxu0 %v9967
    %10508 = vmatprep.subr.bf16.mxu0 0
    %10509 = vmatpush1.bf16.msra.mxu0 %v9968
    %10510 = vmatprep.subr.bf16.mxu0 0
    %10511 = vmatpush1.bf16.msra.mxu0 %v9969
    %10512 = vmatprep.subr.bf16.mxu0 0
    %10513 = vmatpush1.bf16.msra.mxu0 %v9970
    %10514 = vmatprep.subr.bf16.mxu0 0
    %10515 = vmatpush1.bf16.msra.mxu0 %v9971
    %10516 = vmatprep.subr.bf16.mxu0 0
    %10517 = vmatpush1.bf16.msra.mxu0 %v9972
    %10518 = vmatprep.subr.bf16.mxu0 0
    %10519 = vmatpush1.bf16.msra.mxu0 %v9973
    %10520 = vmatprep.subr.bf16.mxu0 0
    %10521 = vmatpush1.bf16.msra.mxu0 %v9974
    %10522 = vmatprep.mubr.bf16.mxu0 %v9353
    %10523 = vmatmul.mubr.bf16.gmra.mrb[0].mxu0 %v9352
    %v10524 = vpop.f32.mrb[0].mxu0
    %v10525 = vadd.f32 %v10380, %v10524
    %v10526 = vpop.f32.mrb[0].mxu0
    %v10527 = vpop.f32.mrb[0].mxu0
    %v10528 = vadd.f32 %v10383, %v10527
    %v10529 = vpop.f32.mrb[0].mxu0
    %10530 = vmatprep.mubr.bf16.mxu0 %v9362
    %10531 = vmatmul.mubr.bf16.gmra.mrb[0].mxu0 %v9361
    %v10532 = vpop.f32.mrb[0].mxu0
    %v10533 = vadd.f32 %v10388, %v10532
    %v10534 = vpop.f32.mrb[0].mxu0
    %v10535 = vpop.f32.mrb[0].mxu0
    %v10536 = vadd.f32 %v10391, %v10535
    %v10537 = vpop.f32.mrb[0].mxu0
    %10538 = vmatprep.mubr.bf16.mxu0 %v9371
    %10539 = vmatmul.mubr.bf16.gmra.mrb[0].mxu0 %v9370
    %v10540 = vpop.f32.mrb[0].mxu0
    %v10541 = vadd.f32 %v10396, %v10540
    %v10542 = vpop.f32.mrb[0].mxu0
    %v10543 = vpop.f32.mrb[0].mxu0
    %v10544 = vadd.f32 %v10399, %v10543
    %v10545 = vpop.f32.mrb[0].mxu0
    %10546 = vmatprep.mubr.bf16.mxu0 %v9380
    %10547 = vmatmul.mubr.bf16.gmra.mrb[0].mxu0 %v9379
    %v10548 = vpop.f32.mrb[0].mxu0
    %v10549 = vadd.f32 %v10404, %v10548
    %v10550 = vpop.f32.mrb[0].mxu0
    %v10551 = vpop.f32.mrb[0].mxu0
    %v10552 = vadd.f32 %v10407, %v10551
    %v10553 = vpop.f32.mrb[0].mxu0
    %10554 = vmatprep.mubr.bf16.mxu0 %v9389
    %10555 = vmatmul.mubr.bf16.gmra.mrb[0].mxu0 %v9388
    %v10556 = vpop.f32.mrb[0].mxu0
    %v10557 = vadd.f32 %v10412, %v10556
    %v10558 = vpop.f32.mrb[0].mxu0
    %v10559 = vpop.f32.mrb[0].mxu0
    %v10560 = vadd.f32 %v10415, %v10559
    %v10561 = vpop.f32.mrb[0].mxu0
    %10562 = vmatprep.mubr.bf16.mxu0 %v9398
    %10563 = vmatmul.mubr.bf16.gmra.mrb[0].mxu0 %v9397
    %v10564 = vpop.f32.mrb[0].mxu0
    %v10565 = vadd.f32 %v10420, %v10564
    %v10566 = vpop.f32.mrb[0].mxu0
    %v10567 = vpop.f32.mrb[0].mxu0
    %v10568 = vadd.f32 %v10423, %v10567
    %v10569 = vpop.f32.mrb[0].mxu0
    %10570 = vmatprep.mubr.bf16.mxu0 %v9407
    %10571 = vmatmul.mubr.bf16.gmra.mrb[0].mxu0 %v9406
    %v10572 = vpop.f32.mrb[0].mxu0
    %v10573 = vadd.f32 %v10428, %v10572
    %v10574 = vpop.f32.mrb[0].mxu0
    %v10575 = vpop.f32.mrb[0].mxu0
    %v10576 = vadd.f32 %v10431, %v10575
    %v10577 = vpop.f32.mrb[0].mxu0
    %10578 = vmatprep.mubr.bf16.mxu0 %v9416
    %10579 = vmatmul.mubr.bf16.gmra.mrb[0].mxu0 %v9415
    %v10580 = vpop.f32.mrb[0].mxu0
    %v10581 = vadd.f32 %v10436, %v10580
    %v10582 = vpop.f32.mrb[0].mxu0
    %v10583 = vpop.f32.mrb[0].mxu0
    %v10584 = vadd.f32 %v10439, %v10583
    %v10585 = vpop.f32.mrb[0].mxu0
    %10586 = vmatprep.mubr.bf16.mxu0 %v9425
    %10587 = vmatmul.mubr.bf16.gmra.mrb[0].mxu0 %v9424
    %v10588 = vpop.f32.mrb[0].mxu0
    %v10589 = vadd.f32 %v10444, %v10588
    %v10590 = vpop.f32.mrb[0].mxu0
    %v10591 = vpop.f32.mrb[0].mxu0
    %v10592 = vadd.f32 %v10447, %v10591
    %v10593 = vpop.f32.mrb[0].mxu0
    %10594 = vmatprep.mubr.bf16.mxu0 %v9434
    %10595 = vmatmul.mubr.bf16.gmra.mrb[0].mxu0 %v9433
    %v10596 = vpop.f32.mrb[0].mxu0
    %v10597 = vadd.f32 %v10452, %v10596
    %v10598 = vpop.f32.mrb[0].mxu0
    %v10599 = vpop.f32.mrb[0].mxu0
    %v10600 = vadd.f32 %v10455, %v10599
    %v10601 = vpop.f32.mrb[0].mxu0
    %10602 = vmatprep.mubr.bf16.mxu0 %v9443
    %10603 = vmatmul.mubr.bf16.gmra.mrb[0].mxu0 %v9442
    %v10604 = vpop.f32.mrb[0].mxu0
    %v10605 = vadd.f32 %v10460, %v10604
    %v10606 = vpop.f32.mrb[0].mxu0
    %v10607 = vpop.f32.mrb[0].mxu0
    %v10608 = vadd.f32 %v10463, %v10607
    %v10609 = vpop.f32.mrb[0].mxu0
    %10610 = vmatprep.mubr.bf16.mxu0 %v9452
    %10611 = vmatmul.mubr.bf16.gmra.mrb[0].mxu0 %v9451
    %v10612 = vpop.f32.mrb[0].mxu0
    %v10613 = vadd.f32 %v10468, %v10612
    %v10614 = vpop.f32.mrb[0].mxu0
    %v10615 = vpop.f32.mrb[0].mxu0
    %v10616 = vadd.f32 %v10471, %v10615
    %v10617 = vpop.f32.mrb[0].mxu0
    %10618 = vmatprep.mubr.bf16.mxu0 %v9461
    %10619 = vmatmul.mubr.bf16.gmra.mrb[0].mxu0 %v9460
    %v10620 = vpop.f32.mrb[0].mxu0
    %v10621 = vadd.f32 %v10476, %v10620
    %v10622 = vpop.f32.mrb[0].mxu0
    %v10623 = vpop.f32.mrb[0].mxu0
    %v10624 = vadd.f32 %v10479, %v10623
    %v10625 = vpop.f32.mrb[0].mxu0
    %10626 = vmatprep.mubr.bf16.mxu0 %v9470
    %10627 = vmatmul.mubr.bf16.gmra.mrb[0].mxu0 %v9469
    %v10628 = vpop.f32.mrb[0].mxu0
    %v10629 = vadd.f32 %v10484, %v10628
    %v10630 = vpop.f32.mrb[0].mxu0
    %v10631 = vpop.f32.mrb[0].mxu0
    %v10632 = vadd.f32 %v10487, %v10631
    %v10633 = vpop.f32.mrb[0].mxu0
    %10634 = vdwg.mxu0
    %10635 = vmatprep.subr.bf16.mxu0 0
    %10636 = vmatpush1.bf16.msra.mxu0 %v9975
    %10637 = vmatprep.subr.bf16.mxu0 0
    %10638 = vmatpush1.bf16.msra.mxu0 %v9976
    %10639 = vmatprep.subr.bf16.mxu0 0
    %10640 = vmatpush1.bf16.msra.mxu0 %v9977
    %10641 = vmatprep.subr.bf16.mxu0 0
    %10642 = vmatpush1.bf16.msra.mxu0 %v9978
    %10643 = vmatprep.subr.bf16.mxu0 0
    %10644 = vmatpush1.bf16.msra.mxu0 %v9979
    %10645 = vmatprep.subr.bf16.mxu0 0
    %10646 = vmatpush1.bf16.msra.mxu0 %v9980
    %10647 = vmatprep.subr.bf16.mxu0 0
    %10648 = vmatpush1.bf16.msra.mxu0 %v9981
    %10649 = vmatprep.subr.bf16.mxu0 0
    %10650 = vmatpush1.bf16.msra.mxu0 %v9982
    %10651 = vmatprep.subr.bf16.mxu0 0
    %10652 = vmatpush1.bf16.msra.mxu0 0
    %10653 = vmatprep.subr.bf16.mxu0 0
    %10654 = vmatpush1.bf16.msra.mxu0 0
    %10655 = vmatprep.subr.bf16.mxu0 0
    %10656 = vmatpush1.bf16.msra.mxu0 0
    %10657 = vmatprep.subr.bf16.mxu0 0
    %10658 = vmatpush1.bf16.msra.mxu0 0
    %10659 = vmatprep.subr.bf16.mxu0 0
    %10660 = vmatpush1.bf16.msra.mxu0 0
    %10661 = vmatprep.subr.bf16.mxu0 0
    %10662 = vmatpush1.bf16.msra.mxu0 0
    %10663 = vmatprep.subr.bf16.mxu0 0
    %10664 = vmatpush1.bf16.msra.mxu0 0
    %10665 = vmatprep.subr.bf16.mxu0 0
    %10666 = vmatpush1.bf16.msra.mxu0 0
    %10667 = vmatprep.mubr.bf16.mxu0 0
    %10668 = vmatmul.mubr.bf16.gmra.mrb[0].mxu0 %v9354
    %v10669 = vpop.f32.mrb[0].mxu0
    %v10670 = vadd.f32 %v10525, %v10669
    %v10671 = vpop.f32.mrb[0].mxu0
    %v10672 = vpop.f32.mrb[0].mxu0
    %v10673 = vadd.f32 %v10528, %v10672
    %v10674 = vpop.f32.mrb[0].mxu0
    %10675 = vmatprep.mubr.bf16.mxu0 0
    %10676 = vmatmul.mubr.bf16.gmra.mrb[0].mxu0 %v9363
    %v10677 = vpop.f32.mrb[0].mxu0
    %v10678 = vadd.f32 %v10533, %v10677
    %v10679 = vpop.f32.mrb[0].mxu0
    %v10680 = vpop.f32.mrb[0].mxu0
    %v10681 = vadd.f32 %v10536, %v10680
    %v10682 = vpop.f32.mrb[0].mxu0
    %10683 = vmatprep.mubr.bf16.mxu0 0
    %10684 = vmatmul.mubr.bf16.gmra.mrb[0].mxu0 %v9372
    %v10685 = vpop.f32.mrb[0].mxu0
    %v10686 = vadd.f32 %v10541, %v10685
    %v10687 = vpop.f32.mrb[0].mxu0
    %v10688 = vpop.f32.mrb[0].mxu0
    %v10689 = vadd.f32 %v10544, %v10688
    %v10690 = vpop.f32.mrb[0].mxu0
    %10691 = vmatprep.mubr.bf16.mxu0 0
    %10692 = vmatmul.mubr.bf16.gmra.mrb[0].mxu0 %v9381
    %v10693 = vpop.f32.mrb[0].mxu0
    %v10694 = vadd.f32 %v10549, %v10693
    %v10695 = vpop.f32.mrb[0].mxu0
    %v10696 = vpop.f32.mrb[0].mxu0
    %v10697 = vadd.f32 %v10552, %v10696
    %v10698 = vpop.f32.mrb[0].mxu0
    %10699 = vmatprep.mubr.bf16.mxu0 0
    %10700 = vmatmul.mubr.bf16.gmra.mrb[0].mxu0 %v9390
    %v10701 = vpop.f32.mrb[0].mxu0
    %v10702 = vadd.f32 %v10557, %v10701
    %v10703 = vpop.f32.mrb[0].mxu0
    %v10704 = vpop.f32.mrb[0].mxu0
    %v10705 = vadd.f32 %v10560, %v10704
    %v10706 = vpop.f32.mrb[0].mxu0
    %10707 = vmatprep.mubr.bf16.mxu0 0
    %10708 = vmatmul.mubr.bf16.gmra.mrb[0].mxu0 %v9399
    %v10709 = vpop.f32.mrb[0].mxu0
    %v10710 = vadd.f32 %v10565, %v10709
    %v10711 = vpop.f32.mrb[0].mxu0
    %v10712 = vpop.f32.mrb[0].mxu0
    %v10713 = vadd.f32 %v10568, %v10712
    %v10714 = vpop.f32.mrb[0].mxu0
    %10715 = vmatprep.mubr.bf16.mxu0 0
    %10716 = vmatmul.mubr.bf16.gmra.mrb[0].mxu0 %v9408
    %v10717 = vpop.f32.mrb[0].mxu0
    %v10718 = vadd.f32 %v10573, %v10717
    %v10719 = vpop.f32.mrb[0].mxu0
    %v10720 = vpop.f32.mrb[0].mxu0
    %v10721 = vadd.f32 %v10576, %v10720
    %v10722 = vpop.f32.mrb[0].mxu0
    %10723 = vmatprep.mubr.bf16.mxu0 0
    %10724 = vmatmul.mubr.bf16.gmra.mrb[0].mxu0 %v9417
    %v10725 = vpop.f32.mrb[0].mxu0
    %v10726 = vadd.f32 %v10581, %v10725
    %v10727 = vpop.f32.mrb[0].mxu0
    %v10728 = vpop.f32.mrb[0].mxu0
    %v10729 = vadd.f32 %v10584, %v10728
    %v10730 = vpop.f32.mrb[0].mxu0
    %10731 = vmatprep.mubr.bf16.mxu0 0
    %10732 = vmatmul.mubr.bf16.gmra.mrb[0].mxu0 %v9426
    %v10733 = vpop.f32.mrb[0].mxu0
    %v10734 = vadd.f32 %v10589, %v10733
    %v10735 = vpop.f32.mrb[0].mxu0
    %v10736 = vpop.f32.mrb[0].mxu0
    %v10737 = vadd.f32 %v10592, %v10736
    %v10738 = vpop.f32.mrb[0].mxu0
    %10739 = vmatprep.mubr.bf16.mxu0 0
    %10740 = vmatmul.mubr.bf16.gmra.mrb[0].mxu0 %v9435
    %v10741 = vpop.f32.mrb[0].mxu0
    %v10742 = vadd.f32 %v10597, %v10741
    %v10743 = vpop.f32.mrb[0].mxu0
    %v10744 = vpop.f32.mrb[0].mxu0
    %v10745 = vadd.f32 %v10600, %v10744
    %v10746 = vpop.f32.mrb[0].mxu0
    %10747 = vmatprep.mubr.bf16.mxu0 0
    %10748 = vmatmul.mubr.bf16.gmra.mrb[0].mxu0 %v9444
    %v10749 = vpop.f32.mrb[0].mxu0
    %v10750 = vadd.f32 %v10605, %v10749
    %v10751 = vpop.f32.mrb[0].mxu0
    %v10752 = vpop.f32.mrb[0].mxu0
    %v10753 = vadd.f32 %v10608, %v10752
    %v10754 = vpop.f32.mrb[0].mxu0
    %10755 = vmatprep.mubr.bf16.mxu0 0
    %10756 = vmatmul.mubr.bf16.gmra.mrb[0].mxu0 %v9453
    %v10757 = vpop.f32.mrb[0].mxu0
    %v10758 = vadd.f32 %v10613, %v10757
    %v10759 = vpop.f32.mrb[0].mxu0
    %v10760 = vpop.f32.mrb[0].mxu0
    %v10761 = vadd.f32 %v10616, %v10760
    %v10762 = vpop.f32.mrb[0].mxu0
    %10763 = vmatprep.mubr.bf16.mxu0 0
    %10764 = vmatmul.mubr.bf16.gmra.mrb[0].mxu0 %v9462
    %v10765 = vpop.f32.mrb[0].mxu0
    %v10766 = vadd.f32 %v10621, %v10765
    %v10767 = vpop.f32.mrb[0].mxu0
    %v10768 = vpop.f32.mrb[0].mxu0
    %v10769 = vadd.f32 %v10624, %v10768
    %v10770 = vpop.f32.mrb[0].mxu0
    %10771 = vmatprep.mubr.bf16.mxu0 0
    %10772 = vmatmul.mubr.bf16.gmra.mrb[0].mxu0 %v9471
    %v10773 = vpop.f32.mrb[0].mxu0
    %v10774 = vadd.f32 %v10629, %v10773
    %v10775 = vpop.f32.mrb[0].mxu0
    %v10776 = vpop.f32.mrb[0].mxu0
    %v10777 = vadd.f32 %v10632, %v10776
    %v10778 = vpop.f32.mrb[0].mxu0
    %10779 = vdwg.mxu0
    %v10780 = vmax.f32 %v10670, 0.0
    %v10781 = vmax.f32 %v10673, 0.0
    %v10782 = vmax.f32 %v10678, 0.0
    %v10783 = vmax.f32 %v10681, 0.0
    %v10784 = vmax.f32 %v10686, 0.0
    %v10785 = vmax.f32 %v10689, 0.0
    %v10786 = vmax.f32 %v10694, 0.0
    %v10787 = vmax.f32 %v10697, 0.0
    %v10788 = vmax.f32 %v10702, 0.0
    %v10789 = vmax.f32 %v10705, 0.0
    %v10790 = vmax.f32 %v10710, 0.0
    %v10791 = vmax.f32 %v10713, 0.0
    %v10792 = vmax.f32 %v10718, 0.0
    %v10793 = vmax.f32 %v10721, 0.0
    %v10794 = vmax.f32 %v10726, 0.0
    %v10795 = vmax.f32 %v10729, 0.0
    %v10796 = vmax.f32 %v10734, 0.0
    %v10797 = vmax.f32 %v10737, 0.0
    %v10798 = vmax.f32 %v10742, 0.0
    %v10799 = vmax.f32 %v10745, 0.0
    %v10800 = vmax.f32 %v10750, 0.0
    %v10801 = vmax.f32 %v10753, 0.0
    %v10802 = vmax.f32 %v10758, 0.0
    %v10803 = vmax.f32 %v10761, 0.0
    %v10804 = vmax.f32 %v10766, 0.0
    %v10805 = vmax.f32 %v10769, 0.0
    %v10806 = vmax.f32 %v10774, 0.0
    %v10807 = vmax.f32 %v10777, 0.0
    %v10808 = vmul.f32 %v10780, %v2750
    %v10809 = vmul.f32 %v10781, %v2755
    %v10810 = vmul.f32 %v10782, %v2760
    %v10811 = vmul.f32 %v10783, %v2765
    %v10812 = vmul.f32 %v10784, %v2770
    %v10813 = vmul.f32 %v10785, %v2775
    %v10814 = vmul.f32 %v10786, %v2780
    %v10815 = vmul.f32 %v10787, %v2785
    %v10816 = vmul.f32 %v10788, %v2790
    %v10817 = vmul.f32 %v10789, %v2795
    %v10818 = vmul.f32 %v10790, %v2800
    %v10819 = vmul.f32 %v10791, %v2805
    %v10820 = vmul.f32 %v10792, %v2810
    %v10821 = vmul.f32 %v10793, %v2815
    %v10822 = vmul.f32 %v10794, %v2820
    %v10823 = vmul.f32 %v10795, %v2825
    %v10824 = vmul.f32 %v10796, %v2830
    %v10825 = vmul.f32 %v10797, %v2835
    %v10826 = vmul.f32 %v10798, %v2840
    %v10827 = vmul.f32 %v10799, %v2845
    %v10828 = vmul.f32 %v10800, %v2850
    %v10829 = vmul.f32 %v10801, %v2855
    %v10830 = vmul.f32 %v10802, %v2860
    %v10831 = vmul.f32 %v10803, %v2865
    %v10832 = vmul.f32 %v10804, %v2870
    %v10833 = vmul.f32 %v10805, %v2875
    %v10834 = vmul.f32 %v10806, %v2880
    %v10835 = vmul.f32 %v10807, %v2885
    %v10836 = vpack.c.bf16 %v10809, %v10808
    %v10837 = vpack.c.bf16 %v10811, %v10810
    %v10838 = vpack.c.bf16 %v10813, %v10812
    %v10839 = vpack.c.bf16 %v10815, %v10814
    %v10840 = vpack.c.bf16 %v10817, %v10816
    %v10841 = vpack.c.bf16 %v10819, %v10818
    %v10842 = vpack.c.bf16 %v10821, %v10820
    %v10843 = vpack.c.bf16 %v10823, %v10822
    %v10844 = vpack.c.bf16 %v10825, %v10824
    %v10845 = vpack.c.bf16 %v10827, %v10826
    %v10846 = vpack.c.bf16 %v10829, %v10828
    %v10847 = vpack.c.bf16 %v10831, %v10830
    %v10848 = vpack.c.bf16 %v10833, %v10832
    %v10849 = vpack.c.bf16 %v10835, %v10834
    %v10851 = vshrl.u32 %v10836, 16
    %v10853 = vrot.slane %v10851, 2
    %v10854 = vshll.u32 %v10836, 16
    %v10856 = vrot.slane %v10854, 3
    %v10857 = vor.u32 %v10853, %v10856
    %v10859 = vshrl.u32 %v10837, 16
    %v10861 = vrot.slane %v10859, 2
    %v10862 = vshll.u32 %v10837, 16
    %v10864 = vrot.slane %v10862, 3
    %v10865 = vor.u32 %v10861, %v10864
    %v10866 = vsel %vm1034, %v10857, %v10865
    %v10868 = vshrl.u32 %v10838, 16
    %v10870 = vrot.slane %v10868, 2
    %v10871 = vshll.u32 %v10838, 16
    %v10873 = vrot.slane %v10871, 3
    %v10874 = vor.u32 %v10870, %v10873
    %v10875 = vsel %vm1034, %v10865, %v10874
    %v10877 = vshrl.u32 %v10839, 16
    %v10879 = vrot.slane %v10877, 2
    %v10880 = vshll.u32 %v10839, 16
    %v10882 = vrot.slane %v10880, 3
    %v10883 = vor.u32 %v10879, %v10882
    %v10884 = vsel %vm1034, %v10874, %v10883
    %v10886 = vshrl.u32 %v10840, 16
    %v10888 = vrot.slane %v10886, 2
    %v10889 = vshll.u32 %v10840, 16
    %v10891 = vrot.slane %v10889, 3
    %v10892 = vor.u32 %v10888, %v10891
    %v10893 = vsel %vm1034, %v10883, %v10892
    %v10895 = vshrl.u32 %v10841, 16
    %v10897 = vrot.slane %v10895, 2
    %v10898 = vshll.u32 %v10841, 16
    %v10900 = vrot.slane %v10898, 3
    %v10901 = vor.u32 %v10897, %v10900
    %v10902 = vsel %vm1034, %v10892, %v10901
    %v10904 = vshrl.u32 %v10842, 16
    %v10906 = vrot.slane %v10904, 2
    %v10907 = vshll.u32 %v10842, 16
    %v10909 = vrot.slane %v10907, 3
    %v10910 = vor.u32 %v10906, %v10909
    %v10911 = vsel %vm1034, %v10901, %v10910
    %v10913 = vshrl.u32 %v10843, 16
    %v10915 = vrot.slane %v10913, 2
    %v10916 = vshll.u32 %v10843, 16
    %v10918 = vrot.slane %v10916, 3
    %v10919 = vor.u32 %v10915, %v10918
    %v10920 = vsel %vm1034, %v10910, %v10919
    %v10922 = vshrl.u32 %v10844, 16
    %v10924 = vrot.slane %v10922, 2
    %v10925 = vshll.u32 %v10844, 16
    %v10927 = vrot.slane %v10925, 3
    %v10928 = vor.u32 %v10924, %v10927
    %v10929 = vsel %vm1034, %v10919, %v10928
    %v10931 = vshrl.u32 %v10845, 16
    %v10933 = vrot.slane %v10931, 2
    %v10934 = vshll.u32 %v10845, 16
    %v10936 = vrot.slane %v10934, 3
    %v10937 = vor.u32 %v10933, %v10936
    %v10938 = vsel %vm1034, %v10928, %v10937
    %v10940 = vshrl.u32 %v10846, 16
    %v10942 = vrot.slane %v10940, 2
    %v10943 = vshll.u32 %v10846, 16
    %v10945 = vrot.slane %v10943, 3
    %v10946 = vor.u32 %v10942, %v10945
    %v10947 = vsel %vm1034, %v10937, %v10946
    %v10949 = vshrl.u32 %v10847, 16
    %v10951 = vrot.slane %v10949, 2
    %v10952 = vshll.u32 %v10847, 16
    %v10954 = vrot.slane %v10952, 3
    %v10955 = vor.u32 %v10951, %v10954
    %v10956 = vsel %vm1034, %v10946, %v10955
    %v10958 = vshrl.u32 %v10848, 16
    %v10960 = vrot.slane %v10958, 2
    %v10961 = vshll.u32 %v10848, 16
    %v10963 = vrot.slane %v10961, 3
    %v10964 = vor.u32 %v10960, %v10963
    %v10965 = vsel %vm1034, %v10955, %v10964
    %v10967 = vshrl.u32 %v10849, 16
    %v10969 = vrot.slane %v10967, 2
    %v10970 = vshll.u32 %v10849, 16
    %v10972 = vrot.slane %v10970, 3
    %v10973 = vor.u32 %v10969, %v10972
    %v10974 = vsel %vm1034, %v10964, %v10973
    %v10990 = vld [vmem:[#allocation2] sm:$0xe0]
    %v10991 = vsel %vm3071, %v10857, %v10990
    %10992 = vst [vmem:[#allocation2] sm:$0xe0] %v10991
    %10993 = vst [vmem:[#allocation2 + $0x8] sm:$0xff] %v10866
    %10994 = vst [vmem:[#allocation2 + $0x10] sm:$0xff] %v10875
    %10995 = vst [vmem:[#allocation2 + $0x18] sm:$0xff] %v10884
    %10996 = vst [vmem:[#allocation2 + $0x20] sm:$0xff] %v10893
    %10997 = vst [vmem:[#allocation2 + $0x28] sm:$0xff] %v10902
    %10998 = vst [vmem:[#allocation2 + $0x30] sm:$0xff] %v10911
    %10999 = vst [vmem:[#allocation2 + $0x38] sm:$0xff] %v10920
    %11000 = vst [vmem:[#allocation2 + $0x40] sm:$0xff] %v10929
    %11001 = vst [vmem:[#allocation2 + $0x48] sm:$0xff] %v10938
    %11002 = vst [vmem:[#allocation2 + $0x50] sm:$0xff] %v10947
    %11003 = vst [vmem:[#allocation2 + $0x58] sm:$0xff] %v10956
    %11004 = vst [vmem:[#allocation2 + $0x60] sm:$0xff] %v10965
    %11005 = vst [vmem:[#allocation2 + $0x68] sm:$0xff] %v10974
    %v11006 = vld [vmem:[#allocation2 + $0x70] sm:$0x3f]
    %v11007 = vsel %vm3088, %v10973, %v11006
    %11008 = vst [vmem:[#allocation2 + $0x70] sm:$0x3f] %v11007
    %11009 = vst [vmem:[#allocation16] sm:$0xff] %v10808
    %11010 = vst [vmem:[#allocation16 + $0x8] sm:$0xff] %v10809
    %11011 = vst [vmem:[#allocation16 + $0x10] sm:$0xff] %v10810
    %11012 = vst [vmem:[#allocation16 + $0x18] sm:$0xff] %v10811
    %11013 = vst [vmem:[#allocation16 + $0x20] sm:$0xff] %v10812
    %11014 = vst [vmem:[#allocation16 + $0x28] sm:$0xff] %v10813
    %11015 = vst [vmem:[#allocation16 + $0x30] sm:$0xff] %v10814
    %11016 = vst [vmem:[#allocation16 + $0x38] sm:$0xff] %v10815
    %11017 = vst [vmem:[#allocation16 + $0x40] sm:$0xff] %v10816
    %11018 = vst [vmem:[#allocation16 + $0x48] sm:$0xff] %v10817
    %11019 = vst [vmem:[#allocation16 + $0x50] sm:$0xff] %v10818
    %11020 = vst [vmem:[#allocation16 + $0x58] sm:$0xff] %v10819
    %11021 = vst [vmem:[#allocation16 + $0x60] sm:$0xff] %v10820
    %11022 = vst [vmem:[#allocation16 + $0x68] sm:$0xff] %v10821
    %11023 = vst [vmem:[#allocation16 + $0x70] sm:$0xff] %v10822
    %11024 = vst [vmem:[#allocation16 + $0x78] sm:$0xff] %v10823
    %11025 = vst [vmem:[#allocation16 + $0x80] sm:$0xff] %v10824
    %11026 = vst [vmem:[#allocation16 + $0x88] sm:$0xff] %v10825
    %11027 = vst [vmem:[#allocation16 + $0x90] sm:$0xff] %v10826
    %11028 = vst [vmem:[#allocation16 + $0x98] sm:$0xff] %v10827
    %11029 = vst [vmem:[#allocation16 + $0xa0] sm:$0xff] %v10828
    %11030 = vst [vmem:[#allocation16 + $0xa8] sm:$0xff] %v10829
    %11031 = vst [vmem:[#allocation16 + $0xb0] sm:$0xff] %v10830
    %11032 = vst [vmem:[#allocation16 + $0xb8] sm:$0xff] %v10831
    %11033 = vst [vmem:[#allocation16 + $0xc0] sm:$0xff] %v10832
    %11034 = vst [vmem:[#allocation16 + $0xc8] sm:$0xff] %v10833
    %11035 = vst [vmem:[#allocation16 + $0xd0] sm:$0xff] %v10834
    %11036 = vst [vmem:[#allocation16 + $0xd8] sm:$0xff] %v10835
    %v11037 = vld [vmem:[%s10] sm:$0xff]
    %v11038 = vld [vmem:[%s10 + $0x8] sm:$0xff]
    %v11039 = vld [vmem:[%s10 + $0x10] sm:$0xff]
    %v11040 = vld [vmem:[%s10 + $0x18] sm:$0xff]
    %v11041 = vld [vmem:[%s10 + $0x20] sm:$0xff]
    %v11042 = vld [vmem:[%s10 + $0x28] sm:$0xff]
    %v11043 = vld [vmem:[%s10 + $0x30] sm:$0xff]
    %v11044 = vld [vmem:[%s10 + $0x38] sm:$0xff]
    %v11045 = vld [vmem:[%s10 + $0x40] sm:$0xff]
    %v11046 = vld [vmem:[%s10 + $0x48] sm:$0xff]
    %v11047 = vld [vmem:[%s10 + $0x50] sm:$0xff]
    %v11048 = vld [vmem:[%s10 + $0x58] sm:$0xff]
    %v11049 = vld [vmem:[%s10 + $0x60] sm:$0xff]
    %v11050 = vld [vmem:[%s10 + $0x68] sm:$0xff]
    %v11051 = vld [vmem:[%s10 + $0x70] sm:$0xff]
    %v11052 = vld [vmem:[%s10 + $0x78] sm:$0xff]
    %v11053 = vld [vmem:[%s10 + $0x80] sm:$0xff]
    %v11054 = vld [vmem:[%s10 + $0x88] sm:$0xff]
    %v11055 = vld [vmem:[%s10 + $0x90] sm:$0xff]
    %v11056 = vld [vmem:[%s10 + $0x98] sm:$0xff]
    %v11057 = vld [vmem:[%s10 + $0xa0] sm:$0xff]
    %v11058 = vld [vmem:[%s10 + $0xa8] sm:$0xff]
    %v11059 = vld [vmem:[%s10 + $0xb0] sm:$0xff]
    %v11060 = vld [vmem:[%s10 + $0xb8] sm:$0xff]
    %v11061 = vld [vmem:[%s10 + $0xc0] sm:$0xff]
    %v11062 = vld [vmem:[%s10 + $0xc8] sm:$0xff]
    %v11063 = vld [vmem:[%s10 + $0xd0] sm:$0xff]
    %v11064 = vld [vmem:[%s10 + $0xd8] sm:$0xff]
    %v11065 = vld [vmem:[%s10 + $0xe0] sm:$0xff]
    %v11066 = vld [vmem:[%s10 + $0xe8] sm:$0xff]
    %v11067 = vld [vmem:[%s10 + $0xf0] sm:$0xff]
    %v11068 = vld [vmem:[%s10 + $0xf8] sm:$0xff]
    %v11069 = vld [vmem:[%s11] sm:$0xf]
    %v11071 = vlaneseq
    %v11072 = vshrl.u32 %v11071, 7
    %v11073 = vsub.s32 0, %v11072
    %v11074 = vrot.slane %v11069, %v11073
    %v11075 = vlaneseq
    %v11076 = vshrl.u32 %v11075, 7
    %v11077 = vsub.s32 1, %v11076
    %v11078 = vrot.slane %v11069, %v11077
    %v11079 = vlaneseq
    %v11080 = vshrl.u32 %v11079, 7
    %v11081 = vsub.s32 2, %v11080
    %v11082 = vrot.slane %v11069, %v11081
    %v11083 = vlaneseq
    %v11084 = vshrl.u32 %v11083, 7
    %v11085 = vsub.s32 3, %v11084
    %v11086 = vrot.slane %v11069, %v11085
    %v11123 = vunpack.c.l.b16 %v11037
    %v11124 = vunpack.c.h.b16 %v11037
    %v11125 = vunpack.c.l.b16 %v11038
    %v11126 = vunpack.c.h.b16 %v11038
    %v11127 = vunpack.c.l.b16 %v11039
    %v11128 = vunpack.c.h.b16 %v11039
    %v11129 = vunpack.c.l.b16 %v11040
    %v11130 = vunpack.c.h.b16 %v11040
    %v11131 = vunpack.c.l.b16 %v11041
    %v11132 = vunpack.c.h.b16 %v11041
    %v11133 = vunpack.c.l.b16 %v11042
    %v11134 = vunpack.c.h.b16 %v11042
    %v11135 = vunpack.c.l.b16 %v11043
    %v11136 = vunpack.c.h.b16 %v11043
    %v11137 = vunpack.c.l.b16 %v11044
    %v11138 = vunpack.c.h.b16 %v11044
    %v11139 = vunpack.c.l.b16 %v11045
    %v11140 = vunpack.c.h.b16 %v11045
    %v11141 = vunpack.c.l.b16 %v11046
    %v11142 = vunpack.c.h.b16 %v11046
    %v11143 = vunpack.c.l.b16 %v11047
    %v11144 = vunpack.c.h.b16 %v11047
    %v11145 = vunpack.c.l.b16 %v11048
    %v11146 = vunpack.c.h.b16 %v11048
    %v11147 = vunpack.c.l.b16 %v11049
    %v11148 = vunpack.c.h.b16 %v11049
    %v11149 = vunpack.c.l.b16 %v11050
    %v11150 = vunpack.c.h.b16 %v11050
    %v11151 = vunpack.c.l.b16 %v11051
    %v11152 = vunpack.c.h.b16 %v11051
    %v11153 = vunpack.c.l.b16 %v11052
    %v11154 = vunpack.c.h.b16 %v11052
    %v11155 = vunpack.c.l.b16 %v11053
    %v11156 = vunpack.c.h.b16 %v11053
    %v11157 = vunpack.c.l.b16 %v11054
    %v11158 = vunpack.c.h.b16 %v11054
    %v11159 = vunpack.c.l.b16 %v11055
    %v11160 = vunpack.c.h.b16 %v11055
    %v11161 = vunpack.c.l.b16 %v11056
    %v11162 = vunpack.c.h.b16 %v11056
    %v11163 = vunpack.c.l.b16 %v11057
    %v11164 = vunpack.c.h.b16 %v11057
    %v11165 = vunpack.c.l.b16 %v11058
    %v11166 = vunpack.c.h.b16 %v11058
    %v11167 = vunpack.c.l.b16 %v11059
    %v11168 = vunpack.c.h.b16 %v11059
    %v11169 = vunpack.c.l.b16 %v11060
    %v11170 = vunpack.c.h.b16 %v11060
    %v11171 = vunpack.c.l.b16 %v11061
    %v11172 = vunpack.c.h.b16 %v11061
    %v11173 = vunpack.c.l.b16 %v11062
    %v11174 = vunpack.c.h.b16 %v11062
    %v11175 = vunpack.c.l.b16 %v11063
    %v11176 = vunpack.c.h.b16 %v11063
    %v11177 = vunpack.c.l.b16 %v11064
    %v11178 = vunpack.c.h.b16 %v11064
    %v11179 = vunpack.c.l.b16 %v11065
    %v11180 = vunpack.c.h.b16 %v11065
    %v11181 = vunpack.c.l.b16 %v11066
    %v11182 = vunpack.c.h.b16 %v11066
    %v11183 = vunpack.c.l.b16 %v11067
    %v11184 = vunpack.c.h.b16 %v11067
    %v11185 = vunpack.c.l.b16 %v11068
    %v11186 = vunpack.c.h.b16 %v11068
    %v11187 = vpack.c.b16 %v11127, %v11123
    %v11188 = vpack.c.b16 %v11128, %v11124
    %v11189 = vpack.c.b16 %v11129, %v11125
    %v11190 = vpack.c.b16 %v11130, %v11126
    %v11191 = vpack.c.b16 %v11135, %v11131
    %v11192 = vpack.c.b16 %v11136, %v11132
    %v11193 = vpack.c.b16 %v11137, %v11133
    %v11194 = vpack.c.b16 %v11138, %v11134
    %v11195 = vpack.c.b16 %v11143, %v11139
    %v11196 = vpack.c.b16 %v11144, %v11140
    %v11197 = vpack.c.b16 %v11145, %v11141
    %v11198 = vpack.c.b16 %v11146, %v11142
    %v11199 = vpack.c.b16 %v11151, %v11147
    %v11200 = vpack.c.b16 %v11152, %v11148
    %v11201 = vpack.c.b16 %v11153, %v11149
    %v11202 = vpack.c.b16 %v11154, %v11150
    %v11203 = vpack.c.b16 %v11159, %v11155
    %v11204 = vpack.c.b16 %v11160, %v11156
    %v11205 = vpack.c.b16 %v11161, %v11157
    %v11206 = vpack.c.b16 %v11162, %v11158
    %v11207 = vpack.c.b16 %v11167, %v11163
    %v11208 = vpack.c.b16 %v11168, %v11164
    %v11209 = vpack.c.b16 %v11169, %v11165
    %v11210 = vpack.c.b16 %v11170, %v11166
    %v11211 = vpack.c.b16 %v11175, %v11171
    %v11212 = vpack.c.b16 %v11176, %v11172
    %v11213 = vpack.c.b16 %v11177, %v11173
    %v11214 = vpack.c.b16 %v11178, %v11174
    %v11215 = vpack.c.b16 %v11183, %v11179
    %v11216 = vpack.c.b16 %v11184, %v11180
    %v11217 = vpack.c.b16 %v11185, %v11181
    %v11218 = vpack.c.b16 %v11186, %v11182
    %11251 = vmatprep.subr.bf16.mxu0 %v11188
    %11252 = vmatpush1.bf16.msra.mxu0 %v11187
    %11253 = vmatprep.subr.bf16.mxu0 %v11192
    %11254 = vmatpush1.bf16.msra.mxu0 %v11191
    %11255 = vmatprep.subr.bf16.mxu0 %v11196
    %11256 = vmatpush1.bf16.msra.mxu0 %v11195
    %11257 = vmatprep.subr.bf16.mxu0 %v11200
    %11258 = vmatpush1.bf16.msra.mxu0 %v11199
    %11259 = vmatprep.subr.bf16.mxu0 %v11204
    %11260 = vmatpush1.bf16.msra.mxu0 %v11203
    %11261 = vmatprep.subr.bf16.mxu0 %v11208
    %11262 = vmatpush1.bf16.msra.mxu0 %v11207
    %11263 = vmatprep.subr.bf16.mxu0 %v11212
    %11264 = vmatpush1.bf16.msra.mxu0 %v11211
    %11265 = vmatprep.subr.bf16.mxu0 %v11216
    %11266 = vmatpush1.bf16.msra.mxu0 %v11215
    %11267 = vmatprep.subr.bf16.mxu0 0
    %11268 = vmatpush1.bf16.msra.mxu0 0
    %11269 = vmatprep.subr.bf16.mxu0 0
    %11270 = vmatpush1.bf16.msra.mxu0 0
    %11271 = vmatprep.subr.bf16.mxu0 0
    %11272 = vmatpush1.bf16.msra.mxu0 0
    %11273 = vmatprep.subr.bf16.mxu0 0
    %11274 = vmatpush1.bf16.msra.mxu0 0
    %11275 = vmatprep.subr.bf16.mxu0 0
    %11276 = vmatpush1.bf16.msra.mxu0 0
    %11277 = vmatprep.subr.bf16.mxu0 0
    %11278 = vmatpush1.bf16.msra.mxu0 0
    %11279 = vmatprep.subr.bf16.mxu0 0
    %11280 = vmatpush1.bf16.msra.mxu0 0
    %11281 = vmatprep.subr.bf16.mxu0 0
    %11282 = vmatpush1.bf16.msra.mxu0 0
    %11283 = vmatprep.mubr.bf16.mxu0 0
    %11284 = vmatmul.mubr.bf16.gmra.mrb[0].mxu0 %v10836
    %v11285 = vpop.f32.mrb[0].mxu0
    %v11286 = vadd.f32 %v11074, %v11285
    %v11287 = vpop.f32.mrb[0].mxu0
    %v11288 = vadd.f32 %v11078, %v11287
    %v11289 = vpop.f32.mrb[0].mxu0
    %v11290 = vadd.f32 %v11074, %v11289
    %v11291 = vpop.f32.mrb[0].mxu0
    %v11292 = vadd.f32 %v11078, %v11291
    %11293 = vmatprep.mubr.bf16.mxu0 0
    %11294 = vmatmul.mubr.bf16.gmra.mrb[0].mxu0 %v10837
    %v11295 = vpop.f32.mrb[0].mxu0
    %v11296 = vadd.f32 %v11074, %v11295
    %v11297 = vpop.f32.mrb[0].mxu0
    %v11298 = vadd.f32 %v11078, %v11297
    %v11299 = vpop.f32.mrb[0].mxu0
    %v11300 = vadd.f32 %v11074, %v11299
    %v11301 = vpop.f32.mrb[0].mxu0
    %v11302 = vadd.f32 %v11078, %v11301
    %11303 = vmatprep.mubr.bf16.mxu0 0
    %11304 = vmatmul.mubr.bf16.gmra.mrb[0].mxu0 %v10838
    %v11305 = vpop.f32.mrb[0].mxu0
    %v11306 = vadd.f32 %v11074, %v11305
    %v11307 = vpop.f32.mrb[0].mxu0
    %v11308 = vadd.f32 %v11078, %v11307
    %v11309 = vpop.f32.mrb[0].mxu0
    %v11310 = vadd.f32 %v11074, %v11309
    %v11311 = vpop.f32.mrb[0].mxu0
    %v11312 = vadd.f32 %v11078, %v11311
    %11313 = vmatprep.mubr.bf16.mxu0 0
    %11314 = vmatmul.mubr.bf16.gmra.mrb[0].mxu0 %v10839
    %v11315 = vpop.f32.mrb[0].mxu0
    %v11316 = vadd.f32 %v11074, %v11315
    %v11317 = vpop.f32.mrb[0].mxu0
    %v11318 = vadd.f32 %v11078, %v11317
    %v11319 = vpop.f32.mrb[0].mxu0
    %v11320 = vadd.f32 %v11074, %v11319
    %v11321 = vpop.f32.mrb[0].mxu0
    %v11322 = vadd.f32 %v11078, %v11321
    %11323 = vmatprep.mubr.bf16.mxu0 0
    %11324 = vmatmul.mubr.bf16.gmra.mrb[0].mxu0 %v10840
    %v11325 = vpop.f32.mrb[0].mxu0
    %v11326 = vadd.f32 %v11074, %v11325
    %v11327 = vpop.f32.mrb[0].mxu0
    %v11328 = vadd.f32 %v11078, %v11327
    %v11329 = vpop.f32.mrb[0].mxu0
    %v11330 = vadd.f32 %v11074, %v11329
    %v11331 = vpop.f32.mrb[0].mxu0
    %v11332 = vadd.f32 %v11078, %v11331
    %11333 = vmatprep.mubr.bf16.mxu0 0
    %11334 = vmatmul.mubr.bf16.gmra.mrb[0].mxu0 %v10841
    %v11335 = vpop.f32.mrb[0].mxu0
    %v11336 = vadd.f32 %v11074, %v11335
    %v11337 = vpop.f32.mrb[0].mxu0
    %v11338 = vadd.f32 %v11078, %v11337
    %v11339 = vpop.f32.mrb[0].mxu0
    %v11340 = vadd.f32 %v11074, %v11339
    %v11341 = vpop.f32.mrb[0].mxu0
    %v11342 = vadd.f32 %v11078, %v11341
    %11343 = vmatprep.mubr.bf16.mxu0 0
    %11344 = vmatmul.mubr.bf16.gmra.mrb[0].mxu0 %v10842
    %v11345 = vpop.f32.mrb[0].mxu0
    %v11346 = vadd.f32 %v11074, %v11345
    %v11347 = vpop.f32.mrb[0].mxu0
    %v11348 = vadd.f32 %v11078, %v11347
    %v11349 = vpop.f32.mrb[0].mxu0
    %v11350 = vadd.f32 %v11074, %v11349
    %v11351 = vpop.f32.mrb[0].mxu0
    %v11352 = vadd.f32 %v11078, %v11351
    %11353 = vmatprep.mubr.bf16.mxu0 0
    %11354 = vmatmul.mubr.bf16.gmra.mrb[0].mxu0 %v10843
    %v11355 = vpop.f32.mrb[0].mxu0
    %v11356 = vadd.f32 %v11074, %v11355
    %v11357 = vpop.f32.mrb[0].mxu0
    %v11358 = vadd.f32 %v11078, %v11357
    %v11359 = vpop.f32.mrb[0].mxu0
    %v11360 = vadd.f32 %v11074, %v11359
    %v11361 = vpop.f32.mrb[0].mxu0
    %v11362 = vadd.f32 %v11078, %v11361
    %11363 = vmatprep.mubr.bf16.mxu0 0
    %11364 = vmatmul.mubr.bf16.gmra.mrb[0].mxu0 %v10844
    %v11365 = vpop.f32.mrb[0].mxu0
    %v11366 = vadd.f32 %v11074, %v11365
    %v11367 = vpop.f32.mrb[0].mxu0
    %v11368 = vadd.f32 %v11078, %v11367
    %v11369 = vpop.f32.mrb[0].mxu0
    %v11370 = vadd.f32 %v11074, %v11369
    %v11371 = vpop.f32.mrb[0].mxu0
    %v11372 = vadd.f32 %v11078, %v11371
    %11373 = vmatprep.mubr.bf16.mxu0 0
    %11374 = vmatmul.mubr.bf16.gmra.mrb[0].mxu0 %v10845
    %v11375 = vpop.f32.mrb[0].mxu0
    %v11376 = vadd.f32 %v11074, %v11375
    %v11377 = vpop.f32.mrb[0].mxu0
    %v11378 = vadd.f32 %v11078, %v11377
    %v11379 = vpop.f32.mrb[0].mxu0
    %v11380 = vadd.f32 %v11074, %v11379
    %v11381 = vpop.f32.mrb[0].mxu0
    %v11382 = vadd.f32 %v11078, %v11381
    %11383 = vmatprep.mubr.bf16.mxu0 0
    %11384 = vmatmul.mubr.bf16.gmra.mrb[0].mxu0 %v10846
    %v11385 = vpop.f32.mrb[0].mxu0
    %v11386 = vadd.f32 %v11074, %v11385
    %v11387 = vpop.f32.mrb[0].mxu0
    %v11388 = vadd.f32 %v11078, %v11387
    %v11389 = vpop.f32.mrb[0].mxu0
    %v11390 = vadd.f32 %v11074, %v11389
    %v11391 = vpop.f32.mrb[0].mxu0
    %v11392 = vadd.f32 %v11078, %v11391
    %11393 = vmatprep.mubr.bf16.mxu0 0
    %11394 = vmatmul.mubr.bf16.gmra.mrb[0].mxu0 %v10847
    %v11395 = vpop.f32.mrb[0].mxu0
    %v11396 = vadd.f32 %v11074, %v11395
    %v11397 = vpop.f32.mrb[0].mxu0
    %v11398 = vadd.f32 %v11078, %v11397
    %v11399 = vpop.f32.mrb[0].mxu0
    %v11400 = vadd.f32 %v11074, %v11399
    %v11401 = vpop.f32.mrb[0].mxu0
    %v11402 = vadd.f32 %v11078, %v11401
    %11403 = vmatprep.mubr.bf16.mxu0 0
    %11404 = vmatmul.mubr.bf16.gmra.mrb[0].mxu0 %v10848
    %v11405 = vpop.f32.mrb[0].mxu0
    %v11406 = vadd.f32 %v11074, %v11405
    %v11407 = vpop.f32.mrb[0].mxu0
    %v11408 = vadd.f32 %v11078, %v11407
    %v11409 = vpop.f32.mrb[0].mxu0
    %v11410 = vadd.f32 %v11074, %v11409
    %v11411 = vpop.f32.mrb[0].mxu0
    %v11412 = vadd.f32 %v11078, %v11411
    %11413 = vmatprep.mubr.bf16.mxu0 0
    %11414 = vmatmul.mubr.bf16.gmra.mrb[0].mxu0 %v10849
    %v11415 = vpop.f32.mrb[0].mxu0
    %v11416 = vadd.f32 %v11074, %v11415
    %v11417 = vpop.f32.mrb[0].mxu0
    %v11418 = vadd.f32 %v11078, %v11417
    %v11419 = vpop.f32.mrb[0].mxu0
    %v11420 = vadd.f32 %v11074, %v11419
    %v11421 = vpop.f32.mrb[0].mxu0
    %v11422 = vadd.f32 %v11078, %v11421
    %11423 = vdwg.mxu0
    %11424 = vmatprep.subr.bf16.mxu0 %v11190
    %11425 = vmatpush1.bf16.msra.mxu0 %v11189
    %11426 = vmatprep.subr.bf16.mxu0 %v11194
    %11427 = vmatpush1.bf16.msra.mxu0 %v11193
    %11428 = vmatprep.subr.bf16.mxu0 %v11198
    %11429 = vmatpush1.bf16.msra.mxu0 %v11197
    %11430 = vmatprep.subr.bf16.mxu0 %v11202
    %11431 = vmatpush1.bf16.msra.mxu0 %v11201
    %11432 = vmatprep.subr.bf16.mxu0 %v11206
    %11433 = vmatpush1.bf16.msra.mxu0 %v11205
    %11434 = vmatprep.subr.bf16.mxu0 %v11210
    %11435 = vmatpush1.bf16.msra.mxu0 %v11209
    %11436 = vmatprep.subr.bf16.mxu0 %v11214
    %11437 = vmatpush1.bf16.msra.mxu0 %v11213
    %11438 = vmatprep.subr.bf16.mxu0 %v11218
    %11439 = vmatpush1.bf16.msra.mxu0 %v11217
    %11440 = vmatprep.subr.bf16.mxu0 0
    %11441 = vmatpush1.bf16.msra.mxu0 0
    %11442 = vmatprep.subr.bf16.mxu0 0
    %11443 = vmatpush1.bf16.msra.mxu0 0
    %11444 = vmatprep.subr.bf16.mxu0 0
    %11445 = vmatpush1.bf16.msra.mxu0 0
    %11446 = vmatprep.subr.bf16.mxu0 0
    %11447 = vmatpush1.bf16.msra.mxu0 0
    %11448 = vmatprep.subr.bf16.mxu0 0
    %11449 = vmatpush1.bf16.msra.mxu0 0
    %11450 = vmatprep.subr.bf16.mxu0 0
    %11451 = vmatpush1.bf16.msra.mxu0 0
    %11452 = vmatprep.subr.bf16.mxu0 0
    %11453 = vmatpush1.bf16.msra.mxu0 0
    %11454 = vmatprep.subr.bf16.mxu0 0
    %11455 = vmatpush1.bf16.msra.mxu0 0
    %11456 = vmatprep.mubr.bf16.mxu0 0
    %11457 = vmatmul.mubr.bf16.gmra.mrb[0].mxu0 %v10836
    %v11458 = vpop.f32.mrb[0].mxu0
    %v11459 = vadd.f32 %v11082, %v11458
    %v11460 = vpop.f32.mrb[0].mxu0
    %v11461 = vadd.f32 %v11086, %v11460
    %v11462 = vpop.f32.mrb[0].mxu0
    %v11463 = vadd.f32 %v11082, %v11462
    %v11464 = vpop.f32.mrb[0].mxu0
    %v11465 = vadd.f32 %v11086, %v11464
    %11466 = vmatprep.mubr.bf16.mxu0 0
    %11467 = vmatmul.mubr.bf16.gmra.mrb[0].mxu0 %v10837
    %v11468 = vpop.f32.mrb[0].mxu0
    %v11469 = vadd.f32 %v11082, %v11468
    %v11470 = vpop.f32.mrb[0].mxu0
    %v11471 = vadd.f32 %v11086, %v11470
    %v11472 = vpop.f32.mrb[0].mxu0
    %v11473 = vadd.f32 %v11082, %v11472
    %v11474 = vpop.f32.mrb[0].mxu0
    %v11475 = vadd.f32 %v11086, %v11474
    %11476 = vmatprep.mubr.bf16.mxu0 0
    %11477 = vmatmul.mubr.bf16.gmra.mrb[0].mxu0 %v10838
    %v11478 = vpop.f32.mrb[0].mxu0
    %v11479 = vadd.f32 %v11082, %v11478
    %v11480 = vpop.f32.mrb[0].mxu0
    %v11481 = vadd.f32 %v11086, %v11480
    %v11482 = vpop.f32.mrb[0].mxu0
    %v11483 = vadd.f32 %v11082, %v11482
    %v11484 = vpop.f32.mrb[0].mxu0
    %v11485 = vadd.f32 %v11086, %v11484
    %11486 = vmatprep.mubr.bf16.mxu0 0
    %11487 = vmatmul.mubr.bf16.gmra.mrb[0].mxu0 %v10839
    %v11488 = vpop.f32.mrb[0].mxu0
    %v11489 = vadd.f32 %v11082, %v11488
    %v11490 = vpop.f32.mrb[0].mxu0
    %v11491 = vadd.f32 %v11086, %v11490
    %v11492 = vpop.f32.mrb[0].mxu0
    %v11493 = vadd.f32 %v11082, %v11492
    %v11494 = vpop.f32.mrb[0].mxu0
    %v11495 = vadd.f32 %v11086, %v11494
    %11496 = vmatprep.mubr.bf16.mxu0 0
    %11497 = vmatmul.mubr.bf16.gmra.mrb[0].mxu0 %v10840
    %v11498 = vpop.f32.mrb[0].mxu0
    %v11499 = vadd.f32 %v11082, %v11498
    %v11500 = vpop.f32.mrb[0].mxu0
    %v11501 = vadd.f32 %v11086, %v11500
    %v11502 = vpop.f32.mrb[0].mxu0
    %v11503 = vadd.f32 %v11082, %v11502
    %v11504 = vpop.f32.mrb[0].mxu0
    %v11505 = vadd.f32 %v11086, %v11504
    %11506 = vmatprep.mubr.bf16.mxu0 0
    %11507 = vmatmul.mubr.bf16.gmra.mrb[0].mxu0 %v10841
    %v11508 = vpop.f32.mrb[0].mxu0
    %v11509 = vadd.f32 %v11082, %v11508
    %v11510 = vpop.f32.mrb[0].mxu0
    %v11511 = vadd.f32 %v11086, %v11510
    %v11512 = vpop.f32.mrb[0].mxu0
    %v11513 = vadd.f32 %v11082, %v11512
    %v11514 = vpop.f32.mrb[0].mxu0
    %v11515 = vadd.f32 %v11086, %v11514
    %11516 = vmatprep.mubr.bf16.mxu0 0
    %11517 = vmatmul.mubr.bf16.gmra.mrb[0].mxu0 %v10842
    %v11518 = vpop.f32.mrb[0].mxu0
    %v11519 = vadd.f32 %v11082, %v11518
    %v11520 = vpop.f32.mrb[0].mxu0
    %v11521 = vadd.f32 %v11086, %v11520
    %v11522 = vpop.f32.mrb[0].mxu0
    %v11523 = vadd.f32 %v11082, %v11522
    %v11524 = vpop.f32.mrb[0].mxu0
    %v11525 = vadd.f32 %v11086, %v11524
    %11526 = vmatprep.mubr.bf16.mxu0 0
    %11527 = vmatmul.mubr.bf16.gmra.mrb[0].mxu0 %v10843
    %v11528 = vpop.f32.mrb[0].mxu0
    %v11529 = vadd.f32 %v11082, %v11528
    %v11530 = vpop.f32.mrb[0].mxu0
    %v11531 = vadd.f32 %v11086, %v11530
    %v11532 = vpop.f32.mrb[0].mxu0
    %v11533 = vadd.f32 %v11082, %v11532
    %v11534 = vpop.f32.mrb[0].mxu0
    %v11535 = vadd.f32 %v11086, %v11534
    %11536 = vmatprep.mubr.bf16.mxu0 0
    %11537 = vmatmul.mubr.bf16.gmra.mrb[0].mxu0 %v10844
    %v11538 = vpop.f32.mrb[0].mxu0
    %v11539 = vadd.f32 %v11082, %v11538
    %v11540 = vpop.f32.mrb[0].mxu0
    %v11541 = vadd.f32 %v11086, %v11540
    %v11542 = vpop.f32.mrb[0].mxu0
    %v11543 = vadd.f32 %v11082, %v11542
    %v11544 = vpop.f32.mrb[0].mxu0
    %v11545 = vadd.f32 %v11086, %v11544
    %11546 = vmatprep.mubr.bf16.mxu0 0
    %11547 = vmatmul.mubr.bf16.gmra.mrb[0].mxu0 %v10845
    %v11548 = vpop.f32.mrb[0].mxu0
    %v11549 = vadd.f32 %v11082, %v11548
    %v11550 = vpop.f32.mrb[0].mxu0
    %v11551 = vadd.f32 %v11086, %v11550
    %v11552 = vpop.f32.mrb[0].mxu0
    %v11553 = vadd.f32 %v11082, %v11552
    %v11554 = vpop.f32.mrb[0].mxu0
    %v11555 = vadd.f32 %v11086, %v11554
    %11556 = vmatprep.mubr.bf16.mxu0 0
    %11557 = vmatmul.mubr.bf16.gmra.mrb[0].mxu0 %v10846
    %v11558 = vpop.f32.mrb[0].mxu0
    %v11559 = vadd.f32 %v11082, %v11558
    %v11560 = vpop.f32.mrb[0].mxu0
    %v11561 = vadd.f32 %v11086, %v11560
    %v11562 = vpop.f32.mrb[0].mxu0
    %v11563 = vadd.f32 %v11082, %v11562
    %v11564 = vpop.f32.mrb[0].mxu0
    %v11565 = vadd.f32 %v11086, %v11564
    %11566 = vmatprep.mubr.bf16.mxu0 0
    %11567 = vmatmul.mubr.bf16.gmra.mrb[0].mxu0 %v10847
    %v11568 = vpop.f32.mrb[0].mxu0
    %v11569 = vadd.f32 %v11082, %v11568
    %v11570 = vpop.f32.mrb[0].mxu0
    %v11571 = vadd.f32 %v11086, %v11570
    %v11572 = vpop.f32.mrb[0].mxu0
    %v11573 = vadd.f32 %v11082, %v11572
    %v11574 = vpop.f32.mrb[0].mxu0
    %v11575 = vadd.f32 %v11086, %v11574
    %11576 = vmatprep.mubr.bf16.mxu0 0
    %11577 = vmatmul.mubr.bf16.gmra.mrb[0].mxu0 %v10848
    %v11578 = vpop.f32.mrb[0].mxu0
    %v11579 = vadd.f32 %v11082, %v11578
    %v11580 = vpop.f32.mrb[0].mxu0
    %v11581 = vadd.f32 %v11086, %v11580
    %v11582 = vpop.f32.mrb[0].mxu0
    %v11583 = vadd.f32 %v11082, %v11582
    %v11584 = vpop.f32.mrb[0].mxu0
    %v11585 = vadd.f32 %v11086, %v11584
    %11586 = vmatprep.mubr.bf16.mxu0 0
    %11587 = vmatmul.mubr.bf16.gmra.mrb[0].mxu0 %v10849
    %v11588 = vpop.f32.mrb[0].mxu0
    %v11589 = vadd.f32 %v11082, %v11588
    %v11590 = vpop.f32.mrb[0].mxu0
    %v11591 = vadd.f32 %v11086, %v11590
    %v11592 = vpop.f32.mrb[0].mxu0
    %v11593 = vadd.f32 %v11082, %v11592
    %v11594 = vpop.f32.mrb[0].mxu0
    %v11595 = vadd.f32 %v11086, %v11594
    %11596 = vdwg.mxu0
    %v11597 = vmax.f32 %v11286, 0.0
    %v11598 = vmax.f32 %v11288, 0.0
    %v11599 = vmax.f32 %v11459, 0.0
    %v11600 = vmax.f32 %v11461, 0.0
    %v11601 = vmax.f32 %v11290, 0.0
    %v11602 = vmax.f32 %v11292, 0.0
    %v11603 = vmax.f32 %v11463, 0.0
    %v11604 = vmax.f32 %v11465, 0.0
    %v11605 = vmax.f32 %v11296, 0.0
    %v11606 = vmax.f32 %v11298, 0.0
    %v11607 = vmax.f32 %v11469, 0.0
    %v11608 = vmax.f32 %v11471, 0.0
    %v11609 = vmax.f32 %v11300, 0.0
    %v11610 = vmax.f32 %v11302, 0.0
    %v11611 = vmax.f32 %v11473, 0.0
    %v11612 = vmax.f32 %v11475, 0.0
    %v11613 = vmax.f32 %v11306, 0.0
    %v11614 = vmax.f32 %v11308, 0.0
    %v11615 = vmax.f32 %v11479, 0.0
    %v11616 = vmax.f32 %v11481, 0.0
    %v11617 = vmax.f32 %v11310, 0.0
    %v11618 = vmax.f32 %v11312, 0.0
    %v11619 = vmax.f32 %v11483, 0.0
    %v11620 = vmax.f32 %v11485, 0.0
    %v11621 = vmax.f32 %v11316, 0.0
    %v11622 = vmax.f32 %v11318, 0.0
    %v11623 = vmax.f32 %v11489, 0.0
    %v11624 = vmax.f32 %v11491, 0.0
    %v11625 = vmax.f32 %v11320, 0.0
    %v11626 = vmax.f32 %v11322, 0.0
    %v11627 = vmax.f32 %v11493, 0.0
    %v11628 = vmax.f32 %v11495, 0.0
    %v11629 = vmax.f32 %v11326, 0.0
    %v11630 = vmax.f32 %v11328, 0.0
    %v11631 = vmax.f32 %v11499, 0.0
    %v11632 = vmax.f32 %v11501, 0.0
    %v11633 = vmax.f32 %v11330, 0.0
    %v11634 = vmax.f32 %v11332, 0.0
    %v11635 = vmax.f32 %v11503, 0.0
    %v11636 = vmax.f32 %v11505, 0.0
    %v11637 = vmax.f32 %v11336, 0.0
    %v11638 = vmax.f32 %v11338, 0.0
    %v11639 = vmax.f32 %v11509, 0.0
    %v11640 = vmax.f32 %v11511, 0.0
    %v11641 = vmax.f32 %v11340, 0.0
    %v11642 = vmax.f32 %v11342, 0.0
    %v11643 = vmax.f32 %v11513, 0.0
    %v11644 = vmax.f32 %v11515, 0.0
    %v11645 = vmax.f32 %v11346, 0.0
    %v11646 = vmax.f32 %v11348, 0.0
    %v11647 = vmax.f32 %v11519, 0.0
    %v11648 = vmax.f32 %v11521, 0.0
    %v11649 = vmax.f32 %v11350, 0.0
    %v11650 = vmax.f32 %v11352, 0.0
    %v11651 = vmax.f32 %v11523, 0.0
    %v11652 = vmax.f32 %v11525, 0.0
    %v11653 = vmax.f32 %v11356, 0.0
    %v11654 = vmax.f32 %v11358, 0.0
    %v11655 = vmax.f32 %v11529, 0.0
    %v11656 = vmax.f32 %v11531, 0.0
    %v11657 = vmax.f32 %v11360, 0.0
    %v11658 = vmax.f32 %v11362, 0.0
    %v11659 = vmax.f32 %v11533, 0.0
    %v11660 = vmax.f32 %v11535, 0.0
    %v11661 = vmax.f32 %v11366, 0.0
    %v11662 = vmax.f32 %v11368, 0.0
    %v11663 = vmax.f32 %v11539, 0.0
    %v11664 = vmax.f32 %v11541, 0.0
    %v11665 = vmax.f32 %v11370, 0.0
    %v11666 = vmax.f32 %v11372, 0.0
    %v11667 = vmax.f32 %v11543, 0.0
    %v11668 = vmax.f32 %v11545, 0.0
    %v11669 = vmax.f32 %v11376, 0.0
    %v11670 = vmax.f32 %v11378, 0.0
    %v11671 = vmax.f32 %v11549, 0.0
    %v11672 = vmax.f32 %v11551, 0.0
    %v11673 = vmax.f32 %v11380, 0.0
    %v11674 = vmax.f32 %v11382, 0.0
    %v11675 = vmax.f32 %v11553, 0.0
    %v11676 = vmax.f32 %v11555, 0.0
    %v11677 = vmax.f32 %v11386, 0.0
    %v11678 = vmax.f32 %v11388, 0.0
    %v11679 = vmax.f32 %v11559, 0.0
    %v11680 = vmax.f32 %v11561, 0.0
    %v11681 = vmax.f32 %v11390, 0.0
    %v11682 = vmax.f32 %v11392, 0.0
    %v11683 = vmax.f32 %v11563, 0.0
    %v11684 = vmax.f32 %v11565, 0.0
    %v11685 = vmax.f32 %v11396, 0.0
    %v11686 = vmax.f32 %v11398, 0.0
    %v11687 = vmax.f32 %v11569, 0.0
    %v11688 = vmax.f32 %v11571, 0.0
    %v11689 = vmax.f32 %v11400, 0.0
    %v11690 = vmax.f32 %v11402, 0.0
    %v11691 = vmax.f32 %v11573, 0.0
    %v11692 = vmax.f32 %v11575, 0.0
    %v11693 = vmax.f32 %v11406, 0.0
    %v11694 = vmax.f32 %v11408, 0.0
    %v11695 = vmax.f32 %v11579, 0.0
    %v11696 = vmax.f32 %v11581, 0.0
    %v11697 = vmax.f32 %v11410, 0.0
    %v11698 = vmax.f32 %v11412, 0.0
    %v11699 = vmax.f32 %v11583, 0.0
    %v11700 = vmax.f32 %v11585, 0.0
    %v11701 = vmax.f32 %v11416, 0.0
    %v11702 = vmax.f32 %v11418, 0.0
    %v11703 = vmax.f32 %v11589, 0.0
    %v11704 = vmax.f32 %v11591, 0.0
    %v11705 = vmax.f32 %v11420, 0.0
    %v11706 = vmax.f32 %v11422, 0.0
    %v11707 = vmax.f32 %v11593, 0.0
    %v11708 = vmax.f32 %v11595, 0.0
    %v11709 = vpack.c.bf16 %v11601, %v11597
    %v11710 = vpack.c.bf16 %v11602, %v11598
    %v11711 = vpack.c.bf16 %v11603, %v11599
    %v11712 = vpack.c.bf16 %v11604, %v11600
    %v11713 = vpack.c.bf16 %v11609, %v11605
    %v11714 = vpack.c.bf16 %v11610, %v11606
    %v11715 = vpack.c.bf16 %v11611, %v11607
    %v11716 = vpack.c.bf16 %v11612, %v11608
    %v11717 = vpack.c.bf16 %v11617, %v11613
    %v11718 = vpack.c.bf16 %v11618, %v11614
    %v11719 = vpack.c.bf16 %v11619, %v11615
    %v11720 = vpack.c.bf16 %v11620, %v11616
    %v11721 = vpack.c.bf16 %v11625, %v11621
    %v11722 = vpack.c.bf16 %v11626, %v11622
    %v11723 = vpack.c.bf16 %v11627, %v11623
    %v11724 = vpack.c.bf16 %v11628, %v11624
    %v11725 = vpack.c.bf16 %v11633, %v11629
    %v11726 = vpack.c.bf16 %v11634, %v11630
    %v11727 = vpack.c.bf16 %v11635, %v11631
    %v11728 = vpack.c.bf16 %v11636, %v11632
    %v11729 = vpack.c.bf16 %v11641, %v11637
    %v11730 = vpack.c.bf16 %v11642, %v11638
    %v11731 = vpack.c.bf16 %v11643, %v11639
    %v11732 = vpack.c.bf16 %v11644, %v11640
    %v11733 = vpack.c.bf16 %v11649, %v11645
    %v11734 = vpack.c.bf16 %v11650, %v11646
    %v11735 = vpack.c.bf16 %v11651, %v11647
    %v11736 = vpack.c.bf16 %v11652, %v11648
    %v11737 = vpack.c.bf16 %v11657, %v11653
    %v11738 = vpack.c.bf16 %v11658, %v11654
    %v11739 = vpack.c.bf16 %v11659, %v11655
    %v11740 = vpack.c.bf16 %v11660, %v11656
    %v11741 = vpack.c.bf16 %v11665, %v11661
    %v11742 = vpack.c.bf16 %v11666, %v11662
    %v11743 = vpack.c.bf16 %v11667, %v11663
    %v11744 = vpack.c.bf16 %v11668, %v11664
    %v11745 = vpack.c.bf16 %v11673, %v11669
    %v11746 = vpack.c.bf16 %v11674, %v11670
    %v11747 = vpack.c.bf16 %v11675, %v11671
    %v11748 = vpack.c.bf16 %v11676, %v11672
    %v11749 = vpack.c.bf16 %v11681, %v11677
    %v11750 = vpack.c.bf16 %v11682, %v11678
    %v11751 = vpack.c.bf16 %v11683, %v11679
    %v11752 = vpack.c.bf16 %v11684, %v11680
    %v11753 = vpack.c.bf16 %v11689, %v11685
    %v11754 = vpack.c.bf16 %v11690, %v11686
    %v11755 = vpack.c.bf16 %v11691, %v11687
    %v11756 = vpack.c.bf16 %v11692, %v11688
    %v11757 = vpack.c.bf16 %v11697, %v11693
    %v11758 = vpack.c.bf16 %v11698, %v11694
    %v11759 = vpack.c.bf16 %v11699, %v11695
    %v11760 = vpack.c.bf16 %v11700, %v11696
    %v11761 = vpack.c.bf16 %v11705, %v11701
    %v11762 = vpack.c.bf16 %v11706, %v11702
    %v11763 = vpack.c.bf16 %v11707, %v11703
    %v11764 = vpack.c.bf16 %v11708, %v11704
    %v11765 = vld [vmem:[#allocation15] sm:$0xf]
    %v11766 = vld [vmem:[#allocation15 + $0x4] sm:$0xf]
    %v11767 = vld [vmem:[#allocation15 + $0x8] sm:$0xf]
    %v11768 = vld [vmem:[#allocation15 + $0xc] sm:$0xf]
    %v11769 = vld [vmem:[#allocation15 + $0x10] sm:$0xf]
    %v11770 = vld [vmem:[#allocation15 + $0x14] sm:$0xf]
    %v11771 = vld [vmem:[#allocation15 + $0x18] sm:$0xf]
    %v11772 = vld [vmem:[#allocation15 + $0x1c] sm:$0xf]
    %v11773 = vld [vmem:[#allocation15 + $0x20] sm:$0xf]
    %v11774 = vld [vmem:[#allocation15 + $0x24] sm:$0xf]
    %v11775 = vld [vmem:[#allocation15 + $0x28] sm:$0xf]
    %v11776 = vld [vmem:[#allocation15 + $0x2c] sm:$0xf]
    %v11777 = vld [vmem:[#allocation15 + $0x30] sm:$0xf]
    %v11778 = vld [vmem:[#allocation15 + $0x34] sm:$0xf]
    %v11779 = vld [vmem:[#allocation15 + $0x38] sm:$0xf]
    %v11780 = vld [vmem:[#allocation15 + $0x3c] sm:$0xf]
    %v11781 = vld [vmem:[%s13] sm:$0x1]
    %v11783 = vlaneseq
    %v11784 = vshrl.u32 %v11783, 7
    %v11785 = vsub.s32 0, %v11784
    %v11786 = vrot.slane %v11781, %v11785
    %v11804 = vunpack.c.l.b16 %v11765
    %v11805 = vunpack.c.l.b16 %v11766
    %v11806 = vunpack.c.l.b16 %v11767
    %v11807 = vunpack.c.l.b16 %v11768
    %v11808 = vunpack.c.l.b16 %v11769
    %v11809 = vunpack.c.l.b16 %v11770
    %v11810 = vunpack.c.l.b16 %v11771
    %v11811 = vunpack.c.l.b16 %v11772
    %v11812 = vunpack.c.l.b16 %v11773
    %v11813 = vunpack.c.l.b16 %v11774
    %v11814 = vunpack.c.l.b16 %v11775
    %v11815 = vunpack.c.l.b16 %v11776
    %v11816 = vunpack.c.l.b16 %v11777
    %v11817 = vunpack.c.l.b16 %v11778
    %v11818 = vunpack.c.l.b16 %v11779
    %v11819 = vunpack.c.l.b16 %v11780
    %v11820 = vpack.c.b16 %v11805, %v11804
    %v11821 = vpack.c.b16 %v11807, %v11806
    %v11822 = vpack.c.b16 %v11809, %v11808
    %v11823 = vpack.c.b16 %v11811, %v11810
    %v11824 = vpack.c.b16 %v11813, %v11812
    %v11825 = vpack.c.b16 %v11815, %v11814
    %v11826 = vpack.c.b16 %v11817, %v11816
    %v11827 = vpack.c.b16 %v11819, %v11818
    %11836 = vmatprep.subr.bf16.mxu0 0
    %11837 = vmatpush1.bf16.msra.mxu0 %v11820
    %11838 = vmatprep.subr.bf16.mxu0 0
    %11839 = vmatpush1.bf16.msra.mxu0 %v11821
    %11840 = vmatprep.subr.bf16.mxu0 0
    %11841 = vmatpush1.bf16.msra.mxu0 %v11822
    %11842 = vmatprep.subr.bf16.mxu0 0
    %11843 = vmatpush1.bf16.msra.mxu0 %v11823
    %11844 = vmatprep.subr.bf16.mxu0 0
    %11845 = vmatpush1.bf16.msra.mxu0 %v11824
    %11846 = vmatprep.subr.bf16.mxu0 0
    %11847 = vmatpush1.bf16.msra.mxu0 %v11825
    %11848 = vmatprep.subr.bf16.mxu0 0
    %11849 = vmatpush1.bf16.msra.mxu0 %v11826
    %11850 = vmatprep.subr.bf16.mxu0 0
    %11851 = vmatpush1.bf16.msra.mxu0 %v11827
    %11852 = vmatprep.subr.bf16.mxu0 0
    %11853 = vmatpush1.bf16.msra.mxu0 0
    %11854 = vmatprep.subr.bf16.mxu0 0
    %11855 = vmatpush1.bf16.msra.mxu0 0
    %11856 = vmatprep.subr.bf16.mxu0 0
    %11857 = vmatpush1.bf16.msra.mxu0 0
    %11858 = vmatprep.subr.bf16.mxu0 0
    %11859 = vmatpush1.bf16.msra.mxu0 0
    %11860 = vmatprep.subr.bf16.mxu0 0
    %11861 = vmatpush1.bf16.msra.mxu0 0
    %11862 = vmatprep.subr.bf16.mxu0 0
    %11863 = vmatpush1.bf16.msra.mxu0 0
    %11864 = vmatprep.subr.bf16.mxu0 0
    %11865 = vmatpush1.bf16.msra.mxu0 0
    %11866 = vmatprep.subr.bf16.mxu0 0
    %11867 = vmatpush1.bf16.msra.mxu0 0
    %11868 = vmatprep.mubr.bf16.mxu0 0
    %11869 = vmatmul.mubr.bf16.gmra.mrb[0].mxu0 %v11709
    %v11870 = vpop.f32.mrb[0].mxu0
    %v11871 = vadd.f32 %v11786, %v11870
    %v11872 = vpop.f32.mrb[0].mxu0
    %v11873 = vpop.f32.mrb[0].mxu0
    %v11874 = vadd.f32 %v11786, %v11873
    %v11875 = vpop.f32.mrb[0].mxu0
    %11876 = vmatprep.mubr.bf16.mxu0 0
    %11877 = vmatmul.mubr.bf16.gmra.mrb[0].mxu0 %v11713
    %v11878 = vpop.f32.mrb[0].mxu0
    %v11879 = vadd.f32 %v11786, %v11878
    %v11880 = vpop.f32.mrb[0].mxu0
    %v11881 = vpop.f32.mrb[0].mxu0
    %v11882 = vadd.f32 %v11786, %v11881
    %v11883 = vpop.f32.mrb[0].mxu0
    %11884 = vmatprep.mubr.bf16.mxu0 0
    %11885 = vmatmul.mubr.bf16.gmra.mrb[0].mxu0 %v11717
    %v11886 = vpop.f32.mrb[0].mxu0
    %v11887 = vadd.f32 %v11786, %v11886
    %v11888 = vpop.f32.mrb[0].mxu0
    %v11889 = vpop.f32.mrb[0].mxu0
    %v11890 = vadd.f32 %v11786, %v11889
    %v11891 = vpop.f32.mrb[0].mxu0
    %11892 = vmatprep.mubr.bf16.mxu0 0
    %11893 = vmatmul.mubr.bf16.gmra.mrb[0].mxu0 %v11721
    %v11894 = vpop.f32.mrb[0].mxu0
    %v11895 = vadd.f32 %v11786, %v11894
    %v11896 = vpop.f32.mrb[0].mxu0
    %v11897 = vpop.f32.mrb[0].mxu0
    %v11898 = vadd.f32 %v11786, %v11897
    %v11899 = vpop.f32.mrb[0].mxu0
    %11900 = vmatprep.mubr.bf16.mxu0 0
    %11901 = vmatmul.mubr.bf16.gmra.mrb[0].mxu0 %v11725
    %v11902 = vpop.f32.mrb[0].mxu0
    %v11903 = vadd.f32 %v11786, %v11902
    %v11904 = vpop.f32.mrb[0].mxu0
    %v11905 = vpop.f32.mrb[0].mxu0
    %v11906 = vadd.f32 %v11786, %v11905
    %v11907 = vpop.f32.mrb[0].mxu0
    %11908 = vmatprep.mubr.bf16.mxu0 0
    %11909 = vmatmul.mubr.bf16.gmra.mrb[0].mxu0 %v11729
    %v11910 = vpop.f32.mrb[0].mxu0
    %v11911 = vadd.f32 %v11786, %v11910
    %v11912 = vpop.f32.mrb[0].mxu0
    %v11913 = vpop.f32.mrb[0].mxu0
    %v11914 = vadd.f32 %v11786, %v11913
    %v11915 = vpop.f32.mrb[0].mxu0
    %11916 = vmatprep.mubr.bf16.mxu0 0
    %11917 = vmatmul.mubr.bf16.gmra.mrb[0].mxu0 %v11733
    %v11918 = vpop.f32.mrb[0].mxu0
    %v11919 = vadd.f32 %v11786, %v11918
    %v11920 = vpop.f32.mrb[0].mxu0
    %v11921 = vpop.f32.mrb[0].mxu0
    %v11922 = vadd.f32 %v11786, %v11921
    %v11923 = vpop.f32.mrb[0].mxu0
    %11924 = vmatprep.mubr.bf16.mxu0 0
    %11925 = vmatmul.mubr.bf16.gmra.mrb[0].mxu0 %v11737
    %v11926 = vpop.f32.mrb[0].mxu0
    %v11927 = vadd.f32 %v11786, %v11926
    %v11928 = vpop.f32.mrb[0].mxu0
    %v11929 = vpop.f32.mrb[0].mxu0
    %v11930 = vadd.f32 %v11786, %v11929
    %v11931 = vpop.f32.mrb[0].mxu0
    %11932 = vmatprep.mubr.bf16.mxu0 0
    %11933 = vmatmul.mubr.bf16.gmra.mrb[0].mxu0 %v11741
    %v11934 = vpop.f32.mrb[0].mxu0
    %v11935 = vadd.f32 %v11786, %v11934
    %v11936 = vpop.f32.mrb[0].mxu0
    %v11937 = vpop.f32.mrb[0].mxu0
    %v11938 = vadd.f32 %v11786, %v11937
    %v11939 = vpop.f32.mrb[0].mxu0
    %11940 = vmatprep.mubr.bf16.mxu0 0
    %11941 = vmatmul.mubr.bf16.gmra.mrb[0].mxu0 %v11745
    %v11942 = vpop.f32.mrb[0].mxu0
    %v11943 = vadd.f32 %v11786, %v11942
    %v11944 = vpop.f32.mrb[0].mxu0
    %v11945 = vpop.f32.mrb[0].mxu0
    %v11946 = vadd.f32 %v11786, %v11945
    %v11947 = vpop.f32.mrb[0].mxu0
    %11948 = vmatprep.mubr.bf16.mxu0 0
    %11949 = vmatmul.mubr.bf16.gmra.mrb[0].mxu0 %v11749
    %v11950 = vpop.f32.mrb[0].mxu0
    %v11951 = vadd.f32 %v11786, %v11950
    %v11952 = vpop.f32.mrb[0].mxu0
    %v11953 = vpop.f32.mrb[0].mxu0
    %v11954 = vadd.f32 %v11786, %v11953
    %v11955 = vpop.f32.mrb[0].mxu0
    %11956 = vmatprep.mubr.bf16.mxu0 0
    %11957 = vmatmul.mubr.bf16.gmra.mrb[0].mxu0 %v11753
    %v11958 = vpop.f32.mrb[0].mxu0
    %v11959 = vadd.f32 %v11786, %v11958
    %v11960 = vpop.f32.mrb[0].mxu0
    %v11961 = vpop.f32.mrb[0].mxu0
    %v11962 = vadd.f32 %v11786, %v11961
    %v11963 = vpop.f32.mrb[0].mxu0
    %11964 = vmatprep.mubr.bf16.mxu0 0
    %11965 = vmatmul.mubr.bf16.gmra.mrb[0].mxu0 %v11757
    %v11966 = vpop.f32.mrb[0].mxu0
    %v11967 = vadd.f32 %v11786, %v11966
    %v11968 = vpop.f32.mrb[0].mxu0
    %v11969 = vpop.f32.mrb[0].mxu0
    %v11970 = vadd.f32 %v11786, %v11969
    %v11971 = vpop.f32.mrb[0].mxu0
    %11972 = vmatprep.mubr.bf16.mxu0 0
    %11973 = vmatmul.mubr.bf16.gmra.mrb[0].mxu0 %v11761
    %v11974 = vpop.f32.mrb[0].mxu0
    %v11975 = vadd.f32 %v11786, %v11974
    %v11976 = vpop.f32.mrb[0].mxu0
    %v11977 = vpop.f32.mrb[0].mxu0
    %v11978 = vadd.f32 %v11786, %v11977
    %v11979 = vpop.f32.mrb[0].mxu0
    %11980 = vdwg.mxu0
    %11981 = vst [vmem:[#allocation17] sm:$0xff] %v11871
    %11982 = vst [vmem:[#allocation17 + $0x20] sm:$0xff] %v11874
    %11983 = vst [vmem:[#allocation17 + $0x40] sm:$0xff] %v11879
    %11984 = vst [vmem:[#allocation17 + $0x60] sm:$0xff] %v11882
    %11985 = vst [vmem:[#allocation17 + $0x80] sm:$0xff] %v11887
    %11986 = vst [vmem:[#allocation17 + $0xa0] sm:$0xff] %v11890
    %11987 = vst [vmem:[#allocation17 + $0xc0] sm:$0xff] %v11895
    %11988 = vst [vmem:[#allocation17 + $0xe0] sm:$0xff] %v11898
    %11989 = vst [vmem:[#allocation17 + $0x100] sm:$0xff] %v11903
    %11990 = vst [vmem:[#allocation17 + $0x120] sm:$0xff] %v11906
    %11991 = vst [vmem:[#allocation17 + $0x140] sm:$0xff] %v11911
    %11992 = vst [vmem:[#allocation17 + $0x160] sm:$0xff] %v11914
    %11993 = vst [vmem:[#allocation17 + $0x180] sm:$0xff] %v11919
    %11994 = vst [vmem:[#allocation17 + $0x1a0] sm:$0xff] %v11922
    %11995 = vst [vmem:[#allocation17 + $0x1c0] sm:$0xff] %v11927
    %11996 = vst [vmem:[#allocation17 + $0x1e0] sm:$0xff] %v11930
    %11997 = vst [vmem:[#allocation17 + $0x200] sm:$0xff] %v11935
    %11998 = vst [vmem:[#allocation17 + $0x220] sm:$0xff] %v11938
    %11999 = vst [vmem:[#allocation17 + $0x240] sm:$0xff] %v11943
    %12000 = vst [vmem:[#allocation17 + $0x260] sm:$0xff] %v11946
    %12001 = vst [vmem:[#allocation17 + $0x280] sm:$0xff] %v11951
    %12002 = vst [vmem:[#allocation17 + $0x2a0] sm:$0xff] %v11954
    %12003 = vst [vmem:[#allocation17 + $0x2c0] sm:$0xff] %v11959
    %12004 = vst [vmem:[#allocation17 + $0x2e0] sm:$0xff] %v11962
    %12005 = vst [vmem:[#allocation17 + $0x300] sm:$0xff] %v11967
    %12006 = vst [vmem:[#allocation17 + $0x320] sm:$0xff] %v11970
    %12007 = vst [vmem:[#allocation17 + $0x340] sm:$0xff] %v11975
    %12008 = vst [vmem:[#allocation17 + $0x360] sm:$0xff] %v11978
    %12009 = vmatprep.subr.bf16.mxu0 0
    %12010 = vmatpush1.bf16.msra.mxu0 %v11820
    %12011 = vmatprep.subr.bf16.mxu0 0
    %12012 = vmatpush1.bf16.msra.mxu0 %v11821
    %12013 = vmatprep.subr.bf16.mxu0 0
    %12014 = vmatpush1.bf16.msra.mxu0 %v11822
    %12015 = vmatprep.subr.bf16.mxu0 0
    %12016 = vmatpush1.bf16.msra.mxu0 %v11823
    %12017 = vmatprep.subr.bf16.mxu0 0
    %12018 = vmatpush1.bf16.msra.mxu0 %v11824
    %12019 = vmatprep.subr.bf16.mxu0 0
    %12020 = vmatpush1.bf16.msra.mxu0 %v11825
    %12021 = vmatprep.subr.bf16.mxu0 0
    %12022 = vmatpush1.bf16.msra.mxu0 %v11826
    %12023 = vmatprep.subr.bf16.mxu0 0
    %12024 = vmatpush1.bf16.msra.mxu0 %v11827
    %12025 = vmatprep.subr.bf16.mxu0 0
    %12026 = vmatpush1.bf16.msra.mxu0 0
    %12027 = vmatprep.subr.bf16.mxu0 0
    %12028 = vmatpush1.bf16.msra.mxu0 0
    %12029 = vmatprep.subr.bf16.mxu0 0
    %12030 = vmatpush1.bf16.msra.mxu0 0
    %12031 = vmatprep.subr.bf16.mxu0 0
    %12032 = vmatpush1.bf16.msra.mxu0 0
    %12033 = vmatprep.subr.bf16.mxu0 0
    %12034 = vmatpush1.bf16.msra.mxu0 0
    %12035 = vmatprep.subr.bf16.mxu0 0
    %12036 = vmatpush1.bf16.msra.mxu0 0
    %12037 = vmatprep.subr.bf16.mxu0 0
    %12038 = vmatpush1.bf16.msra.mxu0 0
    %12039 = vmatprep.subr.bf16.mxu0 0
    %12040 = vmatpush1.bf16.msra.mxu0 0
    %12041 = vmatprep.mubr.bf16.mxu0 0
    %12042 = vmatmul.mubr.bf16.gmra.mrb[0].mxu0 %v11710
    %v12043 = vpop.f32.mrb[0].mxu0
    %v12044 = vadd.f32 %v11786, %v12043
    %v12045 = vpop.f32.mrb[0].mxu0
    %v12046 = vpop.f32.mrb[0].mxu0
    %v12047 = vadd.f32 %v11786, %v12046
    %v12048 = vpop.f32.mrb[0].mxu0
    %12049 = vmatprep.mubr.bf16.mxu0 0
    %12050 = vmatmul.mubr.bf16.gmra.mrb[0].mxu0 %v11714
    %v12051 = vpop.f32.mrb[0].mxu0
    %v12052 = vadd.f32 %v11786, %v12051
    %v12053 = vpop.f32.mrb[0].mxu0
    %v12054 = vpop.f32.mrb[0].mxu0
    %v12055 = vadd.f32 %v11786, %v12054
    %v12056 = vpop.f32.mrb[0].mxu0
    %12057 = vmatprep.mubr.bf16.mxu0 0
    %12058 = vmatmul.mubr.bf16.gmra.mrb[0].mxu0 %v11718
    %v12059 = vpop.f32.mrb[0].mxu0
    %v12060 = vadd.f32 %v11786, %v12059
    %v12061 = vpop.f32.mrb[0].mxu0
    %v12062 = vpop.f32.mrb[0].mxu0
    %v12063 = vadd.f32 %v11786, %v12062
    %v12064 = vpop.f32.mrb[0].mxu0
    %12065 = vmatprep.mubr.bf16.mxu0 0
    %12066 = vmatmul.mubr.bf16.gmra.mrb[0].mxu0 %v11722
    %v12067 = vpop.f32.mrb[0].mxu0
    %v12068 = vadd.f32 %v11786, %v12067
    %v12069 = vpop.f32.mrb[0].mxu0
    %v12070 = vpop.f32.mrb[0].mxu0
    %v12071 = vadd.f32 %v11786, %v12070
    %v12072 = vpop.f32.mrb[0].mxu0
    %12073 = vmatprep.mubr.bf16.mxu0 0
    %12074 = vmatmul.mubr.bf16.gmra.mrb[0].mxu0 %v11726
    %v12075 = vpop.f32.mrb[0].mxu0
    %v12076 = vadd.f32 %v11786, %v12075
    %v12077 = vpop.f32.mrb[0].mxu0
    %v12078 = vpop.f32.mrb[0].mxu0
    %v12079 = vadd.f32 %v11786, %v12078
    %v12080 = vpop.f32.mrb[0].mxu0
    %12081 = vmatprep.mubr.bf16.mxu0 0
    %12082 = vmatmul.mubr.bf16.gmra.mrb[0].mxu0 %v11730
    %v12083 = vpop.f32.mrb[0].mxu0
    %v12084 = vadd.f32 %v11786, %v12083
    %v12085 = vpop.f32.mrb[0].mxu0
    %v12086 = vpop.f32.mrb[0].mxu0
    %v12087 = vadd.f32 %v11786, %v12086
    %v12088 = vpop.f32.mrb[0].mxu0
    %12089 = vmatprep.mubr.bf16.mxu0 0
    %12090 = vmatmul.mubr.bf16.gmra.mrb[0].mxu0 %v11734
    %v12091 = vpop.f32.mrb[0].mxu0
    %v12092 = vadd.f32 %v11786, %v12091
    %v12093 = vpop.f32.mrb[0].mxu0
    %v12094 = vpop.f32.mrb[0].mxu0
    %v12095 = vadd.f32 %v11786, %v12094
    %v12096 = vpop.f32.mrb[0].mxu0
    %12097 = vmatprep.mubr.bf16.mxu0 0
    %12098 = vmatmul.mubr.bf16.gmra.mrb[0].mxu0 %v11738
    %v12099 = vpop.f32.mrb[0].mxu0
    %v12100 = vadd.f32 %v11786, %v12099
    %v12101 = vpop.f32.mrb[0].mxu0
    %v12102 = vpop.f32.mrb[0].mxu0
    %v12103 = vadd.f32 %v11786, %v12102
    %v12104 = vpop.f32.mrb[0].mxu0
    %12105 = vmatprep.mubr.bf16.mxu0 0
    %12106 = vmatmul.mubr.bf16.gmra.mrb[0].mxu0 %v11742
    %v12107 = vpop.f32.mrb[0].mxu0
    %v12108 = vadd.f32 %v11786, %v12107
    %v12109 = vpop.f32.mrb[0].mxu0
    %v12110 = vpop.f32.mrb[0].mxu0
    %v12111 = vadd.f32 %v11786, %v12110
    %v12112 = vpop.f32.mrb[0].mxu0
    %12113 = vmatprep.mubr.bf16.mxu0 0
    %12114 = vmatmul.mubr.bf16.gmra.mrb[0].mxu0 %v11746
    %v12115 = vpop.f32.mrb[0].mxu0
    %v12116 = vadd.f32 %v11786, %v12115
    %v12117 = vpop.f32.mrb[0].mxu0
    %v12118 = vpop.f32.mrb[0].mxu0
    %v12119 = vadd.f32 %v11786, %v12118
    %v12120 = vpop.f32.mrb[0].mxu0
    %12121 = vmatprep.mubr.bf16.mxu0 0
    %12122 = vmatmul.mubr.bf16.gmra.mrb[0].mxu0 %v11750
    %v12123 = vpop.f32.mrb[0].mxu0
    %v12124 = vadd.f32 %v11786, %v12123
    %v12125 = vpop.f32.mrb[0].mxu0
    %v12126 = vpop.f32.mrb[0].mxu0
    %v12127 = vadd.f32 %v11786, %v12126
    %v12128 = vpop.f32.mrb[0].mxu0
    %12129 = vmatprep.mubr.bf16.mxu0 0
    %12130 = vmatmul.mubr.bf16.gmra.mrb[0].mxu0 %v11754
    %v12131 = vpop.f32.mrb[0].mxu0
    %v12132 = vadd.f32 %v11786, %v12131
    %v12133 = vpop.f32.mrb[0].mxu0
    %v12134 = vpop.f32.mrb[0].mxu0
    %v12135 = vadd.f32 %v11786, %v12134
    %v12136 = vpop.f32.mrb[0].mxu0
    %12137 = vmatprep.mubr.bf16.mxu0 0
    %12138 = vmatmul.mubr.bf16.gmra.mrb[0].mxu0 %v11758
    %v12139 = vpop.f32.mrb[0].mxu0
    %v12140 = vadd.f32 %v11786, %v12139
    %v12141 = vpop.f32.mrb[0].mxu0
    %v12142 = vpop.f32.mrb[0].mxu0
    %v12143 = vadd.f32 %v11786, %v12142
    %v12144 = vpop.f32.mrb[0].mxu0
    %12145 = vmatprep.mubr.bf16.mxu0 0
    %12146 = vmatmul.mubr.bf16.gmra.mrb[0].mxu0 %v11762
    %v12147 = vpop.f32.mrb[0].mxu0
    %v12148 = vadd.f32 %v11786, %v12147
    %v12149 = vpop.f32.mrb[0].mxu0
    %v12150 = vpop.f32.mrb[0].mxu0
    %v12151 = vadd.f32 %v11786, %v12150
    %v12152 = vpop.f32.mrb[0].mxu0
    %12153 = vdwg.mxu0
    %12154 = vst [vmem:[#allocation17 + $0x8] sm:$0xff] %v12044
    %12155 = vst [vmem:[#allocation17 + $0x28] sm:$0xff] %v12047
    %12156 = vst [vmem:[#allocation17 + $0x48] sm:$0xff] %v12052
    %12157 = vst [vmem:[#allocation17 + $0x68] sm:$0xff] %v12055
    %12158 = vst [vmem:[#allocation17 + $0x88] sm:$0xff] %v12060
    %12159 = vst [vmem:[#allocation17 + $0xa8] sm:$0xff] %v12063
    %12160 = vst [vmem:[#allocation17 + $0xc8] sm:$0xff] %v12068
    %12161 = vst [vmem:[#allocation17 + $0xe8] sm:$0xff] %v12071
    %12162 = vst [vmem:[#allocation17 + $0x108] sm:$0xff] %v12076
    %12163 = vst [vmem:[#allocation17 + $0x128] sm:$0xff] %v12079
    %12164 = vst [vmem:[#allocation17 + $0x148] sm:$0xff] %v12084
    %12165 = vst [vmem:[#allocation17 + $0x168] sm:$0xff] %v12087
    %12166 = vst [vmem:[#allocation17 + $0x188] sm:$0xff] %v12092
    %12167 = vst [vmem:[#allocation17 + $0x1a8] sm:$0xff] %v12095
    %12168 = vst [vmem:[#allocation17 + $0x1c8] sm:$0xff] %v12100
    %12169 = vst [vmem:[#allocation17 + $0x1e8] sm:$0xff] %v12103
    %12170 = vst [vmem:[#allocation17 + $0x208] sm:$0xff] %v12108
    %12171 = vst [vmem:[#allocation17 + $0x228] sm:$0xff] %v12111
    %12172 = vst [vmem:[#allocation17 + $0x248] sm:$0xff] %v12116
    %12173 = vst [vmem:[#allocation17 + $0x268] sm:$0xff] %v12119
    %12174 = vst [vmem:[#allocation17 + $0x288] sm:$0xff] %v12124
    %12175 = vst [vmem:[#allocation17 + $0x2a8] sm:$0xff] %v12127
    %12176 = vst [vmem:[#allocation17 + $0x2c8] sm:$0xff] %v12132
    %12177 = vst [vmem:[#allocation17 + $0x2e8] sm:$0xff] %v12135
    %12178 = vst [vmem:[#allocation17 + $0x308] sm:$0xff] %v12140
    %12179 = vst [vmem:[#allocation17 + $0x328] sm:$0xff] %v12143
    %12180 = vst [vmem:[#allocation17 + $0x348] sm:$0xff] %v12148
    %12181 = vst [vmem:[#allocation17 + $0x368] sm:$0xff] %v12151
    %12182 = vmatprep.subr.bf16.mxu0 0
    %12183 = vmatpush1.bf16.msra.mxu0 %v11820
    %12184 = vmatprep.subr.bf16.mxu0 0
    %12185 = vmatpush1.bf16.msra.mxu0 %v11821
    %12186 = vmatprep.subr.bf16.mxu0 0
    %12187 = vmatpush1.bf16.msra.mxu0 %v11822
    %12188 = vmatprep.subr.bf16.mxu0 0
    %12189 = vmatpush1.bf16.msra.mxu0 %v11823
    %12190 = vmatprep.subr.bf16.mxu0 0
    %12191 = vmatpush1.bf16.msra.mxu0 %v11824
    %12192 = vmatprep.subr.bf16.mxu0 0
    %12193 = vmatpush1.bf16.msra.mxu0 %v11825
    %12194 = vmatprep.subr.bf16.mxu0 0
    %12195 = vmatpush1.bf16.msra.mxu0 %v11826
    %12196 = vmatprep.subr.bf16.mxu0 0
    %12197 = vmatpush1.bf16.msra.mxu0 %v11827
    %12198 = vmatprep.subr.bf16.mxu0 0
    %12199 = vmatpush1.bf16.msra.mxu0 0
    %12200 = vmatprep.subr.bf16.mxu0 0
    %12201 = vmatpush1.bf16.msra.mxu0 0
    %12202 = vmatprep.subr.bf16.mxu0 0
    %12203 = vmatpush1.bf16.msra.mxu0 0
    %12204 = vmatprep.subr.bf16.mxu0 0
    %12205 = vmatpush1.bf16.msra.mxu0 0
    %12206 = vmatprep.subr.bf16.mxu0 0
    %12207 = vmatpush1.bf16.msra.mxu0 0
    %12208 = vmatprep.subr.bf16.mxu0 0
    %12209 = vmatpush1.bf16.msra.mxu0 0
    %12210 = vmatprep.subr.bf16.mxu0 0
    %12211 = vmatpush1.bf16.msra.mxu0 0
    %12212 = vmatprep.subr.bf16.mxu0 0
    %12213 = vmatpush1.bf16.msra.mxu0 0
    %12214 = vmatprep.mubr.bf16.mxu0 0
    %12215 = vmatmul.mubr.bf16.gmra.mrb[0].mxu0 %v11711
    %v12216 = vpop.f32.mrb[0].mxu0
    %v12217 = vadd.f32 %v11786, %v12216
    %v12218 = vpop.f32.mrb[0].mxu0
    %v12219 = vpop.f32.mrb[0].mxu0
    %v12220 = vadd.f32 %v11786, %v12219
    %v12221 = vpop.f32.mrb[0].mxu0
    %12222 = vmatprep.mubr.bf16.mxu0 0
    %12223 = vmatmul.mubr.bf16.gmra.mrb[0].mxu0 %v11715
    %v12224 = vpop.f32.mrb[0].mxu0
    %v12225 = vadd.f32 %v11786, %v12224
    %v12226 = vpop.f32.mrb[0].mxu0
    %v12227 = vpop.f32.mrb[0].mxu0
    %v12228 = vadd.f32 %v11786, %v12227
    %v12229 = vpop.f32.mrb[0].mxu0
    %12230 = vmatprep.mubr.bf16.mxu0 0
    %12231 = vmatmul.mubr.bf16.gmra.mrb[0].mxu0 %v11719
    %v12232 = vpop.f32.mrb[0].mxu0
    %v12233 = vadd.f32 %v11786, %v12232
    %v12234 = vpop.f32.mrb[0].mxu0
    %v12235 = vpop.f32.mrb[0].mxu0
    %v12236 = vadd.f32 %v11786, %v12235
    %v12237 = vpop.f32.mrb[0].mxu0
    %12238 = vmatprep.mubr.bf16.mxu0 0
    %12239 = vmatmul.mubr.bf16.gmra.mrb[0].mxu0 %v11723
    %v12240 = vpop.f32.mrb[0].mxu0
    %v12241 = vadd.f32 %v11786, %v12240
    %v12242 = vpop.f32.mrb[0].mxu0
    %v12243 = vpop.f32.mrb[0].mxu0
    %v12244 = vadd.f32 %v11786, %v12243
    %v12245 = vpop.f32.mrb[0].mxu0
    %12246 = vmatprep.mubr.bf16.mxu0 0
    %12247 = vmatmul.mubr.bf16.gmra.mrb[0].mxu0 %v11727
    %v12248 = vpop.f32.mrb[0].mxu0
    %v12249 = vadd.f32 %v11786, %v12248
    %v12250 = vpop.f32.mrb[0].mxu0
    %v12251 = vpop.f32.mrb[0].mxu0
    %v12252 = vadd.f32 %v11786, %v12251
    %v12253 = vpop.f32.mrb[0].mxu0
    %12254 = vmatprep.mubr.bf16.mxu0 0
    %12255 = vmatmul.mubr.bf16.gmra.mrb[0].mxu0 %v11731
    %v12256 = vpop.f32.mrb[0].mxu0
    %v12257 = vadd.f32 %v11786, %v12256
    %v12258 = vpop.f32.mrb[0].mxu0
    %v12259 = vpop.f32.mrb[0].mxu0
    %v12260 = vadd.f32 %v11786, %v12259
    %v12261 = vpop.f32.mrb[0].mxu0
    %12262 = vmatprep.mubr.bf16.mxu0 0
    %12263 = vmatmul.mubr.bf16.gmra.mrb[0].mxu0 %v11735
    %v12264 = vpop.f32.mrb[0].mxu0
    %v12265 = vadd.f32 %v11786, %v12264
    %v12266 = vpop.f32.mrb[0].mxu0
    %v12267 = vpop.f32.mrb[0].mxu0
    %v12268 = vadd.f32 %v11786, %v12267
    %v12269 = vpop.f32.mrb[0].mxu0
    %12270 = vmatprep.mubr.bf16.mxu0 0
    %12271 = vmatmul.mubr.bf16.gmra.mrb[0].mxu0 %v11739
    %v12272 = vpop.f32.mrb[0].mxu0
    %v12273 = vadd.f32 %v11786, %v12272
    %v12274 = vpop.f32.mrb[0].mxu0
    %v12275 = vpop.f32.mrb[0].mxu0
    %v12276 = vadd.f32 %v11786, %v12275
    %v12277 = vpop.f32.mrb[0].mxu0
    %12278 = vmatprep.mubr.bf16.mxu0 0
    %12279 = vmatmul.mubr.bf16.gmra.mrb[0].mxu0 %v11743
    %v12280 = vpop.f32.mrb[0].mxu0
    %v12281 = vadd.f32 %v11786, %v12280
    %v12282 = vpop.f32.mrb[0].mxu0
    %v12283 = vpop.f32.mrb[0].mxu0
    %v12284 = vadd.f32 %v11786, %v12283
    %v12285 = vpop.f32.mrb[0].mxu0
    %12286 = vmatprep.mubr.bf16.mxu0 0
    %12287 = vmatmul.mubr.bf16.gmra.mrb[0].mxu0 %v11747
    %v12288 = vpop.f32.mrb[0].mxu0
    %v12289 = vadd.f32 %v11786, %v12288
    %v12290 = vpop.f32.mrb[0].mxu0
    %v12291 = vpop.f32.mrb[0].mxu0
    %v12292 = vadd.f32 %v11786, %v12291
    %v12293 = vpop.f32.mrb[0].mxu0
    %12294 = vmatprep.mubr.bf16.mxu0 0
    %12295 = vmatmul.mubr.bf16.gmra.mrb[0].mxu0 %v11751
    %v12296 = vpop.f32.mrb[0].mxu0
    %v12297 = vadd.f32 %v11786, %v12296
    %v12298 = vpop.f32.mrb[0].mxu0
    %v12299 = vpop.f32.mrb[0].mxu0
    %v12300 = vadd.f32 %v11786, %v12299
    %v12301 = vpop.f32.mrb[0].mxu0
    %12302 = vmatprep.mubr.bf16.mxu0 0
    %12303 = vmatmul.mubr.bf16.gmra.mrb[0].mxu0 %v11755
    %v12304 = vpop.f32.mrb[0].mxu0
    %v12305 = vadd.f32 %v11786, %v12304
    %v12306 = vpop.f32.mrb[0].mxu0
    %v12307 = vpop.f32.mrb[0].mxu0
    %v12308 = vadd.f32 %v11786, %v12307
    %v12309 = vpop.f32.mrb[0].mxu0
    %12310 = vmatprep.mubr.bf16.mxu0 0
    %12311 = vmatmul.mubr.bf16.gmra.mrb[0].mxu0 %v11759
    %v12312 = vpop.f32.mrb[0].mxu0
    %v12313 = vadd.f32 %v11786, %v12312
    %v12314 = vpop.f32.mrb[0].mxu0
    %v12315 = vpop.f32.mrb[0].mxu0
    %v12316 = vadd.f32 %v11786, %v12315
    %v12317 = vpop.f32.mrb[0].mxu0
    %12318 = vmatprep.mubr.bf16.mxu0 0
    %12319 = vmatmul.mubr.bf16.gmra.mrb[0].mxu0 %v11763
    %v12320 = vpop.f32.mrb[0].mxu0
    %v12321 = vadd.f32 %v11786, %v12320
    %v12322 = vpop.f32.mrb[0].mxu0
    %v12323 = vpop.f32.mrb[0].mxu0
    %v12324 = vadd.f32 %v11786, %v12323
    %v12325 = vpop.f32.mrb[0].mxu0
    %12326 = vdwg.mxu0
    %12327 = vst [vmem:[#allocation17 + $0x10] sm:$0xff] %v12217
    %12328 = vst [vmem:[#allocation17 + $0x30] sm:$0xff] %v12220
    %12329 = vst [vmem:[#allocation17 + $0x50] sm:$0xff] %v12225
    %12330 = vst [vmem:[#allocation17 + $0x70] sm:$0xff] %v12228
    %12331 = vst [vmem:[#allocation17 + $0x90] sm:$0xff] %v12233
    %12332 = vst [vmem:[#allocation17 + $0xb0] sm:$0xff] %v12236
    %12333 = vst [vmem:[#allocation17 + $0xd0] sm:$0xff] %v12241
    %12334 = vst [vmem:[#allocation17 + $0xf0] sm:$0xff] %v12244
    %12335 = vst [vmem:[#allocation17 + $0x110] sm:$0xff] %v12249
    %12336 = vst [vmem:[#allocation17 + $0x130] sm:$0xff] %v12252
    %12337 = vst [vmem:[#allocation17 + $0x150] sm:$0xff] %v12257
    %12338 = vst [vmem:[#allocation17 + $0x170] sm:$0xff] %v12260
    %12339 = vst [vmem:[#allocation17 + $0x190] sm:$0xff] %v12265
    %12340 = vst [vmem:[#allocation17 + $0x1b0] sm:$0xff] %v12268
    %12341 = vst [vmem:[#allocation17 + $0x1d0] sm:$0xff] %v12273
    %12342 = vst [vmem:[#allocation17 + $0x1f0] sm:$0xff] %v12276
    %12343 = vst [vmem:[#allocation17 + $0x210] sm:$0xff] %v12281
    %12344 = vst [vmem:[#allocation17 + $0x230] sm:$0xff] %v12284
    %12345 = vst [vmem:[#allocation17 + $0x250] sm:$0xff] %v12289
    %12346 = vst [vmem:[#allocation17 + $0x270] sm:$0xff] %v12292
    %12347 = vst [vmem:[#allocation17 + $0x290] sm:$0xff] %v12297
    %12348 = vst [vmem:[#allocation17 + $0x2b0] sm:$0xff] %v12300
    %12349 = vst [vmem:[#allocation17 + $0x2d0] sm:$0xff] %v12305
    %12350 = vst [vmem:[#allocation17 + $0x2f0] sm:$0xff] %v12308
    %12351 = vst [vmem:[#allocation17 + $0x310] sm:$0xff] %v12313
    %12352 = vst [vmem:[#allocation17 + $0x330] sm:$0xff] %v12316
    %12353 = vst [vmem:[#allocation17 + $0x350] sm:$0xff] %v12321
    %12354 = vst [vmem:[#allocation17 + $0x370] sm:$0xff] %v12324
    %12355 = vmatprep.subr.bf16.mxu0 0
    %12356 = vmatpush1.bf16.msra.mxu0 %v11820
    %12357 = vmatprep.subr.bf16.mxu0 0
    %12358 = vmatpush1.bf16.msra.mxu0 %v11821
    %12359 = vmatprep.subr.bf16.mxu0 0
    %12360 = vmatpush1.bf16.msra.mxu0 %v11822
    %12361 = vmatprep.subr.bf16.mxu0 0
    %12362 = vmatpush1.bf16.msra.mxu0 %v11823
    %12363 = vmatprep.subr.bf16.mxu0 0
    %12364 = vmatpush1.bf16.msra.mxu0 %v11824
    %12365 = vmatprep.subr.bf16.mxu0 0
    %12366 = vmatpush1.bf16.msra.mxu0 %v11825
    %12367 = vmatprep.subr.bf16.mxu0 0
    %12368 = vmatpush1.bf16.msra.mxu0 %v11826
    %12369 = vmatprep.subr.bf16.mxu0 0
    %12370 = vmatpush1.bf16.msra.mxu0 %v11827
    %12371 = vmatprep.subr.bf16.mxu0 0
    %12372 = vmatpush1.bf16.msra.mxu0 0
    %12373 = vmatprep.subr.bf16.mxu0 0
    %12374 = vmatpush1.bf16.msra.mxu0 0
    %12375 = vmatprep.subr.bf16.mxu0 0
    %12376 = vmatpush1.bf16.msra.mxu0 0
    %12377 = vmatprep.subr.bf16.mxu0 0
    %12378 = vmatpush1.bf16.msra.mxu0 0
    %12379 = vmatprep.subr.bf16.mxu0 0
    %12380 = vmatpush1.bf16.msra.mxu0 0
    %12381 = vmatprep.subr.bf16.mxu0 0
    %12382 = vmatpush1.bf16.msra.mxu0 0
    %12383 = vmatprep.subr.bf16.mxu0 0
    %12384 = vmatpush1.bf16.msra.mxu0 0
    %12385 = vmatprep.subr.bf16.mxu0 0
    %12386 = vmatpush1.bf16.msra.mxu0 0
    %12387 = vmatprep.mubr.bf16.mxu0 0
    %12388 = vmatmul.mubr.bf16.gmra.mrb[0].mxu0 %v11712
    %v12389 = vpop.f32.mrb[0].mxu0
    %v12390 = vadd.f32 %v11786, %v12389
    %v12391 = vpop.f32.mrb[0].mxu0
    %v12392 = vpop.f32.mrb[0].mxu0
    %v12393 = vadd.f32 %v11786, %v12392
    %v12394 = vpop.f32.mrb[0].mxu0
    %12395 = vmatprep.mubr.bf16.mxu0 0
    %12396 = vmatmul.mubr.bf16.gmra.mrb[0].mxu0 %v11716
    %v12397 = vpop.f32.mrb[0].mxu0
    %v12398 = vadd.f32 %v11786, %v12397
    %v12399 = vpop.f32.mrb[0].mxu0
    %v12400 = vpop.f32.mrb[0].mxu0
    %v12401 = vadd.f32 %v11786, %v12400
    %v12402 = vpop.f32.mrb[0].mxu0
    %12403 = vmatprep.mubr.bf16.mxu0 0
    %12404 = vmatmul.mubr.bf16.gmra.mrb[0].mxu0 %v11720
    %v12405 = vpop.f32.mrb[0].mxu0
    %v12406 = vadd.f32 %v11786, %v12405
    %v12407 = vpop.f32.mrb[0].mxu0
    %v12408 = vpop.f32.mrb[0].mxu0
    %v12409 = vadd.f32 %v11786, %v12408
    %v12410 = vpop.f32.mrb[0].mxu0
    %12411 = vmatprep.mubr.bf16.mxu0 0
    %12412 = vmatmul.mubr.bf16.gmra.mrb[0].mxu0 %v11724
    %v12413 = vpop.f32.mrb[0].mxu0
    %v12414 = vadd.f32 %v11786, %v12413
    %v12415 = vpop.f32.mrb[0].mxu0
    %v12416 = vpop.f32.mrb[0].mxu0
    %v12417 = vadd.f32 %v11786, %v12416
    %v12418 = vpop.f32.mrb[0].mxu0
    %12419 = vmatprep.mubr.bf16.mxu0 0
    %12420 = vmatmul.mubr.bf16.gmra.mrb[0].mxu0 %v11728
    %v12421 = vpop.f32.mrb[0].mxu0
    %v12422 = vadd.f32 %v11786, %v12421
    %v12423 = vpop.f32.mrb[0].mxu0
    %v12424 = vpop.f32.mrb[0].mxu0
    %v12425 = vadd.f32 %v11786, %v12424
    %v12426 = vpop.f32.mrb[0].mxu0
    %12427 = vmatprep.mubr.bf16.mxu0 0
    %12428 = vmatmul.mubr.bf16.gmra.mrb[0].mxu0 %v11732
    %v12429 = vpop.f32.mrb[0].mxu0
    %v12430 = vadd.f32 %v11786, %v12429
    %v12431 = vpop.f32.mrb[0].mxu0
    %v12432 = vpop.f32.mrb[0].mxu0
    %v12433 = vadd.f32 %v11786, %v12432
    %v12434 = vpop.f32.mrb[0].mxu0
    %12435 = vmatprep.mubr.bf16.mxu0 0
    %12436 = vmatmul.mubr.bf16.gmra.mrb[0].mxu0 %v11736
    %v12437 = vpop.f32.mrb[0].mxu0
    %v12438 = vadd.f32 %v11786, %v12437
    %v12439 = vpop.f32.mrb[0].mxu0
    %v12440 = vpop.f32.mrb[0].mxu0
    %v12441 = vadd.f32 %v11786, %v12440
    %v12442 = vpop.f32.mrb[0].mxu0
    %12443 = vmatprep.mubr.bf16.mxu0 0
    %12444 = vmatmul.mubr.bf16.gmra.mrb[0].mxu0 %v11740
    %v12445 = vpop.f32.mrb[0].mxu0
    %v12446 = vadd.f32 %v11786, %v12445
    %v12447 = vpop.f32.mrb[0].mxu0
    %v12448 = vpop.f32.mrb[0].mxu0
    %v12449 = vadd.f32 %v11786, %v12448
    %v12450 = vpop.f32.mrb[0].mxu0
    %12451 = vmatprep.mubr.bf16.mxu0 0
    %12452 = vmatmul.mubr.bf16.gmra.mrb[0].mxu0 %v11744
    %v12453 = vpop.f32.mrb[0].mxu0
    %v12454 = vadd.f32 %v11786, %v12453
    %v12455 = vpop.f32.mrb[0].mxu0
    %v12456 = vpop.f32.mrb[0].mxu0
    %v12457 = vadd.f32 %v11786, %v12456
    %v12458 = vpop.f32.mrb[0].mxu0
    %12459 = vmatprep.mubr.bf16.mxu0 0
    %12460 = vmatmul.mubr.bf16.gmra.mrb[0].mxu0 %v11748
    %v12461 = vpop.f32.mrb[0].mxu0
    %v12462 = vadd.f32 %v11786, %v12461
    %v12463 = vpop.f32.mrb[0].mxu0
    %v12464 = vpop.f32.mrb[0].mxu0
    %v12465 = vadd.f32 %v11786, %v12464
    %v12466 = vpop.f32.mrb[0].mxu0
    %12467 = vmatprep.mubr.bf16.mxu0 0
    %12468 = vmatmul.mubr.bf16.gmra.mrb[0].mxu0 %v11752
    %v12469 = vpop.f32.mrb[0].mxu0
    %v12470 = vadd.f32 %v11786, %v12469
    %v12471 = vpop.f32.mrb[0].mxu0
    %v12472 = vpop.f32.mrb[0].mxu0
    %v12473 = vadd.f32 %v11786, %v12472
    %v12474 = vpop.f32.mrb[0].mxu0
    %12475 = vmatprep.mubr.bf16.mxu0 0
    %12476 = vmatmul.mubr.bf16.gmra.mrb[0].mxu0 %v11756
    %v12477 = vpop.f32.mrb[0].mxu0
    %v12478 = vadd.f32 %v11786, %v12477
    %v12479 = vpop.f32.mrb[0].mxu0
    %v12480 = vpop.f32.mrb[0].mxu0
    %v12481 = vadd.f32 %v11786, %v12480
    %v12482 = vpop.f32.mrb[0].mxu0
    %12483 = vmatprep.mubr.bf16.mxu0 0
    %12484 = vmatmul.mubr.bf16.gmra.mrb[0].mxu0 %v11760
    %v12485 = vpop.f32.mrb[0].mxu0
    %v12486 = vadd.f32 %v11786, %v12485
    %v12487 = vpop.f32.mrb[0].mxu0
    %v12488 = vpop.f32.mrb[0].mxu0
    %v12489 = vadd.f32 %v11786, %v12488
    %v12490 = vpop.f32.mrb[0].mxu0
    %12491 = vmatprep.mubr.bf16.mxu0 0
    %12492 = vmatmul.mubr.bf16.gmra.mrb[0].mxu0 %v11764
    %v12493 = vpop.f32.mrb[0].mxu0
    %v12494 = vadd.f32 %v11786, %v12493
    %v12495 = vpop.f32.mrb[0].mxu0
    %v12496 = vpop.f32.mrb[0].mxu0
    %v12497 = vadd.f32 %v11786, %v12496
    %v12498 = vpop.f32.mrb[0].mxu0
    %12499 = vdwg.mxu0
    %12500 = vst [vmem:[#allocation17 + $0x18] sm:$0xff] %v12390
    %12501 = vst [vmem:[#allocation17 + $0x38] sm:$0xff] %v12393
    %12502 = vst [vmem:[#allocation17 + $0x58] sm:$0xff] %v12398
    %12503 = vst [vmem:[#allocation17 + $0x78] sm:$0xff] %v12401
    %12504 = vst [vmem:[#allocation17 + $0x98] sm:$0xff] %v12406
    %12505 = vst [vmem:[#allocation17 + $0xb8] sm:$0xff] %v12409
    %12506 = vst [vmem:[#allocation17 + $0xd8] sm:$0xff] %v12414
    %12507 = vst [vmem:[#allocation17 + $0xf8] sm:$0xff] %v12417
    %12508 = vst [vmem:[#allocation17 + $0x118] sm:$0xff] %v12422
    %12509 = vst [vmem:[#allocation17 + $0x138] sm:$0xff] %v12425
    %12510 = vst [vmem:[#allocation17 + $0x158] sm:$0xff] %v12430
    %12511 = vst [vmem:[#allocation17 + $0x178] sm:$0xff] %v12433
    %12512 = vst [vmem:[#allocation17 + $0x198] sm:$0xff] %v12438
    %12513 = vst [vmem:[#allocation17 + $0x1b8] sm:$0xff] %v12441
    %12514 = vst [vmem:[#allocation17 + $0x1d8] sm:$0xff] %v12446
    %12515 = vst [vmem:[#allocation17 + $0x1f8] sm:$0xff] %v12449
    %12516 = vst [vmem:[#allocation17 + $0x218] sm:$0xff] %v12454
    %12517 = vst [vmem:[#allocation17 + $0x238] sm:$0xff] %v12457
    %12518 = vst [vmem:[#allocation17 + $0x258] sm:$0xff] %v12462
    %12519 = vst [vmem:[#allocation17 + $0x278] sm:$0xff] %v12465
    %12520 = vst [vmem:[#allocation17 + $0x298] sm:$0xff] %v12470
    %12521 = vst [vmem:[#allocation17 + $0x2b8] sm:$0xff] %v12473
    %12522 = vst [vmem:[#allocation17 + $0x2d8] sm:$0xff] %v12478
    %12523 = vst [vmem:[#allocation17 + $0x2f8] sm:$0xff] %v12481
    %12524 = vst [vmem:[#allocation17 + $0x318] sm:$0xff] %v12486
    %12525 = vst [vmem:[#allocation17 + $0x338] sm:$0xff] %v12489
    %12526 = vst [vmem:[#allocation17 + $0x358] sm:$0xff] %v12494
    %12527 = vst [vmem:[#allocation17 + $0x378] sm:$0xff] %v12497
    // Predicated region
    $region86: #{tpu_custom_call.1} parent=1 // pred_check
      _
    $region87: #{tpu_custom_call.1} parent=1 // pred_check_branch
      %12529 = sbr.rel (0) target = $region89
    $region88: #{tpu_custom_call.1} parent=1 // pred_region
      %s12531 = ssub.s32 3584, 3584
      %12532 = vsyncadd [#allocation6], %s12531
      %s12533 = sshll.u32 [#allocation16], 4
      %s12534 = int_to_ptr.vmem [resolvable:$true] %s12533
      %12539 = dma.vmem_to_hbm [thread:$0]  %s12534, 3584, %s14, [#allocation6], 128, 128, 8
    $region89: #{tpu_custom_call.1} parent=1 // pred_fallthru
      _
    // Predicated region
    $region90: #{tpu_custom_call.1} parent=1 // pred_check
      _
    $region91: #{tpu_custom_call.1} parent=1 // pred_check_branch
      %12541 = sbr.rel (0) target = $region93
    $region92: #{tpu_custom_call.1} parent=1 // pred_region
      %s12543 = ssub.s32 14336, 14336
      %12544 = vsyncadd [#allocation18], %s12543
      %s12545 = sshll.u32 [#allocation17], 4
      %s12546 = int_to_ptr.vmem [resolvable:$true] %s12545
      %12551 = dma.vmem_to_hbm [thread:$0]  %s12546, 14336, %s15, [#allocation18], 512, 512, 32
    $region93: #{tpu_custom_call.1} parent=1 // pred_fallthru
      _
    // Predicated region
    $region94: #{tpu_custom_call.1} parent=1 // pred_check
      _
    $region95: #{tpu_custom_call.1} parent=1 // pred_check_branch
      %12553 = sbr.rel (0) target = $region97
    $region96: #{tpu_custom_call.1} parent=1 // pred_region
      %12554 = dma.done [#allocation6], 3584
    $region97: #{tpu_custom_call.1} parent=1 // pred_fallthru
      _
    // Predicated region
    $region98: #{tpu_custom_call.1} parent=1 // pred_check
      _
    $region99: #{tpu_custom_call.1} parent=1 // pred_check_branch
      %12556 = sbr.rel (0) target = $region101
    $region100: #{tpu_custom_call.1} parent=1 // pred_region
      %12557 = dma.done [#allocation18], 14336
    $region101: #{tpu_custom_call.1} parent=1 // pred_fallthru
      _
    %12558 = vsyncpa [#allocation5], 1
    %12559 = vsyncpa [#allocation8], 1
    %12560 = vsyncpa [#allocation11], 1
    %12561 = vsyncpa [#allocation14], 1
    %12562 = vsyncpa [#allocation6], 1
    %12563 = vsyncpa [#allocation18], 1

</llo_original>
